<compile_context>
chip_gen: v7x
topology: tpu7x:2x2x1
jax: 0.10.0
libtpu: 0.0.40
codegen_flags: <defaults>
</compile_context>

<pallas_src>
import functools

import jax
import jax.numpy as jnp
from jax import lax
from jax.experimental import pallas as pl
from jax.experimental.pallas import tpu as pltpu

CONV_OUT = 64  # fixed by the module: Conv2d(..., 64, ...) == LSTM input_size


# ---------------------------------------------------------------------------
# The single fused Pallas kernel
# ---------------------------------------------------------------------------
def _fused_forward_kernel(
    patches_ref, cwf_ref, cb_ref,
    w0_ih, w0_hh, b0,
    w1_ih, w1_hh, b1,
    fcw_ref, fcb_ref,
    out_ref,
    conv_sc, gx_sc, h0_sc, h1_sc,
    *, T, B, hid, d0):
  f32 = jnp.float32
  H4 = 4 * hid
  L = 2 * B           # 128 lanes: fwd batch in lanes 0:B, rev batch in B:2B

  # ---- Conv2d as T small im2col matmuls ------------------------------------
  # conv_sc[d, t*B + o] = conv_out[channel o, h=t, w=d]  ==  the transposed
  # (feature, batch) slab the LSTM input projection wants, columns (t, b).
  cwf_v = cwf_ref[...]                                   # (C_in*9, 64)
  cb_v = cb_ref[...]                                     # (1, 64)
  for t in range(T):
    p_t = patches_ref[t * d0:(t + 1) * d0, :]            # (d0, C_in*9)
    conv_sc[:, t * B:(t + 1) * B] = (
        jnp.dot(p_t, cwf_v, preferred_element_type=f32) + cb_v)

  # Hoisted lane masks (fwd occupies lanes 0:B, rev occupies lanes B:2B).
  lane_lo_h = lax.broadcasted_iota(jnp.int32, (hid, L), 1) < B
  lane_lo_g = lax.broadcasted_iota(jnp.int32, (H4, L), 1) < B

  def packed_gate_tile(tf, tr):
    # Assemble the (4H, 128) lane-packed pre-activation tile for one step:
    #   lanes 0:B  <- fwd gates at t = tf (rows 0:4H   of gx_sc)
    #   lanes B:2B <- rev gates at t = tr (rows 4H:8H  of gx_sc)
    # using only 128-lane-aligned loads + a select (+ a half-lane roll).
    a = gx_sc[0:H4, (tf // 2) * L:(tf // 2 + 1) * L]          # aligned tile
    r = gx_sc[H4:2 * H4, (tr // 2) * L:(tr // 2 + 1) * L]     # aligned tile
    fwd_hi, rev_hi = tf % 2, tr % 2                           # static ints
    if (fwd_hi, rev_hi) == (0, 1):
      return jnp.where(lane_lo_g, a, r)
    if (fwd_hi, rev_hi) == (1, 0):
      return pltpu.roll(jnp.where(lane_lo_g, r, a), shift=B, axis=1)
    if (fwd_hi, rev_hi) == (0, 0):
      return jnp.where(lane_lo_g, a, pltpu.roll(r, shift=B, axis=1))
    return jnp.where(lane_lo_g, pltpu.roll(a, shift=B, axis=1), r)

  def run_bilstm_layer(in_sc, w_ih, w_hh, b, out_sc):
    # Hoisted input projection for BOTH directions and ALL timesteps:
    # one lane-dense MXU matmul, M = 8H (=256), N = T*B (=512).
    gx_sc[:, 0:T * B] = (
        jnp.dot(w_ih[...], in_sc[...], preferred_element_type=f32) + b[...])

    w_hh_v = w_hh[...]                                   # (4H, 2H) = [fwd|rev]
    h = jnp.zeros((hid, L), f32)                         # lanes: [fwd | rev]
    c = jnp.zeros((hid, L), f32)
    for s in range(T):                                   # fully unrolled
      tf, tr = s, T - 1 - s
      g = packed_gate_tile(tf, tr)
      if s > 0:
        # One recurrent matmul for both directions: [W_f_hh | W_r_hh] against
        # the sublane-stacked, lane-masked state [[h*lo] ; [h*hi]] (2H, 128).
        s_pk = jnp.concatenate(
            [jnp.where(lane_lo_h, h, 0.0), jnp.where(lane_lo_h, 0.0, h)],
            axis=0)
        g = g + jnp.dot(w_hh_v, s_pk, preferred_element_type=f32)
      # PyTorch gate order i, f, g, o along sublanes (aligned slices).
      i_g = jax.nn.sigmoid(g[0 * hid:1 * hid, :])
      g_g = jnp.tanh(g[2 * hid:3 * hid, :])
      o_g = jax.nn.sigmoid(g[3 * hid:4 * hid, :])
      if s == 0:                       # h, c are zero: skip f-gate & f*c term
        c = i_g * g_g
      else:
        f_g = jax.nn.sigmoid(g[1 * hid:2 * hid, :])
        c = f_g * c + i_g * g_g
      h = o_g * jnp.tanh(c)
      # Layer output columns are (t, b); features: [fwd(0:H) ; rev(H:2H)].
      out_sc[0:hid, tf * B:(tf + 1) * B] = h[:, 0:B]
      out_sc[hid:2 * hid, tr * B:(tr + 1) * B] = h[:, B:2 * B]

  # Layer 0 consumes the conv result, layer 1 consumes layer 0's output.
  run_bilstm_layer(conv_sc, w0_ih, w0_hh, b0, h0_sc)
  run_bilstm_layer(h0_sc, w1_ih, w1_hh, b1, h1_sc)

  # ---- Linear(2H -> n_out): one lane-dense matmul, N = T*B (=512). ---------
  out_ref[...] = (
      jnp.dot(fcw_ref[...], h1_sc[...], preferred_element_type=f32)
      + fcb_ref[...]).astype(out_ref.dtype)


# ---------------------------------------------------------------------------
# Thin jitted wrapper: im2col glue -> single fused kernel -> layout fixup
# ---------------------------------------------------------------------------
def im2col_3x3(x_chw):
  """(C, H, W) -> (H*W, C*9) patches matching PyTorch's (O, C, 3, 3) flatten."""
  C, H, W = x_chw.shape
  xp = jnp.pad(x_chw, ((0, 0), (1, 1), (1, 1)))
  cols = [xp[:, kh:kh + H, kw:kw + W] for kh in range(3) for kw in range(3)]
  patches = jnp.stack(cols, axis=0)            # (9, C, H, W), k = kh*3 + kw
  patches = patches.transpose(1, 0, 2, 3)      # (C, 9, H, W)
  return patches.reshape(C * 9, H * W).T       # (H*W, C*9), rows = (h, w)


def _baseline_forward_impl(x, pp):
  C_in, H, W = x.shape
  assert W == CONV_OUT, "forward only runs when W == 64 (LSTM input_size)"
  hid = pp["lstm_flat"][1].shape[1] // 2       # W_hh_cat is (4H, 2H)
  n_out = pp["fc_b"].shape[0]
  T, B = H, CONV_OUT
  Tp = T + (T % 2)                             # gx column blocks rounded even

  patches = im2col_3x3(x)                      # (H*W, C_in*9), XLA glue

  kernel = functools.partial(
      _fused_forward_kernel, T=T, B=B, hid=hid, d0=W)
  out_k = pl.pallas_call(
      kernel,
      out_shape=jax.ShapeDtypeStruct((n_out, T * B), jnp.float32),
      scratch_shapes=[
          pltpu.VMEM((W, T * B), jnp.float32),         # conv, (feat, t*B+b)
          pltpu.VMEM((8 * hid, Tp * B), jnp.float32),  # stacked fwd|rev proj
          pltpu.VMEM((2 * hid, T * B), jnp.float32),   # layer-0 output
          pltpu.VMEM((2 * hid, T * B), jnp.float32),   # layer-1 output
      ],
  )(patches, pp["conv_wf"], pp["conv_b"],
    *pp["lstm_flat"],
    pp["fc_w"], pp["fc_b"])

  # rows o, cols (t, b)  ->  batch_first (B, T, n_out); tiny XLA transpose.
  return out_k.reshape(n_out, T, B).transpose(2, 1, 0)


baseline_forward = jax.jit(_baseline_forward_impl)


# ---------------------------------------------------------------------------
# Parameter handling
# ---------------------------------------------------------------------------
def init_params(key, input_channels, hidden, output_size):
  """PyTorch-layout parameters (same shapes as the nn.Module)."""
  keys = iter(jax.random.split(key, 32))

  def u(shape, scale=0.1):
    return jax.random.uniform(next(keys), shape, jnp.float32, -scale, scale)

  p = {
      "conv_w": u((CONV_OUT, input_channels, 3, 3)),
      "conv_b": u((CONV_OUT,)),
      "lstm": [],
  }
  in_sz = CONV_OUT
  for _ in range(2):  # num_layers=2
    lp = {}
    for d in ("f", "r"):  # bidirectional
      lp[f"wih_{d}"] = u((4 * hidden, in_sz))
      lp[f"whh_{d}"] = u((4 * hidden, hidden))
      lp[f"bih_{d}"] = u((4 * hidden,))
      lp[f"bhh_{d}"] = u((4 * hidden,))
    p["lstm"].append(lp)
    in_sz = 2 * hidden
  p["fc_w"] = u((output_size, 2 * hidden))
  p["fc_b"] = u((output_size,))
  return p


def prepare_params(p):
  """One-time packing for the kernel (no per-call transposes/reshapes)."""
  pp = {
      "conv_wf": p["conv_w"].reshape(CONV_OUT, -1).T,        # (C_in*9, 64)
      "conv_b": p["conv_b"].reshape(1, CONV_OUT),            # (1, 64)
      "fc_w": p["fc_w"],                                     # (out, 2H) native
      "fc_b": p["fc_b"].reshape(-1, 1),                      # (out, 1)
  }
  flat = []
  for lp in p["lstm"]:
    w_ih = jnp.concatenate([lp["wih_f"], lp["wih_r"]], axis=0)   # (8H, D)
    w_hh = jnp.concatenate([lp["whh_f"], lp["whh_r"]], axis=1)   # (4H, 2H)
    b = jnp.concatenate([lp["bih_f"] + lp["bhh_f"],
                         lp["bih_r"] + lp["bhh_r"]]).reshape(-1, 1)  # (8H, 1)
    flat += [w_ih, w_hh, b]
  pp["lstm_flat"] = tuple(flat)
  return pp


# ---------------------------------------------------------------------------
# Pure-JAX reference (mirrors the PyTorch forward) for validation
# ---------------------------------------------------------------------------
def reference_forward(x, p, hidden):
  with jax.default_matmul_precision("float32"):
    conv = lax.conv_general_dilated(
        x[None], p["conv_w"], (1, 1), "SAME",
        dimension_numbers=("NCHW", "OIHW", "NCHW"))[0]
    conv = conv + p["conv_b"][:, None, None]           # (64, H, W)
    seq = conv                                          # (B=64, T=H, D=W)

    def run_dir(x_btd, wih, whh, bih, bhh):
      B, T, _ = x_btd.shape
      h = jnp.zeros((B, hidden), jnp.float32)
      c = jnp.zeros((B, hidden), jnp.float32)
      outs = []
      for t in range(T):
        g = x_btd[:, t] @ wih.T + h @ whh.T + bih + bhh
        i = jax.nn.sigmoid(g[:, :hidden])
        f = jax.nn.sigmoid(g[:, hidden:2 * hidden])
        gg = jnp.tanh(g[:, 2 * hidden:3 * hidden])
        o = jax.nn.sigmoid(g[:, 3 * hidden:])
        c = f * c + i * gg
        h = o * jnp.tanh(c)
        outs.append(h)
      return jnp.stack(outs, axis=1)                    # (B, T, H)

    layer_in = seq
    for lp in p["lstm"]:
      of = run_dir(layer_in, lp["wih_f"], lp["whh_f"], lp["bih_f"], lp["bhh_f"])
      orv = jnp.flip(
          run_dir(jnp.flip(layer_in, 1), lp["wih_r"], lp["whh_r"],
                  lp["bih_r"], lp["bhh_r"]), 1)
      layer_in = jnp.concatenate([of, orv], axis=-1)
    return layer_in @ p["fc_w"].T + p["fc_b"]


if __name__ == "__main__":
  INPUT_CHANNELS, HIDDEN, OUTPUT = 4, 32, 16
  H, W = 8, 64  # W must equal 64 for the as-written PyTorch forward to run

  key = jax.random.PRNGKey(0)
  kx, kp = jax.random.split(key)
  x = jax.random.normal(kx, (INPUT_CHANNELS, H, W), jnp.float32)
  params = init_params(kp, INPUT_CHANNELS, HIDDEN, OUTPUT)
  packed = prepare_params(params)

  out = baseline_forward(x, packed)
  out = jax.block_until_ready(out)
  assert out.shape == (CONV_OUT, H, OUTPUT), out.shape

  ref = reference_forward(x, params, HIDDEN)
  err = float(jnp.max(jnp.abs(out - ref)))
  # All-f32 path; a future bf16 operand change must re-validate consciously.
  assert err < 5e-3, f"max abs err vs reference: {err}"

  print("KERNEL_OK")
</pallas_src>

<mosaic_0001>
module attributes {stable_mosaic.version = 11 : i64} {
  func.func @_fused_forward_kernel(%arg0: memref<512x36xf32, #tpu.memory_space<vmem>>, %arg1: memref<36x64xf32, #tpu.memory_space<vmem>>, %arg2: memref<1x64xf32, #tpu.memory_space<vmem>>, %arg3: memref<256x64xf32, #tpu.memory_space<vmem>>, %arg4: memref<128x64xf32, #tpu.memory_space<vmem>>, %arg5: memref<256x1xf32, #tpu.memory_space<vmem>>, %arg6: memref<256x64xf32, #tpu.memory_space<vmem>>, %arg7: memref<128x64xf32, #tpu.memory_space<vmem>>, %arg8: memref<256x1xf32, #tpu.memory_space<vmem>>, %arg9: memref<16x64xf32, #tpu.memory_space<vmem>>, %arg10: memref<16x1xf32, #tpu.memory_space<vmem>>, %arg11: memref<16x512xf32, #tpu.memory_space<vmem>>, %arg12: memref<64x512xf32, #tpu.memory_space<vmem>>, %arg13: memref<256x512xf32, #tpu.memory_space<vmem>>, %arg14: memref<64x512xf32, #tpu.memory_space<vmem>>, %arg15: memref<64x512xf32, #tpu.memory_space<vmem>>) attributes {dimension_semantics = [], scalar_prefetch = 0 : i64, scratch_operands = 4 : i64, tpu.core_type = #tpu.core_type<tc>} {
    %c0 = arith.constant 0 : index
    %c0_0 = arith.constant 0 : index
    %0 = vector.load %arg1[%c0, %c0_0] : memref<36x64xf32, #tpu.memory_space<vmem>>, vector<36x64xf32>
    %c0_1 = arith.constant 0 : index
    %c0_2 = arith.constant 0 : index
    %1 = vector.load %arg2[%c0_1, %c0_2] : memref<1x64xf32, #tpu.memory_space<vmem>>, vector<1x64xf32>
    %c0_3 = arith.constant 0 : index
    %c0_4 = arith.constant 0 : index
    %2 = vector.load %arg0[%c0_3, %c0_4] : memref<512x36xf32, #tpu.memory_space<vmem>>, vector<64x36xf32>
    %cst = arith.constant dense<0.000000e+00> : vector<64x64xf32>
    %3 = tpu.matmul %2, %0, %cst {dimension_numbers = #tpu.dot_dimension_numbers<[1], [0], [0], [1], [0, 0, 1, 1], [], []>} : vector<64x36xf32>, vector<36x64xf32>, vector<64x64xf32> -> vector<64x64xf32>
    %4 = vector.broadcast %1 : vector<1x64xf32> to vector<64x64xf32>
    %5 = arith.addf %3, %4 : vector<64x64xf32>
    %c0_5 = arith.constant 0 : index
    %c0_6 = arith.constant 0 : index
    %6 = vector.load %arg12[%c0_5, %c0_6] : memref<64x512xf32, #tpu.memory_space<vmem>>, vector<64x64xf32>
    tpu.vector_store %arg12[%c0_5, %c0_6], %5 {strides = array<i32>} : memref<64x512xf32, #tpu.memory_space<vmem>>, vector<64x64xf32>,
    %c64 = arith.constant 64 : index
    %c0_7 = arith.constant 0 : index
    %7 = vector.load %arg0[%c64, %c0_7] : memref<512x36xf32, #tpu.memory_space<vmem>>, vector<64x36xf32>
    %cst_8 = arith.constant dense<0.000000e+00> : vector<64x64xf32>
    %8 = tpu.matmul %7, %0, %cst_8 {dimension_numbers = #tpu.dot_dimension_numbers<[1], [0], [0], [1], [0, 0, 1, 1], [], []>} : vector<64x36xf32>, vector<36x64xf32>, vector<64x64xf32> -> vector<64x64xf32>
    %9 = vector.broadcast %1 : vector<1x64xf32> to vector<64x64xf32>
    %10 = arith.addf %8, %9 : vector<64x64xf32>
    %c0_9 = arith.constant 0 : index
    %c64_10 = arith.constant 64 : index
    %11 = vector.load %arg12[%c0_9, %c64_10] : memref<64x512xf32, #tpu.memory_space<vmem>>, vector<64x64xf32>
    tpu.vector_store %arg12[%c0_9, %c64_10], %10 {strides = array<i32>} : memref<64x512xf32, #tpu.memory_space<vmem>>, vector<64x64xf32>,
    %c128 = arith.constant 128 : index
    %c0_11 = arith.constant 0 : index
    %12 = vector.load %arg0[%c128, %c0_11] : memref<512x36xf32, #tpu.memory_space<vmem>>, vector<64x36xf32>
    %cst_12 = arith.constant dense<0.000000e+00> : vector<64x64xf32>
    %13 = tpu.matmul %12, %0, %cst_12 {dimension_numbers = #tpu.dot_dimension_numbers<[1], [0], [0], [1], [0, 0, 1, 1], [], []>} : vector<64x36xf32>, vector<36x64xf32>, vector<64x64xf32> -> vector<64x64xf32>
    %14 = vector.broadcast %1 : vector<1x64xf32> to vector<64x64xf32>
    %15 = arith.addf %13, %14 : vector<64x64xf32>
    %c0_13 = arith.constant 0 : index
    %c128_14 = arith.constant 128 : index
    %16 = vector.load %arg12[%c0_13, %c128_14] : memref<64x512xf32, #tpu.memory_space<vmem>>, vector<64x64xf32>
    tpu.vector_store %arg12[%c0_13, %c128_14], %15 {strides = array<i32>} : memref<64x512xf32, #tpu.memory_space<vmem>>, vector<64x64xf32>,
    %c192 = arith.constant 192 : index
    %c0_15 = arith.constant 0 : index
    %17 = vector.load %arg0[%c192, %c0_15] : memref<512x36xf32, #tpu.memory_space<vmem>>, vector<64x36xf32>
    %cst_16 = arith.constant dense<0.000000e+00> : vector<64x64xf32>
    %18 = tpu.matmul %17, %0, %cst_16 {dimension_numbers = #tpu.dot_dimension_numbers<[1], [0], [0], [1], [0, 0, 1, 1], [], []>} : vector<64x36xf32>, vector<36x64xf32>, vector<64x64xf32> -> vector<64x64xf32>
    %19 = vector.broadcast %1 : vector<1x64xf32> to vector<64x64xf32>
    %20 = arith.addf %18, %19 : vector<64x64xf32>
    %c0_17 = arith.constant 0 : index
    %c192_18 = arith.constant 192 : index
    %21 = vector.load %arg12[%c0_17, %c192_18] : memref<64x512xf32, #tpu.memory_space<vmem>>, vector<64x64xf32>
    tpu.vector_store %arg12[%c0_17, %c192_18], %20 {strides = array<i32>} : memref<64x512xf32, #tpu.memory_space<vmem>>, vector<64x64xf32>,
    %c256 = arith.constant 256 : index
    %c0_19 = arith.constant 0 : index
    %22 = vector.load %arg0[%c256, %c0_19] : memref<512x36xf32, #tpu.memory_space<vmem>>, vector<64x36xf32>
    %cst_20 = arith.constant dense<0.000000e+00> : vector<64x64xf32>
    %23 = tpu.matmul %22, %0, %cst_20 {dimension_numbers = #tpu.dot_dimension_numbers<[1], [0], [0], [1], [0, 0, 1, 1], [], []>} : vector<64x36xf32>, vector<36x64xf32>, vector<64x64xf32> -> vector<64x64xf32>
    %24 = vector.broadcast %1 : vector<1x64xf32> to vector<64x64xf32>
    %25 = arith.addf %23, %24 : vector<64x64xf32>
    %c0_21 = arith.constant 0 : index
    %c256_22 = arith.constant 256 : index
    %26 = vector.load %arg12[%c0_21, %c256_22] : memref<64x512xf32, #tpu.memory_space<vmem>>, vector<64x64xf32>
    tpu.vector_store %arg12[%c0_21, %c256_22], %25 {strides = array<i32>} : memref<64x512xf32, #tpu.memory_space<vmem>>, vector<64x64xf32>,
    %c320 = arith.constant 320 : index
    %c0_23 = arith.constant 0 : index
    %27 = vector.load %arg0[%c320, %c0_23] : memref<512x36xf32, #tpu.memory_space<vmem>>, vector<64x36xf32>
    %cst_24 = arith.constant dense<0.000000e+00> : vector<64x64xf32>
    %28 = tpu.matmul %27, %0, %cst_24 {dimension_numbers = #tpu.dot_dimension_numbers<[1], [0], [0], [1], [0, 0, 1, 1], [], []>} : vector<64x36xf32>, vector<36x64xf32>, vector<64x64xf32> -> vector<64x64xf32>
    %29 = vector.broadcast %1 : vector<1x64xf32> to vector<64x64xf32>
    %30 = arith.addf %28, %29 : vector<64x64xf32>
    %c0_25 = arith.constant 0 : index
    %c320_26 = arith.constant 320 : index
    %31 = vector.load %arg12[%c0_25, %c320_26] : memref<64x512xf32, #tpu.memory_space<vmem>>, vector<64x64xf32>
    tpu.vector_store %arg12[%c0_25, %c320_26], %30 {strides = array<i32>} : memref<64x512xf32, #tpu.memory_space<vmem>>, vector<64x64xf32>,
    %c384 = arith.constant 384 : index
    %c0_27 = arith.constant 0 : index
    %32 = vector.load %arg0[%c384, %c0_27] : memref<512x36xf32, #tpu.memory_space<vmem>>, vector<64x36xf32>
    %cst_28 = arith.constant dense<0.000000e+00> : vector<64x64xf32>
    %33 = tpu.matmul %32, %0, %cst_28 {dimension_numbers = #tpu.dot_dimension_numbers<[1], [0], [0], [1], [0, 0, 1, 1], [], []>} : vector<64x36xf32>, vector<36x64xf32>, vector<64x64xf32> -> vector<64x64xf32>
    %34 = vector.broadcast %1 : vector<1x64xf32> to vector<64x64xf32>
    %35 = arith.addf %33, %34 : vector<64x64xf32>
    %c0_29 = arith.constant 0 : index
    %c384_30 = arith.constant 384 : index
    %36 = vector.load %arg12[%c0_29, %c384_30] : memref<64x512xf32, #tpu.memory_space<vmem>>, vector<64x64xf32>
    tpu.vector_store %arg12[%c0_29, %c384_30], %35 {strides = array<i32>} : memref<64x512xf32, #tpu.memory_space<vmem>>, vector<64x64xf32>,
    %c448 = arith.constant 448 : index
    %c0_31 = arith.constant 0 : index
    %37 = vector.load %arg0[%c448, %c0_31] : memref<512x36xf32, #tpu.memory_space<vmem>>, vector<64x36xf32>
    %cst_32 = arith.constant dense<0.000000e+00> : vector<64x64xf32>
    %38 = tpu.matmul %37, %0, %cst_32 {dimension_numbers = #tpu.dot_dimension_numbers<[1], [0], [0], [1], [0, 0, 1, 1], [], []>} : vector<64x36xf32>, vector<36x64xf32>, vector<64x64xf32> -> vector<64x64xf32>
    %39 = vector.broadcast %1 : vector<1x64xf32> to vector<64x64xf32>
    %40 = arith.addf %38, %39 : vector<64x64xf32>
    %c0_33 = arith.constant 0 : index
    %c448_34 = arith.constant 448 : index
    %41 = vector.load %arg12[%c0_33, %c448_34] : memref<64x512xf32, #tpu.memory_space<vmem>>, vector<64x64xf32>
    tpu.vector_store %arg12[%c0_33, %c448_34], %40 {strides = array<i32>} : memref<64x512xf32, #tpu.memory_space<vmem>>, vector<64x64xf32>,
    %42 = tpu.iota {dimensions = array<i32: 1>} : vector<32x128xi32>
    %c64_i32 = arith.constant 64 : i32
    %43 = vector.broadcast %c64_i32 : i32 to vector<32x128xi32>
    %44 = arith.cmpi slt, %42, %43 : vector<32x128xi32>
    %45 = tpu.iota {dimensions = array<i32: 1>} : vector<128x128xi32>
    %c64_i32_35 = arith.constant 64 : i32
    %46 = vector.broadcast %c64_i32_35 : i32 to vector<128x128xi32>
    %47 = arith.cmpi slt, %45, %46 : vector<128x128xi32>
    %c0_36 = arith.constant 0 : index
    %c0_37 = arith.constant 0 : index
    %48 = vector.load %arg3[%c0_36, %c0_37] : memref<256x64xf32, #tpu.memory_space<vmem>>, vector<256x64xf32>
    %c0_38 = arith.constant 0 : index
    %c0_39 = arith.constant 0 : index
    %49 = vector.load %arg12[%c0_38, %c0_39] : memref<64x512xf32, #tpu.memory_space<vmem>>, vector<64x512xf32>
    %cst_40 = arith.constant dense<0.000000e+00> : vector<256x512xf32>
    %50 = tpu.matmul %48, %49, %cst_40 {dimension_numbers = #tpu.dot_dimension_numbers<[1], [0], [0], [1], [0, 0, 1, 1], [], []>} : vector<256x64xf32>, vector<64x512xf32>, vector<256x512xf32> -> vector<256x512xf32>
    %c0_41 = arith.constant 0 : index
    %c0_42 = arith.constant 0 : index
    %51 = vector.load %arg5[%c0_41, %c0_42] : memref<256x1xf32, #tpu.memory_space<vmem>>, vector<256x1xf32>
    %52 = vector.broadcast %51 : vector<256x1xf32> to vector<256x512xf32>
    %53 = arith.addf %50, %52 : vector<256x512xf32>
    %c0_43 = arith.constant 0 : index
    %c0_44 = arith.constant 0 : index
    %54 = vector.load %arg13[%c0_43, %c0_44] : memref<256x512xf32, #tpu.memory_space<vmem>>, vector<256x512xf32>
    tpu.vector_store %arg13[%c0_43, %c0_44], %53 {strides = array<i32>} : memref<256x512xf32, #tpu.memory_space<vmem>>, vector<256x512xf32>,
    %c0_45 = arith.constant 0 : index
    %c0_46 = arith.constant 0 : index
    %55 = vector.load %arg4[%c0_45, %c0_46] : memref<128x64xf32, #tpu.memory_space<vmem>>, vector<128x64xf32>
    %c0_47 = arith.constant 0 : index
    %c0_48 = arith.constant 0 : index
    %56 = vector.load %arg13[%c0_47, %c0_48] : memref<256x512xf32, #tpu.memory_space<vmem>>, vector<128x128xf32>
    %c128_49 = arith.constant 128 : index
    %c384_50 = arith.constant 384 : index
    %57 = vector.load %arg13[%c128_49, %c384_50] : memref<256x512xf32, #tpu.memory_space<vmem>>, vector<128x128xf32>
    %58 = arith.select %47, %56, %57 : vector<128x128xi1>, vector<128x128xf32>
    %59 = vector.extract_strided_slice %58 {offsets = [0, 0], sizes = [32, 128], strides = [1, 1]} : vector<128x128xf32> to vector<32x128xf32>
    %60 = arith.negf %59 : vector<32x128xf32>
    %61 = math.exp %60 : vector<32x128xf32>
    %cst_51 = arith.constant 1.000000e+00 : f32
    %62 = vector.broadcast %cst_51 : f32 to vector<32x128xf32>
    %63 = arith.addf %62, %61 : vector<32x128xf32>
    %64 = arith.divf %62, %63 : vector<32x128xf32>
    %65 = vector.extract_strided_slice %58 {offsets = [64, 0], sizes = [32, 128], strides = [1, 1]} : vector<128x128xf32> to vector<32x128xf32>
    %66 = math.tanh %65 : vector<32x128xf32>
    %67 = vector.extract_strided_slice %58 {offsets = [96, 0], sizes = [32, 128], strides = [1, 1]} : vector<128x128xf32> to vector<32x128xf32>
    %68 = arith.negf %67 : vector<32x128xf32>
    %69 = math.exp %68 : vector<32x128xf32>
    %cst_52 = arith.constant 1.000000e+00 : f32
    %70 = vector.broadcast %cst_52 : f32 to vector<32x128xf32>
    %71 = arith.addf %70, %69 : vector<32x128xf32>
    %72 = arith.divf %70, %71 : vector<32x128xf32>
    %73 = arith.mulf %64, %66 : vector<32x128xf32>
    %74 = math.tanh %73 : vector<32x128xf32>
    %75 = arith.mulf %72, %74 : vector<32x128xf32>
    %76 = vector.extract_strided_slice %75 {offsets = [0, 0], sizes = [32, 64], strides = [1, 1]} : vector<32x128xf32> to vector<32x64xf32>
    %c0_53 = arith.constant 0 : index
    %c0_54 = arith.constant 0 : index
    %77 = vector.load %arg14[%c0_53, %c0_54] : memref<64x512xf32, #tpu.memory_space<vmem>>, vector<32x64xf32>
    tpu.vector_store %arg14[%c0_53, %c0_54], %76 {strides = array<i32>} : memref<64x512xf32, #tpu.memory_space<vmem>>, vector<32x64xf32>,
    %78 = vector.extract_strided_slice %75 {offsets = [0, 64], sizes = [32, 64], strides = [1, 1]} : vector<32x128xf32> to vector<32x64xf32>
    %c32 = arith.constant 32 : index
    %c448_55 = arith.constant 448 : index
    %79 = vector.load %arg14[%c32, %c448_55] : memref<64x512xf32, #tpu.memory_space<vmem>>, vector<32x64xf32>
    tpu.vector_store %arg14[%c32, %c448_55], %78 {strides = array<i32>} : memref<64x512xf32, #tpu.memory_space<vmem>>, vector<32x64xf32>,
    %c0_56 = arith.constant 0 : index
    %c0_57 = arith.constant 0 : index
    %80 = vector.load %arg13[%c0_56, %c0_57] : memref<256x512xf32, #tpu.memory_space<vmem>>, vector<128x128xf32>
    %c128_58 = arith.constant 128 : index
    %c384_59 = arith.constant 384 : index
    %81 = vector.load %arg13[%c128_58, %c384_59] : memref<256x512xf32, #tpu.memory_space<vmem>>, vector<128x128xf32>
    %82 = arith.select %47, %81, %80 : vector<128x128xi1>, vector<128x128xf32>
    %c64_i32_60 = arith.constant 64 : i32
    %83 = tpu.dynamic_rotate %82 by %c64_i32_60 dim 1 : vector<128x128xf32>, i32 -> vector<128x128xf32>
    %cst_61 = arith.constant 0.000000e+00 : f32
    %84 = vector.broadcast %cst_61 : f32 to vector<32x128xf32>
    %85 = arith.select %44, %75, %84 : vector<32x128xi1>, vector<32x128xf32>
    %cst_62 = arith.constant 0.000000e+00 : f32
    %86 = vector.broadcast %cst_62 : f32 to vector<32x128xf32>
    %87 = arith.select %44, %86, %75 : vector<32x128xi1>, vector<32x128xf32>
    %88 = tpu.concatenate %85, %87 in 0 : vector<32x128xf32>, vector<32x128xf32> -> vector<64x128xf32>
    %cst_63 = arith.constant dense<0.000000e+00> : vector<128x128xf32>
    %89 = tpu.matmul %55, %88, %cst_63 {dimension_numbers = #tpu.dot_dimension_numbers<[1], [0], [0], [1], [0, 0, 1, 1], [], []>} : vector<128x64xf32>, vector<64x128xf32>, vector<128x128xf32> -> vector<128x128xf32>
    %90 = arith.addf %83, %89 : vector<128x128xf32>
    %91 = vector.extract_strided_slice %90 {offsets = [0, 0], sizes = [32, 128], strides = [1, 1]} : vector<128x128xf32> to vector<32x128xf32>
    %92 = arith.negf %91 : vector<32x128xf32>
    %93 = math.exp %92 : vector<32x128xf32>
    %cst_64 = arith.constant 1.000000e+00 : f32
    %94 = vector.broadcast %cst_64 : f32 to vector<32x128xf32>
    %95 = arith.addf %94, %93 : vector<32x128xf32>
    %96 = arith.divf %94, %95 : vector<32x128xf32>
    %97 = vector.extract_strided_slice %90 {offsets = [64, 0], sizes = [32, 128], strides = [1, 1]} : vector<128x128xf32> to vector<32x128xf32>
    %98 = math.tanh %97 : vector<32x128xf32>
    %99 = vector.extract_strided_slice %90 {offsets = [96, 0], sizes = [32, 128], strides = [1, 1]} : vector<128x128xf32> to vector<32x128xf32>
    %100 = arith.negf %99 : vector<32x128xf32>
    %101 = math.exp %100 : vector<32x128xf32>
    %cst_65 = arith.constant 1.000000e+00 : f32
    %102 = vector.broadcast %cst_65 : f32 to vector<32x128xf32>
    %103 = arith.addf %102, %101 : vector<32x128xf32>
    %104 = arith.divf %102, %103 : vector<32x128xf32>
    %105 = vector.extract_strided_slice %90 {offsets = [32, 0], sizes = [32, 128], strides = [1, 1]} : vector<128x128xf32> to vector<32x128xf32>
    %106 = arith.negf %105 : vector<32x128xf32>
    %107 = math.exp %106 : vector<32x128xf32>
    %cst_66 = arith.constant 1.000000e+00 : f32
    %108 = vector.broadcast %cst_66 : f32 to vector<32x128xf32>
    %109 = arith.addf %108, %107 : vector<32x128xf32>
    %110 = arith.divf %108, %109 : vector<32x128xf32>
    %111 = arith.mulf %110, %73 : vector<32x128xf32>
    %112 = arith.mulf %96, %98 : vector<32x128xf32>
    %113 = arith.addf %111, %112 : vector<32x128xf32>
    %114 = math.tanh %113 : vector<32x128xf32>
    %115 = arith.mulf %104, %114 : vector<32x128xf32>
    %116 = vector.extract_strided_slice %115 {offsets = [0, 0], sizes = [32, 64], strides = [1, 1]} : vector<32x128xf32> to vector<32x64xf32>
    %c0_67 = arith.constant 0 : index
    %c64_68 = arith.constant 64 : index
    %117 = vector.load %arg14[%c0_67, %c64_68] : memref<64x512xf32, #tpu.memory_space<vmem>>, vector<32x64xf32>
    tpu.vector_store %arg14[%c0_67, %c64_68], %116 {strides = array<i32>} : memref<64x512xf32, #tpu.memory_space<vmem>>, vector<32x64xf32>,
    %118 = vector.extract_strided_slice %115 {offsets = [0, 64], sizes = [32, 64], strides = [1, 1]} : vector<32x128xf32> to vector<32x64xf32>
    %c32_69 = arith.constant 32 : index
    %c384_70 = arith.constant 384 : index
    %119 = vector.load %arg14[%c32_69, %c384_70] : memref<64x512xf32, #tpu.memory_space<vmem>>, vector<32x64xf32>
    tpu.vector_store %arg14[%c32_69, %c384_70], %118 {strides = array<i32>} : memref<64x512xf32, #tpu.memory_space<vmem>>, vector<32x64xf32>,
    %c0_71 = arith.constant 0 : index
    %c128_72 = arith.constant 128 : index
    %120 = vector.load %arg13[%c0_71, %c128_72] : memref<256x512xf32, #tpu.memory_space<vmem>>, vector<128x128xf32>
    %c128_73 = arith.constant 128 : index
    %c256_74 = arith.constant 256 : index
    %121 = vector.load %arg13[%c128_73, %c256_74] : memref<256x512xf32, #tpu.memory_space<vmem>>, vector<128x128xf32>
    %122 = arith.select %47, %120, %121 : vector<128x128xi1>, vector<128x128xf32>
    %cst_75 = arith.constant 0.000000e+00 : f32
    %123 = vector.broadcast %cst_75 : f32 to vector<32x128xf32>
    %124 = arith.select %44, %115, %123 : vector<32x128xi1>, vector<32x128xf32>
    %cst_76 = arith.constant 0.000000e+00 : f32
    %125 = vector.broadcast %cst_76 : f32 to vector<32x128xf32>
    %126 = arith.select %44, %125, %115 : vector<32x128xi1>, vector<32x128xf32>
    %127 = tpu.concatenate %124, %126 in 0 : vector<32x128xf32>, vector<32x128xf32> -> vector<64x128xf32>
    %cst_77 = arith.constant dense<0.000000e+00> : vector<128x128xf32>
    %128 = tpu.matmul %55, %127, %cst_77 {dimension_numbers = #tpu.dot_dimension_numbers<[1], [0], [0], [1], [0, 0, 1, 1], [], []>} : vector<128x64xf32>, vector<64x128xf32>, vector<128x128xf32> -> vector<128x128xf32>
    %129 = arith.addf %122, %128 : vector<128x128xf32>
    %130 = vector.extract_strided_slice %129 {offsets = [0, 0], sizes = [32, 128], strides = [1, 1]} : vector<128x128xf32> to vector<32x128xf32>
    %131 = arith.negf %130 : vector<32x128xf32>
    %132 = math.exp %131 : vector<32x128xf32>
    %cst_78 = arith.constant 1.000000e+00 : f32
    %133 = vector.broadcast %cst_78 : f32 to vector<32x128xf32>
    %134 = arith.addf %133, %132 : vector<32x128xf32>
    %135 = arith.divf %133, %134 : vector<32x128xf32>
    %136 = vector.extract_strided_slice %129 {offsets = [64, 0], sizes = [32, 128], strides = [1, 1]} : vector<128x128xf32> to vector<32x128xf32>
    %137 = math.tanh %136 : vector<32x128xf32>
    %138 = vector.extract_strided_slice %129 {offsets = [96, 0], sizes = [32, 128], strides = [1, 1]} : vector<128x128xf32> to vector<32x128xf32>
    %139 = arith.negf %138 : vector<32x128xf32>
    %140 = math.exp %139 : vector<32x128xf32>
    %cst_79 = arith.constant 1.000000e+00 : f32
    %141 = vector.broadcast %cst_79 : f32 to vector<32x128xf32>
    %142 = arith.addf %141, %140 : vector<32x128xf32>
    %143 = arith.divf %141, %142 : vector<32x128xf32>
    %144 = vector.extract_strided_slice %129 {offsets = [32, 0], sizes = [32, 128], strides = [1, 1]} : vector<128x128xf32> to vector<32x128xf32>
    %145 = arith.negf %144 : vector<32x128xf32>
    %146 = math.exp %145 : vector<32x128xf32>
    %cst_80 = arith.constant 1.000000e+00 : f32
    %147 = vector.broadcast %cst_80 : f32 to vector<32x128xf32>
    %148 = arith.addf %147, %146 : vector<32x128xf32>
    %149 = arith.divf %147, %148 : vector<32x128xf32>
    %150 = arith.mulf %149, %113 : vector<32x128xf32>
    %151 = arith.mulf %135, %137 : vector<32x128xf32>
    %152 = arith.addf %150, %151 : vector<32x128xf32>
    %153 = math.tanh %152 : vector<32x128xf32>
    %154 = arith.mulf %143, %153 : vector<32x128xf32>
    %155 = vector.extract_strided_slice %154 {offsets = [0, 0], sizes = [32, 64], strides = [1, 1]} : vector<32x128xf32> to vector<32x64xf32>
    %c0_81 = arith.constant 0 : index
    %c128_82 = arith.constant 128 : index
    %156 = vector.load %arg14[%c0_81, %c128_82] : memref<64x512xf32, #tpu.memory_space<vmem>>, vector<32x64xf32>
    tpu.vector_store %arg14[%c0_81, %c128_82], %155 {strides = array<i32>} : memref<64x512xf32, #tpu.memory_space<vmem>>, vector<32x64xf32>,
    %157 = vector.extract_strided_slice %154 {offsets = [0, 64], sizes = [32, 64], strides = [1, 1]} : vector<32x128xf32> to vector<32x64xf32>
    %c32_83 = arith.constant 32 : index
    %c320_84 = arith.constant 320 : index
    %158 = vector.load %arg14[%c32_83, %c320_84] : memref<64x512xf32, #tpu.memory_space<vmem>>, vector<32x64xf32>
    tpu.vector_store %arg14[%c32_83, %c320_84], %157 {strides = array<i32>} : memref<64x512xf32, #tpu.memory_space<vmem>>, vector<32x64xf32>,
    %c0_85 = arith.constant 0 : index
    %c128_86 = arith.constant 128 : index
    %159 = vector.load %arg13[%c0_85, %c128_86] : memref<256x512xf32, #tpu.memory_space<vmem>>, vector<128x128xf32>
    %c128_87 = arith.constant 128 : index
    %c256_88 = arith.constant 256 : index
    %160 = vector.load %arg13[%c128_87, %c256_88] : memref<256x512xf32, #tpu.memory_space<vmem>>, vector<128x128xf32>
    %161 = arith.select %47, %160, %159 : vector<128x128xi1>, vector<128x128xf32>
    %c64_i32_89 = arith.constant 64 : i32
    %162 = tpu.dynamic_rotate %161 by %c64_i32_89 dim 1 : vector<128x128xf32>, i32 -> vector<128x128xf32>
    %cst_90 = arith.constant 0.000000e+00 : f32
    %163 = vector.broadcast %cst_90 : f32 to vector<32x128xf32>
    %164 = arith.select %44, %154, %163 : vector<32x128xi1>, vector<32x128xf32>
    %cst_91 = arith.constant 0.000000e+00 : f32
    %165 = vector.broadcast %cst_91 : f32 to vector<32x128xf32>
    %166 = arith.select %44, %165, %154 : vector<32x128xi1>, vector<32x128xf32>
    %167 = tpu.concatenate %164, %166 in 0 : vector<32x128xf32>, vector<32x128xf32> -> vector<64x128xf32>
    %cst_92 = arith.constant dense<0.000000e+00> : vector<128x128xf32>
    %168 = tpu.matmul %55, %167, %cst_92 {dimension_numbers = #tpu.dot_dimension_numbers<[1], [0], [0], [1], [0, 0, 1, 1], [], []>} : vector<128x64xf32>, vector<64x128xf32>, vector<128x128xf32> -> vector<128x128xf32>
    %169 = arith.addf %162, %168 : vector<128x128xf32>
    %170 = vector.extract_strided_slice %169 {offsets = [0, 0], sizes = [32, 128], strides = [1, 1]} : vector<128x128xf32> to vector<32x128xf32>
    %171 = arith.negf %170 : vector<32x128xf32>
    %172 = math.exp %171 : vector<32x128xf32>
    %cst_93 = arith.constant 1.000000e+00 : f32
    %173 = vector.broadcast %cst_93 : f32 to vector<32x128xf32>
    %174 = arith.addf %173, %172 : vector<32x128xf32>
    %175 = arith.divf %173, %174 : vector<32x128xf32>
    %176 = vector.extract_strided_slice %169 {offsets = [64, 0], sizes = [32, 128], strides = [1, 1]} : vector<128x128xf32> to vector<32x128xf32>
    %177 = math.tanh %176 : vector<32x128xf32>
    %178 = vector.extract_strided_slice %169 {offsets = [96, 0], sizes = [32, 128], strides = [1, 1]} : vector<128x128xf32> to vector<32x128xf32>
    %179 = arith.negf %178 : vector<32x128xf32>
    %180 = math.exp %179 : vector<32x128xf32>
    %cst_94 = arith.constant 1.000000e+00 : f32
    %181 = vector.broadcast %cst_94 : f32 to vector<32x128xf32>
    %182 = arith.addf %181, %180 : vector<32x128xf32>
    %183 = arith.divf %181, %182 : vector<32x128xf32>
    %184 = vector.extract_strided_slice %169 {offsets = [32, 0], sizes = [32, 128], strides = [1, 1]} : vector<128x128xf32> to vector<32x128xf32>
    %185 = arith.negf %184 : vector<32x128xf32>
    %186 = math.exp %185 : vector<32x128xf32>
    %cst_95 = arith.constant 1.000000e+00 : f32
    %187 = vector.broadcast %cst_95 : f32 to vector<32x128xf32>
    %188 = arith.addf %187, %186 : vector<32x128xf32>
    %189 = arith.divf %187, %188 : vector<32x128xf32>
    %190 = arith.mulf %189, %152 : vector<32x128xf32>
    %191 = arith.mulf %175, %177 : vector<32x128xf32>
    %192 = arith.addf %190, %191 : vector<32x128xf32>
    %193 = math.tanh %192 : vector<32x128xf32>
    %194 = arith.mulf %183, %193 : vector<32x128xf32>
    %195 = vector.extract_strided_slice %194 {offsets = [0, 0], sizes = [32, 64], strides = [1, 1]} : vector<32x128xf32> to vector<32x64xf32>
    %c0_96 = arith.constant 0 : index
    %c192_97 = arith.constant 192 : index
    %196 = vector.load %arg14[%c0_96, %c192_97] : memref<64x512xf32, #tpu.memory_space<vmem>>, vector<32x64xf32>
    tpu.vector_store %arg14[%c0_96, %c192_97], %195 {strides = array<i32>} : memref<64x512xf32, #tpu.memory_space<vmem>>, vector<32x64xf32>,
    %197 = vector.extract_strided_slice %194 {offsets = [0, 64], sizes = [32, 64], strides = [1, 1]} : vector<32x128xf32> to vector<32x64xf32>
    %c32_98 = arith.constant 32 : index
    %c256_99 = arith.constant 256 : index
    %198 = vector.load %arg14[%c32_98, %c256_99] : memref<64x512xf32, #tpu.memory_space<vmem>>, vector<32x64xf32>
    tpu.vector_store %arg14[%c32_98, %c256_99], %197 {strides = array<i32>} : memref<64x512xf32, #tpu.memory_space<vmem>>, vector<32x64xf32>,
    %c0_100 = arith.constant 0 : index
    %c256_101 = arith.constant 256 : index
    %199 = vector.load %arg13[%c0_100, %c256_101] : memref<256x512xf32, #tpu.memory_space<vmem>>, vector<128x128xf32>
    %c128_102 = arith.constant 128 : index
    %c128_103 = arith.constant 128 : index
    %200 = vector.load %arg13[%c128_102, %c128_103] : memref<256x512xf32, #tpu.memory_space<vmem>>, vector<128x128xf32>
    %201 = arith.select %47, %199, %200 : vector<128x128xi1>, vector<128x128xf32>
    %cst_104 = arith.constant 0.000000e+00 : f32
    %202 = vector.broadcast %cst_104 : f32 to vector<32x128xf32>
    %203 = arith.select %44, %194, %202 : vector<32x128xi1>, vector<32x128xf32>
    %cst_105 = arith.constant 0.000000e+00 : f32
    %204 = vector.broadcast %cst_105 : f32 to vector<32x128xf32>
    %205 = arith.select %44, %204, %194 : vector<32x128xi1>, vector<32x128xf32>
    %206 = tpu.concatenate %203, %205 in 0 : vector<32x128xf32>, vector<32x128xf32> -> vector<64x128xf32>
    %cst_106 = arith.constant dense<0.000000e+00> : vector<128x128xf32>
    %207 = tpu.matmul %55, %206, %cst_106 {dimension_numbers = #tpu.dot_dimension_numbers<[1], [0], [0], [1], [0, 0, 1, 1], [], []>} : vector<128x64xf32>, vector<64x128xf32>, vector<128x128xf32> -> vector<128x128xf32>
    %208 = arith.addf %201, %207 : vector<128x128xf32>
    %209 = vector.extract_strided_slice %208 {offsets = [0, 0], sizes = [32, 128], strides = [1, 1]} : vector<128x128xf32> to vector<32x128xf32>
    %210 = arith.negf %209 : vector<32x128xf32>
    %211 = math.exp %210 : vector<32x128xf32>
    %cst_107 = arith.constant 1.000000e+00 : f32
    %212 = vector.broadcast %cst_107 : f32 to vector<32x128xf32>
    %213 = arith.addf %212, %211 : vector<32x128xf32>
    %214 = arith.divf %212, %213 : vector<32x128xf32>
    %215 = vector.extract_strided_slice %208 {offsets = [64, 0], sizes = [32, 128], strides = [1, 1]} : vector<128x128xf32> to vector<32x128xf32>
    %216 = math.tanh %215 : vector<32x128xf32>
    %217 = vector.extract_strided_slice %208 {offsets = [96, 0], sizes = [32, 128], strides = [1, 1]} : vector<128x128xf32> to vector<32x128xf32>
    %218 = arith.negf %217 : vector<32x128xf32>
    %219 = math.exp %218 : vector<32x128xf32>
    %cst_108 = arith.constant 1.000000e+00 : f32
    %220 = vector.broadcast %cst_108 : f32 to vector<32x128xf32>
    %221 = arith.addf %220, %219 : vector<32x128xf32>
    %222 = arith.divf %220, %221 : vector<32x128xf32>
    %223 = vector.extract_strided_slice %208 {offsets = [32, 0], sizes = [32, 128], strides = [1, 1]} : vector<128x128xf32> to vector<32x128xf32>
    %224 = arith.negf %223 : vector<32x128xf32>
    %225 = math.exp %224 : vector<32x128xf32>
    %cst_109 = arith.constant 1.000000e+00 : f32
    %226 = vector.broadcast %cst_109 : f32 to vector<32x128xf32>
    %227 = arith.addf %226, %225 : vector<32x128xf32>
    %228 = arith.divf %226, %227 : vector<32x128xf32>
    %229 = arith.mulf %228, %192 : vector<32x128xf32>
    %230 = arith.mulf %214, %216 : vector<32x128xf32>
    %231 = arith.addf %229, %230 : vector<32x128xf32>
    %232 = math.tanh %231 : vector<32x128xf32>
    %233 = arith.mulf %222, %232 : vector<32x128xf32>
    %234 = vector.extract_strided_slice %233 {offsets = [0, 0], sizes = [32, 64], strides = [1, 1]} : vector<32x128xf32> to vector<32x64xf32>
    %c0_110 = arith.constant 0 : index
    %c256_111 = arith.constant 256 : index
    %235 = vector.load %arg14[%c0_110, %c256_111] : memref<64x512xf32, #tpu.memory_space<vmem>>, vector<32x64xf32>
    tpu.vector_store %arg14[%c0_110, %c256_111], %234 {strides = array<i32>} : memref<64x512xf32, #tpu.memory_space<vmem>>, vector<32x64xf32>,
    %236 = vector.extract_strided_slice %233 {offsets = [0, 64], sizes = [32, 64], strides = [1, 1]} : vector<32x128xf32> to vector<32x64xf32>
    %c32_112 = arith.constant 32 : index
    %c192_113 = arith.constant 192 : index
    %237 = vector.load %arg14[%c32_112, %c192_113] : memref<64x512xf32, #tpu.memory_space<vmem>>, vector<32x64xf32>
    tpu.vector_store %arg14[%c32_112, %c192_113], %236 {strides = array<i32>} : memref<64x512xf32, #tpu.memory_space<vmem>>, vector<32x64xf32>,
    %c0_114 = arith.constant 0 : index
    %c256_115 = arith.constant 256 : index
    %238 = vector.load %arg13[%c0_114, %c256_115] : memref<256x512xf32, #tpu.memory_space<vmem>>, vector<128x128xf32>
    %c128_116 = arith.constant 128 : index
    %c128_117 = arith.constant 128 : index
    %239 = vector.load %arg13[%c128_116, %c128_117] : memref<256x512xf32, #tpu.memory_space<vmem>>, vector<128x128xf32>
    %240 = arith.select %47, %239, %238 : vector<128x128xi1>, vector<128x128xf32>
    %c64_i32_118 = arith.constant 64 : i32
    %241 = tpu.dynamic_rotate %240 by %c64_i32_118 dim 1 : vector<128x128xf32>, i32 -> vector<128x128xf32>
    %cst_119 = arith.constant 0.000000e+00 : f32
    %242 = vector.broadcast %cst_119 : f32 to vector<32x128xf32>
    %243 = arith.select %44, %233, %242 : vector<32x128xi1>, vector<32x128xf32>
    %cst_120 = arith.constant 0.000000e+00 : f32
    %244 = vector.broadcast %cst_120 : f32 to vector<32x128xf32>
    %245 = arith.select %44, %244, %233 : vector<32x128xi1>, vector<32x128xf32>
    %246 = tpu.concatenate %243, %245 in 0 : vector<32x128xf32>, vector<32x128xf32> -> vector<64x128xf32>
    %cst_121 = arith.constant dense<0.000000e+00> : vector<128x128xf32>
    %247 = tpu.matmul %55, %246, %cst_121 {dimension_numbers = #tpu.dot_dimension_numbers<[1], [0], [0], [1], [0, 0, 1, 1], [], []>} : vector<128x64xf32>, vector<64x128xf32>, vector<128x128xf32> -> vector<128x128xf32>
    %248 = arith.addf %241, %247 : vector<128x128xf32>
    %249 = vector.extract_strided_slice %248 {offsets = [0, 0], sizes = [32, 128], strides = [1, 1]} : vector<128x128xf32> to vector<32x128xf32>
    %250 = arith.negf %249 : vector<32x128xf32>
    %251 = math.exp %250 : vector<32x128xf32>
    %cst_122 = arith.constant 1.000000e+00 : f32
    %252 = vector.broadcast %cst_122 : f32 to vector<32x128xf32>
    %253 = arith.addf %252, %251 : vector<32x128xf32>
    %254 = arith.divf %252, %253 : vector<32x128xf32>
    %255 = vector.extract_strided_slice %248 {offsets = [64, 0], sizes = [32, 128], strides = [1, 1]} : vector<128x128xf32> to vector<32x128xf32>
    %256 = math.tanh %255 : vector<32x128xf32>
    %257 = vector.extract_strided_slice %248 {offsets = [96, 0], sizes = [32, 128], strides = [1, 1]} : vector<128x128xf32> to vector<32x128xf32>
    %258 = arith.negf %257 : vector<32x128xf32>
    %259 = math.exp %258 : vector<32x128xf32>
    %cst_123 = arith.constant 1.000000e+00 : f32
    %260 = vector.broadcast %cst_123 : f32 to vector<32x128xf32>
    %261 = arith.addf %260, %259 : vector<32x128xf32>
    %262 = arith.divf %260, %261 : vector<32x128xf32>
    %263 = vector.extract_strided_slice %248 {offsets = [32, 0], sizes = [32, 128], strides = [1, 1]} : vector<128x128xf32> to vector<32x128xf32>
    %264 = arith.negf %263 : vector<32x128xf32>
    %265 = math.exp %264 : vector<32x128xf32>
    %cst_124 = arith.constant 1.000000e+00 : f32
    %266 = vector.broadcast %cst_124 : f32 to vector<32x128xf32>
    %267 = arith.addf %266, %265 : vector<32x128xf32>
    %268 = arith.divf %266, %267 : vector<32x128xf32>
    %269 = arith.mulf %268, %231 : vector<32x128xf32>
    %270 = arith.mulf %254, %256 : vector<32x128xf32>
    %271 = arith.addf %269, %270 : vector<32x128xf32>
    %272 = math.tanh %271 : vector<32x128xf32>
    %273 = arith.mulf %262, %272 : vector<32x128xf32>
    %274 = vector.extract_strided_slice %273 {offsets = [0, 0], sizes = [32, 64], strides = [1, 1]} : vector<32x128xf32> to vector<32x64xf32>
    %c0_125 = arith.constant 0 : index
    %c320_126 = arith.constant 320 : index
    %275 = vector.load %arg14[%c0_125, %c320_126] : memref<64x512xf32, #tpu.memory_space<vmem>>, vector<32x64xf32>
    tpu.vector_store %arg14[%c0_125, %c320_126], %274 {strides = array<i32>} : memref<64x512xf32, #tpu.memory_space<vmem>>, vector<32x64xf32>,
    %276 = vector.extract_strided_slice %273 {offsets = [0, 64], sizes = [32, 64], strides = [1, 1]} : vector<32x128xf32> to vector<32x64xf32>
    %c32_127 = arith.constant 32 : index
    %c128_128 = arith.constant 128 : index
    %277 = vector.load %arg14[%c32_127, %c128_128] : memref<64x512xf32, #tpu.memory_space<vmem>>, vector<32x64xf32>
    tpu.vector_store %arg14[%c32_127, %c128_128], %276 {strides = array<i32>} : memref<64x512xf32, #tpu.memory_space<vmem>>, vector<32x64xf32>,
    %c0_129 = arith.constant 0 : index
    %c384_130 = arith.constant 384 : index
    %278 = vector.load %arg13[%c0_129, %c384_130] : memref<256x512xf32, #tpu.memory_space<vmem>>, vector<128x128xf32>
    %c128_131 = arith.constant 128 : index
    %c0_132 = arith.constant 0 : index
    %279 = vector.load %arg13[%c128_131, %c0_132] : memref<256x512xf32, #tpu.memory_space<vmem>>, vector<128x128xf32>
    %280 = arith.select %47, %278, %279 : vector<128x128xi1>, vector<128x128xf32>
    %cst_133 = arith.constant 0.000000e+00 : f32
    %281 = vector.broadcast %cst_133 : f32 to vector<32x128xf32>
    %282 = arith.select %44, %273, %281 : vector<32x128xi1>, vector<32x128xf32>
    %cst_134 = arith.constant 0.000000e+00 : f32
    %283 = vector.broadcast %cst_134 : f32 to vector<32x128xf32>
    %284 = arith.select %44, %283, %273 : vector<32x128xi1>, vector<32x128xf32>
    %285 = tpu.concatenate %282, %284 in 0 : vector<32x128xf32>, vector<32x128xf32> -> vector<64x128xf32>
    %cst_135 = arith.constant dense<0.000000e+00> : vector<128x128xf32>
    %286 = tpu.matmul %55, %285, %cst_135 {dimension_numbers = #tpu.dot_dimension_numbers<[1], [0], [0], [1], [0, 0, 1, 1], [], []>} : vector<128x64xf32>, vector<64x128xf32>, vector<128x128xf32> -> vector<128x128xf32>
    %287 = arith.addf %280, %286 : vector<128x128xf32>
    %288 = vector.extract_strided_slice %287 {offsets = [0, 0], sizes = [32, 128], strides = [1, 1]} : vector<128x128xf32> to vector<32x128xf32>
    %289 = arith.negf %288 : vector<32x128xf32>
    %290 = math.exp %289 : vector<32x128xf32>
    %cst_136 = arith.constant 1.000000e+00 : f32
    %291 = vector.broadcast %cst_136 : f32 to vector<32x128xf32>
    %292 = arith.addf %291, %290 : vector<32x128xf32>
    %293 = arith.divf %291, %292 : vector<32x128xf32>
    %294 = vector.extract_strided_slice %287 {offsets = [64, 0], sizes = [32, 128], strides = [1, 1]} : vector<128x128xf32> to vector<32x128xf32>
    %295 = math.tanh %294 : vector<32x128xf32>
    %296 = vector.extract_strided_slice %287 {offsets = [96, 0], sizes = [32, 128], strides = [1, 1]} : vector<128x128xf32> to vector<32x128xf32>
    %297 = arith.negf %296 : vector<32x128xf32>
    %298 = math.exp %297 : vector<32x128xf32>
    %cst_137 = arith.constant 1.000000e+00 : f32
    %299 = vector.broadcast %cst_137 : f32 to vector<32x128xf32>
    %300 = arith.addf %299, %298 : vector<32x128xf32>
    %301 = arith.divf %299, %300 : vector<32x128xf32>
    %302 = vector.extract_strided_slice %287 {offsets = [32, 0], sizes = [32, 128], strides = [1, 1]} : vector<128x128xf32> to vector<32x128xf32>
    %303 = arith.negf %302 : vector<32x128xf32>
    %304 = math.exp %303 : vector<32x128xf32>
    %cst_138 = arith.constant 1.000000e+00 : f32
    %305 = vector.broadcast %cst_138 : f32 to vector<32x128xf32>
    %306 = arith.addf %305, %304 : vector<32x128xf32>
    %307 = arith.divf %305, %306 : vector<32x128xf32>
    %308 = arith.mulf %307, %271 : vector<32x128xf32>
    %309 = arith.mulf %293, %295 : vector<32x128xf32>
    %310 = arith.addf %308, %309 : vector<32x128xf32>
    %311 = math.tanh %310 : vector<32x128xf32>
    %312 = arith.mulf %301, %311 : vector<32x128xf32>
    %313 = vector.extract_strided_slice %312 {offsets = [0, 0], sizes = [32, 64], strides = [1, 1]} : vector<32x128xf32> to vector<32x64xf32>
    %c0_139 = arith.constant 0 : index
    %c384_140 = arith.constant 384 : index
    %314 = vector.load %arg14[%c0_139, %c384_140] : memref<64x512xf32, #tpu.memory_space<vmem>>, vector<32x64xf32>
    tpu.vector_store %arg14[%c0_139, %c384_140], %313 {strides = array<i32>} : memref<64x512xf32, #tpu.memory_space<vmem>>, vector<32x64xf32>,
    %315 = vector.extract_strided_slice %312 {offsets = [0, 64], sizes = [32, 64], strides = [1, 1]} : vector<32x128xf32> to vector<32x64xf32>
    %c32_141 = arith.constant 32 : index
    %c64_142 = arith.constant 64 : index
    %316 = vector.load %arg14[%c32_141, %c64_142] : memref<64x512xf32, #tpu.memory_space<vmem>>, vector<32x64xf32>
    tpu.vector_store %arg14[%c32_141, %c64_142], %315 {strides = array<i32>} : memref<64x512xf32, #tpu.memory_space<vmem>>, vector<32x64xf32>,
    %c0_143 = arith.constant 0 : index
    %c384_144 = arith.constant 384 : index
    %317 = vector.load %arg13[%c0_143, %c384_144] : memref<256x512xf32, #tpu.memory_space<vmem>>, vector<128x128xf32>
    %c128_145 = arith.constant 128 : index
    %c0_146 = arith.constant 0 : index
    %318 = vector.load %arg13[%c128_145, %c0_146] : memref<256x512xf32, #tpu.memory_space<vmem>>, vector<128x128xf32>
    %319 = arith.select %47, %318, %317 : vector<128x128xi1>, vector<128x128xf32>
    %c64_i32_147 = arith.constant 64 : i32
    %320 = tpu.dynamic_rotate %319 by %c64_i32_147 dim 1 : vector<128x128xf32>, i32 -> vector<128x128xf32>
    %cst_148 = arith.constant 0.000000e+00 : f32
    %321 = vector.broadcast %cst_148 : f32 to vector<32x128xf32>
    %322 = arith.select %44, %312, %321 : vector<32x128xi1>, vector<32x128xf32>
    %cst_149 = arith.constant 0.000000e+00 : f32
    %323 = vector.broadcast %cst_149 : f32 to vector<32x128xf32>
    %324 = arith.select %44, %323, %312 : vector<32x128xi1>, vector<32x128xf32>
    %325 = tpu.concatenate %322, %324 in 0 : vector<32x128xf32>, vector<32x128xf32> -> vector<64x128xf32>
    %cst_150 = arith.constant dense<0.000000e+00> : vector<128x128xf32>
    %326 = tpu.matmul %55, %325, %cst_150 {dimension_numbers = #tpu.dot_dimension_numbers<[1], [0], [0], [1], [0, 0, 1, 1], [], []>} : vector<128x64xf32>, vector<64x128xf32>, vector<128x128xf32> -> vector<128x128xf32>
    %327 = arith.addf %320, %326 : vector<128x128xf32>
    %328 = vector.extract_strided_slice %327 {offsets = [0, 0], sizes = [32, 128], strides = [1, 1]} : vector<128x128xf32> to vector<32x128xf32>
    %329 = arith.negf %328 : vector<32x128xf32>
    %330 = math.exp %329 : vector<32x128xf32>
    %cst_151 = arith.constant 1.000000e+00 : f32
    %331 = vector.broadcast %cst_151 : f32 to vector<32x128xf32>
    %332 = arith.addf %331, %330 : vector<32x128xf32>
    %333 = arith.divf %331, %332 : vector<32x128xf32>
    %334 = vector.extract_strided_slice %327 {offsets = [64, 0], sizes = [32, 128], strides = [1, 1]} : vector<128x128xf32> to vector<32x128xf32>
    %335 = math.tanh %334 : vector<32x128xf32>
    %336 = vector.extract_strided_slice %327 {offsets = [96, 0], sizes = [32, 128], strides = [1, 1]} : vector<128x128xf32> to vector<32x128xf32>
    %337 = arith.negf %336 : vector<32x128xf32>
    %338 = math.exp %337 : vector<32x128xf32>
    %cst_152 = arith.constant 1.000000e+00 : f32
    %339 = vector.broadcast %cst_152 : f32 to vector<32x128xf32>
    %340 = arith.addf %339, %338 : vector<32x128xf32>
    %341 = arith.divf %339, %340 : vector<32x128xf32>
    %342 = vector.extract_strided_slice %327 {offsets = [32, 0], sizes = [32, 128], strides = [1, 1]} : vector<128x128xf32> to vector<32x128xf32>
    %343 = arith.negf %342 : vector<32x128xf32>
    %344 = math.exp %343 : vector<32x128xf32>
    %cst_153 = arith.constant 1.000000e+00 : f32
    %345 = vector.broadcast %cst_153 : f32 to vector<32x128xf32>
    %346 = arith.addf %345, %344 : vector<32x128xf32>
    %347 = arith.divf %345, %346 : vector<32x128xf32>
    %348 = arith.mulf %347, %310 : vector<32x128xf32>
    %349 = arith.mulf %333, %335 : vector<32x128xf32>
    %350 = arith.addf %348, %349 : vector<32x128xf32>
    %351 = math.tanh %350 : vector<32x128xf32>
    %352 = arith.mulf %341, %351 : vector<32x128xf32>
    %353 = vector.extract_strided_slice %352 {offsets = [0, 0], sizes = [32, 64], strides = [1, 1]} : vector<32x128xf32> to vector<32x64xf32>
    %c0_154 = arith.constant 0 : index
    %c448_155 = arith.constant 448 : index
    %354 = vector.load %arg14[%c0_154, %c448_155] : memref<64x512xf32, #tpu.memory_space<vmem>>, vector<32x64xf32>
    tpu.vector_store %arg14[%c0_154, %c448_155], %353 {strides = array<i32>} : memref<64x512xf32, #tpu.memory_space<vmem>>, vector<32x64xf32>,
    %355 = vector.extract_strided_slice %352 {offsets = [0, 64], sizes = [32, 64], strides = [1, 1]} : vector<32x128xf32> to vector<32x64xf32>
    %c32_156 = arith.constant 32 : index
    %c0_157 = arith.constant 0 : index
    %356 = vector.load %arg14[%c32_156, %c0_157] : memref<64x512xf32, #tpu.memory_space<vmem>>, vector<32x64xf32>
    tpu.vector_store %arg14[%c32_156, %c0_157], %355 {strides = array<i32>} : memref<64x512xf32, #tpu.memory_space<vmem>>, vector<32x64xf32>,
    %c0_158 = arith.constant 0 : index
    %c0_159 = arith.constant 0 : index
    %357 = vector.load %arg6[%c0_158, %c0_159] : memref<256x64xf32, #tpu.memory_space<vmem>>, vector<256x64xf32>
    %c0_160 = arith.constant 0 : index
    %c0_161 = arith.constant 0 : index
    %358 = vector.load %arg14[%c0_160, %c0_161] : memref<64x512xf32, #tpu.memory_space<vmem>>, vector<64x512xf32>
    %cst_162 = arith.constant dense<0.000000e+00> : vector<256x512xf32>
    %359 = tpu.matmul %357, %358, %cst_162 {dimension_numbers = #tpu.dot_dimension_numbers<[1], [0], [0], [1], [0, 0, 1, 1], [], []>} : vector<256x64xf32>, vector<64x512xf32>, vector<256x512xf32> -> vector<256x512xf32>
    %c0_163 = arith.constant 0 : index
    %c0_164 = arith.constant 0 : index
    %360 = vector.load %arg8[%c0_163, %c0_164] : memref<256x1xf32, #tpu.memory_space<vmem>>, vector<256x1xf32>
    %361 = vector.broadcast %360 : vector<256x1xf32> to vector<256x512xf32>
    %362 = arith.addf %359, %361 : vector<256x512xf32>
    %c0_165 = arith.constant 0 : index
    %c0_166 = arith.constant 0 : index
    %363 = vector.load %arg13[%c0_165, %c0_166] : memref<256x512xf32, #tpu.memory_space<vmem>>, vector<256x512xf32>
    tpu.vector_store %arg13[%c0_165, %c0_166], %362 {strides = array<i32>} : memref<256x512xf32, #tpu.memory_space<vmem>>, vector<256x512xf32>,
    %c0_167 = arith.constant 0 : index
    %c0_168 = arith.constant 0 : index
    %364 = vector.load %arg7[%c0_167, %c0_168] : memref<128x64xf32, #tpu.memory_space<vmem>>, vector<128x64xf32>
    %c0_169 = arith.constant 0 : index
    %c0_170 = arith.constant 0 : index
    %365 = vector.load %arg13[%c0_169, %c0_170] : memref<256x512xf32, #tpu.memory_space<vmem>>, vector<128x128xf32>
    %c128_171 = arith.constant 128 : index
    %c384_172 = arith.constant 384 : index
    %366 = vector.load %arg13[%c128_171, %c384_172] : memref<256x512xf32, #tpu.memory_space<vmem>>, vector<128x128xf32>
    %367 = arith.select %47, %365, %366 : vector<128x128xi1>, vector<128x128xf32>
    %368 = vector.extract_strided_slice %367 {offsets = [0, 0], sizes = [32, 128], strides = [1, 1]} : vector<128x128xf32> to vector<32x128xf32>
    %369 = arith.negf %368 : vector<32x128xf32>
    %370 = math.exp %369 : vector<32x128xf32>
    %cst_173 = arith.constant 1.000000e+00 : f32
    %371 = vector.broadcast %cst_173 : f32 to vector<32x128xf32>
    %372 = arith.addf %371, %370 : vector<32x128xf32>
    %373 = arith.divf %371, %372 : vector<32x128xf32>
    %374 = vector.extract_strided_slice %367 {offsets = [64, 0], sizes = [32, 128], strides = [1, 1]} : vector<128x128xf32> to vector<32x128xf32>
    %375 = math.tanh %374 : vector<32x128xf32>
    %376 = vector.extract_strided_slice %367 {offsets = [96, 0], sizes = [32, 128], strides = [1, 1]} : vector<128x128xf32> to vector<32x128xf32>
    %377 = arith.negf %376 : vector<32x128xf32>
    %378 = math.exp %377 : vector<32x128xf32>
    %cst_174 = arith.constant 1.000000e+00 : f32
    %379 = vector.broadcast %cst_174 : f32 to vector<32x128xf32>
    %380 = arith.addf %379, %378 : vector<32x128xf32>
    %381 = arith.divf %379, %380 : vector<32x128xf32>
    %382 = arith.mulf %373, %375 : vector<32x128xf32>
    %383 = math.tanh %382 : vector<32x128xf32>
    %384 = arith.mulf %381, %383 : vector<32x128xf32>
    %385 = vector.extract_strided_slice %384 {offsets = [0, 0], sizes = [32, 64], strides = [1, 1]} : vector<32x128xf32> to vector<32x64xf32>
    %c0_175 = arith.constant 0 : index
    %c0_176 = arith.constant 0 : index
    %386 = vector.load %arg15[%c0_175, %c0_176] : memref<64x512xf32, #tpu.memory_space<vmem>>, vector<32x64xf32>
    tpu.vector_store %arg15[%c0_175, %c0_176], %385 {strides = array<i32>} : memref<64x512xf32, #tpu.memory_space<vmem>>, vector<32x64xf32>,
    %387 = vector.extract_strided_slice %384 {offsets = [0, 64], sizes = [32, 64], strides = [1, 1]} : vector<32x128xf32> to vector<32x64xf32>
    %c32_177 = arith.constant 32 : index
    %c448_178 = arith.constant 448 : index
    %388 = vector.load %arg15[%c32_177, %c448_178] : memref<64x512xf32, #tpu.memory_space<vmem>>, vector<32x64xf32>
    tpu.vector_store %arg15[%c32_177, %c448_178], %387 {strides = array<i32>} : memref<64x512xf32, #tpu.memory_space<vmem>>, vector<32x64xf32>,
    %c0_179 = arith.constant 0 : index
    %c0_180 = arith.constant 0 : index
    %389 = vector.load %arg13[%c0_179, %c0_180] : memref<256x512xf32, #tpu.memory_space<vmem>>, vector<128x128xf32>
    %c128_181 = arith.constant 128 : index
    %c384_182 = arith.constant 384 : index
    %390 = vector.load %arg13[%c128_181, %c384_182] : memref<256x512xf32, #tpu.memory_space<vmem>>, vector<128x128xf32>
    %391 = arith.select %47, %390, %389 : vector<128x128xi1>, vector<128x128xf32>
    %c64_i32_183 = arith.constant 64 : i32
    %392 = tpu.dynamic_rotate %391 by %c64_i32_183 dim 1 : vector<128x128xf32>, i32 -> vector<128x128xf32>
    %cst_184 = arith.constant 0.000000e+00 : f32
    %393 = vector.broadcast %cst_184 : f32 to vector<32x128xf32>
    %394 = arith.select %44, %384, %393 : vector<32x128xi1>, vector<32x128xf32>
    %cst_185 = arith.constant 0.000000e+00 : f32
    %395 = vector.broadcast %cst_185 : f32 to vector<32x128xf32>
    %396 = arith.select %44, %395, %384 : vector<32x128xi1>, vector<32x128xf32>
    %397 = tpu.concatenate %394, %396 in 0 : vector<32x128xf32>, vector<32x128xf32> -> vector<64x128xf32>
    %cst_186 = arith.constant dense<0.000000e+00> : vector<128x128xf32>
    %398 = tpu.matmul %364, %397, %cst_186 {dimension_numbers = #tpu.dot_dimension_numbers<[1], [0], [0], [1], [0, 0, 1, 1], [], []>} : vector<128x64xf32>, vector<64x128xf32>, vector<128x128xf32> -> vector<128x128xf32>
    %399 = arith.addf %392, %398 : vector<128x128xf32>
    %400 = vector.extract_strided_slice %399 {offsets = [0, 0], sizes = [32, 128], strides = [1, 1]} : vector<128x128xf32> to vector<32x128xf32>
    %401 = arith.negf %400 : vector<32x128xf32>
    %402 = math.exp %401 : vector<32x128xf32>
    %cst_187 = arith.constant 1.000000e+00 : f32
    %403 = vector.broadcast %cst_187 : f32 to vector<32x128xf32>
    %404 = arith.addf %403, %402 : vector<32x128xf32>
    %405 = arith.divf %403, %404 : vector<32x128xf32>
    %406 = vector.extract_strided_slice %399 {offsets = [64, 0], sizes = [32, 128], strides = [1, 1]} : vector<128x128xf32> to vector<32x128xf32>
    %407 = math.tanh %406 : vector<32x128xf32>
    %408 = vector.extract_strided_slice %399 {offsets = [96, 0], sizes = [32, 128], strides = [1, 1]} : vector<128x128xf32> to vector<32x128xf32>
    %409 = arith.negf %408 : vector<32x128xf32>
    %410 = math.exp %409 : vector<32x128xf32>
    %cst_188 = arith.constant 1.000000e+00 : f32
    %411 = vector.broadcast %cst_188 : f32 to vector<32x128xf32>
    %412 = arith.addf %411, %410 : vector<32x128xf32>
    %413 = arith.divf %411, %412 : vector<32x128xf32>
    %414 = vector.extract_strided_slice %399 {offsets = [32, 0], sizes = [32, 128], strides = [1, 1]} : vector<128x128xf32> to vector<32x128xf32>
    %415 = arith.negf %414 : vector<32x128xf32>
    %416 = math.exp %415 : vector<32x128xf32>
    %cst_189 = arith.constant 1.000000e+00 : f32
    %417 = vector.broadcast %cst_189 : f32 to vector<32x128xf32>
    %418 = arith.addf %417, %416 : vector<32x128xf32>
    %419 = arith.divf %417, %418 : vector<32x128xf32>
    %420 = arith.mulf %419, %382 : vector<32x128xf32>
    %421 = arith.mulf %405, %407 : vector<32x128xf32>
    %422 = arith.addf %420, %421 : vector<32x128xf32>
    %423 = math.tanh %422 : vector<32x128xf32>
    %424 = arith.mulf %413, %423 : vector<32x128xf32>
    %425 = vector.extract_strided_slice %424 {offsets = [0, 0], sizes = [32, 64], strides = [1, 1]} : vector<32x128xf32> to vector<32x64xf32>
    %c0_190 = arith.constant 0 : index
    %c64_191 = arith.constant 64 : index
    %426 = vector.load %arg15[%c0_190, %c64_191] : memref<64x512xf32, #tpu.memory_space<vmem>>, vector<32x64xf32>
    tpu.vector_store %arg15[%c0_190, %c64_191], %425 {strides = array<i32>} : memref<64x512xf32, #tpu.memory_space<vmem>>, vector<32x64xf32>,
    %427 = vector.extract_strided_slice %424 {offsets = [0, 64], sizes = [32, 64], strides = [1, 1]} : vector<32x128xf32> to vector<32x64xf32>
    %c32_192 = arith.constant 32 : index
    %c384_193 = arith.constant 384 : index
    %428 = vector.load %arg15[%c32_192, %c384_193] : memref<64x512xf32, #tpu.memory_space<vmem>>, vector<32x64xf32>
    tpu.vector_store %arg15[%c32_192, %c384_193], %427 {strides = array<i32>} : memref<64x512xf32, #tpu.memory_space<vmem>>, vector<32x64xf32>,
    %c0_194 = arith.constant 0 : index
    %c128_195 = arith.constant 128 : index
    %429 = vector.load %arg13[%c0_194, %c128_195] : memref<256x512xf32, #tpu.memory_space<vmem>>, vector<128x128xf32>
    %c128_196 = arith.constant 128 : index
    %c256_197 = arith.constant 256 : index
    %430 = vector.load %arg13[%c128_196, %c256_197] : memref<256x512xf32, #tpu.memory_space<vmem>>, vector<128x128xf32>
    %431 = arith.select %47, %429, %430 : vector<128x128xi1>, vector<128x128xf32>
    %cst_198 = arith.constant 0.000000e+00 : f32
    %432 = vector.broadcast %cst_198 : f32 to vector<32x128xf32>
    %433 = arith.select %44, %424, %432 : vector<32x128xi1>, vector<32x128xf32>
    %cst_199 = arith.constant 0.000000e+00 : f32
    %434 = vector.broadcast %cst_199 : f32 to vector<32x128xf32>
    %435 = arith.select %44, %434, %424 : vector<32x128xi1>, vector<32x128xf32>
    %436 = tpu.concatenate %433, %435 in 0 : vector<32x128xf32>, vector<32x128xf32> -> vector<64x128xf32>
    %cst_200 = arith.constant dense<0.000000e+00> : vector<128x128xf32>
    %437 = tpu.matmul %364, %436, %cst_200 {dimension_numbers = #tpu.dot_dimension_numbers<[1], [0], [0], [1], [0, 0, 1, 1], [], []>} : vector<128x64xf32>, vector<64x128xf32>, vector<128x128xf32> -> vector<128x128xf32>
    %438 = arith.addf %431, %437 : vector<128x128xf32>
    %439 = vector.extract_strided_slice %438 {offsets = [0, 0], sizes = [32, 128], strides = [1, 1]} : vector<128x128xf32> to vector<32x128xf32>
    %440 = arith.negf %439 : vector<32x128xf32>
    %441 = math.exp %440 : vector<32x128xf32>
    %cst_201 = arith.constant 1.000000e+00 : f32
    %442 = vector.broadcast %cst_201 : f32 to vector<32x128xf32>
    %443 = arith.addf %442, %441 : vector<32x128xf32>
    %444 = arith.divf %442, %443 : vector<32x128xf32>
    %445 = vector.extract_strided_slice %438 {offsets = [64, 0], sizes = [32, 128], strides = [1, 1]} : vector<128x128xf32> to vector<32x128xf32>
    %446 = math.tanh %445 : vector<32x128xf32>
    %447 = vector.extract_strided_slice %438 {offsets = [96, 0], sizes = [32, 128], strides = [1, 1]} : vector<128x128xf32> to vector<32x128xf32>
    %448 = arith.negf %447 : vector<32x128xf32>
    %449 = math.exp %448 : vector<32x128xf32>
    %cst_202 = arith.constant 1.000000e+00 : f32
    %450 = vector.broadcast %cst_202 : f32 to vector<32x128xf32>
    %451 = arith.addf %450, %449 : vector<32x128xf32>
    %452 = arith.divf %450, %451 : vector<32x128xf32>
    %453 = vector.extract_strided_slice %438 {offsets = [32, 0], sizes = [32, 128], strides = [1, 1]} : vector<128x128xf32> to vector<32x128xf32>
    %454 = arith.negf %453 : vector<32x128xf32>
    %455 = math.exp %454 : vector<32x128xf32>
    %cst_203 = arith.constant 1.000000e+00 : f32
    %456 = vector.broadcast %cst_203 : f32 to vector<32x128xf32>
    %457 = arith.addf %456, %455 : vector<32x128xf32>
    %458 = arith.divf %456, %457 : vector<32x128xf32>
    %459 = arith.mulf %458, %422 : vector<32x128xf32>
    %460 = arith.mulf %444, %446 : vector<32x128xf32>
    %461 = arith.addf %459, %460 : vector<32x128xf32>
    %462 = math.tanh %461 : vector<32x128xf32>
    %463 = arith.mulf %452, %462 : vector<32x128xf32>
    %464 = vector.extract_strided_slice %463 {offsets = [0, 0], sizes = [32, 64], strides = [1, 1]} : vector<32x128xf32> to vector<32x64xf32>
    %c0_204 = arith.constant 0 : index
    %c128_205 = arith.constant 128 : index
    %465 = vector.load %arg15[%c0_204, %c128_205] : memref<64x512xf32, #tpu.memory_space<vmem>>, vector<32x64xf32>
    tpu.vector_store %arg15[%c0_204, %c128_205], %464 {strides = array<i32>} : memref<64x512xf32, #tpu.memory_space<vmem>>, vector<32x64xf32>,
    %466 = vector.extract_strided_slice %463 {offsets = [0, 64], sizes = [32, 64], strides = [1, 1]} : vector<32x128xf32> to vector<32x64xf32>
    %c32_206 = arith.constant 32 : index
    %c320_207 = arith.constant 320 : index
    %467 = vector.load %arg15[%c32_206, %c320_207] : memref<64x512xf32, #tpu.memory_space<vmem>>, vector<32x64xf32>
    tpu.vector_store %arg15[%c32_206, %c320_207], %466 {strides = array<i32>} : memref<64x512xf32, #tpu.memory_space<vmem>>, vector<32x64xf32>,
    %c0_208 = arith.constant 0 : index
    %c128_209 = arith.constant 128 : index
    %468 = vector.load %arg13[%c0_208, %c128_209] : memref<256x512xf32, #tpu.memory_space<vmem>>, vector<128x128xf32>
    %c128_210 = arith.constant 128 : index
    %c256_211 = arith.constant 256 : index
    %469 = vector.load %arg13[%c128_210, %c256_211] : memref<256x512xf32, #tpu.memory_space<vmem>>, vector<128x128xf32>
    %470 = arith.select %47, %469, %468 : vector<128x128xi1>, vector<128x128xf32>
    %c64_i32_212 = arith.constant 64 : i32
    %471 = tpu.dynamic_rotate %470 by %c64_i32_212 dim 1 : vector<128x128xf32>, i32 -> vector<128x128xf32>
    %cst_213 = arith.constant 0.000000e+00 : f32
    %472 = vector.broadcast %cst_213 : f32 to vector<32x128xf32>
    %473 = arith.select %44, %463, %472 : vector<32x128xi1>, vector<32x128xf32>
    %cst_214 = arith.constant 0.000000e+00 : f32
    %474 = vector.broadcast %cst_214 : f32 to vector<32x128xf32>
    %475 = arith.select %44, %474, %463 : vector<32x128xi1>, vector<32x128xf32>
    %476 = tpu.concatenate %473, %475 in 0 : vector<32x128xf32>, vector<32x128xf32> -> vector<64x128xf32>
    %cst_215 = arith.constant dense<0.000000e+00> : vector<128x128xf32>
    %477 = tpu.matmul %364, %476, %cst_215 {dimension_numbers = #tpu.dot_dimension_numbers<[1], [0], [0], [1], [0, 0, 1, 1], [], []>} : vector<128x64xf32>, vector<64x128xf32>, vector<128x128xf32> -> vector<128x128xf32>
    %478 = arith.addf %471, %477 : vector<128x128xf32>
    %479 = vector.extract_strided_slice %478 {offsets = [0, 0], sizes = [32, 128], strides = [1, 1]} : vector<128x128xf32> to vector<32x128xf32>
    %480 = arith.negf %479 : vector<32x128xf32>
    %481 = math.exp %480 : vector<32x128xf32>
    %cst_216 = arith.constant 1.000000e+00 : f32
    %482 = vector.broadcast %cst_216 : f32 to vector<32x128xf32>
    %483 = arith.addf %482, %481 : vector<32x128xf32>
    %484 = arith.divf %482, %483 : vector<32x128xf32>
    %485 = vector.extract_strided_slice %478 {offsets = [64, 0], sizes = [32, 128], strides = [1, 1]} : vector<128x128xf32> to vector<32x128xf32>
    %486 = math.tanh %485 : vector<32x128xf32>
    %487 = vector.extract_strided_slice %478 {offsets = [96, 0], sizes = [32, 128], strides = [1, 1]} : vector<128x128xf32> to vector<32x128xf32>
    %488 = arith.negf %487 : vector<32x128xf32>
    %489 = math.exp %488 : vector<32x128xf32>
    %cst_217 = arith.constant 1.000000e+00 : f32
    %490 = vector.broadcast %cst_217 : f32 to vector<32x128xf32>
    %491 = arith.addf %490, %489 : vector<32x128xf32>
    %492 = arith.divf %490, %491 : vector<32x128xf32>
    %493 = vector.extract_strided_slice %478 {offsets = [32, 0], sizes = [32, 128], strides = [1, 1]} : vector<128x128xf32> to vector<32x128xf32>
    %494 = arith.negf %493 : vector<32x128xf32>
    %495 = math.exp %494 : vector<32x128xf32>
    %cst_218 = arith.constant 1.000000e+00 : f32
    %496 = vector.broadcast %cst_218 : f32 to vector<32x128xf32>
    %497 = arith.addf %496, %495 : vector<32x128xf32>
    %498 = arith.divf %496, %497 : vector<32x128xf32>
    %499 = arith.mulf %498, %461 : vector<32x128xf32>
    %500 = arith.mulf %484, %486 : vector<32x128xf32>
    %501 = arith.addf %499, %500 : vector<32x128xf32>
    %502 = math.tanh %501 : vector<32x128xf32>
    %503 = arith.mulf %492, %502 : vector<32x128xf32>
    %504 = vector.extract_strided_slice %503 {offsets = [0, 0], sizes = [32, 64], strides = [1, 1]} : vector<32x128xf32> to vector<32x64xf32>
    %c0_219 = arith.constant 0 : index
    %c192_220 = arith.constant 192 : index
    %505 = vector.load %arg15[%c0_219, %c192_220] : memref<64x512xf32, #tpu.memory_space<vmem>>, vector<32x64xf32>
    tpu.vector_store %arg15[%c0_219, %c192_220], %504 {strides = array<i32>} : memref<64x512xf32, #tpu.memory_space<vmem>>, vector<32x64xf32>,
    %506 = vector.extract_strided_slice %503 {offsets = [0, 64], sizes = [32, 64], strides = [1, 1]} : vector<32x128xf32> to vector<32x64xf32>
    %c32_221 = arith.constant 32 : index
    %c256_222 = arith.constant 256 : index
    %507 = vector.load %arg15[%c32_221, %c256_222] : memref<64x512xf32, #tpu.memory_space<vmem>>, vector<32x64xf32>
    tpu.vector_store %arg15[%c32_221, %c256_222], %506 {strides = array<i32>} : memref<64x512xf32, #tpu.memory_space<vmem>>, vector<32x64xf32>,
    %c0_223 = arith.constant 0 : index
    %c256_224 = arith.constant 256 : index
    %508 = vector.load %arg13[%c0_223, %c256_224] : memref<256x512xf32, #tpu.memory_space<vmem>>, vector<128x128xf32>
    %c128_225 = arith.constant 128 : index
    %c128_226 = arith.constant 128 : index
    %509 = vector.load %arg13[%c128_225, %c128_226] : memref<256x512xf32, #tpu.memory_space<vmem>>, vector<128x128xf32>
    %510 = arith.select %47, %508, %509 : vector<128x128xi1>, vector<128x128xf32>
    %cst_227 = arith.constant 0.000000e+00 : f32
    %511 = vector.broadcast %cst_227 : f32 to vector<32x128xf32>
    %512 = arith.select %44, %503, %511 : vector<32x128xi1>, vector<32x128xf32>
    %cst_228 = arith.constant 0.000000e+00 : f32
    %513 = vector.broadcast %cst_228 : f32 to vector<32x128xf32>
    %514 = arith.select %44, %513, %503 : vector<32x128xi1>, vector<32x128xf32>
    %515 = tpu.concatenate %512, %514 in 0 : vector<32x128xf32>, vector<32x128xf32> -> vector<64x128xf32>
    %cst_229 = arith.constant dense<0.000000e+00> : vector<128x128xf32>
    %516 = tpu.matmul %364, %515, %cst_229 {dimension_numbers = #tpu.dot_dimension_numbers<[1], [0], [0], [1], [0, 0, 1, 1], [], []>} : vector<128x64xf32>, vector<64x128xf32>, vector<128x128xf32> -> vector<128x128xf32>
    %517 = arith.addf %510, %516 : vector<128x128xf32>
    %518 = vector.extract_strided_slice %517 {offsets = [0, 0], sizes = [32, 128], strides = [1, 1]} : vector<128x128xf32> to vector<32x128xf32>
    %519 = arith.negf %518 : vector<32x128xf32>
    %520 = math.exp %519 : vector<32x128xf32>
    %cst_230 = arith.constant 1.000000e+00 : f32
    %521 = vector.broadcast %cst_230 : f32 to vector<32x128xf32>
    %522 = arith.addf %521, %520 : vector<32x128xf32>
    %523 = arith.divf %521, %522 : vector<32x128xf32>
    %524 = vector.extract_strided_slice %517 {offsets = [64, 0], sizes = [32, 128], strides = [1, 1]} : vector<128x128xf32> to vector<32x128xf32>
    %525 = math.tanh %524 : vector<32x128xf32>
    %526 = vector.extract_strided_slice %517 {offsets = [96, 0], sizes = [32, 128], strides = [1, 1]} : vector<128x128xf32> to vector<32x128xf32>
    %527 = arith.negf %526 : vector<32x128xf32>
    %528 = math.exp %527 : vector<32x128xf32>
    %cst_231 = arith.constant 1.000000e+00 : f32
    %529 = vector.broadcast %cst_231 : f32 to vector<32x128xf32>
    %530 = arith.addf %529, %528 : vector<32x128xf32>
    %531 = arith.divf %529, %530 : vector<32x128xf32>
    %532 = vector.extract_strided_slice %517 {offsets = [32, 0], sizes = [32, 128], strides = [1, 1]} : vector<128x128xf32> to vector<32x128xf32>
    %533 = arith.negf %532 : vector<32x128xf32>
    %534 = math.exp %533 : vector<32x128xf32>
    %cst_232 = arith.constant 1.000000e+00 : f32
    %535 = vector.broadcast %cst_232 : f32 to vector<32x128xf32>
    %536 = arith.addf %535, %534 : vector<32x128xf32>
    %537 = arith.divf %535, %536 : vector<32x128xf32>
    %538 = arith.mulf %537, %501 : vector<32x128xf32>
    %539 = arith.mulf %523, %525 : vector<32x128xf32>
    %540 = arith.addf %538, %539 : vector<32x128xf32>
    %541 = math.tanh %540 : vector<32x128xf32>
    %542 = arith.mulf %531, %541 : vector<32x128xf32>
    %543 = vector.extract_strided_slice %542 {offsets = [0, 0], sizes = [32, 64], strides = [1, 1]} : vector<32x128xf32> to vector<32x64xf32>
    %c0_233 = arith.constant 0 : index
    %c256_234 = arith.constant 256 : index
    %544 = vector.load %arg15[%c0_233, %c256_234] : memref<64x512xf32, #tpu.memory_space<vmem>>, vector<32x64xf32>
    tpu.vector_store %arg15[%c0_233, %c256_234], %543 {strides = array<i32>} : memref<64x512xf32, #tpu.memory_space<vmem>>, vector<32x64xf32>,
    %545 = vector.extract_strided_slice %542 {offsets = [0, 64], sizes = [32, 64], strides = [1, 1]} : vector<32x128xf32> to vector<32x64xf32>
    %c32_235 = arith.constant 32 : index
    %c192_236 = arith.constant 192 : index
    %546 = vector.load %arg15[%c32_235, %c192_236] : memref<64x512xf32, #tpu.memory_space<vmem>>, vector<32x64xf32>
    tpu.vector_store %arg15[%c32_235, %c192_236], %545 {strides = array<i32>} : memref<64x512xf32, #tpu.memory_space<vmem>>, vector<32x64xf32>,
    %c0_237 = arith.constant 0 : index
    %c256_238 = arith.constant 256 : index
    %547 = vector.load %arg13[%c0_237, %c256_238] : memref<256x512xf32, #tpu.memory_space<vmem>>, vector<128x128xf32>
    %c128_239 = arith.constant 128 : index
    %c128_240 = arith.constant 128 : index
    %548 = vector.load %arg13[%c128_239, %c128_240] : memref<256x512xf32, #tpu.memory_space<vmem>>, vector<128x128xf32>
    %549 = arith.select %47, %548, %547 : vector<128x128xi1>, vector<128x128xf32>
    %c64_i32_241 = arith.constant 64 : i32
    %550 = tpu.dynamic_rotate %549 by %c64_i32_241 dim 1 : vector<128x128xf32>, i32 -> vector<128x128xf32>
    %cst_242 = arith.constant 0.000000e+00 : f32
    %551 = vector.broadcast %cst_242 : f32 to vector<32x128xf32>
    %552 = arith.select %44, %542, %551 : vector<32x128xi1>, vector<32x128xf32>
    %cst_243 = arith.constant 0.000000e+00 : f32
    %553 = vector.broadcast %cst_243 : f32 to vector<32x128xf32>
    %554 = arith.select %44, %553, %542 : vector<32x128xi1>, vector<32x128xf32>
    %555 = tpu.concatenate %552, %554 in 0 : vector<32x128xf32>, vector<32x128xf32> -> vector<64x128xf32>
    %cst_244 = arith.constant dense<0.000000e+00> : vector<128x128xf32>
    %556 = tpu.matmul %364, %555, %cst_244 {dimension_numbers = #tpu.dot_dimension_numbers<[1], [0], [0], [1], [0, 0, 1, 1], [], []>} : vector<128x64xf32>, vector<64x128xf32>, vector<128x128xf32> -> vector<128x128xf32>
    %557 = arith.addf %550, %556 : vector<128x128xf32>
    %558 = vector.extract_strided_slice %557 {offsets = [0, 0], sizes = [32, 128], strides = [1, 1]} : vector<128x128xf32> to vector<32x128xf32>
    %559 = arith.negf %558 : vector<32x128xf32>
    %560 = math.exp %559 : vector<32x128xf32>
    %cst_245 = arith.constant 1.000000e+00 : f32
    %561 = vector.broadcast %cst_245 : f32 to vector<32x128xf32>
    %562 = arith.addf %561, %560 : vector<32x128xf32>
    %563 = arith.divf %561, %562 : vector<32x128xf32>
    %564 = vector.extract_strided_slice %557 {offsets = [64, 0], sizes = [32, 128], strides = [1, 1]} : vector<128x128xf32> to vector<32x128xf32>
    %565 = math.tanh %564 : vector<32x128xf32>
    %566 = vector.extract_strided_slice %557 {offsets = [96, 0], sizes = [32, 128], strides = [1, 1]} : vector<128x128xf32> to vector<32x128xf32>
    %567 = arith.negf %566 : vector<32x128xf32>
    %568 = math.exp %567 : vector<32x128xf32>
    %cst_246 = arith.constant 1.000000e+00 : f32
    %569 = vector.broadcast %cst_246 : f32 to vector<32x128xf32>
    %570 = arith.addf %569, %568 : vector<32x128xf32>
    %571 = arith.divf %569, %570 : vector<32x128xf32>
    %572 = vector.extract_strided_slice %557 {offsets = [32, 0], sizes = [32, 128], strides = [1, 1]} : vector<128x128xf32> to vector<32x128xf32>
    %573 = arith.negf %572 : vector<32x128xf32>
    %574 = math.exp %573 : vector<32x128xf32>
    %cst_247 = arith.constant 1.000000e+00 : f32
    %575 = vector.broadcast %cst_247 : f32 to vector<32x128xf32>
    %576 = arith.addf %575, %574 : vector<32x128xf32>
    %577 = arith.divf %575, %576 : vector<32x128xf32>
    %578 = arith.mulf %577, %540 : vector<32x128xf32>
    %579 = arith.mulf %563, %565 : vector<32x128xf32>
    %580 = arith.addf %578, %579 : vector<32x128xf32>
    %581 = math.tanh %580 : vector<32x128xf32>
    %582 = arith.mulf %571, %581 : vector<32x128xf32>
    %583 = vector.extract_strided_slice %582 {offsets = [0, 0], sizes = [32, 64], strides = [1, 1]} : vector<32x128xf32> to vector<32x64xf32>
    %c0_248 = arith.constant 0 : index
    %c320_249 = arith.constant 320 : index
    %584 = vector.load %arg15[%c0_248, %c320_249] : memref<64x512xf32, #tpu.memory_space<vmem>>, vector<32x64xf32>
    tpu.vector_store %arg15[%c0_248, %c320_249], %583 {strides = array<i32>} : memref<64x512xf32, #tpu.memory_space<vmem>>, vector<32x64xf32>,
    %585 = vector.extract_strided_slice %582 {offsets = [0, 64], sizes = [32, 64], strides = [1, 1]} : vector<32x128xf32> to vector<32x64xf32>
    %c32_250 = arith.constant 32 : index
    %c128_251 = arith.constant 128 : index
    %586 = vector.load %arg15[%c32_250, %c128_251] : memref<64x512xf32, #tpu.memory_space<vmem>>, vector<32x64xf32>
    tpu.vector_store %arg15[%c32_250, %c128_251], %585 {strides = array<i32>} : memref<64x512xf32, #tpu.memory_space<vmem>>, vector<32x64xf32>,
    %c0_252 = arith.constant 0 : index
    %c384_253 = arith.constant 384 : index
    %587 = vector.load %arg13[%c0_252, %c384_253] : memref<256x512xf32, #tpu.memory_space<vmem>>, vector<128x128xf32>
    %c128_254 = arith.constant 128 : index
    %c0_255 = arith.constant 0 : index
    %588 = vector.load %arg13[%c128_254, %c0_255] : memref<256x512xf32, #tpu.memory_space<vmem>>, vector<128x128xf32>
    %589 = arith.select %47, %587, %588 : vector<128x128xi1>, vector<128x128xf32>
    %cst_256 = arith.constant 0.000000e+00 : f32
    %590 = vector.broadcast %cst_256 : f32 to vector<32x128xf32>
    %591 = arith.select %44, %582, %590 : vector<32x128xi1>, vector<32x128xf32>
    %cst_257 = arith.constant 0.000000e+00 : f32
    %592 = vector.broadcast %cst_257 : f32 to vector<32x128xf32>
    %593 = arith.select %44, %592, %582 : vector<32x128xi1>, vector<32x128xf32>
    %594 = tpu.concatenate %591, %593 in 0 : vector<32x128xf32>, vector<32x128xf32> -> vector<64x128xf32>
    %cst_258 = arith.constant dense<0.000000e+00> : vector<128x128xf32>
    %595 = tpu.matmul %364, %594, %cst_258 {dimension_numbers = #tpu.dot_dimension_numbers<[1], [0], [0], [1], [0, 0, 1, 1], [], []>} : vector<128x64xf32>, vector<64x128xf32>, vector<128x128xf32> -> vector<128x128xf32>
    %596 = arith.addf %589, %595 : vector<128x128xf32>
    %597 = vector.extract_strided_slice %596 {offsets = [0, 0], sizes = [32, 128], strides = [1, 1]} : vector<128x128xf32> to vector<32x128xf32>
    %598 = arith.negf %597 : vector<32x128xf32>
    %599 = math.exp %598 : vector<32x128xf32>
    %cst_259 = arith.constant 1.000000e+00 : f32
    %600 = vector.broadcast %cst_259 : f32 to vector<32x128xf32>
    %601 = arith.addf %600, %599 : vector<32x128xf32>
    %602 = arith.divf %600, %601 : vector<32x128xf32>
    %603 = vector.extract_strided_slice %596 {offsets = [64, 0], sizes = [32, 128], strides = [1, 1]} : vector<128x128xf32> to vector<32x128xf32>
    %604 = math.tanh %603 : vector<32x128xf32>
    %605 = vector.extract_strided_slice %596 {offsets = [96, 0], sizes = [32, 128], strides = [1, 1]} : vector<128x128xf32> to vector<32x128xf32>
    %606 = arith.negf %605 : vector<32x128xf32>
    %607 = math.exp %606 : vector<32x128xf32>
    %cst_260 = arith.constant 1.000000e+00 : f32
    %608 = vector.broadcast %cst_260 : f32 to vector<32x128xf32>
    %609 = arith.addf %608, %607 : vector<32x128xf32>
    %610 = arith.divf %608, %609 : vector<32x128xf32>
    %611 = vector.extract_strided_slice %596 {offsets = [32, 0], sizes = [32, 128], strides = [1, 1]} : vector<128x128xf32> to vector<32x128xf32>
    %612 = arith.negf %611 : vector<32x128xf32>
    %613 = math.exp %612 : vector<32x128xf32>
    %cst_261 = arith.constant 1.000000e+00 : f32
    %614 = vector.broadcast %cst_261 : f32 to vector<32x128xf32>
    %615 = arith.addf %614, %613 : vector<32x128xf32>
    %616 = arith.divf %614, %615 : vector<32x128xf32>
    %617 = arith.mulf %616, %580 : vector<32x128xf32>
    %618 = arith.mulf %602, %604 : vector<32x128xf32>
    %619 = arith.addf %617, %618 : vector<32x128xf32>
    %620 = math.tanh %619 : vector<32x128xf32>
    %621 = arith.mulf %610, %620 : vector<32x128xf32>
    %622 = vector.extract_strided_slice %621 {offsets = [0, 0], sizes = [32, 64], strides = [1, 1]} : vector<32x128xf32> to vector<32x64xf32>
    %c0_262 = arith.constant 0 : index
    %c384_263 = arith.constant 384 : index
    %623 = vector.load %arg15[%c0_262, %c384_263] : memref<64x512xf32, #tpu.memory_space<vmem>>, vector<32x64xf32>
    tpu.vector_store %arg15[%c0_262, %c384_263], %622 {strides = array<i32>} : memref<64x512xf32, #tpu.memory_space<vmem>>, vector<32x64xf32>,
    %624 = vector.extract_strided_slice %621 {offsets = [0, 64], sizes = [32, 64], strides = [1, 1]} : vector<32x128xf32> to vector<32x64xf32>
    %c32_264 = arith.constant 32 : index
    %c64_265 = arith.constant 64 : index
    %625 = vector.load %arg15[%c32_264, %c64_265] : memref<64x512xf32, #tpu.memory_space<vmem>>, vector<32x64xf32>
    tpu.vector_store %arg15[%c32_264, %c64_265], %624 {strides = array<i32>} : memref<64x512xf32, #tpu.memory_space<vmem>>, vector<32x64xf32>,
    %c0_266 = arith.constant 0 : index
    %c384_267 = arith.constant 384 : index
    %626 = vector.load %arg13[%c0_266, %c384_267] : memref<256x512xf32, #tpu.memory_space<vmem>>, vector<128x128xf32>
    %c128_268 = arith.constant 128 : index
    %c0_269 = arith.constant 0 : index
    %627 = vector.load %arg13[%c128_268, %c0_269] : memref<256x512xf32, #tpu.memory_space<vmem>>, vector<128x128xf32>
    %628 = arith.select %47, %627, %626 : vector<128x128xi1>, vector<128x128xf32>
    %c64_i32_270 = arith.constant 64 : i32
    %629 = tpu.dynamic_rotate %628 by %c64_i32_270 dim 1 : vector<128x128xf32>, i32 -> vector<128x128xf32>
    %cst_271 = arith.constant 0.000000e+00 : f32
    %630 = vector.broadcast %cst_271 : f32 to vector<32x128xf32>
    %631 = arith.select %44, %621, %630 : vector<32x128xi1>, vector<32x128xf32>
    %cst_272 = arith.constant 0.000000e+00 : f32
    %632 = vector.broadcast %cst_272 : f32 to vector<32x128xf32>
    %633 = arith.select %44, %632, %621 : vector<32x128xi1>, vector<32x128xf32>
    %634 = tpu.concatenate %631, %633 in 0 : vector<32x128xf32>, vector<32x128xf32> -> vector<64x128xf32>
    %cst_273 = arith.constant dense<0.000000e+00> : vector<128x128xf32>
    %635 = tpu.matmul %364, %634, %cst_273 {dimension_numbers = #tpu.dot_dimension_numbers<[1], [0], [0], [1], [0, 0, 1, 1], [], []>} : vector<128x64xf32>, vector<64x128xf32>, vector<128x128xf32> -> vector<128x128xf32>
    %636 = arith.addf %629, %635 : vector<128x128xf32>
    %637 = vector.extract_strided_slice %636 {offsets = [0, 0], sizes = [32, 128], strides = [1, 1]} : vector<128x128xf32> to vector<32x128xf32>
    %638 = arith.negf %637 : vector<32x128xf32>
    %639 = math.exp %638 : vector<32x128xf32>
    %cst_274 = arith.constant 1.000000e+00 : f32
    %640 = vector.broadcast %cst_274 : f32 to vector<32x128xf32>
    %641 = arith.addf %640, %639 : vector<32x128xf32>
    %642 = arith.divf %640, %641 : vector<32x128xf32>
    %643 = vector.extract_strided_slice %636 {offsets = [64, 0], sizes = [32, 128], strides = [1, 1]} : vector<128x128xf32> to vector<32x128xf32>
    %644 = math.tanh %643 : vector<32x128xf32>
    %645 = vector.extract_strided_slice %636 {offsets = [96, 0], sizes = [32, 128], strides = [1, 1]} : vector<128x128xf32> to vector<32x128xf32>
    %646 = arith.negf %645 : vector<32x128xf32>
    %647 = math.exp %646 : vector<32x128xf32>
    %cst_275 = arith.constant 1.000000e+00 : f32
    %648 = vector.broadcast %cst_275 : f32 to vector<32x128xf32>
    %649 = arith.addf %648, %647 : vector<32x128xf32>
    %650 = arith.divf %648, %649 : vector<32x128xf32>
    %651 = vector.extract_strided_slice %636 {offsets = [32, 0], sizes = [32, 128], strides = [1, 1]} : vector<128x128xf32> to vector<32x128xf32>
    %652 = arith.negf %651 : vector<32x128xf32>
    %653 = math.exp %652 : vector<32x128xf32>
    %cst_276 = arith.constant 1.000000e+00 : f32
    %654 = vector.broadcast %cst_276 : f32 to vector<32x128xf32>
    %655 = arith.addf %654, %653 : vector<32x128xf32>
    %656 = arith.divf %654, %655 : vector<32x128xf32>
    %657 = arith.mulf %656, %619 : vector<32x128xf32>
    %658 = arith.mulf %642, %644 : vector<32x128xf32>
    %659 = arith.addf %657, %658 : vector<32x128xf32>
    %660 = math.tanh %659 : vector<32x128xf32>
    %661 = arith.mulf %650, %660 : vector<32x128xf32>
    %662 = vector.extract_strided_slice %661 {offsets = [0, 0], sizes = [32, 64], strides = [1, 1]} : vector<32x128xf32> to vector<32x64xf32>
    %c0_277 = arith.constant 0 : index
    %c448_278 = arith.constant 448 : index
    %663 = vector.load %arg15[%c0_277, %c448_278] : memref<64x512xf32, #tpu.memory_space<vmem>>, vector<32x64xf32>
    tpu.vector_store %arg15[%c0_277, %c448_278], %662 {strides = array<i32>} : memref<64x512xf32, #tpu.memory_space<vmem>>, vector<32x64xf32>,
    %664 = vector.extract_strided_slice %661 {offsets = [0, 64], sizes = [32, 64], strides = [1, 1]} : vector<32x128xf32> to vector<32x64xf32>
    %c32_279 = arith.constant 32 : index
    %c0_280 = arith.constant 0 : index
    %665 = vector.load %arg15[%c32_279, %c0_280] : memref<64x512xf32, #tpu.memory_space<vmem>>, vector<32x64xf32>
    tpu.vector_store %arg15[%c32_279, %c0_280], %664 {strides = array<i32>} : memref<64x512xf32, #tpu.memory_space<vmem>>, vector<32x64xf32>,
    %c0_281 = arith.constant 0 : index
    %c0_282 = arith.constant 0 : index
    %666 = vector.load %arg9[%c0_281, %c0_282] : memref<16x64xf32, #tpu.memory_space<vmem>>, vector<16x64xf32>
    %c0_283 = arith.constant 0 : index
    %c0_284 = arith.constant 0 : index
    %667 = vector.load %arg15[%c0_283, %c0_284] : memref<64x512xf32, #tpu.memory_space<vmem>>, vector<64x512xf32>
    %cst_285 = arith.constant dense<0.000000e+00> : vector<16x512xf32>
    %668 = tpu.matmul %666, %667, %cst_285 {dimension_numbers = #tpu.dot_dimension_numbers<[1], [0], [0], [1], [0, 0, 1, 1], [], []>} : vector<16x64xf32>, vector<64x512xf32>, vector<16x512xf32> -> vector<16x512xf32>
    %c0_286 = arith.constant 0 : index
    %c0_287 = arith.constant 0 : index
    %669 = vector.load %arg10[%c0_286, %c0_287] : memref<16x1xf32, #tpu.memory_space<vmem>>, vector<16x1xf32>
    %670 = vector.broadcast %669 : vector<16x1xf32> to vector<16x512xf32>
    %671 = arith.addf %668, %670 : vector<16x512xf32>
    %c0_288 = arith.constant 0 : index
    %c0_289 = arith.constant 0 : index
    %672 = vector.load %arg11[%c0_288, %c0_289] : memref<16x512xf32, #tpu.memory_space<vmem>>, vector<16x512xf32>
    tpu.vector_store %arg11[%c0_288, %c0_289], %671 {strides = array<i32>} : memref<16x512xf32, #tpu.memory_space<vmem>>, vector<16x512xf32>,
    return
  }
}

</mosaic_0001>

<llo_original>
// kernel: _baseline_forward_impl.1
$region0: #{_baseline_forward_impl.1}
  #allocation0 [shape = 'u32[]', space=smem, size = 0x4, offset = 0x4, fixed_abs, tag = 'smem constant byte address 0x4 - core index']
  #allocation1 [shape = 'u32[144,128]{1,0:T(1,128)}', space=vmem, size = 0x12000, scoped, tag = 'internal scratch']
  #allocation2 [shape = 'f32[64,512]{1,0:T(8,128)}', space=vmem, size = 0x20000, scoped, tag = 'scratch operand']
  #allocation3 [shape = 'f32[256,512]{1,0:T(8,128)}', space=vmem, size = 0x80000, scoped, tag = 'scratch operand']
  #allocation4 [shape = 'f32[64,512]{1,0:T(8,128)}', space=vmem, size = 0x20000, scoped, tag = 'scratch operand']
  #allocation5 [shape = 'f32[64,512]{1,0:T(8,128)}', space=vmem, size = 0x20000, scoped, tag = 'scratch operand']
  %s0 = inlined_call_operand.vmem [shape: f32[512,36], index: 0, kind: input, shape index: {}]
  %s1 = inlined_call_operand.vmem [shape: f32[36,64], index: 1, kind: input, shape index: {}]
  %s2 = inlined_call_operand.vmem [shape: f32[1,64], index: 2, kind: input, shape index: {}]
  %s3 = inlined_call_operand.vmem [shape: f32[256,64], index: 3, kind: input, shape index: {}]
  %s4 = inlined_call_operand.vmem [shape: f32[128,64], index: 4, kind: input, shape index: {}]
  %s5 = inlined_call_operand.vmem [shape: f32[256,1], index: 5, kind: input, shape index: {}]
  %s6 = inlined_call_operand.vmem [shape: f32[256,64], index: 6, kind: input, shape index: {}]
  %s7 = inlined_call_operand.vmem [shape: f32[128,64], index: 7, kind: input, shape index: {}]
  %s8 = inlined_call_operand.vmem [shape: f32[256,1], index: 8, kind: input, shape index: {}]
  %s9 = inlined_call_operand.vmem [shape: f32[16,64], index: 9, kind: input, shape index: {}]
  %s10 = inlined_call_operand.vmem [shape: f32[16,1], index: 10, kind: input, shape index: {}]
  %s11 = inlined_call_operand.vmem [shape: f32[16,512], index: 11, kind: output, shape index: {}]
  %s12 = sld [smem:[#allocation0]]
  $region54: #{_baseline_forward_impl.1} parent=0
    _
  %s14 = ssub.s32 1, %s12
  %s15 = scalar_select 0, %s14, %s12
  // Predicated region
  $region2: #{_baseline_forward_impl.1} parent=0 // pred_check
    _
  $region3: #{_baseline_forward_impl.1} parent=0 // pred_check_branch
    %17 = sbr.rel (0) target = $region5
  $region4: #{_baseline_forward_impl.1} parent=0 // pred_region
    _
  $region5: #{_baseline_forward_impl.1} parent=0 // pred_fallthru
    _
  // Predicated region
  $region6: #{_baseline_forward_impl.1} parent=0 // pred_check
    _
  $region7: #{_baseline_forward_impl.1} parent=0 // pred_check_branch
    %19 = sbr.rel (0) target = $region9
  $region8: #{_baseline_forward_impl.1} parent=0 // pred_region
    _
  $region9: #{_baseline_forward_impl.1} parent=0 // pred_fallthru
    _
  // Predicated region
  $region10: #{_baseline_forward_impl.1} parent=0 // pred_check
    _
  $region11: #{_baseline_forward_impl.1} parent=0 // pred_check_branch
    %21 = sbr.rel (0) target = $region13
  $region12: #{_baseline_forward_impl.1} parent=0 // pred_region
    _
  $region13: #{_baseline_forward_impl.1} parent=0 // pred_fallthru
    _
  // Predicated region
  $region14: #{_baseline_forward_impl.1} parent=0 // pred_check
    _
  $region15: #{_baseline_forward_impl.1} parent=0 // pred_check_branch
    %23 = sbr.rel (0) target = $region17
  $region16: #{_baseline_forward_impl.1} parent=0 // pred_region
    _
  $region17: #{_baseline_forward_impl.1} parent=0 // pred_fallthru
    _
  // Predicated region
  $region18: #{_baseline_forward_impl.1} parent=0 // pred_check
    _
  $region19: #{_baseline_forward_impl.1} parent=0 // pred_check_branch
    %25 = sbr.rel (0) target = $region21
  $region20: #{_baseline_forward_impl.1} parent=0 // pred_region
    _
  $region21: #{_baseline_forward_impl.1} parent=0 // pred_fallthru
    _
  // Predicated region
  $region22: #{_baseline_forward_impl.1} parent=0 // pred_check
    _
  $region23: #{_baseline_forward_impl.1} parent=0 // pred_check_branch
    %27 = sbr.rel (0) target = $region25
  $region24: #{_baseline_forward_impl.1} parent=0 // pred_region
    _
  $region25: #{_baseline_forward_impl.1} parent=0 // pred_fallthru
    _
  // Predicated region
  $region26: #{_baseline_forward_impl.1} parent=0 // pred_check
    _
  $region27: #{_baseline_forward_impl.1} parent=0 // pred_check_branch
    %29 = sbr.rel (0) target = $region29
  $region28: #{_baseline_forward_impl.1} parent=0 // pred_region
    _
  $region29: #{_baseline_forward_impl.1} parent=0 // pred_fallthru
    _
  // Predicated region
  $region30: #{_baseline_forward_impl.1} parent=0 // pred_check
    _
  $region31: #{_baseline_forward_impl.1} parent=0 // pred_check_branch
    %31 = sbr.rel (0) target = $region33
  $region32: #{_baseline_forward_impl.1} parent=0 // pred_region
    _
  $region33: #{_baseline_forward_impl.1} parent=0 // pred_fallthru
    _
  // Predicated region
  $region34: #{_baseline_forward_impl.1} parent=0 // pred_check
    _
  $region35: #{_baseline_forward_impl.1} parent=0 // pred_check_branch
    %33 = sbr.rel (0) target = $region37
  $region36: #{_baseline_forward_impl.1} parent=0 // pred_region
    _
  $region37: #{_baseline_forward_impl.1} parent=0 // pred_fallthru
    _
  // Predicated region
  $region38: #{_baseline_forward_impl.1} parent=0 // pred_check
    _
  $region39: #{_baseline_forward_impl.1} parent=0 // pred_check_branch
    %35 = sbr.rel (0) target = $region41
  $region40: #{_baseline_forward_impl.1} parent=0 // pred_region
    _
  $region41: #{_baseline_forward_impl.1} parent=0 // pred_fallthru
    _
  // Predicated region
  $region42: #{_baseline_forward_impl.1} parent=0 // pred_check
    _
  $region43: #{_baseline_forward_impl.1} parent=0 // pred_check_branch
    %37 = sbr.rel (0) target = $region45
  $region44: #{_baseline_forward_impl.1} parent=0 // pred_region
    _
  $region45: #{_baseline_forward_impl.1} parent=0 // pred_fallthru
    _
  %v38 = vld [vmem:[%s1] sm:$0xff]
  %v39 = vld [vmem:[%s1 + $0x8] sm:$0xff]
  %v40 = vld [vmem:[%s1 + $0x10] sm:$0xff]
  %v41 = vld [vmem:[%s1 + $0x18] sm:$0xff]
  %v42 = vld [vmem:[%s1 + $0x20] sm:$0xf]
  %v43 = vld [vmem:[%s2] sm:$0x1]
  %v44 = vld [vmem:[%s0] sm:$0xff]
  %v45 = vld [vmem:[%s0 + $0x8] sm:$0xff]
  %v46 = vld [vmem:[%s0 + $0x10] sm:$0xff]
  %v47 = vld [vmem:[%s0 + $0x18] sm:$0xff]
  %v48 = vld [vmem:[%s0 + $0x20] sm:$0xff]
  %v49 = vld [vmem:[%s0 + $0x28] sm:$0xff]
  %v50 = vld [vmem:[%s0 + $0x30] sm:$0xff]
  %v51 = vld [vmem:[%s0 + $0x38] sm:$0xff]
  %v53 = vlaneseq
  %v54 = vshrl.u32 %v53, 7
  %v55 = vsub.s32 0, %v54
  %v56 = vrot.slane %v43, %v55
  %vm58 = vcmask 293888
  %v60 = vsel %vm58, %v44, 0
  %v63 = vsel %vm58, %v45, 0
  %v66 = vsel %vm58, %v46, 0
  %v69 = vsel %vm58, %v47, 0
  %v72 = vsel %vm58, %v48, 0
  %v75 = vsel %vm58, %v49, 0
  %v78 = vsel %vm58, %v50, 0
  %v81 = vsel %vm58, %v51, 0
  %vm83 = vcmask 1043456
  %v85 = vsel %vm83, %v42, 0
  %87 = vmatprep.subr.mxu0 0.0
  %88 = vmatpush1.msra.mxu0 %v38
  %89 = vmatprep.subr.mxu0 0.0
  %90 = vmatpush1.msra.mxu0 %v39
  %91 = vmatprep.subr.mxu0 0.0
  %92 = vmatpush1.msra.mxu0 %v40
  %93 = vmatprep.subr.mxu0 0.0
  %94 = vmatpush1.msra.mxu0 %v41
  %95 = vmatprep.subr.mxu0 0.0
  %96 = vmatpush1.msra.mxu0 %v85
  %97 = vmatprep.subr.mxu0 0.0
  %98 = vmatpush1.msra.mxu0 0.0
  %99 = vmatprep.subr.mxu0 0.0
  %100 = vmatpush1.msra.mxu0 0.0
  %101 = vmatprep.subr.mxu0 0.0
  %102 = vmatpush1.msra.mxu0 0.0
  %103 = vmatprep.subr.mxu0 0.0
  %104 = vmatpush1.msra.mxu0 0.0
  %105 = vmatprep.subr.mxu0 0.0
  %106 = vmatpush1.msra.mxu0 0.0
  %107 = vmatprep.subr.mxu0 0.0
  %108 = vmatpush1.msra.mxu0 0.0
  %109 = vmatprep.subr.mxu0 0.0
  %110 = vmatpush1.msra.mxu0 0.0
  %111 = vmatprep.subr.mxu0 0.0
  %112 = vmatpush1.msra.mxu0 0.0
  %113 = vmatprep.subr.mxu0 0.0
  %114 = vmatpush1.msra.mxu0 0.0
  %115 = vmatprep.subr.mxu0 0.0
  %116 = vmatpush1.msra.mxu0 0.0
  %117 = vmatprep.subr.mxu0 0.0
  %118 = vmatpush1.msra.mxu0 0.0
  %119 = vmatprep.subr.mxu0 0.0
  %120 = vmatpush1.msra.mxu0 0.0
  %121 = vmatprep.subr.mxu0 0.0
  %122 = vmatpush1.msra.mxu0 0.0
  %123 = vmatprep.subr.mxu0 0.0
  %124 = vmatpush1.msra.mxu0 0.0
  %125 = vmatprep.subr.mxu0 0.0
  %126 = vmatpush1.msra.mxu0 0.0
  %127 = vmatprep.subr.mxu0 0.0
  %128 = vmatpush1.msra.mxu0 0.0
  %129 = vmatprep.subr.mxu0 0.0
  %130 = vmatpush1.msra.mxu0 0.0
  %131 = vmatprep.subr.mxu0 0.0
  %132 = vmatpush1.msra.mxu0 0.0
  %133 = vmatprep.subr.mxu0 0.0
  %134 = vmatpush1.msra.mxu0 0.0
  %135 = vmatprep.subr.mxu0 0.0
  %136 = vmatpush1.msra.mxu0 0.0
  %137 = vmatprep.subr.mxu0 0.0
  %138 = vmatpush1.msra.mxu0 0.0
  %139 = vmatprep.subr.mxu0 0.0
  %140 = vmatpush1.msra.mxu0 0.0
  %141 = vmatprep.subr.mxu0 0.0
  %142 = vmatpush1.msra.mxu0 0.0
  %143 = vmatprep.subr.mxu0 0.0
  %144 = vmatpush1.msra.mxu0 0.0
  %145 = vmatprep.subr.mxu0 0.0
  %146 = vmatpush1.msra.mxu0 0.0
  %147 = vmatprep.subr.mxu0 0.0
  %148 = vmatpush1.msra.mxu0 0.0
  %149 = vmatprep.subr.mxu0 0.0
  %150 = vmatpush1.msra.mxu0 0.0
  %151 = vmatprep.mubr.f32.mxu0 0.0
  %152 = vmatmul.mubr.f32.gmra.mrb[0].mxu0 %v60
  %v153 = vpop.f32.mrb[0].mxu0
  %v154 = vadd.f32 %v56, %v153
  %v155 = vpop.f32.mrb[0].mxu0
  %156 = vmatprep.mubr.f32.mxu0 0.0
  %157 = vmatmul.mubr.f32.gmra.mrb[0].mxu0 %v63
  %v158 = vpop.f32.mrb[0].mxu0
  %v159 = vadd.f32 %v56, %v158
  %v160 = vpop.f32.mrb[0].mxu0
  %161 = vmatprep.mubr.f32.mxu0 0.0
  %162 = vmatmul.mubr.f32.gmra.mrb[0].mxu0 %v66
  %v163 = vpop.f32.mrb[0].mxu0
  %v164 = vadd.f32 %v56, %v163
  %v165 = vpop.f32.mrb[0].mxu0
  %166 = vmatprep.mubr.f32.mxu0 0.0
  %167 = vmatmul.mubr.f32.gmra.mrb[0].mxu0 %v69
  %v168 = vpop.f32.mrb[0].mxu0
  %v169 = vadd.f32 %v56, %v168
  %v170 = vpop.f32.mrb[0].mxu0
  %171 = vmatprep.mubr.f32.mxu0 0.0
  %172 = vmatmul.mubr.f32.gmra.mrb[0].mxu0 %v72
  %v173 = vpop.f32.mrb[0].mxu0
  %v174 = vadd.f32 %v56, %v173
  %v175 = vpop.f32.mrb[0].mxu0
  %176 = vmatprep.mubr.f32.mxu0 0.0
  %177 = vmatmul.mubr.f32.gmra.mrb[0].mxu0 %v75
  %v178 = vpop.f32.mrb[0].mxu0
  %v179 = vadd.f32 %v56, %v178
  %v180 = vpop.f32.mrb[0].mxu0
  %181 = vmatprep.mubr.f32.mxu0 0.0
  %182 = vmatmul.mubr.f32.gmra.mrb[0].mxu0 %v78
  %v183 = vpop.f32.mrb[0].mxu0
  %v184 = vadd.f32 %v56, %v183
  %v185 = vpop.f32.mrb[0].mxu0
  %186 = vmatprep.mubr.f32.mxu0 0.0
  %187 = vmatmul.mubr.f32.gmra.mrb[0].mxu0 %v81
  %v188 = vpop.f32.mrb[0].mxu0
  %v189 = vadd.f32 %v56, %v188
  %v190 = vpop.f32.mrb[0].mxu0
  %191 = vdwg.mxu0
  %vm192 = vcmask 523264
  %193 = vst.msk [vmem:[#allocation2] sm:$0xff] %vm192, %v154
  %194 = vst.msk [vmem:[#allocation2 + $0x20] sm:$0xff] %vm192, %v159
  %195 = vst.msk [vmem:[#allocation2 + $0x40] sm:$0xff] %vm192, %v164
  %196 = vst.msk [vmem:[#allocation2 + $0x60] sm:$0xff] %vm192, %v169
  %197 = vst.msk [vmem:[#allocation2 + $0x80] sm:$0xff] %vm192, %v174
  %198 = vst.msk [vmem:[#allocation2 + $0xa0] sm:$0xff] %vm192, %v179
  %199 = vst.msk [vmem:[#allocation2 + $0xc0] sm:$0xff] %vm192, %v184
  %200 = vst.msk [vmem:[#allocation2 + $0xe0] sm:$0xff] %vm192, %v189
  %v201 = vld [vmem:[%s0 + $0x40] sm:$0xff]
  %v202 = vld [vmem:[%s0 + $0x48] sm:$0xff]
  %v203 = vld [vmem:[%s0 + $0x50] sm:$0xff]
  %v204 = vld [vmem:[%s0 + $0x58] sm:$0xff]
  %v205 = vld [vmem:[%s0 + $0x60] sm:$0xff]
  %v206 = vld [vmem:[%s0 + $0x68] sm:$0xff]
  %v207 = vld [vmem:[%s0 + $0x70] sm:$0xff]
  %v208 = vld [vmem:[%s0 + $0x78] sm:$0xff]
  %v210 = vsel %vm58, %v201, 0
  %v213 = vsel %vm58, %v202, 0
  %v216 = vsel %vm58, %v203, 0
  %v219 = vsel %vm58, %v204, 0
  %v222 = vsel %vm58, %v205, 0
  %v225 = vsel %vm58, %v206, 0
  %v228 = vsel %vm58, %v207, 0
  %v231 = vsel %vm58, %v208, 0
  %233 = vmatprep.subr.mxu0 0.0
  %234 = vmatpush1.msra.mxu0 %v38
  %235 = vmatprep.subr.mxu0 0.0
  %236 = vmatpush1.msra.mxu0 %v39
  %237 = vmatprep.subr.mxu0 0.0
  %238 = vmatpush1.msra.mxu0 %v40
  %239 = vmatprep.subr.mxu0 0.0
  %240 = vmatpush1.msra.mxu0 %v41
  %241 = vmatprep.subr.mxu0 0.0
  %242 = vmatpush1.msra.mxu0 %v85
  %243 = vmatprep.subr.mxu0 0.0
  %244 = vmatpush1.msra.mxu0 0.0
  %245 = vmatprep.subr.mxu0 0.0
  %246 = vmatpush1.msra.mxu0 0.0
  %247 = vmatprep.subr.mxu0 0.0
  %248 = vmatpush1.msra.mxu0 0.0
  %249 = vmatprep.subr.mxu0 0.0
  %250 = vmatpush1.msra.mxu0 0.0
  %251 = vmatprep.subr.mxu0 0.0
  %252 = vmatpush1.msra.mxu0 0.0
  %253 = vmatprep.subr.mxu0 0.0
  %254 = vmatpush1.msra.mxu0 0.0
  %255 = vmatprep.subr.mxu0 0.0
  %256 = vmatpush1.msra.mxu0 0.0
  %257 = vmatprep.subr.mxu0 0.0
  %258 = vmatpush1.msra.mxu0 0.0
  %259 = vmatprep.subr.mxu0 0.0
  %260 = vmatpush1.msra.mxu0 0.0
  %261 = vmatprep.subr.mxu0 0.0
  %262 = vmatpush1.msra.mxu0 0.0
  %263 = vmatprep.subr.mxu0 0.0
  %264 = vmatpush1.msra.mxu0 0.0
  %265 = vmatprep.subr.mxu0 0.0
  %266 = vmatpush1.msra.mxu0 0.0
  %267 = vmatprep.subr.mxu0 0.0
  %268 = vmatpush1.msra.mxu0 0.0
  %269 = vmatprep.subr.mxu0 0.0
  %270 = vmatpush1.msra.mxu0 0.0
  %271 = vmatprep.subr.mxu0 0.0
  %272 = vmatpush1.msra.mxu0 0.0
  %273 = vmatprep.subr.mxu0 0.0
  %274 = vmatpush1.msra.mxu0 0.0
  %275 = vmatprep.subr.mxu0 0.0
  %276 = vmatpush1.msra.mxu0 0.0
  %277 = vmatprep.subr.mxu0 0.0
  %278 = vmatpush1.msra.mxu0 0.0
  %279 = vmatprep.subr.mxu0 0.0
  %280 = vmatpush1.msra.mxu0 0.0
  %281 = vmatprep.subr.mxu0 0.0
  %282 = vmatpush1.msra.mxu0 0.0
  %283 = vmatprep.subr.mxu0 0.0
  %284 = vmatpush1.msra.mxu0 0.0
  %285 = vmatprep.subr.mxu0 0.0
  %286 = vmatpush1.msra.mxu0 0.0
  %287 = vmatprep.subr.mxu0 0.0
  %288 = vmatpush1.msra.mxu0 0.0
  %289 = vmatprep.subr.mxu0 0.0
  %290 = vmatpush1.msra.mxu0 0.0
  %291 = vmatprep.subr.mxu0 0.0
  %292 = vmatpush1.msra.mxu0 0.0
  %293 = vmatprep.subr.mxu0 0.0
  %294 = vmatpush1.msra.mxu0 0.0
  %295 = vmatprep.subr.mxu0 0.0
  %296 = vmatpush1.msra.mxu0 0.0
  %297 = vmatprep.mubr.f32.mxu0 0.0
  %298 = vmatmul.mubr.f32.gmra.mrb[0].mxu0 %v210
  %v299 = vpop.f32.mrb[0].mxu0
  %v300 = vadd.f32 %v56, %v299
  %v301 = vpop.f32.mrb[0].mxu0
  %302 = vmatprep.mubr.f32.mxu0 0.0
  %303 = vmatmul.mubr.f32.gmra.mrb[0].mxu0 %v213
  %v304 = vpop.f32.mrb[0].mxu0
  %v305 = vadd.f32 %v56, %v304
  %v306 = vpop.f32.mrb[0].mxu0
  %307 = vmatprep.mubr.f32.mxu0 0.0
  %308 = vmatmul.mubr.f32.gmra.mrb[0].mxu0 %v216
  %v309 = vpop.f32.mrb[0].mxu0
  %v310 = vadd.f32 %v56, %v309
  %v311 = vpop.f32.mrb[0].mxu0
  %312 = vmatprep.mubr.f32.mxu0 0.0
  %313 = vmatmul.mubr.f32.gmra.mrb[0].mxu0 %v219
  %v314 = vpop.f32.mrb[0].mxu0
  %v315 = vadd.f32 %v56, %v314
  %v316 = vpop.f32.mrb[0].mxu0
  %317 = vmatprep.mubr.f32.mxu0 0.0
  %318 = vmatmul.mubr.f32.gmra.mrb[0].mxu0 %v222
  %v319 = vpop.f32.mrb[0].mxu0
  %v320 = vadd.f32 %v56, %v319
  %v321 = vpop.f32.mrb[0].mxu0
  %322 = vmatprep.mubr.f32.mxu0 0.0
  %323 = vmatmul.mubr.f32.gmra.mrb[0].mxu0 %v225
  %v324 = vpop.f32.mrb[0].mxu0
  %v325 = vadd.f32 %v56, %v324
  %v326 = vpop.f32.mrb[0].mxu0
  %327 = vmatprep.mubr.f32.mxu0 0.0
  %328 = vmatmul.mubr.f32.gmra.mrb[0].mxu0 %v228
  %v329 = vpop.f32.mrb[0].mxu0
  %v330 = vadd.f32 %v56, %v329
  %v331 = vpop.f32.mrb[0].mxu0
  %332 = vmatprep.mubr.f32.mxu0 0.0
  %333 = vmatmul.mubr.f32.gmra.mrb[0].mxu0 %v231
  %v334 = vpop.f32.mrb[0].mxu0
  %v335 = vadd.f32 %v56, %v334
  %v336 = vpop.f32.mrb[0].mxu0
  %337 = vdwg.mxu0
  %346 = vrot.lane.b32.xlu0 %v300, 64
  %v347 = vpop.permute.xlu0 %346
  %348 = vrot.lane.b32.xlu0 %v305, 64
  %v349 = vpop.permute.xlu0 %348
  %350 = vrot.lane.b32.xlu0 %v310, 64
  %v351 = vpop.permute.xlu0 %350
  %352 = vrot.lane.b32.xlu0 %v315, 64
  %v353 = vpop.permute.xlu0 %352
  %354 = vrot.lane.b32.xlu0 %v320, 64
  %v355 = vpop.permute.xlu0 %354
  %356 = vrot.lane.b32.xlu0 %v325, 64
  %v357 = vpop.permute.xlu0 %356
  %358 = vrot.lane.b32.xlu0 %v330, 64
  %v359 = vpop.permute.xlu0 %358
  %360 = vrot.lane.b32.xlu0 %v335, 64
  %v361 = vpop.permute.xlu0 %360
  %vm370 = vcmask 1048064
  %371 = vst.msk [vmem:[#allocation2] sm:$0xff] %vm370, %v347
  %372 = vst.msk [vmem:[#allocation2 + $0x20] sm:$0xff] %vm370, %v349
  %373 = vst.msk [vmem:[#allocation2 + $0x40] sm:$0xff] %vm370, %v351
  %374 = vst.msk [vmem:[#allocation2 + $0x60] sm:$0xff] %vm370, %v353
  %375 = vst.msk [vmem:[#allocation2 + $0x80] sm:$0xff] %vm370, %v355
  %376 = vst.msk [vmem:[#allocation2 + $0xa0] sm:$0xff] %vm370, %v357
  %377 = vst.msk [vmem:[#allocation2 + $0xc0] sm:$0xff] %vm370, %v359
  %378 = vst.msk [vmem:[#allocation2 + $0xe0] sm:$0xff] %vm370, %v361
  %v379 = vld [vmem:[%s0 + $0x80] sm:$0xff]
  %v380 = vld [vmem:[%s0 + $0x88] sm:$0xff]
  %v381 = vld [vmem:[%s0 + $0x90] sm:$0xff]
  %v382 = vld [vmem:[%s0 + $0x98] sm:$0xff]
  %v383 = vld [vmem:[%s0 + $0xa0] sm:$0xff]
  %v384 = vld [vmem:[%s0 + $0xa8] sm:$0xff]
  %v385 = vld [vmem:[%s0 + $0xb0] sm:$0xff]
  %v386 = vld [vmem:[%s0 + $0xb8] sm:$0xff]
  %v388 = vsel %vm58, %v379, 0
  %v391 = vsel %vm58, %v380, 0
  %v394 = vsel %vm58, %v381, 0
  %v397 = vsel %vm58, %v382, 0
  %v400 = vsel %vm58, %v383, 0
  %v403 = vsel %vm58, %v384, 0
  %v406 = vsel %vm58, %v385, 0
  %v409 = vsel %vm58, %v386, 0
  %411 = vmatprep.subr.mxu0 0.0
  %412 = vmatpush1.msra.mxu0 %v38
  %413 = vmatprep.subr.mxu0 0.0
  %414 = vmatpush1.msra.mxu0 %v39
  %415 = vmatprep.subr.mxu0 0.0
  %416 = vmatpush1.msra.mxu0 %v40
  %417 = vmatprep.subr.mxu0 0.0
  %418 = vmatpush1.msra.mxu0 %v41
  %419 = vmatprep.subr.mxu0 0.0
  %420 = vmatpush1.msra.mxu0 %v85
  %421 = vmatprep.subr.mxu0 0.0
  %422 = vmatpush1.msra.mxu0 0.0
  %423 = vmatprep.subr.mxu0 0.0
  %424 = vmatpush1.msra.mxu0 0.0
  %425 = vmatprep.subr.mxu0 0.0
  %426 = vmatpush1.msra.mxu0 0.0
  %427 = vmatprep.subr.mxu0 0.0
  %428 = vmatpush1.msra.mxu0 0.0
  %429 = vmatprep.subr.mxu0 0.0
  %430 = vmatpush1.msra.mxu0 0.0
  %431 = vmatprep.subr.mxu0 0.0
  %432 = vmatpush1.msra.mxu0 0.0
  %433 = vmatprep.subr.mxu0 0.0
  %434 = vmatpush1.msra.mxu0 0.0
  %435 = vmatprep.subr.mxu0 0.0
  %436 = vmatpush1.msra.mxu0 0.0
  %437 = vmatprep.subr.mxu0 0.0
  %438 = vmatpush1.msra.mxu0 0.0
  %439 = vmatprep.subr.mxu0 0.0
  %440 = vmatpush1.msra.mxu0 0.0
  %441 = vmatprep.subr.mxu0 0.0
  %442 = vmatpush1.msra.mxu0 0.0
  %443 = vmatprep.subr.mxu0 0.0
  %444 = vmatpush1.msra.mxu0 0.0
  %445 = vmatprep.subr.mxu0 0.0
  %446 = vmatpush1.msra.mxu0 0.0
  %447 = vmatprep.subr.mxu0 0.0
  %448 = vmatpush1.msra.mxu0 0.0
  %449 = vmatprep.subr.mxu0 0.0
  %450 = vmatpush1.msra.mxu0 0.0
  %451 = vmatprep.subr.mxu0 0.0
  %452 = vmatpush1.msra.mxu0 0.0
  %453 = vmatprep.subr.mxu0 0.0
  %454 = vmatpush1.msra.mxu0 0.0
  %455 = vmatprep.subr.mxu0 0.0
  %456 = vmatpush1.msra.mxu0 0.0
  %457 = vmatprep.subr.mxu0 0.0
  %458 = vmatpush1.msra.mxu0 0.0
  %459 = vmatprep.subr.mxu0 0.0
  %460 = vmatpush1.msra.mxu0 0.0
  %461 = vmatprep.subr.mxu0 0.0
  %462 = vmatpush1.msra.mxu0 0.0
  %463 = vmatprep.subr.mxu0 0.0
  %464 = vmatpush1.msra.mxu0 0.0
  %465 = vmatprep.subr.mxu0 0.0
  %466 = vmatpush1.msra.mxu0 0.0
  %467 = vmatprep.subr.mxu0 0.0
  %468 = vmatpush1.msra.mxu0 0.0
  %469 = vmatprep.subr.mxu0 0.0
  %470 = vmatpush1.msra.mxu0 0.0
  %471 = vmatprep.subr.mxu0 0.0
  %472 = vmatpush1.msra.mxu0 0.0
  %473 = vmatprep.subr.mxu0 0.0
  %474 = vmatpush1.msra.mxu0 0.0
  %475 = vmatprep.mubr.f32.mxu0 0.0
  %476 = vmatmul.mubr.f32.gmra.mrb[0].mxu0 %v388
  %v477 = vpop.f32.mrb[0].mxu0
  %v478 = vadd.f32 %v56, %v477
  %v479 = vpop.f32.mrb[0].mxu0
  %480 = vmatprep.mubr.f32.mxu0 0.0
  %481 = vmatmul.mubr.f32.gmra.mrb[0].mxu0 %v391
  %v482 = vpop.f32.mrb[0].mxu0
  %v483 = vadd.f32 %v56, %v482
  %v484 = vpop.f32.mrb[0].mxu0
  %485 = vmatprep.mubr.f32.mxu0 0.0
  %486 = vmatmul.mubr.f32.gmra.mrb[0].mxu0 %v394
  %v487 = vpop.f32.mrb[0].mxu0
  %v488 = vadd.f32 %v56, %v487
  %v489 = vpop.f32.mrb[0].mxu0
  %490 = vmatprep.mubr.f32.mxu0 0.0
  %491 = vmatmul.mubr.f32.gmra.mrb[0].mxu0 %v397
  %v492 = vpop.f32.mrb[0].mxu0
  %v493 = vadd.f32 %v56, %v492
  %v494 = vpop.f32.mrb[0].mxu0
  %495 = vmatprep.mubr.f32.mxu0 0.0
  %496 = vmatmul.mubr.f32.gmra.mrb[0].mxu0 %v400
  %v497 = vpop.f32.mrb[0].mxu0
  %v498 = vadd.f32 %v56, %v497
  %v499 = vpop.f32.mrb[0].mxu0
  %500 = vmatprep.mubr.f32.mxu0 0.0
  %501 = vmatmul.mubr.f32.gmra.mrb[0].mxu0 %v403
  %v502 = vpop.f32.mrb[0].mxu0
  %v503 = vadd.f32 %v56, %v502
  %v504 = vpop.f32.mrb[0].mxu0
  %505 = vmatprep.mubr.f32.mxu0 0.0
  %506 = vmatmul.mubr.f32.gmra.mrb[0].mxu0 %v406
  %v507 = vpop.f32.mrb[0].mxu0
  %v508 = vadd.f32 %v56, %v507
  %v509 = vpop.f32.mrb[0].mxu0
  %510 = vmatprep.mubr.f32.mxu0 0.0
  %511 = vmatmul.mubr.f32.gmra.mrb[0].mxu0 %v409
  %v512 = vpop.f32.mrb[0].mxu0
  %v513 = vadd.f32 %v56, %v512
  %v514 = vpop.f32.mrb[0].mxu0
  %515 = vdwg.mxu0
  %516 = vst.msk [vmem:[#allocation2 + $0x8] sm:$0xff] %vm192, %v478
  %517 = vst.msk [vmem:[#allocation2 + $0x28] sm:$0xff] %vm192, %v483
  %518 = vst.msk [vmem:[#allocation2 + $0x48] sm:$0xff] %vm192, %v488
  %519 = vst.msk [vmem:[#allocation2 + $0x68] sm:$0xff] %vm192, %v493
  %520 = vst.msk [vmem:[#allocation2 + $0x88] sm:$0xff] %vm192, %v498
  %521 = vst.msk [vmem:[#allocation2 + $0xa8] sm:$0xff] %vm192, %v503
  %522 = vst.msk [vmem:[#allocation2 + $0xc8] sm:$0xff] %vm192, %v508
  %523 = vst.msk [vmem:[#allocation2 + $0xe8] sm:$0xff] %vm192, %v513
  %v524 = vld [vmem:[%s0 + $0xc0] sm:$0xff]
  %v525 = vld [vmem:[%s0 + $0xc8] sm:$0xff]
  %v526 = vld [vmem:[%s0 + $0xd0] sm:$0xff]
  %v527 = vld [vmem:[%s0 + $0xd8] sm:$0xff]
  %v528 = vld [vmem:[%s0 + $0xe0] sm:$0xff]
  %v529 = vld [vmem:[%s0 + $0xe8] sm:$0xff]
  %v530 = vld [vmem:[%s0 + $0xf0] sm:$0xff]
  %v531 = vld [vmem:[%s0 + $0xf8] sm:$0xff]
  %v533 = vsel %vm58, %v524, 0
  %v536 = vsel %vm58, %v525, 0
  %v539 = vsel %vm58, %v526, 0
  %v542 = vsel %vm58, %v527, 0
  %v545 = vsel %vm58, %v528, 0
  %v548 = vsel %vm58, %v529, 0
  %v551 = vsel %vm58, %v530, 0
  %v554 = vsel %vm58, %v531, 0
  %556 = vmatprep.subr.mxu0 0.0
  %557 = vmatpush1.msra.mxu0 %v38
  %558 = vmatprep.subr.mxu0 0.0
  %559 = vmatpush1.msra.mxu0 %v39
  %560 = vmatprep.subr.mxu0 0.0
  %561 = vmatpush1.msra.mxu0 %v40
  %562 = vmatprep.subr.mxu0 0.0
  %563 = vmatpush1.msra.mxu0 %v41
  %564 = vmatprep.subr.mxu0 0.0
  %565 = vmatpush1.msra.mxu0 %v85
  %566 = vmatprep.subr.mxu0 0.0
  %567 = vmatpush1.msra.mxu0 0.0
  %568 = vmatprep.subr.mxu0 0.0
  %569 = vmatpush1.msra.mxu0 0.0
  %570 = vmatprep.subr.mxu0 0.0
  %571 = vmatpush1.msra.mxu0 0.0
  %572 = vmatprep.subr.mxu0 0.0
  %573 = vmatpush1.msra.mxu0 0.0
  %574 = vmatprep.subr.mxu0 0.0
  %575 = vmatpush1.msra.mxu0 0.0
  %576 = vmatprep.subr.mxu0 0.0
  %577 = vmatpush1.msra.mxu0 0.0
  %578 = vmatprep.subr.mxu0 0.0
  %579 = vmatpush1.msra.mxu0 0.0
  %580 = vmatprep.subr.mxu0 0.0
  %581 = vmatpush1.msra.mxu0 0.0
  %582 = vmatprep.subr.mxu0 0.0
  %583 = vmatpush1.msra.mxu0 0.0
  %584 = vmatprep.subr.mxu0 0.0
  %585 = vmatpush1.msra.mxu0 0.0
  %586 = vmatprep.subr.mxu0 0.0
  %587 = vmatpush1.msra.mxu0 0.0
  %588 = vmatprep.subr.mxu0 0.0
  %589 = vmatpush1.msra.mxu0 0.0
  %590 = vmatprep.subr.mxu0 0.0
  %591 = vmatpush1.msra.mxu0 0.0
  %592 = vmatprep.subr.mxu0 0.0
  %593 = vmatpush1.msra.mxu0 0.0
  %594 = vmatprep.subr.mxu0 0.0
  %595 = vmatpush1.msra.mxu0 0.0
  %596 = vmatprep.subr.mxu0 0.0
  %597 = vmatpush1.msra.mxu0 0.0
  %598 = vmatprep.subr.mxu0 0.0
  %599 = vmatpush1.msra.mxu0 0.0
  %600 = vmatprep.subr.mxu0 0.0
  %601 = vmatpush1.msra.mxu0 0.0
  %602 = vmatprep.subr.mxu0 0.0
  %603 = vmatpush1.msra.mxu0 0.0
  %604 = vmatprep.subr.mxu0 0.0
  %605 = vmatpush1.msra.mxu0 0.0
  %606 = vmatprep.subr.mxu0 0.0
  %607 = vmatpush1.msra.mxu0 0.0
  %608 = vmatprep.subr.mxu0 0.0
  %609 = vmatpush1.msra.mxu0 0.0
  %610 = vmatprep.subr.mxu0 0.0
  %611 = vmatpush1.msra.mxu0 0.0
  %612 = vmatprep.subr.mxu0 0.0
  %613 = vmatpush1.msra.mxu0 0.0
  %614 = vmatprep.subr.mxu0 0.0
  %615 = vmatpush1.msra.mxu0 0.0
  %616 = vmatprep.subr.mxu0 0.0
  %617 = vmatpush1.msra.mxu0 0.0
  %618 = vmatprep.subr.mxu0 0.0
  %619 = vmatpush1.msra.mxu0 0.0
  %620 = vmatprep.mubr.f32.mxu0 0.0
  %621 = vmatmul.mubr.f32.gmra.mrb[0].mxu0 %v533
  %v622 = vpop.f32.mrb[0].mxu0
  %v623 = vadd.f32 %v56, %v622
  %v624 = vpop.f32.mrb[0].mxu0
  %625 = vmatprep.mubr.f32.mxu0 0.0
  %626 = vmatmul.mubr.f32.gmra.mrb[0].mxu0 %v536
  %v627 = vpop.f32.mrb[0].mxu0
  %v628 = vadd.f32 %v56, %v627
  %v629 = vpop.f32.mrb[0].mxu0
  %630 = vmatprep.mubr.f32.mxu0 0.0
  %631 = vmatmul.mubr.f32.gmra.mrb[0].mxu0 %v539
  %v632 = vpop.f32.mrb[0].mxu0
  %v633 = vadd.f32 %v56, %v632
  %v634 = vpop.f32.mrb[0].mxu0
  %635 = vmatprep.mubr.f32.mxu0 0.0
  %636 = vmatmul.mubr.f32.gmra.mrb[0].mxu0 %v542
  %v637 = vpop.f32.mrb[0].mxu0
  %v638 = vadd.f32 %v56, %v637
  %v639 = vpop.f32.mrb[0].mxu0
  %640 = vmatprep.mubr.f32.mxu0 0.0
  %641 = vmatmul.mubr.f32.gmra.mrb[0].mxu0 %v545
  %v642 = vpop.f32.mrb[0].mxu0
  %v643 = vadd.f32 %v56, %v642
  %v644 = vpop.f32.mrb[0].mxu0
  %645 = vmatprep.mubr.f32.mxu0 0.0
  %646 = vmatmul.mubr.f32.gmra.mrb[0].mxu0 %v548
  %v647 = vpop.f32.mrb[0].mxu0
  %v648 = vadd.f32 %v56, %v647
  %v649 = vpop.f32.mrb[0].mxu0
  %650 = vmatprep.mubr.f32.mxu0 0.0
  %651 = vmatmul.mubr.f32.gmra.mrb[0].mxu0 %v551
  %v652 = vpop.f32.mrb[0].mxu0
  %v653 = vadd.f32 %v56, %v652
  %v654 = vpop.f32.mrb[0].mxu0
  %655 = vmatprep.mubr.f32.mxu0 0.0
  %656 = vmatmul.mubr.f32.gmra.mrb[0].mxu0 %v554
  %v657 = vpop.f32.mrb[0].mxu0
  %v658 = vadd.f32 %v56, %v657
  %v659 = vpop.f32.mrb[0].mxu0
  %660 = vdwg.mxu0
  %669 = vrot.lane.b32.xlu0 %v623, 64
  %v670 = vpop.permute.xlu0 %669
  %671 = vrot.lane.b32.xlu0 %v628, 64
  %v672 = vpop.permute.xlu0 %671
  %673 = vrot.lane.b32.xlu0 %v633, 64
  %v674 = vpop.permute.xlu0 %673
  %675 = vrot.lane.b32.xlu0 %v638, 64
  %v676 = vpop.permute.xlu0 %675
  %677 = vrot.lane.b32.xlu0 %v643, 64
  %v678 = vpop.permute.xlu0 %677
  %679 = vrot.lane.b32.xlu0 %v648, 64
  %v680 = vpop.permute.xlu0 %679
  %681 = vrot.lane.b32.xlu0 %v653, 64
  %v682 = vpop.permute.xlu0 %681
  %683 = vrot.lane.b32.xlu0 %v658, 64
  %v684 = vpop.permute.xlu0 %683
  %693 = vst.msk [vmem:[#allocation2 + $0x8] sm:$0xff] %vm370, %v670
  %694 = vst.msk [vmem:[#allocation2 + $0x28] sm:$0xff] %vm370, %v672
  %695 = vst.msk [vmem:[#allocation2 + $0x48] sm:$0xff] %vm370, %v674
  %696 = vst.msk [vmem:[#allocation2 + $0x68] sm:$0xff] %vm370, %v676
  %697 = vst.msk [vmem:[#allocation2 + $0x88] sm:$0xff] %vm370, %v678
  %698 = vst.msk [vmem:[#allocation2 + $0xa8] sm:$0xff] %vm370, %v680
  %699 = vst.msk [vmem:[#allocation2 + $0xc8] sm:$0xff] %vm370, %v682
  %700 = vst.msk [vmem:[#allocation2 + $0xe8] sm:$0xff] %vm370, %v684
  %v701 = vld [vmem:[%s0 + $0x100] sm:$0xff]
  %v702 = vld [vmem:[%s0 + $0x108] sm:$0xff]
  %v703 = vld [vmem:[%s0 + $0x110] sm:$0xff]
  %v704 = vld [vmem:[%s0 + $0x118] sm:$0xff]
  %v705 = vld [vmem:[%s0 + $0x120] sm:$0xff]
  %v706 = vld [vmem:[%s0 + $0x128] sm:$0xff]
  %v707 = vld [vmem:[%s0 + $0x130] sm:$0xff]
  %v708 = vld [vmem:[%s0 + $0x138] sm:$0xff]
  %v710 = vsel %vm58, %v701, 0
  %v713 = vsel %vm58, %v702, 0
  %v716 = vsel %vm58, %v703, 0
  %v719 = vsel %vm58, %v704, 0
  %v722 = vsel %vm58, %v705, 0
  %v725 = vsel %vm58, %v706, 0
  %v728 = vsel %vm58, %v707, 0
  %v731 = vsel %vm58, %v708, 0
  %733 = vmatprep.subr.mxu0 0.0
  %734 = vmatpush1.msra.mxu0 %v38
  %735 = vmatprep.subr.mxu0 0.0
  %736 = vmatpush1.msra.mxu0 %v39
  %737 = vmatprep.subr.mxu0 0.0
  %738 = vmatpush1.msra.mxu0 %v40
  %739 = vmatprep.subr.mxu0 0.0
  %740 = vmatpush1.msra.mxu0 %v41
  %741 = vmatprep.subr.mxu0 0.0
  %742 = vmatpush1.msra.mxu0 %v85
  %743 = vmatprep.subr.mxu0 0.0
  %744 = vmatpush1.msra.mxu0 0.0
  %745 = vmatprep.subr.mxu0 0.0
  %746 = vmatpush1.msra.mxu0 0.0
  %747 = vmatprep.subr.mxu0 0.0
  %748 = vmatpush1.msra.mxu0 0.0
  %749 = vmatprep.subr.mxu0 0.0
  %750 = vmatpush1.msra.mxu0 0.0
  %751 = vmatprep.subr.mxu0 0.0
  %752 = vmatpush1.msra.mxu0 0.0
  %753 = vmatprep.subr.mxu0 0.0
  %754 = vmatpush1.msra.mxu0 0.0
  %755 = vmatprep.subr.mxu0 0.0
  %756 = vmatpush1.msra.mxu0 0.0
  %757 = vmatprep.subr.mxu0 0.0
  %758 = vmatpush1.msra.mxu0 0.0
  %759 = vmatprep.subr.mxu0 0.0
  %760 = vmatpush1.msra.mxu0 0.0
  %761 = vmatprep.subr.mxu0 0.0
  %762 = vmatpush1.msra.mxu0 0.0
  %763 = vmatprep.subr.mxu0 0.0
  %764 = vmatpush1.msra.mxu0 0.0
  %765 = vmatprep.subr.mxu0 0.0
  %766 = vmatpush1.msra.mxu0 0.0
  %767 = vmatprep.subr.mxu0 0.0
  %768 = vmatpush1.msra.mxu0 0.0
  %769 = vmatprep.subr.mxu0 0.0
  %770 = vmatpush1.msra.mxu0 0.0
  %771 = vmatprep.subr.mxu0 0.0
  %772 = vmatpush1.msra.mxu0 0.0
  %773 = vmatprep.subr.mxu0 0.0
  %774 = vmatpush1.msra.mxu0 0.0
  %775 = vmatprep.subr.mxu0 0.0
  %776 = vmatpush1.msra.mxu0 0.0
  %777 = vmatprep.subr.mxu0 0.0
  %778 = vmatpush1.msra.mxu0 0.0
  %779 = vmatprep.subr.mxu0 0.0
  %780 = vmatpush1.msra.mxu0 0.0
  %781 = vmatprep.subr.mxu0 0.0
  %782 = vmatpush1.msra.mxu0 0.0
  %783 = vmatprep.subr.mxu0 0.0
  %784 = vmatpush1.msra.mxu0 0.0
  %785 = vmatprep.subr.mxu0 0.0
  %786 = vmatpush1.msra.mxu0 0.0
  %787 = vmatprep.subr.mxu0 0.0
  %788 = vmatpush1.msra.mxu0 0.0
  %789 = vmatprep.subr.mxu0 0.0
  %790 = vmatpush1.msra.mxu0 0.0
  %791 = vmatprep.subr.mxu0 0.0
  %792 = vmatpush1.msra.mxu0 0.0
  %793 = vmatprep.subr.mxu0 0.0
  %794 = vmatpush1.msra.mxu0 0.0
  %795 = vmatprep.subr.mxu0 0.0
  %796 = vmatpush1.msra.mxu0 0.0
  %797 = vmatprep.mubr.f32.mxu0 0.0
  %798 = vmatmul.mubr.f32.gmra.mrb[0].mxu0 %v710
  %v799 = vpop.f32.mrb[0].mxu0
  %v800 = vadd.f32 %v56, %v799
  %v801 = vpop.f32.mrb[0].mxu0
  %802 = vmatprep.mubr.f32.mxu0 0.0
  %803 = vmatmul.mubr.f32.gmra.mrb[0].mxu0 %v713
  %v804 = vpop.f32.mrb[0].mxu0
  %v805 = vadd.f32 %v56, %v804
  %v806 = vpop.f32.mrb[0].mxu0
  %807 = vmatprep.mubr.f32.mxu0 0.0
  %808 = vmatmul.mubr.f32.gmra.mrb[0].mxu0 %v716
  %v809 = vpop.f32.mrb[0].mxu0
  %v810 = vadd.f32 %v56, %v809
  %v811 = vpop.f32.mrb[0].mxu0
  %812 = vmatprep.mubr.f32.mxu0 0.0
  %813 = vmatmul.mubr.f32.gmra.mrb[0].mxu0 %v719
  %v814 = vpop.f32.mrb[0].mxu0
  %v815 = vadd.f32 %v56, %v814
  %v816 = vpop.f32.mrb[0].mxu0
  %817 = vmatprep.mubr.f32.mxu0 0.0
  %818 = vmatmul.mubr.f32.gmra.mrb[0].mxu0 %v722
  %v819 = vpop.f32.mrb[0].mxu0
  %v820 = vadd.f32 %v56, %v819
  %v821 = vpop.f32.mrb[0].mxu0
  %822 = vmatprep.mubr.f32.mxu0 0.0
  %823 = vmatmul.mubr.f32.gmra.mrb[0].mxu0 %v725
  %v824 = vpop.f32.mrb[0].mxu0
  %v825 = vadd.f32 %v56, %v824
  %v826 = vpop.f32.mrb[0].mxu0
  %827 = vmatprep.mubr.f32.mxu0 0.0
  %828 = vmatmul.mubr.f32.gmra.mrb[0].mxu0 %v728
  %v829 = vpop.f32.mrb[0].mxu0
  %v830 = vadd.f32 %v56, %v829
  %v831 = vpop.f32.mrb[0].mxu0
  %832 = vmatprep.mubr.f32.mxu0 0.0
  %833 = vmatmul.mubr.f32.gmra.mrb[0].mxu0 %v731
  %v834 = vpop.f32.mrb[0].mxu0
  %v835 = vadd.f32 %v56, %v834
  %v836 = vpop.f32.mrb[0].mxu0
  %837 = vdwg.mxu0
  %838 = vst.msk [vmem:[#allocation2 + $0x10] sm:$0xff] %vm192, %v800
  %839 = vst.msk [vmem:[#allocation2 + $0x30] sm:$0xff] %vm192, %v805
  %840 = vst.msk [vmem:[#allocation2 + $0x50] sm:$0xff] %vm192, %v810
  %841 = vst.msk [vmem:[#allocation2 + $0x70] sm:$0xff] %vm192, %v815
  %842 = vst.msk [vmem:[#allocation2 + $0x90] sm:$0xff] %vm192, %v820
  %843 = vst.msk [vmem:[#allocation2 + $0xb0] sm:$0xff] %vm192, %v825
  %844 = vst.msk [vmem:[#allocation2 + $0xd0] sm:$0xff] %vm192, %v830
  %845 = vst.msk [vmem:[#allocation2 + $0xf0] sm:$0xff] %vm192, %v835
  %v846 = vld [vmem:[%s0 + $0x140] sm:$0xff]
  %v847 = vld [vmem:[%s0 + $0x148] sm:$0xff]
  %v848 = vld [vmem:[%s0 + $0x150] sm:$0xff]
  %v849 = vld [vmem:[%s0 + $0x158] sm:$0xff]
  %v850 = vld [vmem:[%s0 + $0x160] sm:$0xff]
  %v851 = vld [vmem:[%s0 + $0x168] sm:$0xff]
  %v852 = vld [vmem:[%s0 + $0x170] sm:$0xff]
  %v853 = vld [vmem:[%s0 + $0x178] sm:$0xff]
  %v855 = vsel %vm58, %v846, 0
  %v858 = vsel %vm58, %v847, 0
  %v861 = vsel %vm58, %v848, 0
  %v864 = vsel %vm58, %v849, 0
  %v867 = vsel %vm58, %v850, 0
  %v870 = vsel %vm58, %v851, 0
  %v873 = vsel %vm58, %v852, 0
  %v876 = vsel %vm58, %v853, 0
  %878 = vmatprep.subr.mxu0 0.0
  %879 = vmatpush1.msra.mxu0 %v38
  %880 = vmatprep.subr.mxu0 0.0
  %881 = vmatpush1.msra.mxu0 %v39
  %882 = vmatprep.subr.mxu0 0.0
  %883 = vmatpush1.msra.mxu0 %v40
  %884 = vmatprep.subr.mxu0 0.0
  %885 = vmatpush1.msra.mxu0 %v41
  %886 = vmatprep.subr.mxu0 0.0
  %887 = vmatpush1.msra.mxu0 %v85
  %888 = vmatprep.subr.mxu0 0.0
  %889 = vmatpush1.msra.mxu0 0.0
  %890 = vmatprep.subr.mxu0 0.0
  %891 = vmatpush1.msra.mxu0 0.0
  %892 = vmatprep.subr.mxu0 0.0
  %893 = vmatpush1.msra.mxu0 0.0
  %894 = vmatprep.subr.mxu0 0.0
  %895 = vmatpush1.msra.mxu0 0.0
  %896 = vmatprep.subr.mxu0 0.0
  %897 = vmatpush1.msra.mxu0 0.0
  %898 = vmatprep.subr.mxu0 0.0
  %899 = vmatpush1.msra.mxu0 0.0
  %900 = vmatprep.subr.mxu0 0.0
  %901 = vmatpush1.msra.mxu0 0.0
  %902 = vmatprep.subr.mxu0 0.0
  %903 = vmatpush1.msra.mxu0 0.0
  %904 = vmatprep.subr.mxu0 0.0
  %905 = vmatpush1.msra.mxu0 0.0
  %906 = vmatprep.subr.mxu0 0.0
  %907 = vmatpush1.msra.mxu0 0.0
  %908 = vmatprep.subr.mxu0 0.0
  %909 = vmatpush1.msra.mxu0 0.0
  %910 = vmatprep.subr.mxu0 0.0
  %911 = vmatpush1.msra.mxu0 0.0
  %912 = vmatprep.subr.mxu0 0.0
  %913 = vmatpush1.msra.mxu0 0.0
  %914 = vmatprep.subr.mxu0 0.0
  %915 = vmatpush1.msra.mxu0 0.0
  %916 = vmatprep.subr.mxu0 0.0
  %917 = vmatpush1.msra.mxu0 0.0
  %918 = vmatprep.subr.mxu0 0.0
  %919 = vmatpush1.msra.mxu0 0.0
  %920 = vmatprep.subr.mxu0 0.0
  %921 = vmatpush1.msra.mxu0 0.0
  %922 = vmatprep.subr.mxu0 0.0
  %923 = vmatpush1.msra.mxu0 0.0
  %924 = vmatprep.subr.mxu0 0.0
  %925 = vmatpush1.msra.mxu0 0.0
  %926 = vmatprep.subr.mxu0 0.0
  %927 = vmatpush1.msra.mxu0 0.0
  %928 = vmatprep.subr.mxu0 0.0
  %929 = vmatpush1.msra.mxu0 0.0
  %930 = vmatprep.subr.mxu0 0.0
  %931 = vmatpush1.msra.mxu0 0.0
  %932 = vmatprep.subr.mxu0 0.0
  %933 = vmatpush1.msra.mxu0 0.0
  %934 = vmatprep.subr.mxu0 0.0
  %935 = vmatpush1.msra.mxu0 0.0
  %936 = vmatprep.subr.mxu0 0.0
  %937 = vmatpush1.msra.mxu0 0.0
  %938 = vmatprep.subr.mxu0 0.0
  %939 = vmatpush1.msra.mxu0 0.0
  %940 = vmatprep.subr.mxu0 0.0
  %941 = vmatpush1.msra.mxu0 0.0
  %942 = vmatprep.mubr.f32.mxu0 0.0
  %943 = vmatmul.mubr.f32.gmra.mrb[0].mxu0 %v855
  %v944 = vpop.f32.mrb[0].mxu0
  %v945 = vadd.f32 %v56, %v944
  %v946 = vpop.f32.mrb[0].mxu0
  %947 = vmatprep.mubr.f32.mxu0 0.0
  %948 = vmatmul.mubr.f32.gmra.mrb[0].mxu0 %v858
  %v949 = vpop.f32.mrb[0].mxu0
  %v950 = vadd.f32 %v56, %v949
  %v951 = vpop.f32.mrb[0].mxu0
  %952 = vmatprep.mubr.f32.mxu0 0.0
  %953 = vmatmul.mubr.f32.gmra.mrb[0].mxu0 %v861
  %v954 = vpop.f32.mrb[0].mxu0
  %v955 = vadd.f32 %v56, %v954
  %v956 = vpop.f32.mrb[0].mxu0
  %957 = vmatprep.mubr.f32.mxu0 0.0
  %958 = vmatmul.mubr.f32.gmra.mrb[0].mxu0 %v864
  %v959 = vpop.f32.mrb[0].mxu0
  %v960 = vadd.f32 %v56, %v959
  %v961 = vpop.f32.mrb[0].mxu0
  %962 = vmatprep.mubr.f32.mxu0 0.0
  %963 = vmatmul.mubr.f32.gmra.mrb[0].mxu0 %v867
  %v964 = vpop.f32.mrb[0].mxu0
  %v965 = vadd.f32 %v56, %v964
  %v966 = vpop.f32.mrb[0].mxu0
  %967 = vmatprep.mubr.f32.mxu0 0.0
  %968 = vmatmul.mubr.f32.gmra.mrb[0].mxu0 %v870
  %v969 = vpop.f32.mrb[0].mxu0
  %v970 = vadd.f32 %v56, %v969
  %v971 = vpop.f32.mrb[0].mxu0
  %972 = vmatprep.mubr.f32.mxu0 0.0
  %973 = vmatmul.mubr.f32.gmra.mrb[0].mxu0 %v873
  %v974 = vpop.f32.mrb[0].mxu0
  %v975 = vadd.f32 %v56, %v974
  %v976 = vpop.f32.mrb[0].mxu0
  %977 = vmatprep.mubr.f32.mxu0 0.0
  %978 = vmatmul.mubr.f32.gmra.mrb[0].mxu0 %v876
  %v979 = vpop.f32.mrb[0].mxu0
  %v980 = vadd.f32 %v56, %v979
  %v981 = vpop.f32.mrb[0].mxu0
  %982 = vdwg.mxu0
  %991 = vrot.lane.b32.xlu0 %v945, 64
  %v992 = vpop.permute.xlu0 %991
  %993 = vrot.lane.b32.xlu0 %v950, 64
  %v994 = vpop.permute.xlu0 %993
  %995 = vrot.lane.b32.xlu0 %v955, 64
  %v996 = vpop.permute.xlu0 %995
  %997 = vrot.lane.b32.xlu0 %v960, 64
  %v998 = vpop.permute.xlu0 %997
  %999 = vrot.lane.b32.xlu0 %v965, 64
  %v1000 = vpop.permute.xlu0 %999
  %1001 = vrot.lane.b32.xlu0 %v970, 64
  %v1002 = vpop.permute.xlu0 %1001
  %1003 = vrot.lane.b32.xlu0 %v975, 64
  %v1004 = vpop.permute.xlu0 %1003
  %1005 = vrot.lane.b32.xlu0 %v980, 64
  %v1006 = vpop.permute.xlu0 %1005
  %1015 = vst.msk [vmem:[#allocation2 + $0x10] sm:$0xff] %vm370, %v992
  %1016 = vst.msk [vmem:[#allocation2 + $0x30] sm:$0xff] %vm370, %v994
  %1017 = vst.msk [vmem:[#allocation2 + $0x50] sm:$0xff] %vm370, %v996
  %1018 = vst.msk [vmem:[#allocation2 + $0x70] sm:$0xff] %vm370, %v998
  %1019 = vst.msk [vmem:[#allocation2 + $0x90] sm:$0xff] %vm370, %v1000
  %1020 = vst.msk [vmem:[#allocation2 + $0xb0] sm:$0xff] %vm370, %v1002
  %1021 = vst.msk [vmem:[#allocation2 + $0xd0] sm:$0xff] %vm370, %v1004
  %1022 = vst.msk [vmem:[#allocation2 + $0xf0] sm:$0xff] %vm370, %v1006
  %v1023 = vld [vmem:[%s0 + $0x180] sm:$0xff]
  %v1024 = vld [vmem:[%s0 + $0x188] sm:$0xff]
  %v1025 = vld [vmem:[%s0 + $0x190] sm:$0xff]
  %v1026 = vld [vmem:[%s0 + $0x198] sm:$0xff]
  %v1027 = vld [vmem:[%s0 + $0x1a0] sm:$0xff]
  %v1028 = vld [vmem:[%s0 + $0x1a8] sm:$0xff]
  %v1029 = vld [vmem:[%s0 + $0x1b0] sm:$0xff]
  %v1030 = vld [vmem:[%s0 + $0x1b8] sm:$0xff]
  %v1032 = vsel %vm58, %v1023, 0
  %v1035 = vsel %vm58, %v1024, 0
  %v1038 = vsel %vm58, %v1025, 0
  %v1041 = vsel %vm58, %v1026, 0
  %v1044 = vsel %vm58, %v1027, 0
  %v1047 = vsel %vm58, %v1028, 0
  %v1050 = vsel %vm58, %v1029, 0
  %v1053 = vsel %vm58, %v1030, 0
  %1055 = vmatprep.subr.mxu0 0.0
  %1056 = vmatpush1.msra.mxu0 %v38
  %1057 = vmatprep.subr.mxu0 0.0
  %1058 = vmatpush1.msra.mxu0 %v39
  %1059 = vmatprep.subr.mxu0 0.0
  %1060 = vmatpush1.msra.mxu0 %v40
  %1061 = vmatprep.subr.mxu0 0.0
  %1062 = vmatpush1.msra.mxu0 %v41
  %1063 = vmatprep.subr.mxu0 0.0
  %1064 = vmatpush1.msra.mxu0 %v85
  %1065 = vmatprep.subr.mxu0 0.0
  %1066 = vmatpush1.msra.mxu0 0.0
  %1067 = vmatprep.subr.mxu0 0.0
  %1068 = vmatpush1.msra.mxu0 0.0
  %1069 = vmatprep.subr.mxu0 0.0
  %1070 = vmatpush1.msra.mxu0 0.0
  %1071 = vmatprep.subr.mxu0 0.0
  %1072 = vmatpush1.msra.mxu0 0.0
  %1073 = vmatprep.subr.mxu0 0.0
  %1074 = vmatpush1.msra.mxu0 0.0
  %1075 = vmatprep.subr.mxu0 0.0
  %1076 = vmatpush1.msra.mxu0 0.0
  %1077 = vmatprep.subr.mxu0 0.0
  %1078 = vmatpush1.msra.mxu0 0.0
  %1079 = vmatprep.subr.mxu0 0.0
  %1080 = vmatpush1.msra.mxu0 0.0
  %1081 = vmatprep.subr.mxu0 0.0
  %1082 = vmatpush1.msra.mxu0 0.0
  %1083 = vmatprep.subr.mxu0 0.0
  %1084 = vmatpush1.msra.mxu0 0.0
  %1085 = vmatprep.subr.mxu0 0.0
  %1086 = vmatpush1.msra.mxu0 0.0
  %1087 = vmatprep.subr.mxu0 0.0
  %1088 = vmatpush1.msra.mxu0 0.0
  %1089 = vmatprep.subr.mxu0 0.0
  %1090 = vmatpush1.msra.mxu0 0.0
  %1091 = vmatprep.subr.mxu0 0.0
  %1092 = vmatpush1.msra.mxu0 0.0
  %1093 = vmatprep.subr.mxu0 0.0
  %1094 = vmatpush1.msra.mxu0 0.0
  %1095 = vmatprep.subr.mxu0 0.0
  %1096 = vmatpush1.msra.mxu0 0.0
  %1097 = vmatprep.subr.mxu0 0.0
  %1098 = vmatpush1.msra.mxu0 0.0
  %1099 = vmatprep.subr.mxu0 0.0
  %1100 = vmatpush1.msra.mxu0 0.0
  %1101 = vmatprep.subr.mxu0 0.0
  %1102 = vmatpush1.msra.mxu0 0.0
  %1103 = vmatprep.subr.mxu0 0.0
  %1104 = vmatpush1.msra.mxu0 0.0
  %1105 = vmatprep.subr.mxu0 0.0
  %1106 = vmatpush1.msra.mxu0 0.0
  %1107 = vmatprep.subr.mxu0 0.0
  %1108 = vmatpush1.msra.mxu0 0.0
  %1109 = vmatprep.subr.mxu0 0.0
  %1110 = vmatpush1.msra.mxu0 0.0
  %1111 = vmatprep.subr.mxu0 0.0
  %1112 = vmatpush1.msra.mxu0 0.0
  %1113 = vmatprep.subr.mxu0 0.0
  %1114 = vmatpush1.msra.mxu0 0.0
  %1115 = vmatprep.subr.mxu0 0.0
  %1116 = vmatpush1.msra.mxu0 0.0
  %1117 = vmatprep.subr.mxu0 0.0
  %1118 = vmatpush1.msra.mxu0 0.0
  %1119 = vmatprep.mubr.f32.mxu0 0.0
  %1120 = vmatmul.mubr.f32.gmra.mrb[0].mxu0 %v1032
  %v1121 = vpop.f32.mrb[0].mxu0
  %v1122 = vadd.f32 %v56, %v1121
  %v1123 = vpop.f32.mrb[0].mxu0
  %1124 = vmatprep.mubr.f32.mxu0 0.0
  %1125 = vmatmul.mubr.f32.gmra.mrb[0].mxu0 %v1035
  %v1126 = vpop.f32.mrb[0].mxu0
  %v1127 = vadd.f32 %v56, %v1126
  %v1128 = vpop.f32.mrb[0].mxu0
  %1129 = vmatprep.mubr.f32.mxu0 0.0
  %1130 = vmatmul.mubr.f32.gmra.mrb[0].mxu0 %v1038
  %v1131 = vpop.f32.mrb[0].mxu0
  %v1132 = vadd.f32 %v56, %v1131
  %v1133 = vpop.f32.mrb[0].mxu0
  %1134 = vmatprep.mubr.f32.mxu0 0.0
  %1135 = vmatmul.mubr.f32.gmra.mrb[0].mxu0 %v1041
  %v1136 = vpop.f32.mrb[0].mxu0
  %v1137 = vadd.f32 %v56, %v1136
  %v1138 = vpop.f32.mrb[0].mxu0
  %1139 = vmatprep.mubr.f32.mxu0 0.0
  %1140 = vmatmul.mubr.f32.gmra.mrb[0].mxu0 %v1044
  %v1141 = vpop.f32.mrb[0].mxu0
  %v1142 = vadd.f32 %v56, %v1141
  %v1143 = vpop.f32.mrb[0].mxu0
  %1144 = vmatprep.mubr.f32.mxu0 0.0
  %1145 = vmatmul.mubr.f32.gmra.mrb[0].mxu0 %v1047
  %v1146 = vpop.f32.mrb[0].mxu0
  %v1147 = vadd.f32 %v56, %v1146
  %v1148 = vpop.f32.mrb[0].mxu0
  %1149 = vmatprep.mubr.f32.mxu0 0.0
  %1150 = vmatmul.mubr.f32.gmra.mrb[0].mxu0 %v1050
  %v1151 = vpop.f32.mrb[0].mxu0
  %v1152 = vadd.f32 %v56, %v1151
  %v1153 = vpop.f32.mrb[0].mxu0
  %1154 = vmatprep.mubr.f32.mxu0 0.0
  %1155 = vmatmul.mubr.f32.gmra.mrb[0].mxu0 %v1053
  %v1156 = vpop.f32.mrb[0].mxu0
  %v1157 = vadd.f32 %v56, %v1156
  %v1158 = vpop.f32.mrb[0].mxu0
  %1159 = vdwg.mxu0
  %1160 = vst.msk [vmem:[#allocation2 + $0x18] sm:$0xff] %vm192, %v1122
  %1161 = vst.msk [vmem:[#allocation2 + $0x38] sm:$0xff] %vm192, %v1127
  %1162 = vst.msk [vmem:[#allocation2 + $0x58] sm:$0xff] %vm192, %v1132
  %1163 = vst.msk [vmem:[#allocation2 + $0x78] sm:$0xff] %vm192, %v1137
  %1164 = vst.msk [vmem:[#allocation2 + $0x98] sm:$0xff] %vm192, %v1142
  %1165 = vst.msk [vmem:[#allocation2 + $0xb8] sm:$0xff] %vm192, %v1147
  %1166 = vst.msk [vmem:[#allocation2 + $0xd8] sm:$0xff] %vm192, %v1152
  %1167 = vst.msk [vmem:[#allocation2 + $0xf8] sm:$0xff] %vm192, %v1157
  %v1168 = vld [vmem:[%s0 + $0x1c0] sm:$0xff]
  %v1169 = vld [vmem:[%s0 + $0x1c8] sm:$0xff]
  %v1170 = vld [vmem:[%s0 + $0x1d0] sm:$0xff]
  %v1171 = vld [vmem:[%s0 + $0x1d8] sm:$0xff]
  %v1172 = vld [vmem:[%s0 + $0x1e0] sm:$0xff]
  %v1173 = vld [vmem:[%s0 + $0x1e8] sm:$0xff]
  %v1174 = vld [vmem:[%s0 + $0x1f0] sm:$0xff]
  %v1175 = vld [vmem:[%s0 + $0x1f8] sm:$0xff]
  %v1177 = vsel %vm58, %v1168, 0
  %v1180 = vsel %vm58, %v1169, 0
  %v1183 = vsel %vm58, %v1170, 0
  %v1186 = vsel %vm58, %v1171, 0
  %v1189 = vsel %vm58, %v1172, 0
  %v1192 = vsel %vm58, %v1173, 0
  %v1195 = vsel %vm58, %v1174, 0
  %v1198 = vsel %vm58, %v1175, 0
  %1200 = vmatprep.subr.mxu0 0.0
  %1201 = vmatpush1.msra.mxu0 %v38
  %1202 = vmatprep.subr.mxu0 0.0
  %1203 = vmatpush1.msra.mxu0 %v39
  %1204 = vmatprep.subr.mxu0 0.0
  %1205 = vmatpush1.msra.mxu0 %v40
  %1206 = vmatprep.subr.mxu0 0.0
  %1207 = vmatpush1.msra.mxu0 %v41
  %1208 = vmatprep.subr.mxu0 0.0
  %1209 = vmatpush1.msra.mxu0 %v85
  %1210 = vmatprep.subr.mxu0 0.0
  %1211 = vmatpush1.msra.mxu0 0.0
  %1212 = vmatprep.subr.mxu0 0.0
  %1213 = vmatpush1.msra.mxu0 0.0
  %1214 = vmatprep.subr.mxu0 0.0
  %1215 = vmatpush1.msra.mxu0 0.0
  %1216 = vmatprep.subr.mxu0 0.0
  %1217 = vmatpush1.msra.mxu0 0.0
  %1218 = vmatprep.subr.mxu0 0.0
  %1219 = vmatpush1.msra.mxu0 0.0
  %1220 = vmatprep.subr.mxu0 0.0
  %1221 = vmatpush1.msra.mxu0 0.0
  %1222 = vmatprep.subr.mxu0 0.0
  %1223 = vmatpush1.msra.mxu0 0.0
  %1224 = vmatprep.subr.mxu0 0.0
  %1225 = vmatpush1.msra.mxu0 0.0
  %1226 = vmatprep.subr.mxu0 0.0
  %1227 = vmatpush1.msra.mxu0 0.0
  %1228 = vmatprep.subr.mxu0 0.0
  %1229 = vmatpush1.msra.mxu0 0.0
  %1230 = vmatprep.subr.mxu0 0.0
  %1231 = vmatpush1.msra.mxu0 0.0
  %1232 = vmatprep.subr.mxu0 0.0
  %1233 = vmatpush1.msra.mxu0 0.0
  %1234 = vmatprep.subr.mxu0 0.0
  %1235 = vmatpush1.msra.mxu0 0.0
  %1236 = vmatprep.subr.mxu0 0.0
  %1237 = vmatpush1.msra.mxu0 0.0
  %1238 = vmatprep.subr.mxu0 0.0
  %1239 = vmatpush1.msra.mxu0 0.0
  %1240 = vmatprep.subr.mxu0 0.0
  %1241 = vmatpush1.msra.mxu0 0.0
  %1242 = vmatprep.subr.mxu0 0.0
  %1243 = vmatpush1.msra.mxu0 0.0
  %1244 = vmatprep.subr.mxu0 0.0
  %1245 = vmatpush1.msra.mxu0 0.0
  %1246 = vmatprep.subr.mxu0 0.0
  %1247 = vmatpush1.msra.mxu0 0.0
  %1248 = vmatprep.subr.mxu0 0.0
  %1249 = vmatpush1.msra.mxu0 0.0
  %1250 = vmatprep.subr.mxu0 0.0
  %1251 = vmatpush1.msra.mxu0 0.0
  %1252 = vmatprep.subr.mxu0 0.0
  %1253 = vmatpush1.msra.mxu0 0.0
  %1254 = vmatprep.subr.mxu0 0.0
  %1255 = vmatpush1.msra.mxu0 0.0
  %1256 = vmatprep.subr.mxu0 0.0
  %1257 = vmatpush1.msra.mxu0 0.0
  %1258 = vmatprep.subr.mxu0 0.0
  %1259 = vmatpush1.msra.mxu0 0.0
  %1260 = vmatprep.subr.mxu0 0.0
  %1261 = vmatpush1.msra.mxu0 0.0
  %1262 = vmatprep.subr.mxu0 0.0
  %1263 = vmatpush1.msra.mxu0 0.0
  %1264 = vmatprep.mubr.f32.mxu0 0.0
  %1265 = vmatmul.mubr.f32.gmra.mrb[0].mxu0 %v1177
  %v1266 = vpop.f32.mrb[0].mxu0
  %v1267 = vadd.f32 %v56, %v1266
  %v1268 = vpop.f32.mrb[0].mxu0
  %1269 = vmatprep.mubr.f32.mxu0 0.0
  %1270 = vmatmul.mubr.f32.gmra.mrb[0].mxu0 %v1180
  %v1271 = vpop.f32.mrb[0].mxu0
  %v1272 = vadd.f32 %v56, %v1271
  %v1273 = vpop.f32.mrb[0].mxu0
  %1274 = vmatprep.mubr.f32.mxu0 0.0
  %1275 = vmatmul.mubr.f32.gmra.mrb[0].mxu0 %v1183
  %v1276 = vpop.f32.mrb[0].mxu0
  %v1277 = vadd.f32 %v56, %v1276
  %v1278 = vpop.f32.mrb[0].mxu0
  %1279 = vmatprep.mubr.f32.mxu0 0.0
  %1280 = vmatmul.mubr.f32.gmra.mrb[0].mxu0 %v1186
  %v1281 = vpop.f32.mrb[0].mxu0
  %v1282 = vadd.f32 %v56, %v1281
  %v1283 = vpop.f32.mrb[0].mxu0
  %1284 = vmatprep.mubr.f32.mxu0 0.0
  %1285 = vmatmul.mubr.f32.gmra.mrb[0].mxu0 %v1189
  %v1286 = vpop.f32.mrb[0].mxu0
  %v1287 = vadd.f32 %v56, %v1286
  %v1288 = vpop.f32.mrb[0].mxu0
  %1289 = vmatprep.mubr.f32.mxu0 0.0
  %1290 = vmatmul.mubr.f32.gmra.mrb[0].mxu0 %v1192
  %v1291 = vpop.f32.mrb[0].mxu0
  %v1292 = vadd.f32 %v56, %v1291
  %v1293 = vpop.f32.mrb[0].mxu0
  %1294 = vmatprep.mubr.f32.mxu0 0.0
  %1295 = vmatmul.mubr.f32.gmra.mrb[0].mxu0 %v1195
  %v1296 = vpop.f32.mrb[0].mxu0
  %v1297 = vadd.f32 %v56, %v1296
  %v1298 = vpop.f32.mrb[0].mxu0
  %1299 = vmatprep.mubr.f32.mxu0 0.0
  %1300 = vmatmul.mubr.f32.gmra.mrb[0].mxu0 %v1198
  %v1301 = vpop.f32.mrb[0].mxu0
  %v1302 = vadd.f32 %v56, %v1301
  %v1303 = vpop.f32.mrb[0].mxu0
  %1304 = vdwg.mxu0
  %1313 = vrot.lane.b32.xlu0 %v1267, 64
  %v1314 = vpop.permute.xlu0 %1313
  %1315 = vrot.lane.b32.xlu0 %v1272, 64
  %v1316 = vpop.permute.xlu0 %1315
  %1317 = vrot.lane.b32.xlu0 %v1277, 64
  %v1318 = vpop.permute.xlu0 %1317
  %1319 = vrot.lane.b32.xlu0 %v1282, 64
  %v1320 = vpop.permute.xlu0 %1319
  %1321 = vrot.lane.b32.xlu0 %v1287, 64
  %v1322 = vpop.permute.xlu0 %1321
  %1323 = vrot.lane.b32.xlu0 %v1292, 64
  %v1324 = vpop.permute.xlu0 %1323
  %1325 = vrot.lane.b32.xlu0 %v1297, 64
  %v1326 = vpop.permute.xlu0 %1325
  %1327 = vrot.lane.b32.xlu0 %v1302, 64
  %v1328 = vpop.permute.xlu0 %1327
  %1337 = vst.msk [vmem:[#allocation2 + $0x18] sm:$0xff] %vm370, %v1314
  %1338 = vst.msk [vmem:[#allocation2 + $0x38] sm:$0xff] %vm370, %v1316
  %1339 = vst.msk [vmem:[#allocation2 + $0x58] sm:$0xff] %vm370, %v1318
  %1340 = vst.msk [vmem:[#allocation2 + $0x78] sm:$0xff] %vm370, %v1320
  %1341 = vst.msk [vmem:[#allocation2 + $0x98] sm:$0xff] %vm370, %v1322
  %1342 = vst.msk [vmem:[#allocation2 + $0xb8] sm:$0xff] %vm370, %v1324
  %1343 = vst.msk [vmem:[#allocation2 + $0xd8] sm:$0xff] %vm370, %v1326
  %1344 = vst.msk [vmem:[#allocation2 + $0xf8] sm:$0xff] %vm370, %v1328
  %v1345 = vlaneseq
  %v1346 = vand.u32 %v1345, 127
  %vm1347 = vcmp.lt.s32.totalorder %v1346, 64
  %v1348 = vld [vmem:[%s3] sm:$0xff]
  %v1349 = vld [vmem:[%s3 + $0x8] sm:$0xff]
  %v1350 = vld [vmem:[%s3 + $0x10] sm:$0xff]
  %v1351 = vld [vmem:[%s3 + $0x18] sm:$0xff]
  %v1352 = vld [vmem:[%s3 + $0x20] sm:$0xff]
  %v1353 = vld [vmem:[%s3 + $0x28] sm:$0xff]
  %v1354 = vld [vmem:[%s3 + $0x30] sm:$0xff]
  %v1355 = vld [vmem:[%s3 + $0x38] sm:$0xff]
  %v1356 = vld [vmem:[%s3 + $0x40] sm:$0xff]
  %v1357 = vld [vmem:[%s3 + $0x48] sm:$0xff]
  %v1358 = vld [vmem:[%s3 + $0x50] sm:$0xff]
  %v1359 = vld [vmem:[%s3 + $0x58] sm:$0xff]
  %v1360 = vld [vmem:[%s3 + $0x60] sm:$0xff]
  %v1361 = vld [vmem:[%s3 + $0x68] sm:$0xff]
  %v1362 = vld [vmem:[%s3 + $0x70] sm:$0xff]
  %v1363 = vld [vmem:[%s3 + $0x78] sm:$0xff]
  %v1364 = vld [vmem:[%s3 + $0x80] sm:$0xff]
  %v1365 = vld [vmem:[%s3 + $0x88] sm:$0xff]
  %v1366 = vld [vmem:[%s3 + $0x90] sm:$0xff]
  %v1367 = vld [vmem:[%s3 + $0x98] sm:$0xff]
  %v1368 = vld [vmem:[%s3 + $0xa0] sm:$0xff]
  %v1369 = vld [vmem:[%s3 + $0xa8] sm:$0xff]
  %v1370 = vld [vmem:[%s3 + $0xb0] sm:$0xff]
  %v1371 = vld [vmem:[%s3 + $0xb8] sm:$0xff]
  %v1372 = vld [vmem:[%s3 + $0xc0] sm:$0xff]
  %v1373 = vld [vmem:[%s3 + $0xc8] sm:$0xff]
  %v1374 = vld [vmem:[%s3 + $0xd0] sm:$0xff]
  %v1375 = vld [vmem:[%s3 + $0xd8] sm:$0xff]
  %v1376 = vld [vmem:[%s3 + $0xe0] sm:$0xff]
  %v1377 = vld [vmem:[%s3 + $0xe8] sm:$0xff]
  %v1378 = vld [vmem:[%s3 + $0xf0] sm:$0xff]
  %v1379 = vld [vmem:[%s3 + $0xf8] sm:$0xff]
  %v1380 = vld [vmem:[#allocation2] sm:$0xff]
  %v1381 = vld [vmem:[#allocation2 + $0x8] sm:$0xff]
  %v1382 = vld [vmem:[#allocation2 + $0x10] sm:$0xff]
  %v1383 = vld [vmem:[#allocation2 + $0x18] sm:$0xff]
  %v1384 = vld [vmem:[#allocation2 + $0x20] sm:$0xff]
  %v1385 = vld [vmem:[#allocation2 + $0x28] sm:$0xff]
  %v1386 = vld [vmem:[#allocation2 + $0x30] sm:$0xff]
  %v1387 = vld [vmem:[#allocation2 + $0x38] sm:$0xff]
  %v1388 = vld [vmem:[#allocation2 + $0x40] sm:$0xff]
  %v1389 = vld [vmem:[#allocation2 + $0x48] sm:$0xff]
  %v1390 = vld [vmem:[#allocation2 + $0x50] sm:$0xff]
  %v1391 = vld [vmem:[#allocation2 + $0x58] sm:$0xff]
  %v1392 = vld [vmem:[#allocation2 + $0x60] sm:$0xff]
  %v1393 = vld [vmem:[#allocation2 + $0x68] sm:$0xff]
  %v1394 = vld [vmem:[#allocation2 + $0x70] sm:$0xff]
  %v1395 = vld [vmem:[#allocation2 + $0x78] sm:$0xff]
  %v1396 = vld [vmem:[#allocation2 + $0x80] sm:$0xff]
  %v1397 = vld [vmem:[#allocation2 + $0x88] sm:$0xff]
  %v1398 = vld [vmem:[#allocation2 + $0x90] sm:$0xff]
  %v1399 = vld [vmem:[#allocation2 + $0x98] sm:$0xff]
  %v1400 = vld [vmem:[#allocation2 + $0xa0] sm:$0xff]
  %v1401 = vld [vmem:[#allocation2 + $0xa8] sm:$0xff]
  %v1402 = vld [vmem:[#allocation2 + $0xb0] sm:$0xff]
  %v1403 = vld [vmem:[#allocation2 + $0xb8] sm:$0xff]
  %v1404 = vld [vmem:[#allocation2 + $0xc0] sm:$0xff]
  %v1405 = vld [vmem:[#allocation2 + $0xc8] sm:$0xff]
  %v1406 = vld [vmem:[#allocation2 + $0xd0] sm:$0xff]
  %v1407 = vld [vmem:[#allocation2 + $0xd8] sm:$0xff]
  %v1408 = vld [vmem:[#allocation2 + $0xe0] sm:$0xff]
  %v1409 = vld [vmem:[#allocation2 + $0xe8] sm:$0xff]
  %v1410 = vld [vmem:[#allocation2 + $0xf0] sm:$0xff]
  %v1411 = vld [vmem:[#allocation2 + $0xf8] sm:$0xff]
  %v1412 = vld [vmem:[%s5] sm:$0xff]
  %v1413 = vld [vmem:[%s5 + $0x8] sm:$0xff]
  %v1414 = vld [vmem:[%s5 + $0x10] sm:$0xff]
  %v1415 = vld [vmem:[%s5 + $0x18] sm:$0xff]
  %v1416 = vld [vmem:[%s5 + $0x20] sm:$0xff]
  %v1417 = vld [vmem:[%s5 + $0x28] sm:$0xff]
  %v1418 = vld [vmem:[%s5 + $0x30] sm:$0xff]
  %v1419 = vld [vmem:[%s5 + $0x38] sm:$0xff]
  %v1420 = vld [vmem:[%s5 + $0x40] sm:$0xff]
  %v1421 = vld [vmem:[%s5 + $0x48] sm:$0xff]
  %v1422 = vld [vmem:[%s5 + $0x50] sm:$0xff]
  %v1423 = vld [vmem:[%s5 + $0x58] sm:$0xff]
  %v1424 = vld [vmem:[%s5 + $0x60] sm:$0xff]
  %v1425 = vld [vmem:[%s5 + $0x68] sm:$0xff]
  %v1426 = vld [vmem:[%s5 + $0x70] sm:$0xff]
  %v1427 = vld [vmem:[%s5 + $0x78] sm:$0xff]
  %v1428 = vld [vmem:[%s5 + $0x80] sm:$0xff]
  %v1429 = vld [vmem:[%s5 + $0x88] sm:$0xff]
  %v1430 = vld [vmem:[%s5 + $0x90] sm:$0xff]
  %v1431 = vld [vmem:[%s5 + $0x98] sm:$0xff]
  %v1432 = vld [vmem:[%s5 + $0xa0] sm:$0xff]
  %v1433 = vld [vmem:[%s5 + $0xa8] sm:$0xff]
  %v1434 = vld [vmem:[%s5 + $0xb0] sm:$0xff]
  %v1435 = vld [vmem:[%s5 + $0xb8] sm:$0xff]
  %v1436 = vld [vmem:[%s5 + $0xc0] sm:$0xff]
  %v1437 = vld [vmem:[%s5 + $0xc8] sm:$0xff]
  %v1438 = vld [vmem:[%s5 + $0xd0] sm:$0xff]
  %v1439 = vld [vmem:[%s5 + $0xd8] sm:$0xff]
  %v1440 = vld [vmem:[%s5 + $0xe0] sm:$0xff]
  %v1441 = vld [vmem:[%s5 + $0xe8] sm:$0xff]
  %v1442 = vld [vmem:[%s5 + $0xf0] sm:$0xff]
  %v1443 = vld [vmem:[%s5 + $0xf8] sm:$0xff]
  %1445 = vset.pattern.permute.xlu0 0
  %1446 = vperm.xlu0 %1445, %v1412
  %v1447 = vpop.permute.xlu0 %1446
  %1450 = vset.pattern.permute.xlu0 0
  %1451 = vperm.xlu0 %1450, %v1413
  %v1452 = vpop.permute.xlu0 %1451
  %1455 = vset.pattern.permute.xlu0 0
  %1456 = vperm.xlu0 %1455, %v1414
  %v1457 = vpop.permute.xlu0 %1456
  %1460 = vset.pattern.permute.xlu0 0
  %1461 = vperm.xlu0 %1460, %v1415
  %v1462 = vpop.permute.xlu0 %1461
  %1465 = vset.pattern.permute.xlu0 0
  %1466 = vperm.xlu0 %1465, %v1416
  %v1467 = vpop.permute.xlu0 %1466
  %1470 = vset.pattern.permute.xlu0 0
  %1471 = vperm.xlu0 %1470, %v1417
  %v1472 = vpop.permute.xlu0 %1471
  %1475 = vset.pattern.permute.xlu0 0
  %1476 = vperm.xlu0 %1475, %v1418
  %v1477 = vpop.permute.xlu0 %1476
  %1480 = vset.pattern.permute.xlu0 0
  %1481 = vperm.xlu0 %1480, %v1419
  %v1482 = vpop.permute.xlu0 %1481
  %1485 = vset.pattern.permute.xlu0 0
  %1486 = vperm.xlu0 %1485, %v1420
  %v1487 = vpop.permute.xlu0 %1486
  %1490 = vset.pattern.permute.xlu0 0
  %1491 = vperm.xlu0 %1490, %v1421
  %v1492 = vpop.permute.xlu0 %1491
  %1495 = vset.pattern.permute.xlu0 0
  %1496 = vperm.xlu0 %1495, %v1422
  %v1497 = vpop.permute.xlu0 %1496
  %1500 = vset.pattern.permute.xlu0 0
  %1501 = vperm.xlu0 %1500, %v1423
  %v1502 = vpop.permute.xlu0 %1501
  %1505 = vset.pattern.permute.xlu0 0
  %1506 = vperm.xlu0 %1505, %v1424
  %v1507 = vpop.permute.xlu0 %1506
  %1510 = vset.pattern.permute.xlu0 0
  %1511 = vperm.xlu0 %1510, %v1425
  %v1512 = vpop.permute.xlu0 %1511
  %1515 = vset.pattern.permute.xlu0 0
  %1516 = vperm.xlu0 %1515, %v1426
  %v1517 = vpop.permute.xlu0 %1516
  %1520 = vset.pattern.permute.xlu0 0
  %1521 = vperm.xlu0 %1520, %v1427
  %v1522 = vpop.permute.xlu0 %1521
  %1525 = vset.pattern.permute.xlu0 0
  %1526 = vperm.xlu0 %1525, %v1428
  %v1527 = vpop.permute.xlu0 %1526
  %1530 = vset.pattern.permute.xlu0 0
  %1531 = vperm.xlu0 %1530, %v1429
  %v1532 = vpop.permute.xlu0 %1531
  %1535 = vset.pattern.permute.xlu0 0
  %1536 = vperm.xlu0 %1535, %v1430
  %v1537 = vpop.permute.xlu0 %1536
  %1540 = vset.pattern.permute.xlu0 0
  %1541 = vperm.xlu0 %1540, %v1431
  %v1542 = vpop.permute.xlu0 %1541
  %1545 = vset.pattern.permute.xlu0 0
  %1546 = vperm.xlu0 %1545, %v1432
  %v1547 = vpop.permute.xlu0 %1546
  %1550 = vset.pattern.permute.xlu0 0
  %1551 = vperm.xlu0 %1550, %v1433
  %v1552 = vpop.permute.xlu0 %1551
  %1555 = vset.pattern.permute.xlu0 0
  %1556 = vperm.xlu0 %1555, %v1434
  %v1557 = vpop.permute.xlu0 %1556
  %1560 = vset.pattern.permute.xlu0 0
  %1561 = vperm.xlu0 %1560, %v1435
  %v1562 = vpop.permute.xlu0 %1561
  %1565 = vset.pattern.permute.xlu0 0
  %1566 = vperm.xlu0 %1565, %v1436
  %v1567 = vpop.permute.xlu0 %1566
  %1570 = vset.pattern.permute.xlu0 0
  %1571 = vperm.xlu0 %1570, %v1437
  %v1572 = vpop.permute.xlu0 %1571
  %1575 = vset.pattern.permute.xlu0 0
  %1576 = vperm.xlu0 %1575, %v1438
  %v1577 = vpop.permute.xlu0 %1576
  %1580 = vset.pattern.permute.xlu0 0
  %1581 = vperm.xlu0 %1580, %v1439
  %v1582 = vpop.permute.xlu0 %1581
  %1585 = vset.pattern.permute.xlu0 0
  %1586 = vperm.xlu0 %1585, %v1440
  %v1587 = vpop.permute.xlu0 %1586
  %1590 = vset.pattern.permute.xlu0 0
  %1591 = vperm.xlu0 %1590, %v1441
  %v1592 = vpop.permute.xlu0 %1591
  %1595 = vset.pattern.permute.xlu0 0
  %1596 = vperm.xlu0 %1595, %v1442
  %v1597 = vpop.permute.xlu0 %1596
  %1600 = vset.pattern.permute.xlu0 0
  %1601 = vperm.xlu0 %1600, %v1443
  %v1602 = vpop.permute.xlu0 %1601
  %v1605 = vsel %vm192, %v1348, 0
  %v1608 = vsel %vm192, %v1349, 0
  %v1611 = vsel %vm192, %v1350, 0
  %v1614 = vsel %vm192, %v1351, 0
  %v1617 = vsel %vm192, %v1352, 0
  %v1620 = vsel %vm192, %v1353, 0
  %v1623 = vsel %vm192, %v1354, 0
  %v1626 = vsel %vm192, %v1355, 0
  %v1629 = vsel %vm192, %v1356, 0
  %v1632 = vsel %vm192, %v1357, 0
  %v1635 = vsel %vm192, %v1358, 0
  %v1638 = vsel %vm192, %v1359, 0
  %v1641 = vsel %vm192, %v1360, 0
  %v1644 = vsel %vm192, %v1361, 0
  %v1647 = vsel %vm192, %v1362, 0
  %v1650 = vsel %vm192, %v1363, 0
  %v1653 = vsel %vm192, %v1364, 0
  %v1656 = vsel %vm192, %v1365, 0
  %v1659 = vsel %vm192, %v1366, 0
  %v1662 = vsel %vm192, %v1367, 0
  %v1665 = vsel %vm192, %v1368, 0
  %v1668 = vsel %vm192, %v1369, 0
  %v1671 = vsel %vm192, %v1370, 0
  %v1674 = vsel %vm192, %v1371, 0
  %v1677 = vsel %vm192, %v1372, 0
  %v1680 = vsel %vm192, %v1373, 0
  %v1683 = vsel %vm192, %v1374, 0
  %v1686 = vsel %vm192, %v1375, 0
  %v1689 = vsel %vm192, %v1376, 0
  %v1692 = vsel %vm192, %v1377, 0
  %v1695 = vsel %vm192, %v1378, 0
  %v1698 = vsel %vm192, %v1379, 0
  %1700 = vmatprep.subr.mxu0 %v1381
  %1701 = vmatpush1.msra.mxu0 %v1380
  %1702 = vmatprep.subr.mxu0 %v1385
  %1703 = vmatpush1.msra.mxu0 %v1384
  %1704 = vmatprep.subr.mxu0 %v1389
  %1705 = vmatpush1.msra.mxu0 %v1388
  %1706 = vmatprep.subr.mxu0 %v1393
  %1707 = vmatpush1.msra.mxu0 %v1392
  %1708 = vmatprep.subr.mxu0 %v1397
  %1709 = vmatpush1.msra.mxu0 %v1396
  %1710 = vmatprep.subr.mxu0 %v1401
  %1711 = vmatpush1.msra.mxu0 %v1400
  %1712 = vmatprep.subr.mxu0 %v1405
  %1713 = vmatpush1.msra.mxu0 %v1404
  %1714 = vmatprep.subr.mxu0 %v1409
  %1715 = vmatpush1.msra.mxu0 %v1408
  %1716 = vmatprep.subr.mxu0 0.0
  %1717 = vmatpush1.msra.mxu0 0.0
  %1718 = vmatprep.subr.mxu0 0.0
  %1719 = vmatpush1.msra.mxu0 0.0
  %1720 = vmatprep.subr.mxu0 0.0
  %1721 = vmatpush1.msra.mxu0 0.0
  %1722 = vmatprep.subr.mxu0 0.0
  %1723 = vmatpush1.msra.mxu0 0.0
  %1724 = vmatprep.subr.mxu0 0.0
  %1725 = vmatpush1.msra.mxu0 0.0
  %1726 = vmatprep.subr.mxu0 0.0
  %1727 = vmatpush1.msra.mxu0 0.0
  %1728 = vmatprep.subr.mxu0 0.0
  %1729 = vmatpush1.msra.mxu0 0.0
  %1730 = vmatprep.subr.mxu0 0.0
  %1731 = vmatpush1.msra.mxu0 0.0
  %1732 = vmatprep.subr.mxu0 0.0
  %1733 = vmatpush1.msra.mxu0 0.0
  %1734 = vmatprep.subr.mxu0 0.0
  %1735 = vmatpush1.msra.mxu0 0.0
  %1736 = vmatprep.subr.mxu0 0.0
  %1737 = vmatpush1.msra.mxu0 0.0
  %1738 = vmatprep.subr.mxu0 0.0
  %1739 = vmatpush1.msra.mxu0 0.0
  %1740 = vmatprep.subr.mxu0 0.0
  %1741 = vmatpush1.msra.mxu0 0.0
  %1742 = vmatprep.subr.mxu0 0.0
  %1743 = vmatpush1.msra.mxu0 0.0
  %1744 = vmatprep.subr.mxu0 0.0
  %1745 = vmatpush1.msra.mxu0 0.0
  %1746 = vmatprep.subr.mxu0 0.0
  %1747 = vmatpush1.msra.mxu0 0.0
  %1748 = vmatprep.subr.mxu0 0.0
  %1749 = vmatpush1.msra.mxu0 0.0
  %1750 = vmatprep.subr.mxu0 0.0
  %1751 = vmatpush1.msra.mxu0 0.0
  %1752 = vmatprep.subr.mxu0 0.0
  %1753 = vmatpush1.msra.mxu0 0.0
  %1754 = vmatprep.subr.mxu0 0.0
  %1755 = vmatpush1.msra.mxu0 0.0
  %1756 = vmatprep.subr.mxu0 0.0
  %1757 = vmatpush1.msra.mxu0 0.0
  %1758 = vmatprep.subr.mxu0 0.0
  %1759 = vmatpush1.msra.mxu0 0.0
  %1760 = vmatprep.subr.mxu0 0.0
  %1761 = vmatpush1.msra.mxu0 0.0
  %1762 = vmatprep.subr.mxu0 0.0
  %1763 = vmatpush1.msra.mxu0 0.0
  %1764 = vmatprep.mubr.f32.mxu0 0.0
  %1765 = vmatmul.mubr.f32.gmra.mrb[0].mxu0 %v1605
  %v1766 = vpop.f32.mrb[0].mxu0
  %v1767 = vadd.f32 %v1447, %v1766
  %v1768 = vpop.f32.mrb[0].mxu0
  %v1769 = vadd.f32 %v1447, %v1768
  %1770 = vmatprep.mubr.f32.mxu0 0.0
  %1771 = vmatmul.mubr.f32.gmra.mrb[0].mxu0 %v1608
  %v1772 = vpop.f32.mrb[0].mxu0
  %v1773 = vadd.f32 %v1452, %v1772
  %v1774 = vpop.f32.mrb[0].mxu0
  %v1775 = vadd.f32 %v1452, %v1774
  %1776 = vmatprep.mubr.f32.mxu0 0.0
  %1777 = vmatmul.mubr.f32.gmra.mrb[0].mxu0 %v1611
  %v1778 = vpop.f32.mrb[0].mxu0
  %v1779 = vadd.f32 %v1457, %v1778
  %v1780 = vpop.f32.mrb[0].mxu0
  %v1781 = vadd.f32 %v1457, %v1780
  %1782 = vmatprep.mubr.f32.mxu0 0.0
  %1783 = vmatmul.mubr.f32.gmra.mrb[0].mxu0 %v1614
  %v1784 = vpop.f32.mrb[0].mxu0
  %v1785 = vadd.f32 %v1462, %v1784
  %v1786 = vpop.f32.mrb[0].mxu0
  %v1787 = vadd.f32 %v1462, %v1786
  %1788 = vmatprep.mubr.f32.mxu0 0.0
  %1789 = vmatmul.mubr.f32.gmra.mrb[0].mxu0 %v1617
  %v1790 = vpop.f32.mrb[0].mxu0
  %v1791 = vadd.f32 %v1467, %v1790
  %v1792 = vpop.f32.mrb[0].mxu0
  %v1793 = vadd.f32 %v1467, %v1792
  %1794 = vmatprep.mubr.f32.mxu0 0.0
  %1795 = vmatmul.mubr.f32.gmra.mrb[0].mxu0 %v1620
  %v1796 = vpop.f32.mrb[0].mxu0
  %v1797 = vadd.f32 %v1472, %v1796
  %v1798 = vpop.f32.mrb[0].mxu0
  %v1799 = vadd.f32 %v1472, %v1798
  %1800 = vmatprep.mubr.f32.mxu0 0.0
  %1801 = vmatmul.mubr.f32.gmra.mrb[0].mxu0 %v1623
  %v1802 = vpop.f32.mrb[0].mxu0
  %v1803 = vadd.f32 %v1477, %v1802
  %v1804 = vpop.f32.mrb[0].mxu0
  %v1805 = vadd.f32 %v1477, %v1804
  %1806 = vmatprep.mubr.f32.mxu0 0.0
  %1807 = vmatmul.mubr.f32.gmra.mrb[0].mxu0 %v1626
  %v1808 = vpop.f32.mrb[0].mxu0
  %v1809 = vadd.f32 %v1482, %v1808
  %v1810 = vpop.f32.mrb[0].mxu0
  %v1811 = vadd.f32 %v1482, %v1810
  %1812 = vmatprep.mubr.f32.mxu0 0.0
  %1813 = vmatmul.mubr.f32.gmra.mrb[0].mxu0 %v1629
  %v1814 = vpop.f32.mrb[0].mxu0
  %v1815 = vadd.f32 %v1487, %v1814
  %v1816 = vpop.f32.mrb[0].mxu0
  %v1817 = vadd.f32 %v1487, %v1816
  %1818 = vmatprep.mubr.f32.mxu0 0.0
  %1819 = vmatmul.mubr.f32.gmra.mrb[0].mxu0 %v1632
  %v1820 = vpop.f32.mrb[0].mxu0
  %v1821 = vadd.f32 %v1492, %v1820
  %v1822 = vpop.f32.mrb[0].mxu0
  %v1823 = vadd.f32 %v1492, %v1822
  %1824 = vmatprep.mubr.f32.mxu0 0.0
  %1825 = vmatmul.mubr.f32.gmra.mrb[0].mxu0 %v1635
  %v1826 = vpop.f32.mrb[0].mxu0
  %v1827 = vadd.f32 %v1497, %v1826
  %v1828 = vpop.f32.mrb[0].mxu0
  %v1829 = vadd.f32 %v1497, %v1828
  %1830 = vmatprep.mubr.f32.mxu0 0.0
  %1831 = vmatmul.mubr.f32.gmra.mrb[0].mxu0 %v1638
  %v1832 = vpop.f32.mrb[0].mxu0
  %v1833 = vadd.f32 %v1502, %v1832
  %v1834 = vpop.f32.mrb[0].mxu0
  %v1835 = vadd.f32 %v1502, %v1834
  %1836 = vmatprep.mubr.f32.mxu0 0.0
  %1837 = vmatmul.mubr.f32.gmra.mrb[0].mxu0 %v1641
  %v1838 = vpop.f32.mrb[0].mxu0
  %v1839 = vadd.f32 %v1507, %v1838
  %v1840 = vpop.f32.mrb[0].mxu0
  %v1841 = vadd.f32 %v1507, %v1840
  %1842 = vmatprep.mubr.f32.mxu0 0.0
  %1843 = vmatmul.mubr.f32.gmra.mrb[0].mxu0 %v1644
  %v1844 = vpop.f32.mrb[0].mxu0
  %v1845 = vadd.f32 %v1512, %v1844
  %v1846 = vpop.f32.mrb[0].mxu0
  %v1847 = vadd.f32 %v1512, %v1846
  %1848 = vmatprep.mubr.f32.mxu0 0.0
  %1849 = vmatmul.mubr.f32.gmra.mrb[0].mxu0 %v1647
  %v1850 = vpop.f32.mrb[0].mxu0
  %v1851 = vadd.f32 %v1517, %v1850
  %v1852 = vpop.f32.mrb[0].mxu0
  %v1853 = vadd.f32 %v1517, %v1852
  %1854 = vmatprep.mubr.f32.mxu0 0.0
  %1855 = vmatmul.mubr.f32.gmra.mrb[0].mxu0 %v1650
  %v1856 = vpop.f32.mrb[0].mxu0
  %v1857 = vadd.f32 %v1522, %v1856
  %v1858 = vpop.f32.mrb[0].mxu0
  %v1859 = vadd.f32 %v1522, %v1858
  %1860 = vmatprep.mubr.f32.mxu0 0.0
  %1861 = vmatmul.mubr.f32.gmra.mrb[0].mxu0 %v1653
  %v1862 = vpop.f32.mrb[0].mxu0
  %v1863 = vadd.f32 %v1527, %v1862
  %v1864 = vpop.f32.mrb[0].mxu0
  %v1865 = vadd.f32 %v1527, %v1864
  %1866 = vmatprep.mubr.f32.mxu0 0.0
  %1867 = vmatmul.mubr.f32.gmra.mrb[0].mxu0 %v1656
  %v1868 = vpop.f32.mrb[0].mxu0
  %v1869 = vadd.f32 %v1532, %v1868
  %v1870 = vpop.f32.mrb[0].mxu0
  %v1871 = vadd.f32 %v1532, %v1870
  %1872 = vmatprep.mubr.f32.mxu0 0.0
  %1873 = vmatmul.mubr.f32.gmra.mrb[0].mxu0 %v1659
  %v1874 = vpop.f32.mrb[0].mxu0
  %v1875 = vadd.f32 %v1537, %v1874
  %v1876 = vpop.f32.mrb[0].mxu0
  %v1877 = vadd.f32 %v1537, %v1876
  %1878 = vmatprep.mubr.f32.mxu0 0.0
  %1879 = vmatmul.mubr.f32.gmra.mrb[0].mxu0 %v1662
  %v1880 = vpop.f32.mrb[0].mxu0
  %v1881 = vadd.f32 %v1542, %v1880
  %v1882 = vpop.f32.mrb[0].mxu0
  %v1883 = vadd.f32 %v1542, %v1882
  %1884 = vmatprep.mubr.f32.mxu0 0.0
  %1885 = vmatmul.mubr.f32.gmra.mrb[0].mxu0 %v1665
  %v1886 = vpop.f32.mrb[0].mxu0
  %v1887 = vadd.f32 %v1547, %v1886
  %v1888 = vpop.f32.mrb[0].mxu0
  %v1889 = vadd.f32 %v1547, %v1888
  %1890 = vmatprep.mubr.f32.mxu0 0.0
  %1891 = vmatmul.mubr.f32.gmra.mrb[0].mxu0 %v1668
  %v1892 = vpop.f32.mrb[0].mxu0
  %v1893 = vadd.f32 %v1552, %v1892
  %v1894 = vpop.f32.mrb[0].mxu0
  %v1895 = vadd.f32 %v1552, %v1894
  %1896 = vmatprep.mubr.f32.mxu0 0.0
  %1897 = vmatmul.mubr.f32.gmra.mrb[0].mxu0 %v1671
  %v1898 = vpop.f32.mrb[0].mxu0
  %v1899 = vadd.f32 %v1557, %v1898
  %v1900 = vpop.f32.mrb[0].mxu0
  %v1901 = vadd.f32 %v1557, %v1900
  %1902 = vmatprep.mubr.f32.mxu0 0.0
  %1903 = vmatmul.mubr.f32.gmra.mrb[0].mxu0 %v1674
  %v1904 = vpop.f32.mrb[0].mxu0
  %v1905 = vadd.f32 %v1562, %v1904
  %v1906 = vpop.f32.mrb[0].mxu0
  %v1907 = vadd.f32 %v1562, %v1906
  %1908 = vmatprep.mubr.f32.mxu0 0.0
  %1909 = vmatmul.mubr.f32.gmra.mrb[0].mxu0 %v1677
  %v1910 = vpop.f32.mrb[0].mxu0
  %v1911 = vadd.f32 %v1567, %v1910
  %v1912 = vpop.f32.mrb[0].mxu0
  %v1913 = vadd.f32 %v1567, %v1912
  %1914 = vmatprep.mubr.f32.mxu0 0.0
  %1915 = vmatmul.mubr.f32.gmra.mrb[0].mxu0 %v1680
  %v1916 = vpop.f32.mrb[0].mxu0
  %v1917 = vadd.f32 %v1572, %v1916
  %v1918 = vpop.f32.mrb[0].mxu0
  %v1919 = vadd.f32 %v1572, %v1918
  %1920 = vmatprep.mubr.f32.mxu0 0.0
  %1921 = vmatmul.mubr.f32.gmra.mrb[0].mxu0 %v1683
  %v1922 = vpop.f32.mrb[0].mxu0
  %v1923 = vadd.f32 %v1577, %v1922
  %v1924 = vpop.f32.mrb[0].mxu0
  %v1925 = vadd.f32 %v1577, %v1924
  %1926 = vmatprep.mubr.f32.mxu0 0.0
  %1927 = vmatmul.mubr.f32.gmra.mrb[0].mxu0 %v1686
  %v1928 = vpop.f32.mrb[0].mxu0
  %v1929 = vadd.f32 %v1582, %v1928
  %v1930 = vpop.f32.mrb[0].mxu0
  %v1931 = vadd.f32 %v1582, %v1930
  %1932 = vmatprep.mubr.f32.mxu0 0.0
  %1933 = vmatmul.mubr.f32.gmra.mrb[0].mxu0 %v1689
  %v1934 = vpop.f32.mrb[0].mxu0
  %v1935 = vadd.f32 %v1587, %v1934
  %v1936 = vpop.f32.mrb[0].mxu0
  %v1937 = vadd.f32 %v1587, %v1936
  %1938 = vmatprep.mubr.f32.mxu0 0.0
  %1939 = vmatmul.mubr.f32.gmra.mrb[0].mxu0 %v1692
  %v1940 = vpop.f32.mrb[0].mxu0
  %v1941 = vadd.f32 %v1592, %v1940
  %v1942 = vpop.f32.mrb[0].mxu0
  %v1943 = vadd.f32 %v1592, %v1942
  %1944 = vmatprep.mubr.f32.mxu0 0.0
  %1945 = vmatmul.mubr.f32.gmra.mrb[0].mxu0 %v1695
  %v1946 = vpop.f32.mrb[0].mxu0
  %v1947 = vadd.f32 %v1597, %v1946
  %v1948 = vpop.f32.mrb[0].mxu0
  %v1949 = vadd.f32 %v1597, %v1948
  %1950 = vmatprep.mubr.f32.mxu0 0.0
  %1951 = vmatmul.mubr.f32.gmra.mrb[0].mxu0 %v1698
  %v1952 = vpop.f32.mrb[0].mxu0
  %v1953 = vadd.f32 %v1602, %v1952
  %v1954 = vpop.f32.mrb[0].mxu0
  %v1955 = vadd.f32 %v1602, %v1954
  %1956 = vdwg.mxu0
  %1957 = vmatprep.subr.mxu0 %v1383
  %1958 = vmatpush1.msra.mxu0 %v1382
  %1959 = vmatprep.subr.mxu0 %v1387
  %1960 = vmatpush1.msra.mxu0 %v1386
  %1961 = vmatprep.subr.mxu0 %v1391
  %1962 = vmatpush1.msra.mxu0 %v1390
  %1963 = vmatprep.subr.mxu0 %v1395
  %1964 = vmatpush1.msra.mxu0 %v1394
  %1965 = vmatprep.subr.mxu0 %v1399
  %1966 = vmatpush1.msra.mxu0 %v1398
  %1967 = vmatprep.subr.mxu0 %v1403
  %1968 = vmatpush1.msra.mxu0 %v1402
  %1969 = vmatprep.subr.mxu0 %v1407
  %1970 = vmatpush1.msra.mxu0 %v1406
  %1971 = vmatprep.subr.mxu0 %v1411
  %1972 = vmatpush1.msra.mxu0 %v1410
  %1973 = vmatprep.subr.mxu0 0.0
  %1974 = vmatpush1.msra.mxu0 0.0
  %1975 = vmatprep.subr.mxu0 0.0
  %1976 = vmatpush1.msra.mxu0 0.0
  %1977 = vmatprep.subr.mxu0 0.0
  %1978 = vmatpush1.msra.mxu0 0.0
  %1979 = vmatprep.subr.mxu0 0.0
  %1980 = vmatpush1.msra.mxu0 0.0
  %1981 = vmatprep.subr.mxu0 0.0
  %1982 = vmatpush1.msra.mxu0 0.0
  %1983 = vmatprep.subr.mxu0 0.0
  %1984 = vmatpush1.msra.mxu0 0.0
  %1985 = vmatprep.subr.mxu0 0.0
  %1986 = vmatpush1.msra.mxu0 0.0
  %1987 = vmatprep.subr.mxu0 0.0
  %1988 = vmatpush1.msra.mxu0 0.0
  %1989 = vmatprep.subr.mxu0 0.0
  %1990 = vmatpush1.msra.mxu0 0.0
  %1991 = vmatprep.subr.mxu0 0.0
  %1992 = vmatpush1.msra.mxu0 0.0
  %1993 = vmatprep.subr.mxu0 0.0
  %1994 = vmatpush1.msra.mxu0 0.0
  %1995 = vmatprep.subr.mxu0 0.0
  %1996 = vmatpush1.msra.mxu0 0.0
  %1997 = vmatprep.subr.mxu0 0.0
  %1998 = vmatpush1.msra.mxu0 0.0
  %1999 = vmatprep.subr.mxu0 0.0
  %2000 = vmatpush1.msra.mxu0 0.0
  %2001 = vmatprep.subr.mxu0 0.0
  %2002 = vmatpush1.msra.mxu0 0.0
  %2003 = vmatprep.subr.mxu0 0.0
  %2004 = vmatpush1.msra.mxu0 0.0
  %2005 = vmatprep.subr.mxu0 0.0
  %2006 = vmatpush1.msra.mxu0 0.0
  %2007 = vmatprep.subr.mxu0 0.0
  %2008 = vmatpush1.msra.mxu0 0.0
  %2009 = vmatprep.subr.mxu0 0.0
  %2010 = vmatpush1.msra.mxu0 0.0
  %2011 = vmatprep.subr.mxu0 0.0
  %2012 = vmatpush1.msra.mxu0 0.0
  %2013 = vmatprep.subr.mxu0 0.0
  %2014 = vmatpush1.msra.mxu0 0.0
  %2015 = vmatprep.subr.mxu0 0.0
  %2016 = vmatpush1.msra.mxu0 0.0
  %2017 = vmatprep.subr.mxu0 0.0
  %2018 = vmatpush1.msra.mxu0 0.0
  %2019 = vmatprep.subr.mxu0 0.0
  %2020 = vmatpush1.msra.mxu0 0.0
  %2021 = vmatprep.mubr.f32.mxu0 0.0
  %2022 = vmatmul.mubr.f32.gmra.mrb[0].mxu0 %v1605
  %v2023 = vpop.f32.mrb[0].mxu0
  %v2024 = vadd.f32 %v1447, %v2023
  %v2025 = vpop.f32.mrb[0].mxu0
  %v2026 = vadd.f32 %v1447, %v2025
  %2027 = vmatprep.mubr.f32.mxu0 0.0
  %2028 = vmatmul.mubr.f32.gmra.mrb[0].mxu0 %v1608
  %v2029 = vpop.f32.mrb[0].mxu0
  %v2030 = vadd.f32 %v1452, %v2029
  %v2031 = vpop.f32.mrb[0].mxu0
  %v2032 = vadd.f32 %v1452, %v2031
  %2033 = vmatprep.mubr.f32.mxu0 0.0
  %2034 = vmatmul.mubr.f32.gmra.mrb[0].mxu0 %v1611
  %v2035 = vpop.f32.mrb[0].mxu0
  %v2036 = vadd.f32 %v1457, %v2035
  %v2037 = vpop.f32.mrb[0].mxu0
  %v2038 = vadd.f32 %v1457, %v2037
  %2039 = vmatprep.mubr.f32.mxu0 0.0
  %2040 = vmatmul.mubr.f32.gmra.mrb[0].mxu0 %v1614
  %v2041 = vpop.f32.mrb[0].mxu0
  %v2042 = vadd.f32 %v1462, %v2041
  %v2043 = vpop.f32.mrb[0].mxu0
  %v2044 = vadd.f32 %v1462, %v2043
  %2045 = vmatprep.mubr.f32.mxu0 0.0
  %2046 = vmatmul.mubr.f32.gmra.mrb[0].mxu0 %v1617
  %v2047 = vpop.f32.mrb[0].mxu0
  %v2048 = vadd.f32 %v1467, %v2047
  %v2049 = vpop.f32.mrb[0].mxu0
  %v2050 = vadd.f32 %v1467, %v2049
  %2051 = vmatprep.mubr.f32.mxu0 0.0
  %2052 = vmatmul.mubr.f32.gmra.mrb[0].mxu0 %v1620
  %v2053 = vpop.f32.mrb[0].mxu0
  %v2054 = vadd.f32 %v1472, %v2053
  %v2055 = vpop.f32.mrb[0].mxu0
  %v2056 = vadd.f32 %v1472, %v2055
  %2057 = vmatprep.mubr.f32.mxu0 0.0
  %2058 = vmatmul.mubr.f32.gmra.mrb[0].mxu0 %v1623
  %v2059 = vpop.f32.mrb[0].mxu0
  %v2060 = vadd.f32 %v1477, %v2059
  %v2061 = vpop.f32.mrb[0].mxu0
  %v2062 = vadd.f32 %v1477, %v2061
  %2063 = vmatprep.mubr.f32.mxu0 0.0
  %2064 = vmatmul.mubr.f32.gmra.mrb[0].mxu0 %v1626
  %v2065 = vpop.f32.mrb[0].mxu0
  %v2066 = vadd.f32 %v1482, %v2065
  %v2067 = vpop.f32.mrb[0].mxu0
  %v2068 = vadd.f32 %v1482, %v2067
  %2069 = vmatprep.mubr.f32.mxu0 0.0
  %2070 = vmatmul.mubr.f32.gmra.mrb[0].mxu0 %v1629
  %v2071 = vpop.f32.mrb[0].mxu0
  %v2072 = vadd.f32 %v1487, %v2071
  %v2073 = vpop.f32.mrb[0].mxu0
  %v2074 = vadd.f32 %v1487, %v2073
  %2075 = vmatprep.mubr.f32.mxu0 0.0
  %2076 = vmatmul.mubr.f32.gmra.mrb[0].mxu0 %v1632
  %v2077 = vpop.f32.mrb[0].mxu0
  %v2078 = vadd.f32 %v1492, %v2077
  %v2079 = vpop.f32.mrb[0].mxu0
  %v2080 = vadd.f32 %v1492, %v2079
  %2081 = vmatprep.mubr.f32.mxu0 0.0
  %2082 = vmatmul.mubr.f32.gmra.mrb[0].mxu0 %v1635
  %v2083 = vpop.f32.mrb[0].mxu0
  %v2084 = vadd.f32 %v1497, %v2083
  %v2085 = vpop.f32.mrb[0].mxu0
  %v2086 = vadd.f32 %v1497, %v2085
  %2087 = vmatprep.mubr.f32.mxu0 0.0
  %2088 = vmatmul.mubr.f32.gmra.mrb[0].mxu0 %v1638
  %v2089 = vpop.f32.mrb[0].mxu0
  %v2090 = vadd.f32 %v1502, %v2089
  %v2091 = vpop.f32.mrb[0].mxu0
  %v2092 = vadd.f32 %v1502, %v2091
  %2093 = vmatprep.mubr.f32.mxu0 0.0
  %2094 = vmatmul.mubr.f32.gmra.mrb[0].mxu0 %v1641
  %v2095 = vpop.f32.mrb[0].mxu0
  %v2096 = vadd.f32 %v1507, %v2095
  %v2097 = vpop.f32.mrb[0].mxu0
  %v2098 = vadd.f32 %v1507, %v2097
  %2099 = vmatprep.mubr.f32.mxu0 0.0
  %2100 = vmatmul.mubr.f32.gmra.mrb[0].mxu0 %v1644
  %v2101 = vpop.f32.mrb[0].mxu0
  %v2102 = vadd.f32 %v1512, %v2101
  %v2103 = vpop.f32.mrb[0].mxu0
  %v2104 = vadd.f32 %v1512, %v2103
  %2105 = vmatprep.mubr.f32.mxu0 0.0
  %2106 = vmatmul.mubr.f32.gmra.mrb[0].mxu0 %v1647
  %v2107 = vpop.f32.mrb[0].mxu0
  %v2108 = vadd.f32 %v1517, %v2107
  %v2109 = vpop.f32.mrb[0].mxu0
  %v2110 = vadd.f32 %v1517, %v2109
  %2111 = vmatprep.mubr.f32.mxu0 0.0
  %2112 = vmatmul.mubr.f32.gmra.mrb[0].mxu0 %v1650
  %v2113 = vpop.f32.mrb[0].mxu0
  %v2114 = vadd.f32 %v1522, %v2113
  %v2115 = vpop.f32.mrb[0].mxu0
  %v2116 = vadd.f32 %v1522, %v2115
  %2117 = vmatprep.mubr.f32.mxu0 0.0
  %2118 = vmatmul.mubr.f32.gmra.mrb[0].mxu0 %v1653
  %v2119 = vpop.f32.mrb[0].mxu0
  %v2120 = vadd.f32 %v1527, %v2119
  %v2121 = vpop.f32.mrb[0].mxu0
  %v2122 = vadd.f32 %v1527, %v2121
  %2123 = vmatprep.mubr.f32.mxu0 0.0
  %2124 = vmatmul.mubr.f32.gmra.mrb[0].mxu0 %v1656
  %v2125 = vpop.f32.mrb[0].mxu0
  %v2126 = vadd.f32 %v1532, %v2125
  %v2127 = vpop.f32.mrb[0].mxu0
  %v2128 = vadd.f32 %v1532, %v2127
  %2129 = vmatprep.mubr.f32.mxu0 0.0
  %2130 = vmatmul.mubr.f32.gmra.mrb[0].mxu0 %v1659
  %v2131 = vpop.f32.mrb[0].mxu0
  %v2132 = vadd.f32 %v1537, %v2131
  %v2133 = vpop.f32.mrb[0].mxu0
  %v2134 = vadd.f32 %v1537, %v2133
  %2135 = vmatprep.mubr.f32.mxu0 0.0
  %2136 = vmatmul.mubr.f32.gmra.mrb[0].mxu0 %v1662
  %v2137 = vpop.f32.mrb[0].mxu0
  %v2138 = vadd.f32 %v1542, %v2137
  %v2139 = vpop.f32.mrb[0].mxu0
  %v2140 = vadd.f32 %v1542, %v2139
  %2141 = vmatprep.mubr.f32.mxu0 0.0
  %2142 = vmatmul.mubr.f32.gmra.mrb[0].mxu0 %v1665
  %v2143 = vpop.f32.mrb[0].mxu0
  %v2144 = vadd.f32 %v1547, %v2143
  %v2145 = vpop.f32.mrb[0].mxu0
  %v2146 = vadd.f32 %v1547, %v2145
  %2147 = vmatprep.mubr.f32.mxu0 0.0
  %2148 = vmatmul.mubr.f32.gmra.mrb[0].mxu0 %v1668
  %v2149 = vpop.f32.mrb[0].mxu0
  %v2150 = vadd.f32 %v1552, %v2149
  %v2151 = vpop.f32.mrb[0].mxu0
  %v2152 = vadd.f32 %v1552, %v2151
  %2153 = vmatprep.mubr.f32.mxu0 0.0
  %2154 = vmatmul.mubr.f32.gmra.mrb[0].mxu0 %v1671
  %v2155 = vpop.f32.mrb[0].mxu0
  %v2156 = vadd.f32 %v1557, %v2155
  %v2157 = vpop.f32.mrb[0].mxu0
  %v2158 = vadd.f32 %v1557, %v2157
  %2159 = vmatprep.mubr.f32.mxu0 0.0
  %2160 = vmatmul.mubr.f32.gmra.mrb[0].mxu0 %v1674
  %v2161 = vpop.f32.mrb[0].mxu0
  %v2162 = vadd.f32 %v1562, %v2161
  %v2163 = vpop.f32.mrb[0].mxu0
  %v2164 = vadd.f32 %v1562, %v2163
  %2165 = vmatprep.mubr.f32.mxu0 0.0
  %2166 = vmatmul.mubr.f32.gmra.mrb[0].mxu0 %v1677
  %v2167 = vpop.f32.mrb[0].mxu0
  %v2168 = vadd.f32 %v1567, %v2167
  %v2169 = vpop.f32.mrb[0].mxu0
  %v2170 = vadd.f32 %v1567, %v2169
  %2171 = vmatprep.mubr.f32.mxu0 0.0
  %2172 = vmatmul.mubr.f32.gmra.mrb[0].mxu0 %v1680
  %v2173 = vpop.f32.mrb[0].mxu0
  %v2174 = vadd.f32 %v1572, %v2173
  %v2175 = vpop.f32.mrb[0].mxu0
  %v2176 = vadd.f32 %v1572, %v2175
  %2177 = vmatprep.mubr.f32.mxu0 0.0
  %2178 = vmatmul.mubr.f32.gmra.mrb[0].mxu0 %v1683
  %v2179 = vpop.f32.mrb[0].mxu0
  %v2180 = vadd.f32 %v1577, %v2179
  %v2181 = vpop.f32.mrb[0].mxu0
  %v2182 = vadd.f32 %v1577, %v2181
  %2183 = vmatprep.mubr.f32.mxu0 0.0
  %2184 = vmatmul.mubr.f32.gmra.mrb[0].mxu0 %v1686
  %v2185 = vpop.f32.mrb[0].mxu0
  %v2186 = vadd.f32 %v1582, %v2185
  %v2187 = vpop.f32.mrb[0].mxu0
  %v2188 = vadd.f32 %v1582, %v2187
  %2189 = vmatprep.mubr.f32.mxu0 0.0
  %2190 = vmatmul.mubr.f32.gmra.mrb[0].mxu0 %v1689
  %v2191 = vpop.f32.mrb[0].mxu0
  %v2192 = vadd.f32 %v1587, %v2191
  %v2193 = vpop.f32.mrb[0].mxu0
  %v2194 = vadd.f32 %v1587, %v2193
  %2195 = vmatprep.mubr.f32.mxu0 0.0
  %2196 = vmatmul.mubr.f32.gmra.mrb[0].mxu0 %v1692
  %v2197 = vpop.f32.mrb[0].mxu0
  %v2198 = vadd.f32 %v1592, %v2197
  %v2199 = vpop.f32.mrb[0].mxu0
  %v2200 = vadd.f32 %v1592, %v2199
  %2201 = vmatprep.mubr.f32.mxu0 0.0
  %2202 = vmatmul.mubr.f32.gmra.mrb[0].mxu0 %v1695
  %v2203 = vpop.f32.mrb[0].mxu0
  %v2204 = vadd.f32 %v1597, %v2203
  %v2205 = vpop.f32.mrb[0].mxu0
  %v2206 = vadd.f32 %v1597, %v2205
  %2207 = vmatprep.mubr.f32.mxu0 0.0
  %2208 = vmatmul.mubr.f32.gmra.mrb[0].mxu0 %v1698
  %v2209 = vpop.f32.mrb[0].mxu0
  %v2210 = vadd.f32 %v1602, %v2209
  %v2211 = vpop.f32.mrb[0].mxu0
  %v2212 = vadd.f32 %v1602, %v2211
  %2213 = vdwg.mxu0
  %2214 = vst [vmem:[#allocation3] sm:$0xff] %v1767
  %2215 = vst [vmem:[#allocation3 + $0x8] sm:$0xff] %v1769
  %2216 = vst [vmem:[#allocation3 + $0x10] sm:$0xff] %v2024
  %2217 = vst [vmem:[#allocation3 + $0x18] sm:$0xff] %v2026
  %2218 = vst [vmem:[#allocation3 + $0x20] sm:$0xff] %v1773
  %2219 = vst [vmem:[#allocation3 + $0x28] sm:$0xff] %v1775
  %2220 = vst [vmem:[#allocation3 + $0x30] sm:$0xff] %v2030
  %2221 = vst [vmem:[#allocation3 + $0x38] sm:$0xff] %v2032
  %2222 = vst [vmem:[#allocation3 + $0x40] sm:$0xff] %v1779
  %2223 = vst [vmem:[#allocation3 + $0x48] sm:$0xff] %v1781
  %2224 = vst [vmem:[#allocation3 + $0x50] sm:$0xff] %v2036
  %2225 = vst [vmem:[#allocation3 + $0x58] sm:$0xff] %v2038
  %2226 = vst [vmem:[#allocation3 + $0x60] sm:$0xff] %v1785
  %2227 = vst [vmem:[#allocation3 + $0x68] sm:$0xff] %v1787
  %2228 = vst [vmem:[#allocation3 + $0x70] sm:$0xff] %v2042
  %2229 = vst [vmem:[#allocation3 + $0x78] sm:$0xff] %v2044
  %2230 = vst [vmem:[#allocation3 + $0x80] sm:$0xff] %v1791
  %2231 = vst [vmem:[#allocation3 + $0x88] sm:$0xff] %v1793
  %2232 = vst [vmem:[#allocation3 + $0x90] sm:$0xff] %v2048
  %2233 = vst [vmem:[#allocation3 + $0x98] sm:$0xff] %v2050
  %2234 = vst [vmem:[#allocation3 + $0xa0] sm:$0xff] %v1797
  %2235 = vst [vmem:[#allocation3 + $0xa8] sm:$0xff] %v1799
  %2236 = vst [vmem:[#allocation3 + $0xb0] sm:$0xff] %v2054
  %2237 = vst [vmem:[#allocation3 + $0xb8] sm:$0xff] %v2056
  %2238 = vst [vmem:[#allocation3 + $0xc0] sm:$0xff] %v1803
  %2239 = vst [vmem:[#allocation3 + $0xc8] sm:$0xff] %v1805
  %2240 = vst [vmem:[#allocation3 + $0xd0] sm:$0xff] %v2060
  %2241 = vst [vmem:[#allocation3 + $0xd8] sm:$0xff] %v2062
  %2242 = vst [vmem:[#allocation3 + $0xe0] sm:$0xff] %v1809
  %2243 = vst [vmem:[#allocation3 + $0xe8] sm:$0xff] %v1811
  %2244 = vst [vmem:[#allocation3 + $0xf0] sm:$0xff] %v2066
  %2245 = vst [vmem:[#allocation3 + $0xf8] sm:$0xff] %v2068
  %2246 = vst [vmem:[#allocation3 + $0x100] sm:$0xff] %v1815
  %2247 = vst [vmem:[#allocation3 + $0x108] sm:$0xff] %v1817
  %2248 = vst [vmem:[#allocation3 + $0x110] sm:$0xff] %v2072
  %2249 = vst [vmem:[#allocation3 + $0x118] sm:$0xff] %v2074
  %2250 = vst [vmem:[#allocation3 + $0x120] sm:$0xff] %v1821
  %2251 = vst [vmem:[#allocation3 + $0x128] sm:$0xff] %v1823
  %2252 = vst [vmem:[#allocation3 + $0x130] sm:$0xff] %v2078
  %2253 = vst [vmem:[#allocation3 + $0x138] sm:$0xff] %v2080
  %2254 = vst [vmem:[#allocation3 + $0x140] sm:$0xff] %v1827
  %2255 = vst [vmem:[#allocation3 + $0x148] sm:$0xff] %v1829
  %2256 = vst [vmem:[#allocation3 + $0x150] sm:$0xff] %v2084
  %2257 = vst [vmem:[#allocation3 + $0x158] sm:$0xff] %v2086
  %2258 = vst [vmem:[#allocation3 + $0x160] sm:$0xff] %v1833
  %2259 = vst [vmem:[#allocation3 + $0x168] sm:$0xff] %v1835
  %2260 = vst [vmem:[#allocation3 + $0x170] sm:$0xff] %v2090
  %2261 = vst [vmem:[#allocation3 + $0x178] sm:$0xff] %v2092
  %2262 = vst [vmem:[#allocation3 + $0x180] sm:$0xff] %v1839
  %2263 = vst [vmem:[#allocation3 + $0x188] sm:$0xff] %v1841
  %2264 = vst [vmem:[#allocation3 + $0x190] sm:$0xff] %v2096
  %2265 = vst [vmem:[#allocation3 + $0x198] sm:$0xff] %v2098
  %2266 = vst [vmem:[#allocation3 + $0x1a0] sm:$0xff] %v1845
  %2267 = vst [vmem:[#allocation3 + $0x1a8] sm:$0xff] %v1847
  %2268 = vst [vmem:[#allocation3 + $0x1b0] sm:$0xff] %v2102
  %2269 = vst [vmem:[#allocation3 + $0x1b8] sm:$0xff] %v2104
  %2270 = vst [vmem:[#allocation3 + $0x1c0] sm:$0xff] %v1851
  %2271 = vst [vmem:[#allocation3 + $0x1c8] sm:$0xff] %v1853
  %2272 = vst [vmem:[#allocation3 + $0x1d0] sm:$0xff] %v2108
  %2273 = vst [vmem:[#allocation3 + $0x1d8] sm:$0xff] %v2110
  %2274 = vst [vmem:[#allocation3 + $0x1e0] sm:$0xff] %v1857
  %2275 = vst [vmem:[#allocation3 + $0x1e8] sm:$0xff] %v1859
  %2276 = vst [vmem:[#allocation3 + $0x1f0] sm:$0xff] %v2114
  %2277 = vst [vmem:[#allocation3 + $0x1f8] sm:$0xff] %v2116
  %2278 = vst [vmem:[#allocation3 + $0x200] sm:$0xff] %v1863
  %2279 = vst [vmem:[#allocation3 + $0x208] sm:$0xff] %v1865
  %2280 = vst [vmem:[#allocation3 + $0x210] sm:$0xff] %v2120
  %2281 = vst [vmem:[#allocation3 + $0x218] sm:$0xff] %v2122
  %2282 = vst [vmem:[#allocation3 + $0x220] sm:$0xff] %v1869
  %2283 = vst [vmem:[#allocation3 + $0x228] sm:$0xff] %v1871
  %2284 = vst [vmem:[#allocation3 + $0x230] sm:$0xff] %v2126
  %2285 = vst [vmem:[#allocation3 + $0x238] sm:$0xff] %v2128
  %2286 = vst [vmem:[#allocation3 + $0x240] sm:$0xff] %v1875
  %2287 = vst [vmem:[#allocation3 + $0x248] sm:$0xff] %v1877
  %2288 = vst [vmem:[#allocation3 + $0x250] sm:$0xff] %v2132
  %2289 = vst [vmem:[#allocation3 + $0x258] sm:$0xff] %v2134
  %2290 = vst [vmem:[#allocation3 + $0x260] sm:$0xff] %v1881
  %2291 = vst [vmem:[#allocation3 + $0x268] sm:$0xff] %v1883
  %2292 = vst [vmem:[#allocation3 + $0x270] sm:$0xff] %v2138
  %2293 = vst [vmem:[#allocation3 + $0x278] sm:$0xff] %v2140
  %2294 = vst [vmem:[#allocation3 + $0x280] sm:$0xff] %v1887
  %2295 = vst [vmem:[#allocation3 + $0x288] sm:$0xff] %v1889
  %2296 = vst [vmem:[#allocation3 + $0x290] sm:$0xff] %v2144
  %2297 = vst [vmem:[#allocation3 + $0x298] sm:$0xff] %v2146
  %2298 = vst [vmem:[#allocation3 + $0x2a0] sm:$0xff] %v1893
  %2299 = vst [vmem:[#allocation3 + $0x2a8] sm:$0xff] %v1895
  %2300 = vst [vmem:[#allocation3 + $0x2b0] sm:$0xff] %v2150
  %2301 = vst [vmem:[#allocation3 + $0x2b8] sm:$0xff] %v2152
  %2302 = vst [vmem:[#allocation3 + $0x2c0] sm:$0xff] %v1899
  %2303 = vst [vmem:[#allocation3 + $0x2c8] sm:$0xff] %v1901
  %2304 = vst [vmem:[#allocation3 + $0x2d0] sm:$0xff] %v2156
  %2305 = vst [vmem:[#allocation3 + $0x2d8] sm:$0xff] %v2158
  %2306 = vst [vmem:[#allocation3 + $0x2e0] sm:$0xff] %v1905
  %2307 = vst [vmem:[#allocation3 + $0x2e8] sm:$0xff] %v1907
  %2308 = vst [vmem:[#allocation3 + $0x2f0] sm:$0xff] %v2162
  %2309 = vst [vmem:[#allocation3 + $0x2f8] sm:$0xff] %v2164
  %2310 = vst [vmem:[#allocation3 + $0x300] sm:$0xff] %v1911
  %2311 = vst [vmem:[#allocation3 + $0x308] sm:$0xff] %v1913
  %2312 = vst [vmem:[#allocation3 + $0x310] sm:$0xff] %v2168
  %2313 = vst [vmem:[#allocation3 + $0x318] sm:$0xff] %v2170
  %2314 = vst [vmem:[#allocation3 + $0x320] sm:$0xff] %v1917
  %2315 = vst [vmem:[#allocation3 + $0x328] sm:$0xff] %v1919
  %2316 = vst [vmem:[#allocation3 + $0x330] sm:$0xff] %v2174
  %2317 = vst [vmem:[#allocation3 + $0x338] sm:$0xff] %v2176
  %2318 = vst [vmem:[#allocation3 + $0x340] sm:$0xff] %v1923
  %2319 = vst [vmem:[#allocation3 + $0x348] sm:$0xff] %v1925
  %2320 = vst [vmem:[#allocation3 + $0x350] sm:$0xff] %v2180
  %2321 = vst [vmem:[#allocation3 + $0x358] sm:$0xff] %v2182
  %2322 = vst [vmem:[#allocation3 + $0x360] sm:$0xff] %v1929
  %2323 = vst [vmem:[#allocation3 + $0x368] sm:$0xff] %v1931
  %2324 = vst [vmem:[#allocation3 + $0x370] sm:$0xff] %v2186
  %2325 = vst [vmem:[#allocation3 + $0x378] sm:$0xff] %v2188
  %2326 = vst [vmem:[#allocation3 + $0x380] sm:$0xff] %v1935
  %2327 = vst [vmem:[#allocation3 + $0x388] sm:$0xff] %v1937
  %2328 = vst [vmem:[#allocation3 + $0x390] sm:$0xff] %v2192
  %2329 = vst [vmem:[#allocation3 + $0x398] sm:$0xff] %v2194
  %2330 = vst [vmem:[#allocation3 + $0x3a0] sm:$0xff] %v1941
  %2331 = vst [vmem:[#allocation3 + $0x3a8] sm:$0xff] %v1943
  %2332 = vst [vmem:[#allocation3 + $0x3b0] sm:$0xff] %v2198
  %2333 = vst [vmem:[#allocation3 + $0x3b8] sm:$0xff] %v2200
  %2334 = vst [vmem:[#allocation3 + $0x3c0] sm:$0xff] %v1947
  %2335 = vst [vmem:[#allocation3 + $0x3c8] sm:$0xff] %v1949
  %2336 = vst [vmem:[#allocation3 + $0x3d0] sm:$0xff] %v2204
  %2337 = vst [vmem:[#allocation3 + $0x3d8] sm:$0xff] %v2206
  %2338 = vst [vmem:[#allocation3 + $0x3e0] sm:$0xff] %v1953
  %2339 = vst [vmem:[#allocation3 + $0x3e8] sm:$0xff] %v1955
  %2340 = vst [vmem:[#allocation3 + $0x3f0] sm:$0xff] %v2210
  %2341 = vst [vmem:[#allocation3 + $0x3f8] sm:$0xff] %v2212
  %v2342 = vld [vmem:[%s4] sm:$0xff]
  %v2343 = vld [vmem:[%s4 + $0x8] sm:$0xff]
  %v2344 = vld [vmem:[%s4 + $0x10] sm:$0xff]
  %v2345 = vld [vmem:[%s4 + $0x18] sm:$0xff]
  %v2346 = vld [vmem:[%s4 + $0x20] sm:$0xff]
  %v2347 = vld [vmem:[%s4 + $0x28] sm:$0xff]
  %v2348 = vld [vmem:[%s4 + $0x30] sm:$0xff]
  %v2349 = vld [vmem:[%s4 + $0x38] sm:$0xff]
  %v2350 = vld [vmem:[%s4 + $0x40] sm:$0xff]
  %v2351 = vld [vmem:[%s4 + $0x48] sm:$0xff]
  %v2352 = vld [vmem:[%s4 + $0x50] sm:$0xff]
  %v2353 = vld [vmem:[%s4 + $0x58] sm:$0xff]
  %v2354 = vld [vmem:[%s4 + $0x60] sm:$0xff]
  %v2355 = vld [vmem:[%s4 + $0x68] sm:$0xff]
  %v2356 = vld [vmem:[%s4 + $0x70] sm:$0xff]
  %v2357 = vld [vmem:[%s4 + $0x78] sm:$0xff]
  %v2358 = vld [vmem:[#allocation3] sm:$0xff]
  %v2359 = vld [vmem:[#allocation3 + $0x20] sm:$0xff]
  %v2360 = vld [vmem:[#allocation3 + $0x40] sm:$0xff]
  %v2361 = vld [vmem:[#allocation3 + $0x60] sm:$0xff]
  %v2362 = vld [vmem:[#allocation3 + $0x100] sm:$0xff]
  %v2363 = vld [vmem:[#allocation3 + $0x120] sm:$0xff]
  %v2364 = vld [vmem:[#allocation3 + $0x140] sm:$0xff]
  %v2365 = vld [vmem:[#allocation3 + $0x160] sm:$0xff]
  %v2366 = vld [vmem:[#allocation3 + $0x180] sm:$0xff]
  %v2367 = vld [vmem:[#allocation3 + $0x1a0] sm:$0xff]
  %v2368 = vld [vmem:[#allocation3 + $0x1c0] sm:$0xff]
  %v2369 = vld [vmem:[#allocation3 + $0x1e0] sm:$0xff]
  %v2370 = vld [vmem:[#allocation3 + $0x218] sm:$0xff]
  %v2371 = vld [vmem:[#allocation3 + $0x238] sm:$0xff]
  %v2372 = vld [vmem:[#allocation3 + $0x258] sm:$0xff]
  %v2373 = vld [vmem:[#allocation3 + $0x278] sm:$0xff]
  %v2374 = vld [vmem:[#allocation3 + $0x318] sm:$0xff]
  %v2375 = vld [vmem:[#allocation3 + $0x338] sm:$0xff]
  %v2376 = vld [vmem:[#allocation3 + $0x358] sm:$0xff]
  %v2377 = vld [vmem:[#allocation3 + $0x378] sm:$0xff]
  %v2378 = vld [vmem:[#allocation3 + $0x398] sm:$0xff]
  %v2379 = vld [vmem:[#allocation3 + $0x3b8] sm:$0xff]
  %v2380 = vld [vmem:[#allocation3 + $0x3d8] sm:$0xff]
  %v2381 = vld [vmem:[#allocation3 + $0x3f8] sm:$0xff]
  %v2382 = vsel %vm1347, %v2358, %v2370
  %v2383 = vsel %vm1347, %v2359, %v2371
  %v2384 = vsel %vm1347, %v2360, %v2372
  %v2385 = vsel %vm1347, %v2361, %v2373
  %v2386 = vsel %vm1347, %v2362, %v2374
  %v2387 = vsel %vm1347, %v2363, %v2375
  %v2388 = vsel %vm1347, %v2364, %v2376
  %v2389 = vsel %vm1347, %v2365, %v2377
  %v2390 = vsel %vm1347, %v2366, %v2378
  %v2391 = vsel %vm1347, %v2367, %v2379
  %v2392 = vsel %vm1347, %v2368, %v2380
  %v2393 = vsel %vm1347, %v2369, %v2381
  %v2394 = vxor.u32 %v2382, 2147483648
  %v2395 = vxor.u32 %v2383, 2147483648
  %v2396 = vxor.u32 %v2384, 2147483648
  %v2397 = vxor.u32 %v2385, 2147483648
  %v2398 = vmul.f32 %v2394, 1.442695
  %v2399 = vpow.pop %v2398
  %v2400 = vmul.f32 %v2395, 1.442695
  %v2401 = vpow.pop %v2400
  %v2402 = vmul.f32 %v2396, 1.442695
  %v2403 = vpow.pop %v2402
  %v2404 = vmul.f32 %v2397, 1.442695
  %v2405 = vpow.pop %v2404
  %v2406 = vadd.f32 %v2399, 1.0
  %v2407 = vadd.f32 %v2401, 1.0
  %v2408 = vadd.f32 %v2403, 1.0
  %v2409 = vadd.f32 %v2405, 1.0
  %v2410 = vrcp.pop %v2406
  %v2411 = vmul.f32 1.0, %v2410
  %v2412 = vrcp.pop %v2407
  %v2413 = vmul.f32 1.0, %v2412
  %v2414 = vrcp.pop %v2408
  %v2415 = vmul.f32 1.0, %v2414
  %v2416 = vrcp.pop %v2409
  %v2417 = vmul.f32 1.0, %v2416
  %v2418 = vtanh.pop %v2386
  %v2419 = vtanh.pop %v2387
  %v2420 = vtanh.pop %v2388
  %v2421 = vtanh.pop %v2389
  %v2422 = vxor.u32 %v2390, 2147483648
  %v2423 = vxor.u32 %v2391, 2147483648
  %v2424 = vxor.u32 %v2392, 2147483648
  %v2425 = vxor.u32 %v2393, 2147483648
  %v2426 = vmul.f32 %v2422, 1.442695
  %v2427 = vpow.pop %v2426
  %v2428 = vmul.f32 %v2423, 1.442695
  %v2429 = vpow.pop %v2428
  %v2430 = vmul.f32 %v2424, 1.442695
  %v2431 = vpow.pop %v2430
  %v2432 = vmul.f32 %v2425, 1.442695
  %v2433 = vpow.pop %v2432
  %v2434 = vadd.f32 %v2427, 1.0
  %v2435 = vadd.f32 %v2429, 1.0
  %v2436 = vadd.f32 %v2431, 1.0
  %v2437 = vadd.f32 %v2433, 1.0
  %v2438 = vrcp.pop %v2434
  %v2439 = vmul.f32 1.0, %v2438
  %v2440 = vrcp.pop %v2435
  %v2441 = vmul.f32 1.0, %v2440
  %v2442 = vrcp.pop %v2436
  %v2443 = vmul.f32 1.0, %v2442
  %v2444 = vrcp.pop %v2437
  %v2445 = vmul.f32 1.0, %v2444
  %v2446 = vmul.f32 %v2411, %v2418
  %v2447 = vmul.f32 %v2413, %v2419
  %v2448 = vmul.f32 %v2415, %v2420
  %v2449 = vmul.f32 %v2417, %v2421
  %v2450 = vtanh.pop %v2446
  %v2451 = vtanh.pop %v2447
  %v2452 = vtanh.pop %v2448
  %v2453 = vtanh.pop %v2449
  %v2454 = vmul.f32 %v2439, %v2450
  %v2455 = vmul.f32 %v2441, %v2451
  %v2456 = vmul.f32 %v2443, %v2452
  %v2457 = vmul.f32 %v2445, %v2453
  %2458 = vst.msk [vmem:[#allocation4] sm:$0xff] %vm192, %v2454
  %2459 = vst.msk [vmem:[#allocation4 + $0x20] sm:$0xff] %vm192, %v2455
  %2460 = vst.msk [vmem:[#allocation4 + $0x40] sm:$0xff] %vm192, %v2456
  %2461 = vst.msk [vmem:[#allocation4 + $0x60] sm:$0xff] %vm192, %v2457
  %2462 = vst.msk [vmem:[#allocation4 + $0x98] sm:$0xff] %vm370, %v2454
  %2463 = vst.msk [vmem:[#allocation4 + $0xb8] sm:$0xff] %vm370, %v2455
  %2464 = vst.msk [vmem:[#allocation4 + $0xd8] sm:$0xff] %vm370, %v2456
  %2465 = vst.msk [vmem:[#allocation4 + $0xf8] sm:$0xff] %vm370, %v2457
  %v2466 = vld [vmem:[#allocation3] sm:$0xff]
  %v2467 = vld [vmem:[#allocation3 + $0x20] sm:$0xff]
  %v2468 = vld [vmem:[#allocation3 + $0x40] sm:$0xff]
  %v2469 = vld [vmem:[#allocation3 + $0x60] sm:$0xff]
  %v2470 = vld [vmem:[#allocation3 + $0x80] sm:$0xff]
  %v2471 = vld [vmem:[#allocation3 + $0xa0] sm:$0xff]
  %v2472 = vld [vmem:[#allocation3 + $0xc0] sm:$0xff]
  %v2473 = vld [vmem:[#allocation3 + $0xe0] sm:$0xff]
  %v2474 = vld [vmem:[#allocation3 + $0x100] sm:$0xff]
  %v2475 = vld [vmem:[#allocation3 + $0x120] sm:$0xff]
  %v2476 = vld [vmem:[#allocation3 + $0x140] sm:$0xff]
  %v2477 = vld [vmem:[#allocation3 + $0x160] sm:$0xff]
  %v2478 = vld [vmem:[#allocation3 + $0x180] sm:$0xff]
  %v2479 = vld [vmem:[#allocation3 + $0x1a0] sm:$0xff]
  %v2480 = vld [vmem:[#allocation3 + $0x1c0] sm:$0xff]
  %v2481 = vld [vmem:[#allocation3 + $0x1e0] sm:$0xff]
  %v2482 = vld [vmem:[#allocation3 + $0x218] sm:$0xff]
  %v2483 = vld [vmem:[#allocation3 + $0x238] sm:$0xff]
  %v2484 = vld [vmem:[#allocation3 + $0x258] sm:$0xff]
  %v2485 = vld [vmem:[#allocation3 + $0x278] sm:$0xff]
  %v2486 = vld [vmem:[#allocation3 + $0x298] sm:$0xff]
  %v2487 = vld [vmem:[#allocation3 + $0x2b8] sm:$0xff]
  %v2488 = vld [vmem:[#allocation3 + $0x2d8] sm:$0xff]
  %v2489 = vld [vmem:[#allocation3 + $0x2f8] sm:$0xff]
  %v2490 = vld [vmem:[#allocation3 + $0x318] sm:$0xff]
  %v2491 = vld [vmem:[#allocation3 + $0x338] sm:$0xff]
  %v2492 = vld [vmem:[#allocation3 + $0x358] sm:$0xff]
  %v2493 = vld [vmem:[#allocation3 + $0x378] sm:$0xff]
  %v2494 = vld [vmem:[#allocation3 + $0x398] sm:$0xff]
  %v2495 = vld [vmem:[#allocation3 + $0x3b8] sm:$0xff]
  %v2496 = vld [vmem:[#allocation3 + $0x3d8] sm:$0xff]
  %v2497 = vld [vmem:[#allocation3 + $0x3f8] sm:$0xff]
  %v2498 = vsel %vm1347, %v2482, %v2466
  %v2499 = vsel %vm1347, %v2483, %v2467
  %v2500 = vsel %vm1347, %v2484, %v2468
  %v2501 = vsel %vm1347, %v2485, %v2469
  %v2502 = vsel %vm1347, %v2486, %v2470
  %v2503 = vsel %vm1347, %v2487, %v2471
  %v2504 = vsel %vm1347, %v2488, %v2472
  %v2505 = vsel %vm1347, %v2489, %v2473
  %v2506 = vsel %vm1347, %v2490, %v2474
  %v2507 = vsel %vm1347, %v2491, %v2475
  %v2508 = vsel %vm1347, %v2492, %v2476
  %v2509 = vsel %vm1347, %v2493, %v2477
  %v2510 = vsel %vm1347, %v2494, %v2478
  %v2511 = vsel %vm1347, %v2495, %v2479
  %v2512 = vsel %vm1347, %v2496, %v2480
  %v2513 = vsel %vm1347, %v2497, %v2481
  %2514 = vrot.lane.b32.xlu0 %v2498, 64
  %v2515 = vpop.permute.xlu0 %2514
  %2516 = vrot.lane.b32.xlu0 %v2499, 64
  %v2517 = vpop.permute.xlu0 %2516
  %2518 = vrot.lane.b32.xlu0 %v2500, 64
  %v2519 = vpop.permute.xlu0 %2518
  %2520 = vrot.lane.b32.xlu0 %v2501, 64
  %v2521 = vpop.permute.xlu0 %2520
  %2522 = vrot.lane.b32.xlu0 %v2502, 64
  %v2523 = vpop.permute.xlu0 %2522
  %2524 = vrot.lane.b32.xlu0 %v2503, 64
  %v2525 = vpop.permute.xlu0 %2524
  %2526 = vrot.lane.b32.xlu0 %v2504, 64
  %v2527 = vpop.permute.xlu0 %2526
  %2528 = vrot.lane.b32.xlu0 %v2505, 64
  %v2529 = vpop.permute.xlu0 %2528
  %2530 = vrot.lane.b32.xlu0 %v2506, 64
  %v2531 = vpop.permute.xlu0 %2530
  %2532 = vrot.lane.b32.xlu0 %v2507, 64
  %v2533 = vpop.permute.xlu0 %2532
  %2534 = vrot.lane.b32.xlu0 %v2508, 64
  %v2535 = vpop.permute.xlu0 %2534
  %2536 = vrot.lane.b32.xlu0 %v2509, 64
  %v2537 = vpop.permute.xlu0 %2536
  %2538 = vrot.lane.b32.xlu0 %v2510, 64
  %v2539 = vpop.permute.xlu0 %2538
  %2540 = vrot.lane.b32.xlu0 %v2511, 64
  %v2541 = vpop.permute.xlu0 %2540
  %2542 = vrot.lane.b32.xlu0 %v2512, 64
  %v2543 = vpop.permute.xlu0 %2542
  %2544 = vrot.lane.b32.xlu0 %v2513, 64
  %v2545 = vpop.permute.xlu0 %2544
  %v2546 = vsel %vm1347, %v2454, 0.0
  %v2547 = vsel %vm1347, %v2455, 0.0
  %v2548 = vsel %vm1347, %v2456, 0.0
  %v2549 = vsel %vm1347, %v2457, 0.0
  %v2550 = vsel %vm1347, 0.0, %v2454
  %v2551 = vsel %vm1347, 0.0, %v2455
  %v2552 = vsel %vm1347, 0.0, %v2456
  %v2553 = vsel %vm1347, 0.0, %v2457
  %v2555 = vsel %vm192, %v2342, 0
  %v2558 = vsel %vm192, %v2343, 0
  %v2561 = vsel %vm192, %v2344, 0
  %v2564 = vsel %vm192, %v2345, 0
  %v2567 = vsel %vm192, %v2346, 0
  %v2570 = vsel %vm192, %v2347, 0
  %v2573 = vsel %vm192, %v2348, 0
  %v2576 = vsel %vm192, %v2349, 0
  %v2579 = vsel %vm192, %v2350, 0
  %v2582 = vsel %vm192, %v2351, 0
  %v2585 = vsel %vm192, %v2352, 0
  %v2588 = vsel %vm192, %v2353, 0
  %v2591 = vsel %vm192, %v2354, 0
  %v2594 = vsel %vm192, %v2355, 0
  %v2597 = vsel %vm192, %v2356, 0
  %v2600 = vsel %vm192, %v2357, 0
  %2602 = vmatprep.subr.mxu0 0.0
  %2603 = vmatpush1.msra.mxu0 %v2546
  %2604 = vmatprep.subr.mxu0 0.0
  %2605 = vmatpush1.msra.mxu0 %v2547
  %2606 = vmatprep.subr.mxu0 0.0
  %2607 = vmatpush1.msra.mxu0 %v2548
  %2608 = vmatprep.subr.mxu0 0.0
  %2609 = vmatpush1.msra.mxu0 %v2549
  %2610 = vmatprep.subr.mxu0 0.0
  %2611 = vmatpush1.msra.mxu0 %v2550
  %2612 = vmatprep.subr.mxu0 0.0
  %2613 = vmatpush1.msra.mxu0 %v2551
  %2614 = vmatprep.subr.mxu0 0.0
  %2615 = vmatpush1.msra.mxu0 %v2552
  %2616 = vmatprep.subr.mxu0 0.0
  %2617 = vmatpush1.msra.mxu0 %v2553
  %2618 = vmatprep.subr.mxu0 0.0
  %2619 = vmatpush1.msra.mxu0 0.0
  %2620 = vmatprep.subr.mxu0 0.0
  %2621 = vmatpush1.msra.mxu0 0.0
  %2622 = vmatprep.subr.mxu0 0.0
  %2623 = vmatpush1.msra.mxu0 0.0
  %2624 = vmatprep.subr.mxu0 0.0
  %2625 = vmatpush1.msra.mxu0 0.0
  %2626 = vmatprep.subr.mxu0 0.0
  %2627 = vmatpush1.msra.mxu0 0.0
  %2628 = vmatprep.subr.mxu0 0.0
  %2629 = vmatpush1.msra.mxu0 0.0
  %2630 = vmatprep.subr.mxu0 0.0
  %2631 = vmatpush1.msra.mxu0 0.0
  %2632 = vmatprep.subr.mxu0 0.0
  %2633 = vmatpush1.msra.mxu0 0.0
  %2634 = vmatprep.subr.mxu0 0.0
  %2635 = vmatpush1.msra.mxu0 0.0
  %2636 = vmatprep.subr.mxu0 0.0
  %2637 = vmatpush1.msra.mxu0 0.0
  %2638 = vmatprep.subr.mxu0 0.0
  %2639 = vmatpush1.msra.mxu0 0.0
  %2640 = vmatprep.subr.mxu0 0.0
  %2641 = vmatpush1.msra.mxu0 0.0
  %2642 = vmatprep.subr.mxu0 0.0
  %2643 = vmatpush1.msra.mxu0 0.0
  %2644 = vmatprep.subr.mxu0 0.0
  %2645 = vmatpush1.msra.mxu0 0.0
  %2646 = vmatprep.subr.mxu0 0.0
  %2647 = vmatpush1.msra.mxu0 0.0
  %2648 = vmatprep.subr.mxu0 0.0
  %2649 = vmatpush1.msra.mxu0 0.0
  %2650 = vmatprep.subr.mxu0 0.0
  %2651 = vmatpush1.msra.mxu0 0.0
  %2652 = vmatprep.subr.mxu0 0.0
  %2653 = vmatpush1.msra.mxu0 0.0
  %2654 = vmatprep.subr.mxu0 0.0
  %2655 = vmatpush1.msra.mxu0 0.0
  %2656 = vmatprep.subr.mxu0 0.0
  %2657 = vmatpush1.msra.mxu0 0.0
  %2658 = vmatprep.subr.mxu0 0.0
  %2659 = vmatpush1.msra.mxu0 0.0
  %2660 = vmatprep.subr.mxu0 0.0
  %2661 = vmatpush1.msra.mxu0 0.0
  %2662 = vmatprep.subr.mxu0 0.0
  %2663 = vmatpush1.msra.mxu0 0.0
  %2664 = vmatprep.subr.mxu0 0.0
  %2665 = vmatpush1.msra.mxu0 0.0
  %2666 = vmatprep.mubr.f32.mxu0 0.0
  %2667 = vmatmul.mubr.f32.gmra.mrb[0].mxu0 %v2555
  %v2668 = vpop.f32.mrb[0].mxu0
  %v2669 = vadd.f32 0.0, %v2668
  %v2670 = vpop.f32.mrb[0].mxu0
  %2671 = vmatprep.mubr.f32.mxu0 0.0
  %2672 = vmatmul.mubr.f32.gmra.mrb[0].mxu0 %v2558
  %v2673 = vpop.f32.mrb[0].mxu0
  %v2674 = vadd.f32 0.0, %v2673
  %v2675 = vpop.f32.mrb[0].mxu0
  %2676 = vmatprep.mubr.f32.mxu0 0.0
  %2677 = vmatmul.mubr.f32.gmra.mrb[0].mxu0 %v2561
  %v2678 = vpop.f32.mrb[0].mxu0
  %v2679 = vadd.f32 0.0, %v2678
  %v2680 = vpop.f32.mrb[0].mxu0
  %2681 = vmatprep.mubr.f32.mxu0 0.0
  %2682 = vmatmul.mubr.f32.gmra.mrb[0].mxu0 %v2564
  %v2683 = vpop.f32.mrb[0].mxu0
  %v2684 = vadd.f32 0.0, %v2683
  %v2685 = vpop.f32.mrb[0].mxu0
  %2686 = vmatprep.mubr.f32.mxu0 0.0
  %2687 = vmatmul.mubr.f32.gmra.mrb[0].mxu0 %v2567
  %v2688 = vpop.f32.mrb[0].mxu0
  %v2689 = vadd.f32 0.0, %v2688
  %v2690 = vpop.f32.mrb[0].mxu0
  %2691 = vmatprep.mubr.f32.mxu0 0.0
  %2692 = vmatmul.mubr.f32.gmra.mrb[0].mxu0 %v2570
  %v2693 = vpop.f32.mrb[0].mxu0
  %v2694 = vadd.f32 0.0, %v2693
  %v2695 = vpop.f32.mrb[0].mxu0
  %2696 = vmatprep.mubr.f32.mxu0 0.0
  %2697 = vmatmul.mubr.f32.gmra.mrb[0].mxu0 %v2573
  %v2698 = vpop.f32.mrb[0].mxu0
  %v2699 = vadd.f32 0.0, %v2698
  %v2700 = vpop.f32.mrb[0].mxu0
  %2701 = vmatprep.mubr.f32.mxu0 0.0
  %2702 = vmatmul.mubr.f32.gmra.mrb[0].mxu0 %v2576
  %v2703 = vpop.f32.mrb[0].mxu0
  %v2704 = vadd.f32 0.0, %v2703
  %v2705 = vpop.f32.mrb[0].mxu0
  %2706 = vmatprep.mubr.f32.mxu0 0.0
  %2707 = vmatmul.mubr.f32.gmra.mrb[0].mxu0 %v2579
  %v2708 = vpop.f32.mrb[0].mxu0
  %v2709 = vadd.f32 0.0, %v2708
  %v2710 = vpop.f32.mrb[0].mxu0
  %2711 = vmatprep.mubr.f32.mxu0 0.0
  %2712 = vmatmul.mubr.f32.gmra.mrb[0].mxu0 %v2582
  %v2713 = vpop.f32.mrb[0].mxu0
  %v2714 = vadd.f32 0.0, %v2713
  %v2715 = vpop.f32.mrb[0].mxu0
  %2716 = vmatprep.mubr.f32.mxu0 0.0
  %2717 = vmatmul.mubr.f32.gmra.mrb[0].mxu0 %v2585
  %v2718 = vpop.f32.mrb[0].mxu0
  %v2719 = vadd.f32 0.0, %v2718
  %v2720 = vpop.f32.mrb[0].mxu0
  %2721 = vmatprep.mubr.f32.mxu0 0.0
  %2722 = vmatmul.mubr.f32.gmra.mrb[0].mxu0 %v2588
  %v2723 = vpop.f32.mrb[0].mxu0
  %v2724 = vadd.f32 0.0, %v2723
  %v2725 = vpop.f32.mrb[0].mxu0
  %2726 = vmatprep.mubr.f32.mxu0 0.0
  %2727 = vmatmul.mubr.f32.gmra.mrb[0].mxu0 %v2591
  %v2728 = vpop.f32.mrb[0].mxu0
  %v2729 = vadd.f32 0.0, %v2728
  %v2730 = vpop.f32.mrb[0].mxu0
  %2731 = vmatprep.mubr.f32.mxu0 0.0
  %2732 = vmatmul.mubr.f32.gmra.mrb[0].mxu0 %v2594
  %v2733 = vpop.f32.mrb[0].mxu0
  %v2734 = vadd.f32 0.0, %v2733
  %v2735 = vpop.f32.mrb[0].mxu0
  %2736 = vmatprep.mubr.f32.mxu0 0.0
  %2737 = vmatmul.mubr.f32.gmra.mrb[0].mxu0 %v2597
  %v2738 = vpop.f32.mrb[0].mxu0
  %v2739 = vadd.f32 0.0, %v2738
  %v2740 = vpop.f32.mrb[0].mxu0
  %2741 = vmatprep.mubr.f32.mxu0 0.0
  %2742 = vmatmul.mubr.f32.gmra.mrb[0].mxu0 %v2600
  %v2743 = vpop.f32.mrb[0].mxu0
  %v2744 = vadd.f32 0.0, %v2743
  %v2745 = vpop.f32.mrb[0].mxu0
  %2746 = vdwg.mxu0
  %v2747 = vadd.f32 %v2515, %v2669
  %v2748 = vadd.f32 %v2517, %v2674
  %v2749 = vadd.f32 %v2519, %v2679
  %v2750 = vadd.f32 %v2521, %v2684
  %v2751 = vadd.f32 %v2523, %v2689
  %v2752 = vadd.f32 %v2525, %v2694
  %v2753 = vadd.f32 %v2527, %v2699
  %v2754 = vadd.f32 %v2529, %v2704
  %v2755 = vadd.f32 %v2531, %v2709
  %v2756 = vadd.f32 %v2533, %v2714
  %v2757 = vadd.f32 %v2535, %v2719
  %v2758 = vadd.f32 %v2537, %v2724
  %v2759 = vadd.f32 %v2539, %v2729
  %v2760 = vadd.f32 %v2541, %v2734
  %v2761 = vadd.f32 %v2543, %v2739
  %v2762 = vadd.f32 %v2545, %v2744
  %v2763 = vxor.u32 %v2747, 2147483648
  %v2764 = vxor.u32 %v2748, 2147483648
  %v2765 = vxor.u32 %v2749, 2147483648
  %v2766 = vxor.u32 %v2750, 2147483648
  %v2767 = vmul.f32 %v2763, 1.442695
  %v2768 = vpow.pop %v2767
  %v2769 = vmul.f32 %v2764, 1.442695
  %v2770 = vpow.pop %v2769
  %v2771 = vmul.f32 %v2765, 1.442695
  %v2772 = vpow.pop %v2771
  %v2773 = vmul.f32 %v2766, 1.442695
  %v2774 = vpow.pop %v2773
  %v2775 = vadd.f32 %v2768, 1.0
  %v2776 = vadd.f32 %v2770, 1.0
  %v2777 = vadd.f32 %v2772, 1.0
  %v2778 = vadd.f32 %v2774, 1.0
  %v2779 = vrcp.pop %v2775
  %v2780 = vmul.f32 1.0, %v2779
  %v2781 = vrcp.pop %v2776
  %v2782 = vmul.f32 1.0, %v2781
  %v2783 = vrcp.pop %v2777
  %v2784 = vmul.f32 1.0, %v2783
  %v2785 = vrcp.pop %v2778
  %v2786 = vmul.f32 1.0, %v2785
  %v2787 = vtanh.pop %v2755
  %v2788 = vtanh.pop %v2756
  %v2789 = vtanh.pop %v2757
  %v2790 = vtanh.pop %v2758
  %v2791 = vxor.u32 %v2759, 2147483648
  %v2792 = vxor.u32 %v2760, 2147483648
  %v2793 = vxor.u32 %v2761, 2147483648
  %v2794 = vxor.u32 %v2762, 2147483648
  %v2795 = vmul.f32 %v2791, 1.442695
  %v2796 = vpow.pop %v2795
  %v2797 = vmul.f32 %v2792, 1.442695
  %v2798 = vpow.pop %v2797
  %v2799 = vmul.f32 %v2793, 1.442695
  %v2800 = vpow.pop %v2799
  %v2801 = vmul.f32 %v2794, 1.442695
  %v2802 = vpow.pop %v2801
  %v2803 = vadd.f32 %v2796, 1.0
  %v2804 = vadd.f32 %v2798, 1.0
  %v2805 = vadd.f32 %v2800, 1.0
  %v2806 = vadd.f32 %v2802, 1.0
  %v2807 = vrcp.pop %v2803
  %v2808 = vmul.f32 1.0, %v2807
  %v2809 = vrcp.pop %v2804
  %v2810 = vmul.f32 1.0, %v2809
  %v2811 = vrcp.pop %v2805
  %v2812 = vmul.f32 1.0, %v2811
  %v2813 = vrcp.pop %v2806
  %v2814 = vmul.f32 1.0, %v2813
  %v2815 = vxor.u32 %v2751, 2147483648
  %v2816 = vxor.u32 %v2752, 2147483648
  %v2817 = vxor.u32 %v2753, 2147483648
  %v2818 = vxor.u32 %v2754, 2147483648
  %v2819 = vmul.f32 %v2815, 1.442695
  %v2820 = vpow.pop %v2819
  %v2821 = vmul.f32 %v2816, 1.442695
  %v2822 = vpow.pop %v2821
  %v2823 = vmul.f32 %v2817, 1.442695
  %v2824 = vpow.pop %v2823
  %v2825 = vmul.f32 %v2818, 1.442695
  %v2826 = vpow.pop %v2825
  %v2827 = vadd.f32 %v2820, 1.0
  %v2828 = vadd.f32 %v2822, 1.0
  %v2829 = vadd.f32 %v2824, 1.0
  %v2830 = vadd.f32 %v2826, 1.0
  %v2831 = vrcp.pop %v2827
  %v2832 = vmul.f32 1.0, %v2831
  %v2833 = vrcp.pop %v2828
  %v2834 = vmul.f32 1.0, %v2833
  %v2835 = vrcp.pop %v2829
  %v2836 = vmul.f32 1.0, %v2835
  %v2837 = vrcp.pop %v2830
  %v2838 = vmul.f32 1.0, %v2837
  %v2839 = vmul.f32 %v2832, %v2446
  %v2840 = vmul.f32 %v2834, %v2447
  %v2841 = vmul.f32 %v2836, %v2448
  %v2842 = vmul.f32 %v2838, %v2449
  %v2843 = vmul.f32 %v2780, %v2787
  %v2844 = vmul.f32 %v2782, %v2788
  %v2845 = vmul.f32 %v2784, %v2789
  %v2846 = vmul.f32 %v2786, %v2790
  %v2847 = vadd.f32 %v2839, %v2843
  %v2848 = vadd.f32 %v2840, %v2844
  %v2849 = vadd.f32 %v2841, %v2845
  %v2850 = vadd.f32 %v2842, %v2846
  %v2851 = vtanh.pop %v2847
  %v2852 = vtanh.pop %v2848
  %v2853 = vtanh.pop %v2849
  %v2854 = vtanh.pop %v2850
  %v2855 = vmul.f32 %v2808, %v2851
  %v2856 = vmul.f32 %v2810, %v2852
  %v2857 = vmul.f32 %v2812, %v2853
  %v2858 = vmul.f32 %v2814, %v2854
  %2863 = vrot.lane.b32.xlu0 %v2855, 64
  %v2864 = vpop.permute.xlu0 %2863
  %2865 = vrot.lane.b32.xlu0 %v2856, 64
  %v2866 = vpop.permute.xlu0 %2865
  %2867 = vrot.lane.b32.xlu0 %v2857, 64
  %v2868 = vpop.permute.xlu0 %2867
  %2869 = vrot.lane.b32.xlu0 %v2858, 64
  %v2870 = vpop.permute.xlu0 %2869
  %2875 = vst.msk [vmem:[#allocation4] sm:$0xff] %vm370, %v2864
  %2876 = vst.msk [vmem:[#allocation4 + $0x20] sm:$0xff] %vm370, %v2866
  %2877 = vst.msk [vmem:[#allocation4 + $0x40] sm:$0xff] %vm370, %v2868
  %2878 = vst.msk [vmem:[#allocation4 + $0x60] sm:$0xff] %vm370, %v2870
  %2879 = vst.msk [vmem:[#allocation4 + $0x98] sm:$0xff] %vm192, %v2864
  %2880 = vst.msk [vmem:[#allocation4 + $0xb8] sm:$0xff] %vm192, %v2866
  %2881 = vst.msk [vmem:[#allocation4 + $0xd8] sm:$0xff] %vm192, %v2868
  %2882 = vst.msk [vmem:[#allocation4 + $0xf8] sm:$0xff] %vm192, %v2870
  %v2883 = vld [vmem:[#allocation3 + $0x8] sm:$0xff]
  %v2884 = vld [vmem:[#allocation3 + $0x28] sm:$0xff]
  %v2885 = vld [vmem:[#allocation3 + $0x48] sm:$0xff]
  %v2886 = vld [vmem:[#allocation3 + $0x68] sm:$0xff]
  %v2887 = vld [vmem:[#allocation3 + $0x88] sm:$0xff]
  %v2888 = vld [vmem:[#allocation3 + $0xa8] sm:$0xff]
  %v2889 = vld [vmem:[#allocation3 + $0xc8] sm:$0xff]
  %v2890 = vld [vmem:[#allocation3 + $0xe8] sm:$0xff]
  %v2891 = vld [vmem:[#allocation3 + $0x108] sm:$0xff]
  %v2892 = vld [vmem:[#allocation3 + $0x128] sm:$0xff]
  %v2893 = vld [vmem:[#allocation3 + $0x148] sm:$0xff]
  %v2894 = vld [vmem:[#allocation3 + $0x168] sm:$0xff]
  %v2895 = vld [vmem:[#allocation3 + $0x188] sm:$0xff]
  %v2896 = vld [vmem:[#allocation3 + $0x1a8] sm:$0xff]
  %v2897 = vld [vmem:[#allocation3 + $0x1c8] sm:$0xff]
  %v2898 = vld [vmem:[#allocation3 + $0x1e8] sm:$0xff]
  %v2899 = vld [vmem:[#allocation3 + $0x210] sm:$0xff]
  %v2900 = vld [vmem:[#allocation3 + $0x230] sm:$0xff]
  %v2901 = vld [vmem:[#allocation3 + $0x250] sm:$0xff]
  %v2902 = vld [vmem:[#allocation3 + $0x270] sm:$0xff]
  %v2903 = vld [vmem:[#allocation3 + $0x290] sm:$0xff]
  %v2904 = vld [vmem:[#allocation3 + $0x2b0] sm:$0xff]
  %v2905 = vld [vmem:[#allocation3 + $0x2d0] sm:$0xff]
  %v2906 = vld [vmem:[#allocation3 + $0x2f0] sm:$0xff]
  %v2907 = vld [vmem:[#allocation3 + $0x310] sm:$0xff]
  %v2908 = vld [vmem:[#allocation3 + $0x330] sm:$0xff]
  %v2909 = vld [vmem:[#allocation3 + $0x350] sm:$0xff]
  %v2910 = vld [vmem:[#allocation3 + $0x370] sm:$0xff]
  %v2911 = vld [vmem:[#allocation3 + $0x390] sm:$0xff]
  %v2912 = vld [vmem:[#allocation3 + $0x3b0] sm:$0xff]
  %v2913 = vld [vmem:[#allocation3 + $0x3d0] sm:$0xff]
  %v2914 = vld [vmem:[#allocation3 + $0x3f0] sm:$0xff]
  %v2915 = vsel %vm1347, %v2883, %v2899
  %v2916 = vsel %vm1347, %v2884, %v2900
  %v2917 = vsel %vm1347, %v2885, %v2901
  %v2918 = vsel %vm1347, %v2886, %v2902
  %v2919 = vsel %vm1347, %v2887, %v2903
  %v2920 = vsel %vm1347, %v2888, %v2904
  %v2921 = vsel %vm1347, %v2889, %v2905
  %v2922 = vsel %vm1347, %v2890, %v2906
  %v2923 = vsel %vm1347, %v2891, %v2907
  %v2924 = vsel %vm1347, %v2892, %v2908
  %v2925 = vsel %vm1347, %v2893, %v2909
  %v2926 = vsel %vm1347, %v2894, %v2910
  %v2927 = vsel %vm1347, %v2895, %v2911
  %v2928 = vsel %vm1347, %v2896, %v2912
  %v2929 = vsel %vm1347, %v2897, %v2913
  %v2930 = vsel %vm1347, %v2898, %v2914
  %v2931 = vsel %vm1347, %v2855, 0.0
  %v2932 = vsel %vm1347, %v2856, 0.0
  %v2933 = vsel %vm1347, %v2857, 0.0
  %v2934 = vsel %vm1347, %v2858, 0.0
  %v2935 = vsel %vm1347, 0.0, %v2855
  %v2936 = vsel %vm1347, 0.0, %v2856
  %v2937 = vsel %vm1347, 0.0, %v2857
  %v2938 = vsel %vm1347, 0.0, %v2858
  %2939 = vmatprep.subr.mxu0 0.0
  %2940 = vmatpush1.msra.mxu0 %v2931
  %2941 = vmatprep.subr.mxu0 0.0
  %2942 = vmatpush1.msra.mxu0 %v2932
  %2943 = vmatprep.subr.mxu0 0.0
  %2944 = vmatpush1.msra.mxu0 %v2933
  %2945 = vmatprep.subr.mxu0 0.0
  %2946 = vmatpush1.msra.mxu0 %v2934
  %2947 = vmatprep.subr.mxu0 0.0
  %2948 = vmatpush1.msra.mxu0 %v2935
  %2949 = vmatprep.subr.mxu0 0.0
  %2950 = vmatpush1.msra.mxu0 %v2936
  %2951 = vmatprep.subr.mxu0 0.0
  %2952 = vmatpush1.msra.mxu0 %v2937
  %2953 = vmatprep.subr.mxu0 0.0
  %2954 = vmatpush1.msra.mxu0 %v2938
  %2955 = vmatprep.subr.mxu0 0.0
  %2956 = vmatpush1.msra.mxu0 0.0
  %2957 = vmatprep.subr.mxu0 0.0
  %2958 = vmatpush1.msra.mxu0 0.0
  %2959 = vmatprep.subr.mxu0 0.0
  %2960 = vmatpush1.msra.mxu0 0.0
  %2961 = vmatprep.subr.mxu0 0.0
  %2962 = vmatpush1.msra.mxu0 0.0
  %2963 = vmatprep.subr.mxu0 0.0
  %2964 = vmatpush1.msra.mxu0 0.0
  %2965 = vmatprep.subr.mxu0 0.0
  %2966 = vmatpush1.msra.mxu0 0.0
  %2967 = vmatprep.subr.mxu0 0.0
  %2968 = vmatpush1.msra.mxu0 0.0
  %2969 = vmatprep.subr.mxu0 0.0
  %2970 = vmatpush1.msra.mxu0 0.0
  %2971 = vmatprep.subr.mxu0 0.0
  %2972 = vmatpush1.msra.mxu0 0.0
  %2973 = vmatprep.subr.mxu0 0.0
  %2974 = vmatpush1.msra.mxu0 0.0
  %2975 = vmatprep.subr.mxu0 0.0
  %2976 = vmatpush1.msra.mxu0 0.0
  %2977 = vmatprep.subr.mxu0 0.0
  %2978 = vmatpush1.msra.mxu0 0.0
  %2979 = vmatprep.subr.mxu0 0.0
  %2980 = vmatpush1.msra.mxu0 0.0
  %2981 = vmatprep.subr.mxu0 0.0
  %2982 = vmatpush1.msra.mxu0 0.0
  %2983 = vmatprep.subr.mxu0 0.0
  %2984 = vmatpush1.msra.mxu0 0.0
  %2985 = vmatprep.subr.mxu0 0.0
  %2986 = vmatpush1.msra.mxu0 0.0
  %2987 = vmatprep.subr.mxu0 0.0
  %2988 = vmatpush1.msra.mxu0 0.0
  %2989 = vmatprep.subr.mxu0 0.0
  %2990 = vmatpush1.msra.mxu0 0.0
  %2991 = vmatprep.subr.mxu0 0.0
  %2992 = vmatpush1.msra.mxu0 0.0
  %2993 = vmatprep.subr.mxu0 0.0
  %2994 = vmatpush1.msra.mxu0 0.0
  %2995 = vmatprep.subr.mxu0 0.0
  %2996 = vmatpush1.msra.mxu0 0.0
  %2997 = vmatprep.subr.mxu0 0.0
  %2998 = vmatpush1.msra.mxu0 0.0
  %2999 = vmatprep.subr.mxu0 0.0
  %3000 = vmatpush1.msra.mxu0 0.0
  %3001 = vmatprep.subr.mxu0 0.0
  %3002 = vmatpush1.msra.mxu0 0.0
  %3003 = vmatprep.mubr.f32.mxu0 0.0
  %3004 = vmatmul.mubr.f32.gmra.mrb[0].mxu0 %v2555
  %v3005 = vpop.f32.mrb[0].mxu0
  %v3006 = vadd.f32 0.0, %v3005
  %v3007 = vpop.f32.mrb[0].mxu0
  %3008 = vmatprep.mubr.f32.mxu0 0.0
  %3009 = vmatmul.mubr.f32.gmra.mrb[0].mxu0 %v2558
  %v3010 = vpop.f32.mrb[0].mxu0
  %v3011 = vadd.f32 0.0, %v3010
  %v3012 = vpop.f32.mrb[0].mxu0
  %3013 = vmatprep.mubr.f32.mxu0 0.0
  %3014 = vmatmul.mubr.f32.gmra.mrb[0].mxu0 %v2561
  %v3015 = vpop.f32.mrb[0].mxu0
  %v3016 = vadd.f32 0.0, %v3015
  %v3017 = vpop.f32.mrb[0].mxu0
  %3018 = vmatprep.mubr.f32.mxu0 0.0
  %3019 = vmatmul.mubr.f32.gmra.mrb[0].mxu0 %v2564
  %v3020 = vpop.f32.mrb[0].mxu0
  %v3021 = vadd.f32 0.0, %v3020
  %v3022 = vpop.f32.mrb[0].mxu0
  %3023 = vmatprep.mubr.f32.mxu0 0.0
  %3024 = vmatmul.mubr.f32.gmra.mrb[0].mxu0 %v2567
  %v3025 = vpop.f32.mrb[0].mxu0
  %v3026 = vadd.f32 0.0, %v3025
  %v3027 = vpop.f32.mrb[0].mxu0
  %3028 = vmatprep.mubr.f32.mxu0 0.0
  %3029 = vmatmul.mubr.f32.gmra.mrb[0].mxu0 %v2570
  %v3030 = vpop.f32.mrb[0].mxu0
  %v3031 = vadd.f32 0.0, %v3030
  %v3032 = vpop.f32.mrb[0].mxu0
  %3033 = vmatprep.mubr.f32.mxu0 0.0
  %3034 = vmatmul.mubr.f32.gmra.mrb[0].mxu0 %v2573
  %v3035 = vpop.f32.mrb[0].mxu0
  %v3036 = vadd.f32 0.0, %v3035
  %v3037 = vpop.f32.mrb[0].mxu0
  %3038 = vmatprep.mubr.f32.mxu0 0.0
  %3039 = vmatmul.mubr.f32.gmra.mrb[0].mxu0 %v2576
  %v3040 = vpop.f32.mrb[0].mxu0
  %v3041 = vadd.f32 0.0, %v3040
  %v3042 = vpop.f32.mrb[0].mxu0
  %3043 = vmatprep.mubr.f32.mxu0 0.0
  %3044 = vmatmul.mubr.f32.gmra.mrb[0].mxu0 %v2579
  %v3045 = vpop.f32.mrb[0].mxu0
  %v3046 = vadd.f32 0.0, %v3045
  %v3047 = vpop.f32.mrb[0].mxu0
  %3048 = vmatprep.mubr.f32.mxu0 0.0
  %3049 = vmatmul.mubr.f32.gmra.mrb[0].mxu0 %v2582
  %v3050 = vpop.f32.mrb[0].mxu0
  %v3051 = vadd.f32 0.0, %v3050
  %v3052 = vpop.f32.mrb[0].mxu0
  %3053 = vmatprep.mubr.f32.mxu0 0.0
  %3054 = vmatmul.mubr.f32.gmra.mrb[0].mxu0 %v2585
  %v3055 = vpop.f32.mrb[0].mxu0
  %v3056 = vadd.f32 0.0, %v3055
  %v3057 = vpop.f32.mrb[0].mxu0
  %3058 = vmatprep.mubr.f32.mxu0 0.0
  %3059 = vmatmul.mubr.f32.gmra.mrb[0].mxu0 %v2588
  %v3060 = vpop.f32.mrb[0].mxu0
  %v3061 = vadd.f32 0.0, %v3060
  %v3062 = vpop.f32.mrb[0].mxu0
  %3063 = vmatprep.mubr.f32.mxu0 0.0
  %3064 = vmatmul.mubr.f32.gmra.mrb[0].mxu0 %v2591
  %v3065 = vpop.f32.mrb[0].mxu0
  %v3066 = vadd.f32 0.0, %v3065
  %v3067 = vpop.f32.mrb[0].mxu0
  %3068 = vmatprep.mubr.f32.mxu0 0.0
  %3069 = vmatmul.mubr.f32.gmra.mrb[0].mxu0 %v2594
  %v3070 = vpop.f32.mrb[0].mxu0
  %v3071 = vadd.f32 0.0, %v3070
  %v3072 = vpop.f32.mrb[0].mxu0
  %3073 = vmatprep.mubr.f32.mxu0 0.0
  %3074 = vmatmul.mubr.f32.gmra.mrb[0].mxu0 %v2597
  %v3075 = vpop.f32.mrb[0].mxu0
  %v3076 = vadd.f32 0.0, %v3075
  %v3077 = vpop.f32.mrb[0].mxu0
  %3078 = vmatprep.mubr.f32.mxu0 0.0
  %3079 = vmatmul.mubr.f32.gmra.mrb[0].mxu0 %v2600
  %v3080 = vpop.f32.mrb[0].mxu0
  %v3081 = vadd.f32 0.0, %v3080
  %v3082 = vpop.f32.mrb[0].mxu0
  %3083 = vdwg.mxu0
  %v3084 = vadd.f32 %v2915, %v3006
  %v3085 = vadd.f32 %v2916, %v3011
  %v3086 = vadd.f32 %v2917, %v3016
  %v3087 = vadd.f32 %v2918, %v3021
  %v3088 = vadd.f32 %v2919, %v3026
  %v3089 = vadd.f32 %v2920, %v3031
  %v3090 = vadd.f32 %v2921, %v3036
  %v3091 = vadd.f32 %v2922, %v3041
  %v3092 = vadd.f32 %v2923, %v3046
  %v3093 = vadd.f32 %v2924, %v3051
  %v3094 = vadd.f32 %v2925, %v3056
  %v3095 = vadd.f32 %v2926, %v3061
  %v3096 = vadd.f32 %v2927, %v3066
  %v3097 = vadd.f32 %v2928, %v3071
  %v3098 = vadd.f32 %v2929, %v3076
  %v3099 = vadd.f32 %v2930, %v3081
  %v3100 = vxor.u32 %v3084, 2147483648
  %v3101 = vxor.u32 %v3085, 2147483648
  %v3102 = vxor.u32 %v3086, 2147483648
  %v3103 = vxor.u32 %v3087, 2147483648
  %v3104 = vmul.f32 %v3100, 1.442695
  %v3105 = vpow.pop %v3104
  %v3106 = vmul.f32 %v3101, 1.442695
  %v3107 = vpow.pop %v3106
  %v3108 = vmul.f32 %v3102, 1.442695
  %v3109 = vpow.pop %v3108
  %v3110 = vmul.f32 %v3103, 1.442695
  %v3111 = vpow.pop %v3110
  %v3112 = vadd.f32 %v3105, 1.0
  %v3113 = vadd.f32 %v3107, 1.0
  %v3114 = vadd.f32 %v3109, 1.0
  %v3115 = vadd.f32 %v3111, 1.0
  %v3116 = vrcp.pop %v3112
  %v3117 = vmul.f32 1.0, %v3116
  %v3118 = vrcp.pop %v3113
  %v3119 = vmul.f32 1.0, %v3118
  %v3120 = vrcp.pop %v3114
  %v3121 = vmul.f32 1.0, %v3120
  %v3122 = vrcp.pop %v3115
  %v3123 = vmul.f32 1.0, %v3122
  %v3124 = vtanh.pop %v3092
  %v3125 = vtanh.pop %v3093
  %v3126 = vtanh.pop %v3094
  %v3127 = vtanh.pop %v3095
  %v3128 = vxor.u32 %v3096, 2147483648
  %v3129 = vxor.u32 %v3097, 2147483648
  %v3130 = vxor.u32 %v3098, 2147483648
  %v3131 = vxor.u32 %v3099, 2147483648
  %v3132 = vmul.f32 %v3128, 1.442695
  %v3133 = vpow.pop %v3132
  %v3134 = vmul.f32 %v3129, 1.442695
  %v3135 = vpow.pop %v3134
  %v3136 = vmul.f32 %v3130, 1.442695
  %v3137 = vpow.pop %v3136
  %v3138 = vmul.f32 %v3131, 1.442695
  %v3139 = vpow.pop %v3138
  %v3140 = vadd.f32 %v3133, 1.0
  %v3141 = vadd.f32 %v3135, 1.0
  %v3142 = vadd.f32 %v3137, 1.0
  %v3143 = vadd.f32 %v3139, 1.0
  %v3144 = vrcp.pop %v3140
  %v3145 = vmul.f32 1.0, %v3144
  %v3146 = vrcp.pop %v3141
  %v3147 = vmul.f32 1.0, %v3146
  %v3148 = vrcp.pop %v3142
  %v3149 = vmul.f32 1.0, %v3148
  %v3150 = vrcp.pop %v3143
  %v3151 = vmul.f32 1.0, %v3150
  %v3152 = vxor.u32 %v3088, 2147483648
  %v3153 = vxor.u32 %v3089, 2147483648
  %v3154 = vxor.u32 %v3090, 2147483648
  %v3155 = vxor.u32 %v3091, 2147483648
  %v3156 = vmul.f32 %v3152, 1.442695
  %v3157 = vpow.pop %v3156
  %v3158 = vmul.f32 %v3153, 1.442695
  %v3159 = vpow.pop %v3158
  %v3160 = vmul.f32 %v3154, 1.442695
  %v3161 = vpow.pop %v3160
  %v3162 = vmul.f32 %v3155, 1.442695
  %v3163 = vpow.pop %v3162
  %v3164 = vadd.f32 %v3157, 1.0
  %v3165 = vadd.f32 %v3159, 1.0
  %v3166 = vadd.f32 %v3161, 1.0
  %v3167 = vadd.f32 %v3163, 1.0
  %v3168 = vrcp.pop %v3164
  %v3169 = vmul.f32 1.0, %v3168
  %v3170 = vrcp.pop %v3165
  %v3171 = vmul.f32 1.0, %v3170
  %v3172 = vrcp.pop %v3166
  %v3173 = vmul.f32 1.0, %v3172
  %v3174 = vrcp.pop %v3167
  %v3175 = vmul.f32 1.0, %v3174
  %v3176 = vmul.f32 %v3169, %v2847
  %v3177 = vmul.f32 %v3171, %v2848
  %v3178 = vmul.f32 %v3173, %v2849
  %v3179 = vmul.f32 %v3175, %v2850
  %v3180 = vmul.f32 %v3117, %v3124
  %v3181 = vmul.f32 %v3119, %v3125
  %v3182 = vmul.f32 %v3121, %v3126
  %v3183 = vmul.f32 %v3123, %v3127
  %v3184 = vadd.f32 %v3176, %v3180
  %v3185 = vadd.f32 %v3177, %v3181
  %v3186 = vadd.f32 %v3178, %v3182
  %v3187 = vadd.f32 %v3179, %v3183
  %v3188 = vtanh.pop %v3184
  %v3189 = vtanh.pop %v3185
  %v3190 = vtanh.pop %v3186
  %v3191 = vtanh.pop %v3187
  %v3192 = vmul.f32 %v3145, %v3188
  %v3193 = vmul.f32 %v3147, %v3189
  %v3194 = vmul.f32 %v3149, %v3190
  %v3195 = vmul.f32 %v3151, %v3191
  %3196 = vst.msk [vmem:[#allocation4 + $0x8] sm:$0xff] %vm192, %v3192
  %3197 = vst.msk [vmem:[#allocation4 + $0x28] sm:$0xff] %vm192, %v3193
  %3198 = vst.msk [vmem:[#allocation4 + $0x48] sm:$0xff] %vm192, %v3194
  %3199 = vst.msk [vmem:[#allocation4 + $0x68] sm:$0xff] %vm192, %v3195
  %3200 = vst.msk [vmem:[#allocation4 + $0x90] sm:$0xff] %vm370, %v3192
  %3201 = vst.msk [vmem:[#allocation4 + $0xb0] sm:$0xff] %vm370, %v3193
  %3202 = vst.msk [vmem:[#allocation4 + $0xd0] sm:$0xff] %vm370, %v3194
  %3203 = vst.msk [vmem:[#allocation4 + $0xf0] sm:$0xff] %vm370, %v3195
  %v3204 = vld [vmem:[#allocation3 + $0x8] sm:$0xff]
  %v3205 = vld [vmem:[#allocation3 + $0x28] sm:$0xff]
  %v3206 = vld [vmem:[#allocation3 + $0x48] sm:$0xff]
  %v3207 = vld [vmem:[#allocation3 + $0x68] sm:$0xff]
  %v3208 = vld [vmem:[#allocation3 + $0x88] sm:$0xff]
  %v3209 = vld [vmem:[#allocation3 + $0xa8] sm:$0xff]
  %v3210 = vld [vmem:[#allocation3 + $0xc8] sm:$0xff]
  %v3211 = vld [vmem:[#allocation3 + $0xe8] sm:$0xff]
  %v3212 = vld [vmem:[#allocation3 + $0x108] sm:$0xff]
  %v3213 = vld [vmem:[#allocation3 + $0x128] sm:$0xff]
  %v3214 = vld [vmem:[#allocation3 + $0x148] sm:$0xff]
  %v3215 = vld [vmem:[#allocation3 + $0x168] sm:$0xff]
  %v3216 = vld [vmem:[#allocation3 + $0x188] sm:$0xff]
  %v3217 = vld [vmem:[#allocation3 + $0x1a8] sm:$0xff]
  %v3218 = vld [vmem:[#allocation3 + $0x1c8] sm:$0xff]
  %v3219 = vld [vmem:[#allocation3 + $0x1e8] sm:$0xff]
  %v3220 = vld [vmem:[#allocation3 + $0x210] sm:$0xff]
  %v3221 = vld [vmem:[#allocation3 + $0x230] sm:$0xff]
  %v3222 = vld [vmem:[#allocation3 + $0x250] sm:$0xff]
  %v3223 = vld [vmem:[#allocation3 + $0x270] sm:$0xff]
  %v3224 = vld [vmem:[#allocation3 + $0x290] sm:$0xff]
  %v3225 = vld [vmem:[#allocation3 + $0x2b0] sm:$0xff]
  %v3226 = vld [vmem:[#allocation3 + $0x2d0] sm:$0xff]
  %v3227 = vld [vmem:[#allocation3 + $0x2f0] sm:$0xff]
  %v3228 = vld [vmem:[#allocation3 + $0x310] sm:$0xff]
  %v3229 = vld [vmem:[#allocation3 + $0x330] sm:$0xff]
  %v3230 = vld [vmem:[#allocation3 + $0x350] sm:$0xff]
  %v3231 = vld [vmem:[#allocation3 + $0x370] sm:$0xff]
  %v3232 = vld [vmem:[#allocation3 + $0x390] sm:$0xff]
  %v3233 = vld [vmem:[#allocation3 + $0x3b0] sm:$0xff]
  %v3234 = vld [vmem:[#allocation3 + $0x3d0] sm:$0xff]
  %v3235 = vld [vmem:[#allocation3 + $0x3f0] sm:$0xff]
  %v3236 = vsel %vm1347, %v3220, %v3204
  %v3237 = vsel %vm1347, %v3221, %v3205
  %v3238 = vsel %vm1347, %v3222, %v3206
  %v3239 = vsel %vm1347, %v3223, %v3207
  %v3240 = vsel %vm1347, %v3224, %v3208
  %v3241 = vsel %vm1347, %v3225, %v3209
  %v3242 = vsel %vm1347, %v3226, %v3210
  %v3243 = vsel %vm1347, %v3227, %v3211
  %v3244 = vsel %vm1347, %v3228, %v3212
  %v3245 = vsel %vm1347, %v3229, %v3213
  %v3246 = vsel %vm1347, %v3230, %v3214
  %v3247 = vsel %vm1347, %v3231, %v3215
  %v3248 = vsel %vm1347, %v3232, %v3216
  %v3249 = vsel %vm1347, %v3233, %v3217
  %v3250 = vsel %vm1347, %v3234, %v3218
  %v3251 = vsel %vm1347, %v3235, %v3219
  %3252 = vrot.lane.b32.xlu0 %v3236, 64
  %v3253 = vpop.permute.xlu0 %3252
  %3254 = vrot.lane.b32.xlu0 %v3237, 64
  %v3255 = vpop.permute.xlu0 %3254
  %3256 = vrot.lane.b32.xlu0 %v3238, 64
  %v3257 = vpop.permute.xlu0 %3256
  %3258 = vrot.lane.b32.xlu0 %v3239, 64
  %v3259 = vpop.permute.xlu0 %3258
  %3260 = vrot.lane.b32.xlu0 %v3240, 64
  %v3261 = vpop.permute.xlu0 %3260
  %3262 = vrot.lane.b32.xlu0 %v3241, 64
  %v3263 = vpop.permute.xlu0 %3262
  %3264 = vrot.lane.b32.xlu0 %v3242, 64
  %v3265 = vpop.permute.xlu0 %3264
  %3266 = vrot.lane.b32.xlu0 %v3243, 64
  %v3267 = vpop.permute.xlu0 %3266
  %3268 = vrot.lane.b32.xlu0 %v3244, 64
  %v3269 = vpop.permute.xlu0 %3268
  %3270 = vrot.lane.b32.xlu0 %v3245, 64
  %v3271 = vpop.permute.xlu0 %3270
  %3272 = vrot.lane.b32.xlu0 %v3246, 64
  %v3273 = vpop.permute.xlu0 %3272
  %3274 = vrot.lane.b32.xlu0 %v3247, 64
  %v3275 = vpop.permute.xlu0 %3274
  %3276 = vrot.lane.b32.xlu0 %v3248, 64
  %v3277 = vpop.permute.xlu0 %3276
  %3278 = vrot.lane.b32.xlu0 %v3249, 64
  %v3279 = vpop.permute.xlu0 %3278
  %3280 = vrot.lane.b32.xlu0 %v3250, 64
  %v3281 = vpop.permute.xlu0 %3280
  %3282 = vrot.lane.b32.xlu0 %v3251, 64
  %v3283 = vpop.permute.xlu0 %3282
  %v3284 = vsel %vm1347, %v3192, 0.0
  %v3285 = vsel %vm1347, %v3193, 0.0
  %v3286 = vsel %vm1347, %v3194, 0.0
  %v3287 = vsel %vm1347, %v3195, 0.0
  %v3288 = vsel %vm1347, 0.0, %v3192
  %v3289 = vsel %vm1347, 0.0, %v3193
  %v3290 = vsel %vm1347, 0.0, %v3194
  %v3291 = vsel %vm1347, 0.0, %v3195
  %3292 = vmatprep.subr.mxu0 0.0
  %3293 = vmatpush1.msra.mxu0 %v3284
  %3294 = vmatprep.subr.mxu0 0.0
  %3295 = vmatpush1.msra.mxu0 %v3285
  %3296 = vmatprep.subr.mxu0 0.0
  %3297 = vmatpush1.msra.mxu0 %v3286
  %3298 = vmatprep.subr.mxu0 0.0
  %3299 = vmatpush1.msra.mxu0 %v3287
  %3300 = vmatprep.subr.mxu0 0.0
  %3301 = vmatpush1.msra.mxu0 %v3288
  %3302 = vmatprep.subr.mxu0 0.0
  %3303 = vmatpush1.msra.mxu0 %v3289
  %3304 = vmatprep.subr.mxu0 0.0
  %3305 = vmatpush1.msra.mxu0 %v3290
  %3306 = vmatprep.subr.mxu0 0.0
  %3307 = vmatpush1.msra.mxu0 %v3291
  %3308 = vmatprep.subr.mxu0 0.0
  %3309 = vmatpush1.msra.mxu0 0.0
  %3310 = vmatprep.subr.mxu0 0.0
  %3311 = vmatpush1.msra.mxu0 0.0
  %3312 = vmatprep.subr.mxu0 0.0
  %3313 = vmatpush1.msra.mxu0 0.0
  %3314 = vmatprep.subr.mxu0 0.0
  %3315 = vmatpush1.msra.mxu0 0.0
  %3316 = vmatprep.subr.mxu0 0.0
  %3317 = vmatpush1.msra.mxu0 0.0
  %3318 = vmatprep.subr.mxu0 0.0
  %3319 = vmatpush1.msra.mxu0 0.0
  %3320 = vmatprep.subr.mxu0 0.0
  %3321 = vmatpush1.msra.mxu0 0.0
  %3322 = vmatprep.subr.mxu0 0.0
  %3323 = vmatpush1.msra.mxu0 0.0
  %3324 = vmatprep.subr.mxu0 0.0
  %3325 = vmatpush1.msra.mxu0 0.0
  %3326 = vmatprep.subr.mxu0 0.0
  %3327 = vmatpush1.msra.mxu0 0.0
  %3328 = vmatprep.subr.mxu0 0.0
  %3329 = vmatpush1.msra.mxu0 0.0
  %3330 = vmatprep.subr.mxu0 0.0
  %3331 = vmatpush1.msra.mxu0 0.0
  %3332 = vmatprep.subr.mxu0 0.0
  %3333 = vmatpush1.msra.mxu0 0.0
  %3334 = vmatprep.subr.mxu0 0.0
  %3335 = vmatpush1.msra.mxu0 0.0
  %3336 = vmatprep.subr.mxu0 0.0
  %3337 = vmatpush1.msra.mxu0 0.0
  %3338 = vmatprep.subr.mxu0 0.0
  %3339 = vmatpush1.msra.mxu0 0.0
  %3340 = vmatprep.subr.mxu0 0.0
  %3341 = vmatpush1.msra.mxu0 0.0
  %3342 = vmatprep.subr.mxu0 0.0
  %3343 = vmatpush1.msra.mxu0 0.0
  %3344 = vmatprep.subr.mxu0 0.0
  %3345 = vmatpush1.msra.mxu0 0.0
  %3346 = vmatprep.subr.mxu0 0.0
  %3347 = vmatpush1.msra.mxu0 0.0
  %3348 = vmatprep.subr.mxu0 0.0
  %3349 = vmatpush1.msra.mxu0 0.0
  %3350 = vmatprep.subr.mxu0 0.0
  %3351 = vmatpush1.msra.mxu0 0.0
  %3352 = vmatprep.subr.mxu0 0.0
  %3353 = vmatpush1.msra.mxu0 0.0
  %3354 = vmatprep.subr.mxu0 0.0
  %3355 = vmatpush1.msra.mxu0 0.0
  %3356 = vmatprep.mubr.f32.mxu0 0.0
  %3357 = vmatmul.mubr.f32.gmra.mrb[0].mxu0 %v2555
  %v3358 = vpop.f32.mrb[0].mxu0
  %v3359 = vadd.f32 0.0, %v3358
  %v3360 = vpop.f32.mrb[0].mxu0
  %3361 = vmatprep.mubr.f32.mxu0 0.0
  %3362 = vmatmul.mubr.f32.gmra.mrb[0].mxu0 %v2558
  %v3363 = vpop.f32.mrb[0].mxu0
  %v3364 = vadd.f32 0.0, %v3363
  %v3365 = vpop.f32.mrb[0].mxu0
  %3366 = vmatprep.mubr.f32.mxu0 0.0
  %3367 = vmatmul.mubr.f32.gmra.mrb[0].mxu0 %v2561
  %v3368 = vpop.f32.mrb[0].mxu0
  %v3369 = vadd.f32 0.0, %v3368
  %v3370 = vpop.f32.mrb[0].mxu0
  %3371 = vmatprep.mubr.f32.mxu0 0.0
  %3372 = vmatmul.mubr.f32.gmra.mrb[0].mxu0 %v2564
  %v3373 = vpop.f32.mrb[0].mxu0
  %v3374 = vadd.f32 0.0, %v3373
  %v3375 = vpop.f32.mrb[0].mxu0
  %3376 = vmatprep.mubr.f32.mxu0 0.0
  %3377 = vmatmul.mubr.f32.gmra.mrb[0].mxu0 %v2567
  %v3378 = vpop.f32.mrb[0].mxu0
  %v3379 = vadd.f32 0.0, %v3378
  %v3380 = vpop.f32.mrb[0].mxu0
  %3381 = vmatprep.mubr.f32.mxu0 0.0
  %3382 = vmatmul.mubr.f32.gmra.mrb[0].mxu0 %v2570
  %v3383 = vpop.f32.mrb[0].mxu0
  %v3384 = vadd.f32 0.0, %v3383
  %v3385 = vpop.f32.mrb[0].mxu0
  %3386 = vmatprep.mubr.f32.mxu0 0.0
  %3387 = vmatmul.mubr.f32.gmra.mrb[0].mxu0 %v2573
  %v3388 = vpop.f32.mrb[0].mxu0
  %v3389 = vadd.f32 0.0, %v3388
  %v3390 = vpop.f32.mrb[0].mxu0
  %3391 = vmatprep.mubr.f32.mxu0 0.0
  %3392 = vmatmul.mubr.f32.gmra.mrb[0].mxu0 %v2576
  %v3393 = vpop.f32.mrb[0].mxu0
  %v3394 = vadd.f32 0.0, %v3393
  %v3395 = vpop.f32.mrb[0].mxu0
  %3396 = vmatprep.mubr.f32.mxu0 0.0
  %3397 = vmatmul.mubr.f32.gmra.mrb[0].mxu0 %v2579
  %v3398 = vpop.f32.mrb[0].mxu0
  %v3399 = vadd.f32 0.0, %v3398
  %v3400 = vpop.f32.mrb[0].mxu0
  %3401 = vmatprep.mubr.f32.mxu0 0.0
  %3402 = vmatmul.mubr.f32.gmra.mrb[0].mxu0 %v2582
  %v3403 = vpop.f32.mrb[0].mxu0
  %v3404 = vadd.f32 0.0, %v3403
  %v3405 = vpop.f32.mrb[0].mxu0
  %3406 = vmatprep.mubr.f32.mxu0 0.0
  %3407 = vmatmul.mubr.f32.gmra.mrb[0].mxu0 %v2585
  %v3408 = vpop.f32.mrb[0].mxu0
  %v3409 = vadd.f32 0.0, %v3408
  %v3410 = vpop.f32.mrb[0].mxu0
  %3411 = vmatprep.mubr.f32.mxu0 0.0
  %3412 = vmatmul.mubr.f32.gmra.mrb[0].mxu0 %v2588
  %v3413 = vpop.f32.mrb[0].mxu0
  %v3414 = vadd.f32 0.0, %v3413
  %v3415 = vpop.f32.mrb[0].mxu0
  %3416 = vmatprep.mubr.f32.mxu0 0.0
  %3417 = vmatmul.mubr.f32.gmra.mrb[0].mxu0 %v2591
  %v3418 = vpop.f32.mrb[0].mxu0
  %v3419 = vadd.f32 0.0, %v3418
  %v3420 = vpop.f32.mrb[0].mxu0
  %3421 = vmatprep.mubr.f32.mxu0 0.0
  %3422 = vmatmul.mubr.f32.gmra.mrb[0].mxu0 %v2594
  %v3423 = vpop.f32.mrb[0].mxu0
  %v3424 = vadd.f32 0.0, %v3423
  %v3425 = vpop.f32.mrb[0].mxu0
  %3426 = vmatprep.mubr.f32.mxu0 0.0
  %3427 = vmatmul.mubr.f32.gmra.mrb[0].mxu0 %v2597
  %v3428 = vpop.f32.mrb[0].mxu0
  %v3429 = vadd.f32 0.0, %v3428
  %v3430 = vpop.f32.mrb[0].mxu0
  %3431 = vmatprep.mubr.f32.mxu0 0.0
  %3432 = vmatmul.mubr.f32.gmra.mrb[0].mxu0 %v2600
  %v3433 = vpop.f32.mrb[0].mxu0
  %v3434 = vadd.f32 0.0, %v3433
  %v3435 = vpop.f32.mrb[0].mxu0
  %3436 = vdwg.mxu0
  %v3437 = vadd.f32 %v3253, %v3359
  %v3438 = vadd.f32 %v3255, %v3364
  %v3439 = vadd.f32 %v3257, %v3369
  %v3440 = vadd.f32 %v3259, %v3374
  %v3441 = vadd.f32 %v3261, %v3379
  %v3442 = vadd.f32 %v3263, %v3384
  %v3443 = vadd.f32 %v3265, %v3389
  %v3444 = vadd.f32 %v3267, %v3394
  %v3445 = vadd.f32 %v3269, %v3399
  %v3446 = vadd.f32 %v3271, %v3404
  %v3447 = vadd.f32 %v3273, %v3409
  %v3448 = vadd.f32 %v3275, %v3414
  %v3449 = vadd.f32 %v3277, %v3419
  %v3450 = vadd.f32 %v3279, %v3424
  %v3451 = vadd.f32 %v3281, %v3429
  %v3452 = vadd.f32 %v3283, %v3434
  %v3453 = vxor.u32 %v3437, 2147483648
  %v3454 = vxor.u32 %v3438, 2147483648
  %v3455 = vxor.u32 %v3439, 2147483648
  %v3456 = vxor.u32 %v3440, 2147483648
  %v3457 = vmul.f32 %v3453, 1.442695
  %v3458 = vpow.pop %v3457
  %v3459 = vmul.f32 %v3454, 1.442695
  %v3460 = vpow.pop %v3459
  %v3461 = vmul.f32 %v3455, 1.442695
  %v3462 = vpow.pop %v3461
  %v3463 = vmul.f32 %v3456, 1.442695
  %v3464 = vpow.pop %v3463
  %v3465 = vadd.f32 %v3458, 1.0
  %v3466 = vadd.f32 %v3460, 1.0
  %v3467 = vadd.f32 %v3462, 1.0
  %v3468 = vadd.f32 %v3464, 1.0
  %v3469 = vrcp.pop %v3465
  %v3470 = vmul.f32 1.0, %v3469
  %v3471 = vrcp.pop %v3466
  %v3472 = vmul.f32 1.0, %v3471
  %v3473 = vrcp.pop %v3467
  %v3474 = vmul.f32 1.0, %v3473
  %v3475 = vrcp.pop %v3468
  %v3476 = vmul.f32 1.0, %v3475
  %v3477 = vtanh.pop %v3445
  %v3478 = vtanh.pop %v3446
  %v3479 = vtanh.pop %v3447
  %v3480 = vtanh.pop %v3448
  %v3481 = vxor.u32 %v3449, 2147483648
  %v3482 = vxor.u32 %v3450, 2147483648
  %v3483 = vxor.u32 %v3451, 2147483648
  %v3484 = vxor.u32 %v3452, 2147483648
  %v3485 = vmul.f32 %v3481, 1.442695
  %v3486 = vpow.pop %v3485
  %v3487 = vmul.f32 %v3482, 1.442695
  %v3488 = vpow.pop %v3487
  %v3489 = vmul.f32 %v3483, 1.442695
  %v3490 = vpow.pop %v3489
  %v3491 = vmul.f32 %v3484, 1.442695
  %v3492 = vpow.pop %v3491
  %v3493 = vadd.f32 %v3486, 1.0
  %v3494 = vadd.f32 %v3488, 1.0
  %v3495 = vadd.f32 %v3490, 1.0
  %v3496 = vadd.f32 %v3492, 1.0
  %v3497 = vrcp.pop %v3493
  %v3498 = vmul.f32 1.0, %v3497
  %v3499 = vrcp.pop %v3494
  %v3500 = vmul.f32 1.0, %v3499
  %v3501 = vrcp.pop %v3495
  %v3502 = vmul.f32 1.0, %v3501
  %v3503 = vrcp.pop %v3496
  %v3504 = vmul.f32 1.0, %v3503
  %v3505 = vxor.u32 %v3441, 2147483648
  %v3506 = vxor.u32 %v3442, 2147483648
  %v3507 = vxor.u32 %v3443, 2147483648
  %v3508 = vxor.u32 %v3444, 2147483648
  %v3509 = vmul.f32 %v3505, 1.442695
  %v3510 = vpow.pop %v3509
  %v3511 = vmul.f32 %v3506, 1.442695
  %v3512 = vpow.pop %v3511
  %v3513 = vmul.f32 %v3507, 1.442695
  %v3514 = vpow.pop %v3513
  %v3515 = vmul.f32 %v3508, 1.442695
  %v3516 = vpow.pop %v3515
  %v3517 = vadd.f32 %v3510, 1.0
  %v3518 = vadd.f32 %v3512, 1.0
  %v3519 = vadd.f32 %v3514, 1.0
  %v3520 = vadd.f32 %v3516, 1.0
  %v3521 = vrcp.pop %v3517
  %v3522 = vmul.f32 1.0, %v3521
  %v3523 = vrcp.pop %v3518
  %v3524 = vmul.f32 1.0, %v3523
  %v3525 = vrcp.pop %v3519
  %v3526 = vmul.f32 1.0, %v3525
  %v3527 = vrcp.pop %v3520
  %v3528 = vmul.f32 1.0, %v3527
  %v3529 = vmul.f32 %v3522, %v3184
  %v3530 = vmul.f32 %v3524, %v3185
  %v3531 = vmul.f32 %v3526, %v3186
  %v3532 = vmul.f32 %v3528, %v3187
  %v3533 = vmul.f32 %v3470, %v3477
  %v3534 = vmul.f32 %v3472, %v3478
  %v3535 = vmul.f32 %v3474, %v3479
  %v3536 = vmul.f32 %v3476, %v3480
  %v3537 = vadd.f32 %v3529, %v3533
  %v3538 = vadd.f32 %v3530, %v3534
  %v3539 = vadd.f32 %v3531, %v3535
  %v3540 = vadd.f32 %v3532, %v3536
  %v3541 = vtanh.pop %v3537
  %v3542 = vtanh.pop %v3538
  %v3543 = vtanh.pop %v3539
  %v3544 = vtanh.pop %v3540
  %v3545 = vmul.f32 %v3498, %v3541
  %v3546 = vmul.f32 %v3500, %v3542
  %v3547 = vmul.f32 %v3502, %v3543
  %v3548 = vmul.f32 %v3504, %v3544
  %3553 = vrot.lane.b32.xlu0 %v3545, 64
  %v3554 = vpop.permute.xlu0 %3553
  %3555 = vrot.lane.b32.xlu0 %v3546, 64
  %v3556 = vpop.permute.xlu0 %3555
  %3557 = vrot.lane.b32.xlu0 %v3547, 64
  %v3558 = vpop.permute.xlu0 %3557
  %3559 = vrot.lane.b32.xlu0 %v3548, 64
  %v3560 = vpop.permute.xlu0 %3559
  %3565 = vst.msk [vmem:[#allocation4 + $0x8] sm:$0xff] %vm370, %v3554
  %3566 = vst.msk [vmem:[#allocation4 + $0x28] sm:$0xff] %vm370, %v3556
  %3567 = vst.msk [vmem:[#allocation4 + $0x48] sm:$0xff] %vm370, %v3558
  %3568 = vst.msk [vmem:[#allocation4 + $0x68] sm:$0xff] %vm370, %v3560
  %3569 = vst.msk [vmem:[#allocation4 + $0x90] sm:$0xff] %vm192, %v3554
  %3570 = vst.msk [vmem:[#allocation4 + $0xb0] sm:$0xff] %vm192, %v3556
  %3571 = vst.msk [vmem:[#allocation4 + $0xd0] sm:$0xff] %vm192, %v3558
  %3572 = vst.msk [vmem:[#allocation4 + $0xf0] sm:$0xff] %vm192, %v3560
  %v3573 = vld [vmem:[#allocation3 + $0x10] sm:$0xff]
  %v3574 = vld [vmem:[#allocation3 + $0x30] sm:$0xff]
  %v3575 = vld [vmem:[#allocation3 + $0x50] sm:$0xff]
  %v3576 = vld [vmem:[#allocation3 + $0x70] sm:$0xff]
  %v3577 = vld [vmem:[#allocation3 + $0x90] sm:$0xff]
  %v3578 = vld [vmem:[#allocation3 + $0xb0] sm:$0xff]
  %v3579 = vld [vmem:[#allocation3 + $0xd0] sm:$0xff]
  %v3580 = vld [vmem:[#allocation3 + $0xf0] sm:$0xff]
  %v3581 = vld [vmem:[#allocation3 + $0x110] sm:$0xff]
  %v3582 = vld [vmem:[#allocation3 + $0x130] sm:$0xff]
  %v3583 = vld [vmem:[#allocation3 + $0x150] sm:$0xff]
  %v3584 = vld [vmem:[#allocation3 + $0x170] sm:$0xff]
  %v3585 = vld [vmem:[#allocation3 + $0x190] sm:$0xff]
  %v3586 = vld [vmem:[#allocation3 + $0x1b0] sm:$0xff]
  %v3587 = vld [vmem:[#allocation3 + $0x1d0] sm:$0xff]
  %v3588 = vld [vmem:[#allocation3 + $0x1f0] sm:$0xff]
  %v3589 = vld [vmem:[#allocation3 + $0x208] sm:$0xff]
  %v3590 = vld [vmem:[#allocation3 + $0x228] sm:$0xff]
  %v3591 = vld [vmem:[#allocation3 + $0x248] sm:$0xff]
  %v3592 = vld [vmem:[#allocation3 + $0x268] sm:$0xff]
  %v3593 = vld [vmem:[#allocation3 + $0x288] sm:$0xff]
  %v3594 = vld [vmem:[#allocation3 + $0x2a8] sm:$0xff]
  %v3595 = vld [vmem:[#allocation3 + $0x2c8] sm:$0xff]
  %v3596 = vld [vmem:[#allocation3 + $0x2e8] sm:$0xff]
  %v3597 = vld [vmem:[#allocation3 + $0x308] sm:$0xff]
  %v3598 = vld [vmem:[#allocation3 + $0x328] sm:$0xff]
  %v3599 = vld [vmem:[#allocation3 + $0x348] sm:$0xff]
  %v3600 = vld [vmem:[#allocation3 + $0x368] sm:$0xff]
  %v3601 = vld [vmem:[#allocation3 + $0x388] sm:$0xff]
  %v3602 = vld [vmem:[#allocation3 + $0x3a8] sm:$0xff]
  %v3603 = vld [vmem:[#allocation3 + $0x3c8] sm:$0xff]
  %v3604 = vld [vmem:[#allocation3 + $0x3e8] sm:$0xff]
  %v3605 = vsel %vm1347, %v3573, %v3589
  %v3606 = vsel %vm1347, %v3574, %v3590
  %v3607 = vsel %vm1347, %v3575, %v3591
  %v3608 = vsel %vm1347, %v3576, %v3592
  %v3609 = vsel %vm1347, %v3577, %v3593
  %v3610 = vsel %vm1347, %v3578, %v3594
  %v3611 = vsel %vm1347, %v3579, %v3595
  %v3612 = vsel %vm1347, %v3580, %v3596
  %v3613 = vsel %vm1347, %v3581, %v3597
  %v3614 = vsel %vm1347, %v3582, %v3598
  %v3615 = vsel %vm1347, %v3583, %v3599
  %v3616 = vsel %vm1347, %v3584, %v3600
  %v3617 = vsel %vm1347, %v3585, %v3601
  %v3618 = vsel %vm1347, %v3586, %v3602
  %v3619 = vsel %vm1347, %v3587, %v3603
  %v3620 = vsel %vm1347, %v3588, %v3604
  %v3621 = vsel %vm1347, %v3545, 0.0
  %v3622 = vsel %vm1347, %v3546, 0.0
  %v3623 = vsel %vm1347, %v3547, 0.0
  %v3624 = vsel %vm1347, %v3548, 0.0
  %v3625 = vsel %vm1347, 0.0, %v3545
  %v3626 = vsel %vm1347, 0.0, %v3546
  %v3627 = vsel %vm1347, 0.0, %v3547
  %v3628 = vsel %vm1347, 0.0, %v3548
  %3629 = vmatprep.subr.mxu0 0.0
  %3630 = vmatpush1.msra.mxu0 %v3621
  %3631 = vmatprep.subr.mxu0 0.0
  %3632 = vmatpush1.msra.mxu0 %v3622
  %3633 = vmatprep.subr.mxu0 0.0
  %3634 = vmatpush1.msra.mxu0 %v3623
  %3635 = vmatprep.subr.mxu0 0.0
  %3636 = vmatpush1.msra.mxu0 %v3624
  %3637 = vmatprep.subr.mxu0 0.0
  %3638 = vmatpush1.msra.mxu0 %v3625
  %3639 = vmatprep.subr.mxu0 0.0
  %3640 = vmatpush1.msra.mxu0 %v3626
  %3641 = vmatprep.subr.mxu0 0.0
  %3642 = vmatpush1.msra.mxu0 %v3627
  %3643 = vmatprep.subr.mxu0 0.0
  %3644 = vmatpush1.msra.mxu0 %v3628
  %3645 = vmatprep.subr.mxu0 0.0
  %3646 = vmatpush1.msra.mxu0 0.0
  %3647 = vmatprep.subr.mxu0 0.0
  %3648 = vmatpush1.msra.mxu0 0.0
  %3649 = vmatprep.subr.mxu0 0.0
  %3650 = vmatpush1.msra.mxu0 0.0
  %3651 = vmatprep.subr.mxu0 0.0
  %3652 = vmatpush1.msra.mxu0 0.0
  %3653 = vmatprep.subr.mxu0 0.0
  %3654 = vmatpush1.msra.mxu0 0.0
  %3655 = vmatprep.subr.mxu0 0.0
  %3656 = vmatpush1.msra.mxu0 0.0
  %3657 = vmatprep.subr.mxu0 0.0
  %3658 = vmatpush1.msra.mxu0 0.0
  %3659 = vmatprep.subr.mxu0 0.0
  %3660 = vmatpush1.msra.mxu0 0.0
  %3661 = vmatprep.subr.mxu0 0.0
  %3662 = vmatpush1.msra.mxu0 0.0
  %3663 = vmatprep.subr.mxu0 0.0
  %3664 = vmatpush1.msra.mxu0 0.0
  %3665 = vmatprep.subr.mxu0 0.0
  %3666 = vmatpush1.msra.mxu0 0.0
  %3667 = vmatprep.subr.mxu0 0.0
  %3668 = vmatpush1.msra.mxu0 0.0
  %3669 = vmatprep.subr.mxu0 0.0
  %3670 = vmatpush1.msra.mxu0 0.0
  %3671 = vmatprep.subr.mxu0 0.0
  %3672 = vmatpush1.msra.mxu0 0.0
  %3673 = vmatprep.subr.mxu0 0.0
  %3674 = vmatpush1.msra.mxu0 0.0
  %3675 = vmatprep.subr.mxu0 0.0
  %3676 = vmatpush1.msra.mxu0 0.0
  %3677 = vmatprep.subr.mxu0 0.0
  %3678 = vmatpush1.msra.mxu0 0.0
  %3679 = vmatprep.subr.mxu0 0.0
  %3680 = vmatpush1.msra.mxu0 0.0
  %3681 = vmatprep.subr.mxu0 0.0
  %3682 = vmatpush1.msra.mxu0 0.0
  %3683 = vmatprep.subr.mxu0 0.0
  %3684 = vmatpush1.msra.mxu0 0.0
  %3685 = vmatprep.subr.mxu0 0.0
  %3686 = vmatpush1.msra.mxu0 0.0
  %3687 = vmatprep.subr.mxu0 0.0
  %3688 = vmatpush1.msra.mxu0 0.0
  %3689 = vmatprep.subr.mxu0 0.0
  %3690 = vmatpush1.msra.mxu0 0.0
  %3691 = vmatprep.subr.mxu0 0.0
  %3692 = vmatpush1.msra.mxu0 0.0
  %3693 = vmatprep.mubr.f32.mxu0 0.0
  %3694 = vmatmul.mubr.f32.gmra.mrb[0].mxu0 %v2555
  %v3695 = vpop.f32.mrb[0].mxu0
  %v3696 = vadd.f32 0.0, %v3695
  %v3697 = vpop.f32.mrb[0].mxu0
  %3698 = vmatprep.mubr.f32.mxu0 0.0
  %3699 = vmatmul.mubr.f32.gmra.mrb[0].mxu0 %v2558
  %v3700 = vpop.f32.mrb[0].mxu0
  %v3701 = vadd.f32 0.0, %v3700
  %v3702 = vpop.f32.mrb[0].mxu0
  %3703 = vmatprep.mubr.f32.mxu0 0.0
  %3704 = vmatmul.mubr.f32.gmra.mrb[0].mxu0 %v2561
  %v3705 = vpop.f32.mrb[0].mxu0
  %v3706 = vadd.f32 0.0, %v3705
  %v3707 = vpop.f32.mrb[0].mxu0
  %3708 = vmatprep.mubr.f32.mxu0 0.0
  %3709 = vmatmul.mubr.f32.gmra.mrb[0].mxu0 %v2564
  %v3710 = vpop.f32.mrb[0].mxu0
  %v3711 = vadd.f32 0.0, %v3710
  %v3712 = vpop.f32.mrb[0].mxu0
  %3713 = vmatprep.mubr.f32.mxu0 0.0
  %3714 = vmatmul.mubr.f32.gmra.mrb[0].mxu0 %v2567
  %v3715 = vpop.f32.mrb[0].mxu0
  %v3716 = vadd.f32 0.0, %v3715
  %v3717 = vpop.f32.mrb[0].mxu0
  %3718 = vmatprep.mubr.f32.mxu0 0.0
  %3719 = vmatmul.mubr.f32.gmra.mrb[0].mxu0 %v2570
  %v3720 = vpop.f32.mrb[0].mxu0
  %v3721 = vadd.f32 0.0, %v3720
  %v3722 = vpop.f32.mrb[0].mxu0
  %3723 = vmatprep.mubr.f32.mxu0 0.0
  %3724 = vmatmul.mubr.f32.gmra.mrb[0].mxu0 %v2573
  %v3725 = vpop.f32.mrb[0].mxu0
  %v3726 = vadd.f32 0.0, %v3725
  %v3727 = vpop.f32.mrb[0].mxu0
  %3728 = vmatprep.mubr.f32.mxu0 0.0
  %3729 = vmatmul.mubr.f32.gmra.mrb[0].mxu0 %v2576
  %v3730 = vpop.f32.mrb[0].mxu0
  %v3731 = vadd.f32 0.0, %v3730
  %v3732 = vpop.f32.mrb[0].mxu0
  %3733 = vmatprep.mubr.f32.mxu0 0.0
  %3734 = vmatmul.mubr.f32.gmra.mrb[0].mxu0 %v2579
  %v3735 = vpop.f32.mrb[0].mxu0
  %v3736 = vadd.f32 0.0, %v3735
  %v3737 = vpop.f32.mrb[0].mxu0
  %3738 = vmatprep.mubr.f32.mxu0 0.0
  %3739 = vmatmul.mubr.f32.gmra.mrb[0].mxu0 %v2582
  %v3740 = vpop.f32.mrb[0].mxu0
  %v3741 = vadd.f32 0.0, %v3740
  %v3742 = vpop.f32.mrb[0].mxu0
  %3743 = vmatprep.mubr.f32.mxu0 0.0
  %3744 = vmatmul.mubr.f32.gmra.mrb[0].mxu0 %v2585
  %v3745 = vpop.f32.mrb[0].mxu0
  %v3746 = vadd.f32 0.0, %v3745
  %v3747 = vpop.f32.mrb[0].mxu0
  %3748 = vmatprep.mubr.f32.mxu0 0.0
  %3749 = vmatmul.mubr.f32.gmra.mrb[0].mxu0 %v2588
  %v3750 = vpop.f32.mrb[0].mxu0
  %v3751 = vadd.f32 0.0, %v3750
  %v3752 = vpop.f32.mrb[0].mxu0
  %3753 = vmatprep.mubr.f32.mxu0 0.0
  %3754 = vmatmul.mubr.f32.gmra.mrb[0].mxu0 %v2591
  %v3755 = vpop.f32.mrb[0].mxu0
  %v3756 = vadd.f32 0.0, %v3755
  %v3757 = vpop.f32.mrb[0].mxu0
  %3758 = vmatprep.mubr.f32.mxu0 0.0
  %3759 = vmatmul.mubr.f32.gmra.mrb[0].mxu0 %v2594
  %v3760 = vpop.f32.mrb[0].mxu0
  %v3761 = vadd.f32 0.0, %v3760
  %v3762 = vpop.f32.mrb[0].mxu0
  %3763 = vmatprep.mubr.f32.mxu0 0.0
  %3764 = vmatmul.mubr.f32.gmra.mrb[0].mxu0 %v2597
  %v3765 = vpop.f32.mrb[0].mxu0
  %v3766 = vadd.f32 0.0, %v3765
  %v3767 = vpop.f32.mrb[0].mxu0
  %3768 = vmatprep.mubr.f32.mxu0 0.0
  %3769 = vmatmul.mubr.f32.gmra.mrb[0].mxu0 %v2600
  %v3770 = vpop.f32.mrb[0].mxu0
  %v3771 = vadd.f32 0.0, %v3770
  %v3772 = vpop.f32.mrb[0].mxu0
  %3773 = vdwg.mxu0
  %v3774 = vadd.f32 %v3605, %v3696
  %v3775 = vadd.f32 %v3606, %v3701
  %v3776 = vadd.f32 %v3607, %v3706
  %v3777 = vadd.f32 %v3608, %v3711
  %v3778 = vadd.f32 %v3609, %v3716
  %v3779 = vadd.f32 %v3610, %v3721
  %v3780 = vadd.f32 %v3611, %v3726
  %v3781 = vadd.f32 %v3612, %v3731
  %v3782 = vadd.f32 %v3613, %v3736
  %v3783 = vadd.f32 %v3614, %v3741
  %v3784 = vadd.f32 %v3615, %v3746
  %v3785 = vadd.f32 %v3616, %v3751
  %v3786 = vadd.f32 %v3617, %v3756
  %v3787 = vadd.f32 %v3618, %v3761
  %v3788 = vadd.f32 %v3619, %v3766
  %v3789 = vadd.f32 %v3620, %v3771
  %v3790 = vxor.u32 %v3774, 2147483648
  %v3791 = vxor.u32 %v3775, 2147483648
  %v3792 = vxor.u32 %v3776, 2147483648
  %v3793 = vxor.u32 %v3777, 2147483648
  %v3794 = vmul.f32 %v3790, 1.442695
  %v3795 = vpow.pop %v3794
  %v3796 = vmul.f32 %v3791, 1.442695
  %v3797 = vpow.pop %v3796
  %v3798 = vmul.f32 %v3792, 1.442695
  %v3799 = vpow.pop %v3798
  %v3800 = vmul.f32 %v3793, 1.442695
  %v3801 = vpow.pop %v3800
  %v3802 = vadd.f32 %v3795, 1.0
  %v3803 = vadd.f32 %v3797, 1.0
  %v3804 = vadd.f32 %v3799, 1.0
  %v3805 = vadd.f32 %v3801, 1.0
  %v3806 = vrcp.pop %v3802
  %v3807 = vmul.f32 1.0, %v3806
  %v3808 = vrcp.pop %v3803
  %v3809 = vmul.f32 1.0, %v3808
  %v3810 = vrcp.pop %v3804
  %v3811 = vmul.f32 1.0, %v3810
  %v3812 = vrcp.pop %v3805
  %v3813 = vmul.f32 1.0, %v3812
  %v3814 = vtanh.pop %v3782
  %v3815 = vtanh.pop %v3783
  %v3816 = vtanh.pop %v3784
  %v3817 = vtanh.pop %v3785
  %v3818 = vxor.u32 %v3786, 2147483648
  %v3819 = vxor.u32 %v3787, 2147483648
  %v3820 = vxor.u32 %v3788, 2147483648
  %v3821 = vxor.u32 %v3789, 2147483648
  %v3822 = vmul.f32 %v3818, 1.442695
  %v3823 = vpow.pop %v3822
  %v3824 = vmul.f32 %v3819, 1.442695
  %v3825 = vpow.pop %v3824
  %v3826 = vmul.f32 %v3820, 1.442695
  %v3827 = vpow.pop %v3826
  %v3828 = vmul.f32 %v3821, 1.442695
  %v3829 = vpow.pop %v3828
  %v3830 = vadd.f32 %v3823, 1.0
  %v3831 = vadd.f32 %v3825, 1.0
  %v3832 = vadd.f32 %v3827, 1.0
  %v3833 = vadd.f32 %v3829, 1.0
  %v3834 = vrcp.pop %v3830
  %v3835 = vmul.f32 1.0, %v3834
  %v3836 = vrcp.pop %v3831
  %v3837 = vmul.f32 1.0, %v3836
  %v3838 = vrcp.pop %v3832
  %v3839 = vmul.f32 1.0, %v3838
  %v3840 = vrcp.pop %v3833
  %v3841 = vmul.f32 1.0, %v3840
  %v3842 = vxor.u32 %v3778, 2147483648
  %v3843 = vxor.u32 %v3779, 2147483648
  %v3844 = vxor.u32 %v3780, 2147483648
  %v3845 = vxor.u32 %v3781, 2147483648
  %v3846 = vmul.f32 %v3842, 1.442695
  %v3847 = vpow.pop %v3846
  %v3848 = vmul.f32 %v3843, 1.442695
  %v3849 = vpow.pop %v3848
  %v3850 = vmul.f32 %v3844, 1.442695
  %v3851 = vpow.pop %v3850
  %v3852 = vmul.f32 %v3845, 1.442695
  %v3853 = vpow.pop %v3852
  %v3854 = vadd.f32 %v3847, 1.0
  %v3855 = vadd.f32 %v3849, 1.0
  %v3856 = vadd.f32 %v3851, 1.0
  %v3857 = vadd.f32 %v3853, 1.0
  %v3858 = vrcp.pop %v3854
  %v3859 = vmul.f32 1.0, %v3858
  %v3860 = vrcp.pop %v3855
  %v3861 = vmul.f32 1.0, %v3860
  %v3862 = vrcp.pop %v3856
  %v3863 = vmul.f32 1.0, %v3862
  %v3864 = vrcp.pop %v3857
  %v3865 = vmul.f32 1.0, %v3864
  %v3866 = vmul.f32 %v3859, %v3537
  %v3867 = vmul.f32 %v3861, %v3538
  %v3868 = vmul.f32 %v3863, %v3539
  %v3869 = vmul.f32 %v3865, %v3540
  %v3870 = vmul.f32 %v3807, %v3814
  %v3871 = vmul.f32 %v3809, %v3815
  %v3872 = vmul.f32 %v3811, %v3816
  %v3873 = vmul.f32 %v3813, %v3817
  %v3874 = vadd.f32 %v3866, %v3870
  %v3875 = vadd.f32 %v3867, %v3871
  %v3876 = vadd.f32 %v3868, %v3872
  %v3877 = vadd.f32 %v3869, %v3873
  %v3878 = vtanh.pop %v3874
  %v3879 = vtanh.pop %v3875
  %v3880 = vtanh.pop %v3876
  %v3881 = vtanh.pop %v3877
  %v3882 = vmul.f32 %v3835, %v3878
  %v3883 = vmul.f32 %v3837, %v3879
  %v3884 = vmul.f32 %v3839, %v3880
  %v3885 = vmul.f32 %v3841, %v3881
  %3886 = vst.msk [vmem:[#allocation4 + $0x10] sm:$0xff] %vm192, %v3882
  %3887 = vst.msk [vmem:[#allocation4 + $0x30] sm:$0xff] %vm192, %v3883
  %3888 = vst.msk [vmem:[#allocation4 + $0x50] sm:$0xff] %vm192, %v3884
  %3889 = vst.msk [vmem:[#allocation4 + $0x70] sm:$0xff] %vm192, %v3885
  %3890 = vst.msk [vmem:[#allocation4 + $0x88] sm:$0xff] %vm370, %v3882
  %3891 = vst.msk [vmem:[#allocation4 + $0xa8] sm:$0xff] %vm370, %v3883
  %3892 = vst.msk [vmem:[#allocation4 + $0xc8] sm:$0xff] %vm370, %v3884
  %3893 = vst.msk [vmem:[#allocation4 + $0xe8] sm:$0xff] %vm370, %v3885
  %v3894 = vld [vmem:[#allocation3 + $0x10] sm:$0xff]
  %v3895 = vld [vmem:[#allocation3 + $0x30] sm:$0xff]
  %v3896 = vld [vmem:[#allocation3 + $0x50] sm:$0xff]
  %v3897 = vld [vmem:[#allocation3 + $0x70] sm:$0xff]
  %v3898 = vld [vmem:[#allocation3 + $0x90] sm:$0xff]
  %v3899 = vld [vmem:[#allocation3 + $0xb0] sm:$0xff]
  %v3900 = vld [vmem:[#allocation3 + $0xd0] sm:$0xff]
  %v3901 = vld [vmem:[#allocation3 + $0xf0] sm:$0xff]
  %v3902 = vld [vmem:[#allocation3 + $0x110] sm:$0xff]
  %v3903 = vld [vmem:[#allocation3 + $0x130] sm:$0xff]
  %v3904 = vld [vmem:[#allocation3 + $0x150] sm:$0xff]
  %v3905 = vld [vmem:[#allocation3 + $0x170] sm:$0xff]
  %v3906 = vld [vmem:[#allocation3 + $0x190] sm:$0xff]
  %v3907 = vld [vmem:[#allocation3 + $0x1b0] sm:$0xff]
  %v3908 = vld [vmem:[#allocation3 + $0x1d0] sm:$0xff]
  %v3909 = vld [vmem:[#allocation3 + $0x1f0] sm:$0xff]
  %v3910 = vld [vmem:[#allocation3 + $0x208] sm:$0xff]
  %v3911 = vld [vmem:[#allocation3 + $0x228] sm:$0xff]
  %v3912 = vld [vmem:[#allocation3 + $0x248] sm:$0xff]
  %v3913 = vld [vmem:[#allocation3 + $0x268] sm:$0xff]
  %v3914 = vld [vmem:[#allocation3 + $0x288] sm:$0xff]
  %v3915 = vld [vmem:[#allocation3 + $0x2a8] sm:$0xff]
  %v3916 = vld [vmem:[#allocation3 + $0x2c8] sm:$0xff]
  %v3917 = vld [vmem:[#allocation3 + $0x2e8] sm:$0xff]
  %v3918 = vld [vmem:[#allocation3 + $0x308] sm:$0xff]
  %v3919 = vld [vmem:[#allocation3 + $0x328] sm:$0xff]
  %v3920 = vld [vmem:[#allocation3 + $0x348] sm:$0xff]
  %v3921 = vld [vmem:[#allocation3 + $0x368] sm:$0xff]
  %v3922 = vld [vmem:[#allocation3 + $0x388] sm:$0xff]
  %v3923 = vld [vmem:[#allocation3 + $0x3a8] sm:$0xff]
  %v3924 = vld [vmem:[#allocation3 + $0x3c8] sm:$0xff]
  %v3925 = vld [vmem:[#allocation3 + $0x3e8] sm:$0xff]
  %v3926 = vsel %vm1347, %v3910, %v3894
  %v3927 = vsel %vm1347, %v3911, %v3895
  %v3928 = vsel %vm1347, %v3912, %v3896
  %v3929 = vsel %vm1347, %v3913, %v3897
  %v3930 = vsel %vm1347, %v3914, %v3898
  %v3931 = vsel %vm1347, %v3915, %v3899
  %v3932 = vsel %vm1347, %v3916, %v3900
  %v3933 = vsel %vm1347, %v3917, %v3901
  %v3934 = vsel %vm1347, %v3918, %v3902
  %v3935 = vsel %vm1347, %v3919, %v3903
  %v3936 = vsel %vm1347, %v3920, %v3904
  %v3937 = vsel %vm1347, %v3921, %v3905
  %v3938 = vsel %vm1347, %v3922, %v3906
  %v3939 = vsel %vm1347, %v3923, %v3907
  %v3940 = vsel %vm1347, %v3924, %v3908
  %v3941 = vsel %vm1347, %v3925, %v3909
  %3942 = vrot.lane.b32.xlu0 %v3926, 64
  %v3943 = vpop.permute.xlu0 %3942
  %3944 = vrot.lane.b32.xlu0 %v3927, 64
  %v3945 = vpop.permute.xlu0 %3944
  %3946 = vrot.lane.b32.xlu0 %v3928, 64
  %v3947 = vpop.permute.xlu0 %3946
  %3948 = vrot.lane.b32.xlu0 %v3929, 64
  %v3949 = vpop.permute.xlu0 %3948
  %3950 = vrot.lane.b32.xlu0 %v3930, 64
  %v3951 = vpop.permute.xlu0 %3950
  %3952 = vrot.lane.b32.xlu0 %v3931, 64
  %v3953 = vpop.permute.xlu0 %3952
  %3954 = vrot.lane.b32.xlu0 %v3932, 64
  %v3955 = vpop.permute.xlu0 %3954
  %3956 = vrot.lane.b32.xlu0 %v3933, 64
  %v3957 = vpop.permute.xlu0 %3956
  %3958 = vrot.lane.b32.xlu0 %v3934, 64
  %v3959 = vpop.permute.xlu0 %3958
  %3960 = vrot.lane.b32.xlu0 %v3935, 64
  %v3961 = vpop.permute.xlu0 %3960
  %3962 = vrot.lane.b32.xlu0 %v3936, 64
  %v3963 = vpop.permute.xlu0 %3962
  %3964 = vrot.lane.b32.xlu0 %v3937, 64
  %v3965 = vpop.permute.xlu0 %3964
  %3966 = vrot.lane.b32.xlu0 %v3938, 64
  %v3967 = vpop.permute.xlu0 %3966
  %3968 = vrot.lane.b32.xlu0 %v3939, 64
  %v3969 = vpop.permute.xlu0 %3968
  %3970 = vrot.lane.b32.xlu0 %v3940, 64
  %v3971 = vpop.permute.xlu0 %3970
  %3972 = vrot.lane.b32.xlu0 %v3941, 64
  %v3973 = vpop.permute.xlu0 %3972
  %v3974 = vsel %vm1347, %v3882, 0.0
  %v3975 = vsel %vm1347, %v3883, 0.0
  %v3976 = vsel %vm1347, %v3884, 0.0
  %v3977 = vsel %vm1347, %v3885, 0.0
  %v3978 = vsel %vm1347, 0.0, %v3882
  %v3979 = vsel %vm1347, 0.0, %v3883
  %v3980 = vsel %vm1347, 0.0, %v3884
  %v3981 = vsel %vm1347, 0.0, %v3885
  %3982 = vmatprep.subr.mxu0 0.0
  %3983 = vmatpush1.msra.mxu0 %v3974
  %3984 = vmatprep.subr.mxu0 0.0
  %3985 = vmatpush1.msra.mxu0 %v3975
  %3986 = vmatprep.subr.mxu0 0.0
  %3987 = vmatpush1.msra.mxu0 %v3976
  %3988 = vmatprep.subr.mxu0 0.0
  %3989 = vmatpush1.msra.mxu0 %v3977
  %3990 = vmatprep.subr.mxu0 0.0
  %3991 = vmatpush1.msra.mxu0 %v3978
  %3992 = vmatprep.subr.mxu0 0.0
  %3993 = vmatpush1.msra.mxu0 %v3979
  %3994 = vmatprep.subr.mxu0 0.0
  %3995 = vmatpush1.msra.mxu0 %v3980
  %3996 = vmatprep.subr.mxu0 0.0
  %3997 = vmatpush1.msra.mxu0 %v3981
  %3998 = vmatprep.subr.mxu0 0.0
  %3999 = vmatpush1.msra.mxu0 0.0
  %4000 = vmatprep.subr.mxu0 0.0
  %4001 = vmatpush1.msra.mxu0 0.0
  %4002 = vmatprep.subr.mxu0 0.0
  %4003 = vmatpush1.msra.mxu0 0.0
  %4004 = vmatprep.subr.mxu0 0.0
  %4005 = vmatpush1.msra.mxu0 0.0
  %4006 = vmatprep.subr.mxu0 0.0
  %4007 = vmatpush1.msra.mxu0 0.0
  %4008 = vmatprep.subr.mxu0 0.0
  %4009 = vmatpush1.msra.mxu0 0.0
  %4010 = vmatprep.subr.mxu0 0.0
  %4011 = vmatpush1.msra.mxu0 0.0
  %4012 = vmatprep.subr.mxu0 0.0
  %4013 = vmatpush1.msra.mxu0 0.0
  %4014 = vmatprep.subr.mxu0 0.0
  %4015 = vmatpush1.msra.mxu0 0.0
  %4016 = vmatprep.subr.mxu0 0.0
  %4017 = vmatpush1.msra.mxu0 0.0
  %4018 = vmatprep.subr.mxu0 0.0
  %4019 = vmatpush1.msra.mxu0 0.0
  %4020 = vmatprep.subr.mxu0 0.0
  %4021 = vmatpush1.msra.mxu0 0.0
  %4022 = vmatprep.subr.mxu0 0.0
  %4023 = vmatpush1.msra.mxu0 0.0
  %4024 = vmatprep.subr.mxu0 0.0
  %4025 = vmatpush1.msra.mxu0 0.0
  %4026 = vmatprep.subr.mxu0 0.0
  %4027 = vmatpush1.msra.mxu0 0.0
  %4028 = vmatprep.subr.mxu0 0.0
  %4029 = vmatpush1.msra.mxu0 0.0
  %4030 = vmatprep.subr.mxu0 0.0
  %4031 = vmatpush1.msra.mxu0 0.0
  %4032 = vmatprep.subr.mxu0 0.0
  %4033 = vmatpush1.msra.mxu0 0.0
  %4034 = vmatprep.subr.mxu0 0.0
  %4035 = vmatpush1.msra.mxu0 0.0
  %4036 = vmatprep.subr.mxu0 0.0
  %4037 = vmatpush1.msra.mxu0 0.0
  %4038 = vmatprep.subr.mxu0 0.0
  %4039 = vmatpush1.msra.mxu0 0.0
  %4040 = vmatprep.subr.mxu0 0.0
  %4041 = vmatpush1.msra.mxu0 0.0
  %4042 = vmatprep.subr.mxu0 0.0
  %4043 = vmatpush1.msra.mxu0 0.0
  %4044 = vmatprep.subr.mxu0 0.0
  %4045 = vmatpush1.msra.mxu0 0.0
  %4046 = vmatprep.mubr.f32.mxu0 0.0
  %4047 = vmatmul.mubr.f32.gmra.mrb[0].mxu0 %v2555
  %v4048 = vpop.f32.mrb[0].mxu0
  %v4049 = vadd.f32 0.0, %v4048
  %v4050 = vpop.f32.mrb[0].mxu0
  %4051 = vmatprep.mubr.f32.mxu0 0.0
  %4052 = vmatmul.mubr.f32.gmra.mrb[0].mxu0 %v2558
  %v4053 = vpop.f32.mrb[0].mxu0
  %v4054 = vadd.f32 0.0, %v4053
  %v4055 = vpop.f32.mrb[0].mxu0
  %4056 = vmatprep.mubr.f32.mxu0 0.0
  %4057 = vmatmul.mubr.f32.gmra.mrb[0].mxu0 %v2561
  %v4058 = vpop.f32.mrb[0].mxu0
  %v4059 = vadd.f32 0.0, %v4058
  %v4060 = vpop.f32.mrb[0].mxu0
  %4061 = vmatprep.mubr.f32.mxu0 0.0
  %4062 = vmatmul.mubr.f32.gmra.mrb[0].mxu0 %v2564
  %v4063 = vpop.f32.mrb[0].mxu0
  %v4064 = vadd.f32 0.0, %v4063
  %v4065 = vpop.f32.mrb[0].mxu0
  %4066 = vmatprep.mubr.f32.mxu0 0.0
  %4067 = vmatmul.mubr.f32.gmra.mrb[0].mxu0 %v2567
  %v4068 = vpop.f32.mrb[0].mxu0
  %v4069 = vadd.f32 0.0, %v4068
  %v4070 = vpop.f32.mrb[0].mxu0
  %4071 = vmatprep.mubr.f32.mxu0 0.0
  %4072 = vmatmul.mubr.f32.gmra.mrb[0].mxu0 %v2570
  %v4073 = vpop.f32.mrb[0].mxu0
  %v4074 = vadd.f32 0.0, %v4073
  %v4075 = vpop.f32.mrb[0].mxu0
  %4076 = vmatprep.mubr.f32.mxu0 0.0
  %4077 = vmatmul.mubr.f32.gmra.mrb[0].mxu0 %v2573
  %v4078 = vpop.f32.mrb[0].mxu0
  %v4079 = vadd.f32 0.0, %v4078
  %v4080 = vpop.f32.mrb[0].mxu0
  %4081 = vmatprep.mubr.f32.mxu0 0.0
  %4082 = vmatmul.mubr.f32.gmra.mrb[0].mxu0 %v2576
  %v4083 = vpop.f32.mrb[0].mxu0
  %v4084 = vadd.f32 0.0, %v4083
  %v4085 = vpop.f32.mrb[0].mxu0
  %4086 = vmatprep.mubr.f32.mxu0 0.0
  %4087 = vmatmul.mubr.f32.gmra.mrb[0].mxu0 %v2579
  %v4088 = vpop.f32.mrb[0].mxu0
  %v4089 = vadd.f32 0.0, %v4088
  %v4090 = vpop.f32.mrb[0].mxu0
  %4091 = vmatprep.mubr.f32.mxu0 0.0
  %4092 = vmatmul.mubr.f32.gmra.mrb[0].mxu0 %v2582
  %v4093 = vpop.f32.mrb[0].mxu0
  %v4094 = vadd.f32 0.0, %v4093
  %v4095 = vpop.f32.mrb[0].mxu0
  %4096 = vmatprep.mubr.f32.mxu0 0.0
  %4097 = vmatmul.mubr.f32.gmra.mrb[0].mxu0 %v2585
  %v4098 = vpop.f32.mrb[0].mxu0
  %v4099 = vadd.f32 0.0, %v4098
  %v4100 = vpop.f32.mrb[0].mxu0
  %4101 = vmatprep.mubr.f32.mxu0 0.0
  %4102 = vmatmul.mubr.f32.gmra.mrb[0].mxu0 %v2588
  %v4103 = vpop.f32.mrb[0].mxu0
  %v4104 = vadd.f32 0.0, %v4103
  %v4105 = vpop.f32.mrb[0].mxu0
  %4106 = vmatprep.mubr.f32.mxu0 0.0
  %4107 = vmatmul.mubr.f32.gmra.mrb[0].mxu0 %v2591
  %v4108 = vpop.f32.mrb[0].mxu0
  %v4109 = vadd.f32 0.0, %v4108
  %v4110 = vpop.f32.mrb[0].mxu0
  %4111 = vmatprep.mubr.f32.mxu0 0.0
  %4112 = vmatmul.mubr.f32.gmra.mrb[0].mxu0 %v2594
  %v4113 = vpop.f32.mrb[0].mxu0
  %v4114 = vadd.f32 0.0, %v4113
  %v4115 = vpop.f32.mrb[0].mxu0
  %4116 = vmatprep.mubr.f32.mxu0 0.0
  %4117 = vmatmul.mubr.f32.gmra.mrb[0].mxu0 %v2597
  %v4118 = vpop.f32.mrb[0].mxu0
  %v4119 = vadd.f32 0.0, %v4118
  %v4120 = vpop.f32.mrb[0].mxu0
  %4121 = vmatprep.mubr.f32.mxu0 0.0
  %4122 = vmatmul.mubr.f32.gmra.mrb[0].mxu0 %v2600
  %v4123 = vpop.f32.mrb[0].mxu0
  %v4124 = vadd.f32 0.0, %v4123
  %v4125 = vpop.f32.mrb[0].mxu0
  %4126 = vdwg.mxu0
  %v4127 = vadd.f32 %v3943, %v4049
  %v4128 = vadd.f32 %v3945, %v4054
  %v4129 = vadd.f32 %v3947, %v4059
  %v4130 = vadd.f32 %v3949, %v4064
  %v4131 = vadd.f32 %v3951, %v4069
  %v4132 = vadd.f32 %v3953, %v4074
  %v4133 = vadd.f32 %v3955, %v4079
  %v4134 = vadd.f32 %v3957, %v4084
  %v4135 = vadd.f32 %v3959, %v4089
  %v4136 = vadd.f32 %v3961, %v4094
  %v4137 = vadd.f32 %v3963, %v4099
  %v4138 = vadd.f32 %v3965, %v4104
  %v4139 = vadd.f32 %v3967, %v4109
  %v4140 = vadd.f32 %v3969, %v4114
  %v4141 = vadd.f32 %v3971, %v4119
  %v4142 = vadd.f32 %v3973, %v4124
  %v4143 = vxor.u32 %v4127, 2147483648
  %v4144 = vxor.u32 %v4128, 2147483648
  %v4145 = vxor.u32 %v4129, 2147483648
  %v4146 = vxor.u32 %v4130, 2147483648
  %v4147 = vmul.f32 %v4143, 1.442695
  %v4148 = vpow.pop %v4147
  %v4149 = vmul.f32 %v4144, 1.442695
  %v4150 = vpow.pop %v4149
  %v4151 = vmul.f32 %v4145, 1.442695
  %v4152 = vpow.pop %v4151
  %v4153 = vmul.f32 %v4146, 1.442695
  %v4154 = vpow.pop %v4153
  %v4155 = vadd.f32 %v4148, 1.0
  %v4156 = vadd.f32 %v4150, 1.0
  %v4157 = vadd.f32 %v4152, 1.0
  %v4158 = vadd.f32 %v4154, 1.0
  %v4159 = vrcp.pop %v4155
  %v4160 = vmul.f32 1.0, %v4159
  %v4161 = vrcp.pop %v4156
  %v4162 = vmul.f32 1.0, %v4161
  %v4163 = vrcp.pop %v4157
  %v4164 = vmul.f32 1.0, %v4163
  %v4165 = vrcp.pop %v4158
  %v4166 = vmul.f32 1.0, %v4165
  %v4167 = vtanh.pop %v4135
  %v4168 = vtanh.pop %v4136
  %v4169 = vtanh.pop %v4137
  %v4170 = vtanh.pop %v4138
  %v4171 = vxor.u32 %v4139, 2147483648
  %v4172 = vxor.u32 %v4140, 2147483648
  %v4173 = vxor.u32 %v4141, 2147483648
  %v4174 = vxor.u32 %v4142, 2147483648
  %v4175 = vmul.f32 %v4171, 1.442695
  %v4176 = vpow.pop %v4175
  %v4177 = vmul.f32 %v4172, 1.442695
  %v4178 = vpow.pop %v4177
  %v4179 = vmul.f32 %v4173, 1.442695
  %v4180 = vpow.pop %v4179
  %v4181 = vmul.f32 %v4174, 1.442695
  %v4182 = vpow.pop %v4181
  %v4183 = vadd.f32 %v4176, 1.0
  %v4184 = vadd.f32 %v4178, 1.0
  %v4185 = vadd.f32 %v4180, 1.0
  %v4186 = vadd.f32 %v4182, 1.0
  %v4187 = vrcp.pop %v4183
  %v4188 = vmul.f32 1.0, %v4187
  %v4189 = vrcp.pop %v4184
  %v4190 = vmul.f32 1.0, %v4189
  %v4191 = vrcp.pop %v4185
  %v4192 = vmul.f32 1.0, %v4191
  %v4193 = vrcp.pop %v4186
  %v4194 = vmul.f32 1.0, %v4193
  %v4195 = vxor.u32 %v4131, 2147483648
  %v4196 = vxor.u32 %v4132, 2147483648
  %v4197 = vxor.u32 %v4133, 2147483648
  %v4198 = vxor.u32 %v4134, 2147483648
  %v4199 = vmul.f32 %v4195, 1.442695
  %v4200 = vpow.pop %v4199
  %v4201 = vmul.f32 %v4196, 1.442695
  %v4202 = vpow.pop %v4201
  %v4203 = vmul.f32 %v4197, 1.442695
  %v4204 = vpow.pop %v4203
  %v4205 = vmul.f32 %v4198, 1.442695
  %v4206 = vpow.pop %v4205
  %v4207 = vadd.f32 %v4200, 1.0
  %v4208 = vadd.f32 %v4202, 1.0
  %v4209 = vadd.f32 %v4204, 1.0
  %v4210 = vadd.f32 %v4206, 1.0
  %v4211 = vrcp.pop %v4207
  %v4212 = vmul.f32 1.0, %v4211
  %v4213 = vrcp.pop %v4208
  %v4214 = vmul.f32 1.0, %v4213
  %v4215 = vrcp.pop %v4209
  %v4216 = vmul.f32 1.0, %v4215
  %v4217 = vrcp.pop %v4210
  %v4218 = vmul.f32 1.0, %v4217
  %v4219 = vmul.f32 %v4212, %v3874
  %v4220 = vmul.f32 %v4214, %v3875
  %v4221 = vmul.f32 %v4216, %v3876
  %v4222 = vmul.f32 %v4218, %v3877
  %v4223 = vmul.f32 %v4160, %v4167
  %v4224 = vmul.f32 %v4162, %v4168
  %v4225 = vmul.f32 %v4164, %v4169
  %v4226 = vmul.f32 %v4166, %v4170
  %v4227 = vadd.f32 %v4219, %v4223
  %v4228 = vadd.f32 %v4220, %v4224
  %v4229 = vadd.f32 %v4221, %v4225
  %v4230 = vadd.f32 %v4222, %v4226
  %v4231 = vtanh.pop %v4227
  %v4232 = vtanh.pop %v4228
  %v4233 = vtanh.pop %v4229
  %v4234 = vtanh.pop %v4230
  %v4235 = vmul.f32 %v4188, %v4231
  %v4236 = vmul.f32 %v4190, %v4232
  %v4237 = vmul.f32 %v4192, %v4233
  %v4238 = vmul.f32 %v4194, %v4234
  %4243 = vrot.lane.b32.xlu0 %v4235, 64
  %v4244 = vpop.permute.xlu0 %4243
  %4245 = vrot.lane.b32.xlu0 %v4236, 64
  %v4246 = vpop.permute.xlu0 %4245
  %4247 = vrot.lane.b32.xlu0 %v4237, 64
  %v4248 = vpop.permute.xlu0 %4247
  %4249 = vrot.lane.b32.xlu0 %v4238, 64
  %v4250 = vpop.permute.xlu0 %4249
  %4255 = vst.msk [vmem:[#allocation4 + $0x10] sm:$0xff] %vm370, %v4244
  %4256 = vst.msk [vmem:[#allocation4 + $0x30] sm:$0xff] %vm370, %v4246
  %4257 = vst.msk [vmem:[#allocation4 + $0x50] sm:$0xff] %vm370, %v4248
  %4258 = vst.msk [vmem:[#allocation4 + $0x70] sm:$0xff] %vm370, %v4250
  %4259 = vst.msk [vmem:[#allocation4 + $0x88] sm:$0xff] %vm192, %v4244
  %4260 = vst.msk [vmem:[#allocation4 + $0xa8] sm:$0xff] %vm192, %v4246
  %4261 = vst.msk [vmem:[#allocation4 + $0xc8] sm:$0xff] %vm192, %v4248
  %4262 = vst.msk [vmem:[#allocation4 + $0xe8] sm:$0xff] %vm192, %v4250
  %v4263 = vld [vmem:[#allocation3 + $0x18] sm:$0xff]
  %v4264 = vld [vmem:[#allocation3 + $0x38] sm:$0xff]
  %v4265 = vld [vmem:[#allocation3 + $0x58] sm:$0xff]
  %v4266 = vld [vmem:[#allocation3 + $0x78] sm:$0xff]
  %v4267 = vld [vmem:[#allocation3 + $0x98] sm:$0xff]
  %v4268 = vld [vmem:[#allocation3 + $0xb8] sm:$0xff]
  %v4269 = vld [vmem:[#allocation3 + $0xd8] sm:$0xff]
  %v4270 = vld [vmem:[#allocation3 + $0xf8] sm:$0xff]
  %v4271 = vld [vmem:[#allocation3 + $0x118] sm:$0xff]
  %v4272 = vld [vmem:[#allocation3 + $0x138] sm:$0xff]
  %v4273 = vld [vmem:[#allocation3 + $0x158] sm:$0xff]
  %v4274 = vld [vmem:[#allocation3 + $0x178] sm:$0xff]
  %v4275 = vld [vmem:[#allocation3 + $0x198] sm:$0xff]
  %v4276 = vld [vmem:[#allocation3 + $0x1b8] sm:$0xff]
  %v4277 = vld [vmem:[#allocation3 + $0x1d8] sm:$0xff]
  %v4278 = vld [vmem:[#allocation3 + $0x1f8] sm:$0xff]
  %v4279 = vld [vmem:[#allocation3 + $0x200] sm:$0xff]
  %v4280 = vld [vmem:[#allocation3 + $0x220] sm:$0xff]
  %v4281 = vld [vmem:[#allocation3 + $0x240] sm:$0xff]
  %v4282 = vld [vmem:[#allocation3 + $0x260] sm:$0xff]
  %v4283 = vld [vmem:[#allocation3 + $0x280] sm:$0xff]
  %v4284 = vld [vmem:[#allocation3 + $0x2a0] sm:$0xff]
  %v4285 = vld [vmem:[#allocation3 + $0x2c0] sm:$0xff]
  %v4286 = vld [vmem:[#allocation3 + $0x2e0] sm:$0xff]
  %v4287 = vld [vmem:[#allocation3 + $0x300] sm:$0xff]
  %v4288 = vld [vmem:[#allocation3 + $0x320] sm:$0xff]
  %v4289 = vld [vmem:[#allocation3 + $0x340] sm:$0xff]
  %v4290 = vld [vmem:[#allocation3 + $0x360] sm:$0xff]
  %v4291 = vld [vmem:[#allocation3 + $0x380] sm:$0xff]
  %v4292 = vld [vmem:[#allocation3 + $0x3a0] sm:$0xff]
  %v4293 = vld [vmem:[#allocation3 + $0x3c0] sm:$0xff]
  %v4294 = vld [vmem:[#allocation3 + $0x3e0] sm:$0xff]
  %v4295 = vsel %vm1347, %v4263, %v4279
  %v4296 = vsel %vm1347, %v4264, %v4280
  %v4297 = vsel %vm1347, %v4265, %v4281
  %v4298 = vsel %vm1347, %v4266, %v4282
  %v4299 = vsel %vm1347, %v4267, %v4283
  %v4300 = vsel %vm1347, %v4268, %v4284
  %v4301 = vsel %vm1347, %v4269, %v4285
  %v4302 = vsel %vm1347, %v4270, %v4286
  %v4303 = vsel %vm1347, %v4271, %v4287
  %v4304 = vsel %vm1347, %v4272, %v4288
  %v4305 = vsel %vm1347, %v4273, %v4289
  %v4306 = vsel %vm1347, %v4274, %v4290
  %v4307 = vsel %vm1347, %v4275, %v4291
  %v4308 = vsel %vm1347, %v4276, %v4292
  %v4309 = vsel %vm1347, %v4277, %v4293
  %v4310 = vsel %vm1347, %v4278, %v4294
  %v4311 = vsel %vm1347, %v4235, 0.0
  %v4312 = vsel %vm1347, %v4236, 0.0
  %v4313 = vsel %vm1347, %v4237, 0.0
  %v4314 = vsel %vm1347, %v4238, 0.0
  %v4315 = vsel %vm1347, 0.0, %v4235
  %v4316 = vsel %vm1347, 0.0, %v4236
  %v4317 = vsel %vm1347, 0.0, %v4237
  %v4318 = vsel %vm1347, 0.0, %v4238
  %4319 = vmatprep.subr.mxu0 0.0
  %4320 = vmatpush1.msra.mxu0 %v4311
  %4321 = vmatprep.subr.mxu0 0.0
  %4322 = vmatpush1.msra.mxu0 %v4312
  %4323 = vmatprep.subr.mxu0 0.0
  %4324 = vmatpush1.msra.mxu0 %v4313
  %4325 = vmatprep.subr.mxu0 0.0
  %4326 = vmatpush1.msra.mxu0 %v4314
  %4327 = vmatprep.subr.mxu0 0.0
  %4328 = vmatpush1.msra.mxu0 %v4315
  %4329 = vmatprep.subr.mxu0 0.0
  %4330 = vmatpush1.msra.mxu0 %v4316
  %4331 = vmatprep.subr.mxu0 0.0
  %4332 = vmatpush1.msra.mxu0 %v4317
  %4333 = vmatprep.subr.mxu0 0.0
  %4334 = vmatpush1.msra.mxu0 %v4318
  %4335 = vmatprep.subr.mxu0 0.0
  %4336 = vmatpush1.msra.mxu0 0.0
  %4337 = vmatprep.subr.mxu0 0.0
  %4338 = vmatpush1.msra.mxu0 0.0
  %4339 = vmatprep.subr.mxu0 0.0
  %4340 = vmatpush1.msra.mxu0 0.0
  %4341 = vmatprep.subr.mxu0 0.0
  %4342 = vmatpush1.msra.mxu0 0.0
  %4343 = vmatprep.subr.mxu0 0.0
  %4344 = vmatpush1.msra.mxu0 0.0
  %4345 = vmatprep.subr.mxu0 0.0
  %4346 = vmatpush1.msra.mxu0 0.0
  %4347 = vmatprep.subr.mxu0 0.0
  %4348 = vmatpush1.msra.mxu0 0.0
  %4349 = vmatprep.subr.mxu0 0.0
  %4350 = vmatpush1.msra.mxu0 0.0
  %4351 = vmatprep.subr.mxu0 0.0
  %4352 = vmatpush1.msra.mxu0 0.0
  %4353 = vmatprep.subr.mxu0 0.0
  %4354 = vmatpush1.msra.mxu0 0.0
  %4355 = vmatprep.subr.mxu0 0.0
  %4356 = vmatpush1.msra.mxu0 0.0
  %4357 = vmatprep.subr.mxu0 0.0
  %4358 = vmatpush1.msra.mxu0 0.0
  %4359 = vmatprep.subr.mxu0 0.0
  %4360 = vmatpush1.msra.mxu0 0.0
  %4361 = vmatprep.subr.mxu0 0.0
  %4362 = vmatpush1.msra.mxu0 0.0
  %4363 = vmatprep.subr.mxu0 0.0
  %4364 = vmatpush1.msra.mxu0 0.0
  %4365 = vmatprep.subr.mxu0 0.0
  %4366 = vmatpush1.msra.mxu0 0.0
  %4367 = vmatprep.subr.mxu0 0.0
  %4368 = vmatpush1.msra.mxu0 0.0
  %4369 = vmatprep.subr.mxu0 0.0
  %4370 = vmatpush1.msra.mxu0 0.0
  %4371 = vmatprep.subr.mxu0 0.0
  %4372 = vmatpush1.msra.mxu0 0.0
  %4373 = vmatprep.subr.mxu0 0.0
  %4374 = vmatpush1.msra.mxu0 0.0
  %4375 = vmatprep.subr.mxu0 0.0
  %4376 = vmatpush1.msra.mxu0 0.0
  %4377 = vmatprep.subr.mxu0 0.0
  %4378 = vmatpush1.msra.mxu0 0.0
  %4379 = vmatprep.subr.mxu0 0.0
  %4380 = vmatpush1.msra.mxu0 0.0
  %4381 = vmatprep.subr.mxu0 0.0
  %4382 = vmatpush1.msra.mxu0 0.0
  %4383 = vmatprep.mubr.f32.mxu0 0.0
  %4384 = vmatmul.mubr.f32.gmra.mrb[0].mxu0 %v2555
  %v4385 = vpop.f32.mrb[0].mxu0
  %v4386 = vadd.f32 0.0, %v4385
  %v4387 = vpop.f32.mrb[0].mxu0
  %4388 = vmatprep.mubr.f32.mxu0 0.0
  %4389 = vmatmul.mubr.f32.gmra.mrb[0].mxu0 %v2558
  %v4390 = vpop.f32.mrb[0].mxu0
  %v4391 = vadd.f32 0.0, %v4390
  %v4392 = vpop.f32.mrb[0].mxu0
  %4393 = vmatprep.mubr.f32.mxu0 0.0
  %4394 = vmatmul.mubr.f32.gmra.mrb[0].mxu0 %v2561
  %v4395 = vpop.f32.mrb[0].mxu0
  %v4396 = vadd.f32 0.0, %v4395
  %v4397 = vpop.f32.mrb[0].mxu0
  %4398 = vmatprep.mubr.f32.mxu0 0.0
  %4399 = vmatmul.mubr.f32.gmra.mrb[0].mxu0 %v2564
  %v4400 = vpop.f32.mrb[0].mxu0
  %v4401 = vadd.f32 0.0, %v4400
  %v4402 = vpop.f32.mrb[0].mxu0
  %4403 = vmatprep.mubr.f32.mxu0 0.0
  %4404 = vmatmul.mubr.f32.gmra.mrb[0].mxu0 %v2567
  %v4405 = vpop.f32.mrb[0].mxu0
  %v4406 = vadd.f32 0.0, %v4405
  %v4407 = vpop.f32.mrb[0].mxu0
  %4408 = vmatprep.mubr.f32.mxu0 0.0
  %4409 = vmatmul.mubr.f32.gmra.mrb[0].mxu0 %v2570
  %v4410 = vpop.f32.mrb[0].mxu0
  %v4411 = vadd.f32 0.0, %v4410
  %v4412 = vpop.f32.mrb[0].mxu0
  %4413 = vmatprep.mubr.f32.mxu0 0.0
  %4414 = vmatmul.mubr.f32.gmra.mrb[0].mxu0 %v2573
  %v4415 = vpop.f32.mrb[0].mxu0
  %v4416 = vadd.f32 0.0, %v4415
  %v4417 = vpop.f32.mrb[0].mxu0
  %4418 = vmatprep.mubr.f32.mxu0 0.0
  %4419 = vmatmul.mubr.f32.gmra.mrb[0].mxu0 %v2576
  %v4420 = vpop.f32.mrb[0].mxu0
  %v4421 = vadd.f32 0.0, %v4420
  %v4422 = vpop.f32.mrb[0].mxu0
  %4423 = vmatprep.mubr.f32.mxu0 0.0
  %4424 = vmatmul.mubr.f32.gmra.mrb[0].mxu0 %v2579
  %v4425 = vpop.f32.mrb[0].mxu0
  %v4426 = vadd.f32 0.0, %v4425
  %v4427 = vpop.f32.mrb[0].mxu0
  %4428 = vmatprep.mubr.f32.mxu0 0.0
  %4429 = vmatmul.mubr.f32.gmra.mrb[0].mxu0 %v2582
  %v4430 = vpop.f32.mrb[0].mxu0
  %v4431 = vadd.f32 0.0, %v4430
  %v4432 = vpop.f32.mrb[0].mxu0
  %4433 = vmatprep.mubr.f32.mxu0 0.0
  %4434 = vmatmul.mubr.f32.gmra.mrb[0].mxu0 %v2585
  %v4435 = vpop.f32.mrb[0].mxu0
  %v4436 = vadd.f32 0.0, %v4435
  %v4437 = vpop.f32.mrb[0].mxu0
  %4438 = vmatprep.mubr.f32.mxu0 0.0
  %4439 = vmatmul.mubr.f32.gmra.mrb[0].mxu0 %v2588
  %v4440 = vpop.f32.mrb[0].mxu0
  %v4441 = vadd.f32 0.0, %v4440
  %v4442 = vpop.f32.mrb[0].mxu0
  %4443 = vmatprep.mubr.f32.mxu0 0.0
  %4444 = vmatmul.mubr.f32.gmra.mrb[0].mxu0 %v2591
  %v4445 = vpop.f32.mrb[0].mxu0
  %v4446 = vadd.f32 0.0, %v4445
  %v4447 = vpop.f32.mrb[0].mxu0
  %4448 = vmatprep.mubr.f32.mxu0 0.0
  %4449 = vmatmul.mubr.f32.gmra.mrb[0].mxu0 %v2594
  %v4450 = vpop.f32.mrb[0].mxu0
  %v4451 = vadd.f32 0.0, %v4450
  %v4452 = vpop.f32.mrb[0].mxu0
  %4453 = vmatprep.mubr.f32.mxu0 0.0
  %4454 = vmatmul.mubr.f32.gmra.mrb[0].mxu0 %v2597
  %v4455 = vpop.f32.mrb[0].mxu0
  %v4456 = vadd.f32 0.0, %v4455
  %v4457 = vpop.f32.mrb[0].mxu0
  %4458 = vmatprep.mubr.f32.mxu0 0.0
  %4459 = vmatmul.mubr.f32.gmra.mrb[0].mxu0 %v2600
  %v4460 = vpop.f32.mrb[0].mxu0
  %v4461 = vadd.f32 0.0, %v4460
  %v4462 = vpop.f32.mrb[0].mxu0
  %4463 = vdwg.mxu0
  %v4464 = vadd.f32 %v4295, %v4386
  %v4465 = vadd.f32 %v4296, %v4391
  %v4466 = vadd.f32 %v4297, %v4396
  %v4467 = vadd.f32 %v4298, %v4401
  %v4468 = vadd.f32 %v4299, %v4406
  %v4469 = vadd.f32 %v4300, %v4411
  %v4470 = vadd.f32 %v4301, %v4416
  %v4471 = vadd.f32 %v4302, %v4421
  %v4472 = vadd.f32 %v4303, %v4426
  %v4473 = vadd.f32 %v4304, %v4431
  %v4474 = vadd.f32 %v4305, %v4436
  %v4475 = vadd.f32 %v4306, %v4441
  %v4476 = vadd.f32 %v4307, %v4446
  %v4477 = vadd.f32 %v4308, %v4451
  %v4478 = vadd.f32 %v4309, %v4456
  %v4479 = vadd.f32 %v4310, %v4461
  %v4480 = vxor.u32 %v4464, 2147483648
  %v4481 = vxor.u32 %v4465, 2147483648
  %v4482 = vxor.u32 %v4466, 2147483648
  %v4483 = vxor.u32 %v4467, 2147483648
  %v4484 = vmul.f32 %v4480, 1.442695
  %v4485 = vpow.pop %v4484
  %v4486 = vmul.f32 %v4481, 1.442695
  %v4487 = vpow.pop %v4486
  %v4488 = vmul.f32 %v4482, 1.442695
  %v4489 = vpow.pop %v4488
  %v4490 = vmul.f32 %v4483, 1.442695
  %v4491 = vpow.pop %v4490
  %v4492 = vadd.f32 %v4485, 1.0
  %v4493 = vadd.f32 %v4487, 1.0
  %v4494 = vadd.f32 %v4489, 1.0
  %v4495 = vadd.f32 %v4491, 1.0
  %v4496 = vrcp.pop %v4492
  %v4497 = vmul.f32 1.0, %v4496
  %v4498 = vrcp.pop %v4493
  %v4499 = vmul.f32 1.0, %v4498
  %v4500 = vrcp.pop %v4494
  %v4501 = vmul.f32 1.0, %v4500
  %v4502 = vrcp.pop %v4495
  %v4503 = vmul.f32 1.0, %v4502
  %v4504 = vtanh.pop %v4472
  %v4505 = vtanh.pop %v4473
  %v4506 = vtanh.pop %v4474
  %v4507 = vtanh.pop %v4475
  %v4508 = vxor.u32 %v4476, 2147483648
  %v4509 = vxor.u32 %v4477, 2147483648
  %v4510 = vxor.u32 %v4478, 2147483648
  %v4511 = vxor.u32 %v4479, 2147483648
  %v4512 = vmul.f32 %v4508, 1.442695
  %v4513 = vpow.pop %v4512
  %v4514 = vmul.f32 %v4509, 1.442695
  %v4515 = vpow.pop %v4514
  %v4516 = vmul.f32 %v4510, 1.442695
  %v4517 = vpow.pop %v4516
  %v4518 = vmul.f32 %v4511, 1.442695
  %v4519 = vpow.pop %v4518
  %v4520 = vadd.f32 %v4513, 1.0
  %v4521 = vadd.f32 %v4515, 1.0
  %v4522 = vadd.f32 %v4517, 1.0
  %v4523 = vadd.f32 %v4519, 1.0
  %v4524 = vrcp.pop %v4520
  %v4525 = vmul.f32 1.0, %v4524
  %v4526 = vrcp.pop %v4521
  %v4527 = vmul.f32 1.0, %v4526
  %v4528 = vrcp.pop %v4522
  %v4529 = vmul.f32 1.0, %v4528
  %v4530 = vrcp.pop %v4523
  %v4531 = vmul.f32 1.0, %v4530
  %v4532 = vxor.u32 %v4468, 2147483648
  %v4533 = vxor.u32 %v4469, 2147483648
  %v4534 = vxor.u32 %v4470, 2147483648
  %v4535 = vxor.u32 %v4471, 2147483648
  %v4536 = vmul.f32 %v4532, 1.442695
  %v4537 = vpow.pop %v4536
  %v4538 = vmul.f32 %v4533, 1.442695
  %v4539 = vpow.pop %v4538
  %v4540 = vmul.f32 %v4534, 1.442695
  %v4541 = vpow.pop %v4540
  %v4542 = vmul.f32 %v4535, 1.442695
  %v4543 = vpow.pop %v4542
  %v4544 = vadd.f32 %v4537, 1.0
  %v4545 = vadd.f32 %v4539, 1.0
  %v4546 = vadd.f32 %v4541, 1.0
  %v4547 = vadd.f32 %v4543, 1.0
  %v4548 = vrcp.pop %v4544
  %v4549 = vmul.f32 1.0, %v4548
  %v4550 = vrcp.pop %v4545
  %v4551 = vmul.f32 1.0, %v4550
  %v4552 = vrcp.pop %v4546
  %v4553 = vmul.f32 1.0, %v4552
  %v4554 = vrcp.pop %v4547
  %v4555 = vmul.f32 1.0, %v4554
  %v4556 = vmul.f32 %v4549, %v4227
  %v4557 = vmul.f32 %v4551, %v4228
  %v4558 = vmul.f32 %v4553, %v4229
  %v4559 = vmul.f32 %v4555, %v4230
  %v4560 = vmul.f32 %v4497, %v4504
  %v4561 = vmul.f32 %v4499, %v4505
  %v4562 = vmul.f32 %v4501, %v4506
  %v4563 = vmul.f32 %v4503, %v4507
  %v4564 = vadd.f32 %v4556, %v4560
  %v4565 = vadd.f32 %v4557, %v4561
  %v4566 = vadd.f32 %v4558, %v4562
  %v4567 = vadd.f32 %v4559, %v4563
  %v4568 = vtanh.pop %v4564
  %v4569 = vtanh.pop %v4565
  %v4570 = vtanh.pop %v4566
  %v4571 = vtanh.pop %v4567
  %v4572 = vmul.f32 %v4525, %v4568
  %v4573 = vmul.f32 %v4527, %v4569
  %v4574 = vmul.f32 %v4529, %v4570
  %v4575 = vmul.f32 %v4531, %v4571
  %4576 = vst.msk [vmem:[#allocation4 + $0x18] sm:$0xff] %vm192, %v4572
  %4577 = vst.msk [vmem:[#allocation4 + $0x38] sm:$0xff] %vm192, %v4573
  %4578 = vst.msk [vmem:[#allocation4 + $0x58] sm:$0xff] %vm192, %v4574
  %4579 = vst.msk [vmem:[#allocation4 + $0x78] sm:$0xff] %vm192, %v4575
  %4580 = vst.msk [vmem:[#allocation4 + $0x80] sm:$0xff] %vm370, %v4572
  %4581 = vst.msk [vmem:[#allocation4 + $0xa0] sm:$0xff] %vm370, %v4573
  %4582 = vst.msk [vmem:[#allocation4 + $0xc0] sm:$0xff] %vm370, %v4574
  %4583 = vst.msk [vmem:[#allocation4 + $0xe0] sm:$0xff] %vm370, %v4575
  %v4584 = vld [vmem:[#allocation3 + $0x18] sm:$0xff]
  %v4585 = vld [vmem:[#allocation3 + $0x38] sm:$0xff]
  %v4586 = vld [vmem:[#allocation3 + $0x58] sm:$0xff]
  %v4587 = vld [vmem:[#allocation3 + $0x78] sm:$0xff]
  %v4588 = vld [vmem:[#allocation3 + $0x98] sm:$0xff]
  %v4589 = vld [vmem:[#allocation3 + $0xb8] sm:$0xff]
  %v4590 = vld [vmem:[#allocation3 + $0xd8] sm:$0xff]
  %v4591 = vld [vmem:[#allocation3 + $0xf8] sm:$0xff]
  %v4592 = vld [vmem:[#allocation3 + $0x118] sm:$0xff]
  %v4593 = vld [vmem:[#allocation3 + $0x138] sm:$0xff]
  %v4594 = vld [vmem:[#allocation3 + $0x158] sm:$0xff]
  %v4595 = vld [vmem:[#allocation3 + $0x178] sm:$0xff]
  %v4596 = vld [vmem:[#allocation3 + $0x198] sm:$0xff]
  %v4597 = vld [vmem:[#allocation3 + $0x1b8] sm:$0xff]
  %v4598 = vld [vmem:[#allocation3 + $0x1d8] sm:$0xff]
  %v4599 = vld [vmem:[#allocation3 + $0x1f8] sm:$0xff]
  %v4600 = vld [vmem:[#allocation3 + $0x200] sm:$0xff]
  %v4601 = vld [vmem:[#allocation3 + $0x220] sm:$0xff]
  %v4602 = vld [vmem:[#allocation3 + $0x240] sm:$0xff]
  %v4603 = vld [vmem:[#allocation3 + $0x260] sm:$0xff]
  %v4604 = vld [vmem:[#allocation3 + $0x280] sm:$0xff]
  %v4605 = vld [vmem:[#allocation3 + $0x2a0] sm:$0xff]
  %v4606 = vld [vmem:[#allocation3 + $0x2c0] sm:$0xff]
  %v4607 = vld [vmem:[#allocation3 + $0x2e0] sm:$0xff]
  %v4608 = vld [vmem:[#allocation3 + $0x300] sm:$0xff]
  %v4609 = vld [vmem:[#allocation3 + $0x320] sm:$0xff]
  %v4610 = vld [vmem:[#allocation3 + $0x340] sm:$0xff]
  %v4611 = vld [vmem:[#allocation3 + $0x360] sm:$0xff]
  %v4612 = vld [vmem:[#allocation3 + $0x380] sm:$0xff]
  %v4613 = vld [vmem:[#allocation3 + $0x3a0] sm:$0xff]
  %v4614 = vld [vmem:[#allocation3 + $0x3c0] sm:$0xff]
  %v4615 = vld [vmem:[#allocation3 + $0x3e0] sm:$0xff]
  %v4616 = vsel %vm1347, %v4600, %v4584
  %v4617 = vsel %vm1347, %v4601, %v4585
  %v4618 = vsel %vm1347, %v4602, %v4586
  %v4619 = vsel %vm1347, %v4603, %v4587
  %v4620 = vsel %vm1347, %v4604, %v4588
  %v4621 = vsel %vm1347, %v4605, %v4589
  %v4622 = vsel %vm1347, %v4606, %v4590
  %v4623 = vsel %vm1347, %v4607, %v4591
  %v4624 = vsel %vm1347, %v4608, %v4592
  %v4625 = vsel %vm1347, %v4609, %v4593
  %v4626 = vsel %vm1347, %v4610, %v4594
  %v4627 = vsel %vm1347, %v4611, %v4595
  %v4628 = vsel %vm1347, %v4612, %v4596
  %v4629 = vsel %vm1347, %v4613, %v4597
  %v4630 = vsel %vm1347, %v4614, %v4598
  %v4631 = vsel %vm1347, %v4615, %v4599
  %4632 = vrot.lane.b32.xlu0 %v4616, 64
  %v4633 = vpop.permute.xlu0 %4632
  %4634 = vrot.lane.b32.xlu0 %v4617, 64
  %v4635 = vpop.permute.xlu0 %4634
  %4636 = vrot.lane.b32.xlu0 %v4618, 64
  %v4637 = vpop.permute.xlu0 %4636
  %4638 = vrot.lane.b32.xlu0 %v4619, 64
  %v4639 = vpop.permute.xlu0 %4638
  %4640 = vrot.lane.b32.xlu0 %v4620, 64
  %v4641 = vpop.permute.xlu0 %4640
  %4642 = vrot.lane.b32.xlu0 %v4621, 64
  %v4643 = vpop.permute.xlu0 %4642
  %4644 = vrot.lane.b32.xlu0 %v4622, 64
  %v4645 = vpop.permute.xlu0 %4644
  %4646 = vrot.lane.b32.xlu0 %v4623, 64
  %v4647 = vpop.permute.xlu0 %4646
  %4648 = vrot.lane.b32.xlu0 %v4624, 64
  %v4649 = vpop.permute.xlu0 %4648
  %4650 = vrot.lane.b32.xlu0 %v4625, 64
  %v4651 = vpop.permute.xlu0 %4650
  %4652 = vrot.lane.b32.xlu0 %v4626, 64
  %v4653 = vpop.permute.xlu0 %4652
  %4654 = vrot.lane.b32.xlu0 %v4627, 64
  %v4655 = vpop.permute.xlu0 %4654
  %4656 = vrot.lane.b32.xlu0 %v4628, 64
  %v4657 = vpop.permute.xlu0 %4656
  %4658 = vrot.lane.b32.xlu0 %v4629, 64
  %v4659 = vpop.permute.xlu0 %4658
  %4660 = vrot.lane.b32.xlu0 %v4630, 64
  %v4661 = vpop.permute.xlu0 %4660
  %4662 = vrot.lane.b32.xlu0 %v4631, 64
  %v4663 = vpop.permute.xlu0 %4662
  %v4664 = vsel %vm1347, %v4572, 0.0
  %v4665 = vsel %vm1347, %v4573, 0.0
  %v4666 = vsel %vm1347, %v4574, 0.0
  %v4667 = vsel %vm1347, %v4575, 0.0
  %v4668 = vsel %vm1347, 0.0, %v4572
  %v4669 = vsel %vm1347, 0.0, %v4573
  %v4670 = vsel %vm1347, 0.0, %v4574
  %v4671 = vsel %vm1347, 0.0, %v4575
  %4672 = vmatprep.subr.mxu0 0.0
  %4673 = vmatpush1.msra.mxu0 %v4664
  %4674 = vmatprep.subr.mxu0 0.0
  %4675 = vmatpush1.msra.mxu0 %v4665
  %4676 = vmatprep.subr.mxu0 0.0
  %4677 = vmatpush1.msra.mxu0 %v4666
  %4678 = vmatprep.subr.mxu0 0.0
  %4679 = vmatpush1.msra.mxu0 %v4667
  %4680 = vmatprep.subr.mxu0 0.0
  %4681 = vmatpush1.msra.mxu0 %v4668
  %4682 = vmatprep.subr.mxu0 0.0
  %4683 = vmatpush1.msra.mxu0 %v4669
  %4684 = vmatprep.subr.mxu0 0.0
  %4685 = vmatpush1.msra.mxu0 %v4670
  %4686 = vmatprep.subr.mxu0 0.0
  %4687 = vmatpush1.msra.mxu0 %v4671
  %4688 = vmatprep.subr.mxu0 0.0
  %4689 = vmatpush1.msra.mxu0 0.0
  %4690 = vmatprep.subr.mxu0 0.0
  %4691 = vmatpush1.msra.mxu0 0.0
  %4692 = vmatprep.subr.mxu0 0.0
  %4693 = vmatpush1.msra.mxu0 0.0
  %4694 = vmatprep.subr.mxu0 0.0
  %4695 = vmatpush1.msra.mxu0 0.0
  %4696 = vmatprep.subr.mxu0 0.0
  %4697 = vmatpush1.msra.mxu0 0.0
  %4698 = vmatprep.subr.mxu0 0.0
  %4699 = vmatpush1.msra.mxu0 0.0
  %4700 = vmatprep.subr.mxu0 0.0
  %4701 = vmatpush1.msra.mxu0 0.0
  %4702 = vmatprep.subr.mxu0 0.0
  %4703 = vmatpush1.msra.mxu0 0.0
  %4704 = vmatprep.subr.mxu0 0.0
  %4705 = vmatpush1.msra.mxu0 0.0
  %4706 = vmatprep.subr.mxu0 0.0
  %4707 = vmatpush1.msra.mxu0 0.0
  %4708 = vmatprep.subr.mxu0 0.0
  %4709 = vmatpush1.msra.mxu0 0.0
  %4710 = vmatprep.subr.mxu0 0.0
  %4711 = vmatpush1.msra.mxu0 0.0
  %4712 = vmatprep.subr.mxu0 0.0
  %4713 = vmatpush1.msra.mxu0 0.0
  %4714 = vmatprep.subr.mxu0 0.0
  %4715 = vmatpush1.msra.mxu0 0.0
  %4716 = vmatprep.subr.mxu0 0.0
  %4717 = vmatpush1.msra.mxu0 0.0
  %4718 = vmatprep.subr.mxu0 0.0
  %4719 = vmatpush1.msra.mxu0 0.0
  %4720 = vmatprep.subr.mxu0 0.0
  %4721 = vmatpush1.msra.mxu0 0.0
  %4722 = vmatprep.subr.mxu0 0.0
  %4723 = vmatpush1.msra.mxu0 0.0
  %4724 = vmatprep.subr.mxu0 0.0
  %4725 = vmatpush1.msra.mxu0 0.0
  %4726 = vmatprep.subr.mxu0 0.0
  %4727 = vmatpush1.msra.mxu0 0.0
  %4728 = vmatprep.subr.mxu0 0.0
  %4729 = vmatpush1.msra.mxu0 0.0
  %4730 = vmatprep.subr.mxu0 0.0
  %4731 = vmatpush1.msra.mxu0 0.0
  %4732 = vmatprep.subr.mxu0 0.0
  %4733 = vmatpush1.msra.mxu0 0.0
  %4734 = vmatprep.subr.mxu0 0.0
  %4735 = vmatpush1.msra.mxu0 0.0
  %4736 = vmatprep.mubr.f32.mxu0 0.0
  %4737 = vmatmul.mubr.f32.gmra.mrb[0].mxu0 %v2555
  %v4738 = vpop.f32.mrb[0].mxu0
  %v4739 = vadd.f32 0.0, %v4738
  %v4740 = vpop.f32.mrb[0].mxu0
  %4741 = vmatprep.mubr.f32.mxu0 0.0
  %4742 = vmatmul.mubr.f32.gmra.mrb[0].mxu0 %v2558
  %v4743 = vpop.f32.mrb[0].mxu0
  %v4744 = vadd.f32 0.0, %v4743
  %v4745 = vpop.f32.mrb[0].mxu0
  %4746 = vmatprep.mubr.f32.mxu0 0.0
  %4747 = vmatmul.mubr.f32.gmra.mrb[0].mxu0 %v2561
  %v4748 = vpop.f32.mrb[0].mxu0
  %v4749 = vadd.f32 0.0, %v4748
  %v4750 = vpop.f32.mrb[0].mxu0
  %4751 = vmatprep.mubr.f32.mxu0 0.0
  %4752 = vmatmul.mubr.f32.gmra.mrb[0].mxu0 %v2564
  %v4753 = vpop.f32.mrb[0].mxu0
  %v4754 = vadd.f32 0.0, %v4753
  %v4755 = vpop.f32.mrb[0].mxu0
  %4756 = vmatprep.mubr.f32.mxu0 0.0
  %4757 = vmatmul.mubr.f32.gmra.mrb[0].mxu0 %v2567
  %v4758 = vpop.f32.mrb[0].mxu0
  %v4759 = vadd.f32 0.0, %v4758
  %v4760 = vpop.f32.mrb[0].mxu0
  %4761 = vmatprep.mubr.f32.mxu0 0.0
  %4762 = vmatmul.mubr.f32.gmra.mrb[0].mxu0 %v2570
  %v4763 = vpop.f32.mrb[0].mxu0
  %v4764 = vadd.f32 0.0, %v4763
  %v4765 = vpop.f32.mrb[0].mxu0
  %4766 = vmatprep.mubr.f32.mxu0 0.0
  %4767 = vmatmul.mubr.f32.gmra.mrb[0].mxu0 %v2573
  %v4768 = vpop.f32.mrb[0].mxu0
  %v4769 = vadd.f32 0.0, %v4768
  %v4770 = vpop.f32.mrb[0].mxu0
  %4771 = vmatprep.mubr.f32.mxu0 0.0
  %4772 = vmatmul.mubr.f32.gmra.mrb[0].mxu0 %v2576
  %v4773 = vpop.f32.mrb[0].mxu0
  %v4774 = vadd.f32 0.0, %v4773
  %v4775 = vpop.f32.mrb[0].mxu0
  %4776 = vmatprep.mubr.f32.mxu0 0.0
  %4777 = vmatmul.mubr.f32.gmra.mrb[0].mxu0 %v2579
  %v4778 = vpop.f32.mrb[0].mxu0
  %v4779 = vadd.f32 0.0, %v4778
  %v4780 = vpop.f32.mrb[0].mxu0
  %4781 = vmatprep.mubr.f32.mxu0 0.0
  %4782 = vmatmul.mubr.f32.gmra.mrb[0].mxu0 %v2582
  %v4783 = vpop.f32.mrb[0].mxu0
  %v4784 = vadd.f32 0.0, %v4783
  %v4785 = vpop.f32.mrb[0].mxu0
  %4786 = vmatprep.mubr.f32.mxu0 0.0
  %4787 = vmatmul.mubr.f32.gmra.mrb[0].mxu0 %v2585
  %v4788 = vpop.f32.mrb[0].mxu0
  %v4789 = vadd.f32 0.0, %v4788
  %v4790 = vpop.f32.mrb[0].mxu0
  %4791 = vmatprep.mubr.f32.mxu0 0.0
  %4792 = vmatmul.mubr.f32.gmra.mrb[0].mxu0 %v2588
  %v4793 = vpop.f32.mrb[0].mxu0
  %v4794 = vadd.f32 0.0, %v4793
  %v4795 = vpop.f32.mrb[0].mxu0
  %4796 = vmatprep.mubr.f32.mxu0 0.0
  %4797 = vmatmul.mubr.f32.gmra.mrb[0].mxu0 %v2591
  %v4798 = vpop.f32.mrb[0].mxu0
  %v4799 = vadd.f32 0.0, %v4798
  %v4800 = vpop.f32.mrb[0].mxu0
  %4801 = vmatprep.mubr.f32.mxu0 0.0
  %4802 = vmatmul.mubr.f32.gmra.mrb[0].mxu0 %v2594
  %v4803 = vpop.f32.mrb[0].mxu0
  %v4804 = vadd.f32 0.0, %v4803
  %v4805 = vpop.f32.mrb[0].mxu0
  %4806 = vmatprep.mubr.f32.mxu0 0.0
  %4807 = vmatmul.mubr.f32.gmra.mrb[0].mxu0 %v2597
  %v4808 = vpop.f32.mrb[0].mxu0
  %v4809 = vadd.f32 0.0, %v4808
  %v4810 = vpop.f32.mrb[0].mxu0
  %4811 = vmatprep.mubr.f32.mxu0 0.0
  %4812 = vmatmul.mubr.f32.gmra.mrb[0].mxu0 %v2600
  %v4813 = vpop.f32.mrb[0].mxu0
  %v4814 = vadd.f32 0.0, %v4813
  %v4815 = vpop.f32.mrb[0].mxu0
  %4816 = vdwg.mxu0
  %v4817 = vadd.f32 %v4633, %v4739
  %v4818 = vadd.f32 %v4635, %v4744
  %v4819 = vadd.f32 %v4637, %v4749
  %v4820 = vadd.f32 %v4639, %v4754
  %v4821 = vadd.f32 %v4641, %v4759
  %v4822 = vadd.f32 %v4643, %v4764
  %v4823 = vadd.f32 %v4645, %v4769
  %v4824 = vadd.f32 %v4647, %v4774
  %v4825 = vadd.f32 %v4649, %v4779
  %v4826 = vadd.f32 %v4651, %v4784
  %v4827 = vadd.f32 %v4653, %v4789
  %v4828 = vadd.f32 %v4655, %v4794
  %v4829 = vadd.f32 %v4657, %v4799
  %v4830 = vadd.f32 %v4659, %v4804
  %v4831 = vadd.f32 %v4661, %v4809
  %v4832 = vadd.f32 %v4663, %v4814
  %v4833 = vxor.u32 %v4817, 2147483648
  %v4834 = vxor.u32 %v4818, 2147483648
  %v4835 = vxor.u32 %v4819, 2147483648
  %v4836 = vxor.u32 %v4820, 2147483648
  %v4837 = vmul.f32 %v4833, 1.442695
  %v4838 = vpow.pop %v4837
  %v4839 = vmul.f32 %v4834, 1.442695
  %v4840 = vpow.pop %v4839
  %v4841 = vmul.f32 %v4835, 1.442695
  %v4842 = vpow.pop %v4841
  %v4843 = vmul.f32 %v4836, 1.442695
  %v4844 = vpow.pop %v4843
  %v4845 = vadd.f32 %v4838, 1.0
  %v4846 = vadd.f32 %v4840, 1.0
  %v4847 = vadd.f32 %v4842, 1.0
  %v4848 = vadd.f32 %v4844, 1.0
  %v4849 = vrcp.pop %v4845
  %v4850 = vmul.f32 1.0, %v4849
  %v4851 = vrcp.pop %v4846
  %v4852 = vmul.f32 1.0, %v4851
  %v4853 = vrcp.pop %v4847
  %v4854 = vmul.f32 1.0, %v4853
  %v4855 = vrcp.pop %v4848
  %v4856 = vmul.f32 1.0, %v4855
  %v4857 = vtanh.pop %v4825
  %v4858 = vtanh.pop %v4826
  %v4859 = vtanh.pop %v4827
  %v4860 = vtanh.pop %v4828
  %v4861 = vxor.u32 %v4829, 2147483648
  %v4862 = vxor.u32 %v4830, 2147483648
  %v4863 = vxor.u32 %v4831, 2147483648
  %v4864 = vxor.u32 %v4832, 2147483648
  %v4865 = vmul.f32 %v4861, 1.442695
  %v4866 = vpow.pop %v4865
  %v4867 = vmul.f32 %v4862, 1.442695
  %v4868 = vpow.pop %v4867
  %v4869 = vmul.f32 %v4863, 1.442695
  %v4870 = vpow.pop %v4869
  %v4871 = vmul.f32 %v4864, 1.442695
  %v4872 = vpow.pop %v4871
  %v4873 = vadd.f32 %v4866, 1.0
  %v4874 = vadd.f32 %v4868, 1.0
  %v4875 = vadd.f32 %v4870, 1.0
  %v4876 = vadd.f32 %v4872, 1.0
  %v4877 = vrcp.pop %v4873
  %v4878 = vmul.f32 1.0, %v4877
  %v4879 = vrcp.pop %v4874
  %v4880 = vmul.f32 1.0, %v4879
  %v4881 = vrcp.pop %v4875
  %v4882 = vmul.f32 1.0, %v4881
  %v4883 = vrcp.pop %v4876
  %v4884 = vmul.f32 1.0, %v4883
  %v4885 = vxor.u32 %v4821, 2147483648
  %v4886 = vxor.u32 %v4822, 2147483648
  %v4887 = vxor.u32 %v4823, 2147483648
  %v4888 = vxor.u32 %v4824, 2147483648
  %v4889 = vmul.f32 %v4885, 1.442695
  %v4890 = vpow.pop %v4889
  %v4891 = vmul.f32 %v4886, 1.442695
  %v4892 = vpow.pop %v4891
  %v4893 = vmul.f32 %v4887, 1.442695
  %v4894 = vpow.pop %v4893
  %v4895 = vmul.f32 %v4888, 1.442695
  %v4896 = vpow.pop %v4895
  %v4897 = vadd.f32 %v4890, 1.0
  %v4898 = vadd.f32 %v4892, 1.0
  %v4899 = vadd.f32 %v4894, 1.0
  %v4900 = vadd.f32 %v4896, 1.0
  %v4901 = vrcp.pop %v4897
  %v4902 = vmul.f32 1.0, %v4901
  %v4903 = vrcp.pop %v4898
  %v4904 = vmul.f32 1.0, %v4903
  %v4905 = vrcp.pop %v4899
  %v4906 = vmul.f32 1.0, %v4905
  %v4907 = vrcp.pop %v4900
  %v4908 = vmul.f32 1.0, %v4907
  %v4909 = vmul.f32 %v4902, %v4564
  %v4910 = vmul.f32 %v4904, %v4565
  %v4911 = vmul.f32 %v4906, %v4566
  %v4912 = vmul.f32 %v4908, %v4567
  %v4913 = vmul.f32 %v4850, %v4857
  %v4914 = vmul.f32 %v4852, %v4858
  %v4915 = vmul.f32 %v4854, %v4859
  %v4916 = vmul.f32 %v4856, %v4860
  %v4917 = vadd.f32 %v4909, %v4913
  %v4918 = vadd.f32 %v4910, %v4914
  %v4919 = vadd.f32 %v4911, %v4915
  %v4920 = vadd.f32 %v4912, %v4916
  %v4921 = vtanh.pop %v4917
  %v4922 = vtanh.pop %v4918
  %v4923 = vtanh.pop %v4919
  %v4924 = vtanh.pop %v4920
  %v4925 = vmul.f32 %v4878, %v4921
  %v4926 = vmul.f32 %v4880, %v4922
  %v4927 = vmul.f32 %v4882, %v4923
  %v4928 = vmul.f32 %v4884, %v4924
  %4933 = vrot.lane.b32.xlu0 %v4925, 64
  %v4934 = vpop.permute.xlu0 %4933
  %4935 = vrot.lane.b32.xlu0 %v4926, 64
  %v4936 = vpop.permute.xlu0 %4935
  %4937 = vrot.lane.b32.xlu0 %v4927, 64
  %v4938 = vpop.permute.xlu0 %4937
  %4939 = vrot.lane.b32.xlu0 %v4928, 64
  %v4940 = vpop.permute.xlu0 %4939
  %4945 = vst.msk [vmem:[#allocation4 + $0x18] sm:$0xff] %vm370, %v4934
  %4946 = vst.msk [vmem:[#allocation4 + $0x38] sm:$0xff] %vm370, %v4936
  %4947 = vst.msk [vmem:[#allocation4 + $0x58] sm:$0xff] %vm370, %v4938
  %4948 = vst.msk [vmem:[#allocation4 + $0x78] sm:$0xff] %vm370, %v4940
  %4949 = vst.msk [vmem:[#allocation4 + $0x80] sm:$0xff] %vm192, %v4934
  %4950 = vst.msk [vmem:[#allocation4 + $0xa0] sm:$0xff] %vm192, %v4936
  %4951 = vst.msk [vmem:[#allocation4 + $0xc0] sm:$0xff] %vm192, %v4938
  %4952 = vst.msk [vmem:[#allocation4 + $0xe0] sm:$0xff] %vm192, %v4940
  %v4953 = vld [vmem:[%s6] sm:$0xff]
  %v4954 = vld [vmem:[%s6 + $0x8] sm:$0xff]
  %v4955 = vld [vmem:[%s6 + $0x10] sm:$0xff]
  %v4956 = vld [vmem:[%s6 + $0x18] sm:$0xff]
  %v4957 = vld [vmem:[%s6 + $0x20] sm:$0xff]
  %v4958 = vld [vmem:[%s6 + $0x28] sm:$0xff]
  %v4959 = vld [vmem:[%s6 + $0x30] sm:$0xff]
  %v4960 = vld [vmem:[%s6 + $0x38] sm:$0xff]
  %v4961 = vld [vmem:[%s6 + $0x40] sm:$0xff]
  %v4962 = vld [vmem:[%s6 + $0x48] sm:$0xff]
  %v4963 = vld [vmem:[%s6 + $0x50] sm:$0xff]
  %v4964 = vld [vmem:[%s6 + $0x58] sm:$0xff]
  %v4965 = vld [vmem:[%s6 + $0x60] sm:$0xff]
  %v4966 = vld [vmem:[%s6 + $0x68] sm:$0xff]
  %v4967 = vld [vmem:[%s6 + $0x70] sm:$0xff]
  %v4968 = vld [vmem:[%s6 + $0x78] sm:$0xff]
  %v4969 = vld [vmem:[%s6 + $0x80] sm:$0xff]
  %v4970 = vld [vmem:[%s6 + $0x88] sm:$0xff]
  %v4971 = vld [vmem:[%s6 + $0x90] sm:$0xff]
  %v4972 = vld [vmem:[%s6 + $0x98] sm:$0xff]
  %v4973 = vld [vmem:[%s6 + $0xa0] sm:$0xff]
  %v4974 = vld [vmem:[%s6 + $0xa8] sm:$0xff]
  %v4975 = vld [vmem:[%s6 + $0xb0] sm:$0xff]
  %v4976 = vld [vmem:[%s6 + $0xb8] sm:$0xff]
  %v4977 = vld [vmem:[%s6 + $0xc0] sm:$0xff]
  %v4978 = vld [vmem:[%s6 + $0xc8] sm:$0xff]
  %v4979 = vld [vmem:[%s6 + $0xd0] sm:$0xff]
  %v4980 = vld [vmem:[%s6 + $0xd8] sm:$0xff]
  %v4981 = vld [vmem:[%s6 + $0xe0] sm:$0xff]
  %v4982 = vld [vmem:[%s6 + $0xe8] sm:$0xff]
  %v4983 = vld [vmem:[%s6 + $0xf0] sm:$0xff]
  %v4984 = vld [vmem:[%s6 + $0xf8] sm:$0xff]
  %v4985 = vld [vmem:[#allocation4] sm:$0xff]
  %v4986 = vld [vmem:[#allocation4 + $0x8] sm:$0xff]
  %v4987 = vld [vmem:[#allocation4 + $0x10] sm:$0xff]
  %v4988 = vld [vmem:[#allocation4 + $0x18] sm:$0xff]
  %v4989 = vld [vmem:[#allocation4 + $0x20] sm:$0xff]
  %v4990 = vld [vmem:[#allocation4 + $0x28] sm:$0xff]
  %v4991 = vld [vmem:[#allocation4 + $0x30] sm:$0xff]
  %v4992 = vld [vmem:[#allocation4 + $0x38] sm:$0xff]
  %v4993 = vld [vmem:[#allocation4 + $0x40] sm:$0xff]
  %v4994 = vld [vmem:[#allocation4 + $0x48] sm:$0xff]
  %v4995 = vld [vmem:[#allocation4 + $0x50] sm:$0xff]
  %v4996 = vld [vmem:[#allocation4 + $0x58] sm:$0xff]
  %v4997 = vld [vmem:[#allocation4 + $0x60] sm:$0xff]
  %v4998 = vld [vmem:[#allocation4 + $0x68] sm:$0xff]
  %v4999 = vld [vmem:[#allocation4 + $0x70] sm:$0xff]
  %v5000 = vld [vmem:[#allocation4 + $0x78] sm:$0xff]
  %v5001 = vld [vmem:[#allocation4 + $0x80] sm:$0xff]
  %v5002 = vld [vmem:[#allocation4 + $0x88] sm:$0xff]
  %v5003 = vld [vmem:[#allocation4 + $0x90] sm:$0xff]
  %v5004 = vld [vmem:[#allocation4 + $0x98] sm:$0xff]
  %v5005 = vld [vmem:[#allocation4 + $0xa0] sm:$0xff]
  %v5006 = vld [vmem:[#allocation4 + $0xa8] sm:$0xff]
  %v5007 = vld [vmem:[#allocation4 + $0xb0] sm:$0xff]
  %v5008 = vld [vmem:[#allocation4 + $0xb8] sm:$0xff]
  %v5009 = vld [vmem:[#allocation4 + $0xc0] sm:$0xff]
  %v5010 = vld [vmem:[#allocation4 + $0xc8] sm:$0xff]
  %v5011 = vld [vmem:[#allocation4 + $0xd0] sm:$0xff]
  %v5012 = vld [vmem:[#allocation4 + $0xd8] sm:$0xff]
  %v5013 = vld [vmem:[#allocation4 + $0xe0] sm:$0xff]
  %v5014 = vld [vmem:[#allocation4 + $0xe8] sm:$0xff]
  %v5015 = vld [vmem:[#allocation4 + $0xf0] sm:$0xff]
  %v5016 = vld [vmem:[#allocation4 + $0xf8] sm:$0xff]
  %v5017 = vld [vmem:[%s8] sm:$0xff]
  %v5018 = vld [vmem:[%s8 + $0x8] sm:$0xff]
  %v5019 = vld [vmem:[%s8 + $0x10] sm:$0xff]
  %v5020 = vld [vmem:[%s8 + $0x18] sm:$0xff]
  %v5021 = vld [vmem:[%s8 + $0x20] sm:$0xff]
  %v5022 = vld [vmem:[%s8 + $0x28] sm:$0xff]
  %v5023 = vld [vmem:[%s8 + $0x30] sm:$0xff]
  %v5024 = vld [vmem:[%s8 + $0x38] sm:$0xff]
  %v5025 = vld [vmem:[%s8 + $0x40] sm:$0xff]
  %v5026 = vld [vmem:[%s8 + $0x48] sm:$0xff]
  %v5027 = vld [vmem:[%s8 + $0x50] sm:$0xff]
  %v5028 = vld [vmem:[%s8 + $0x58] sm:$0xff]
  %v5029 = vld [vmem:[%s8 + $0x60] sm:$0xff]
  %v5030 = vld [vmem:[%s8 + $0x68] sm:$0xff]
  %v5031 = vld [vmem:[%s8 + $0x70] sm:$0xff]
  %v5032 = vld [vmem:[%s8 + $0x78] sm:$0xff]
  %v5033 = vld [vmem:[%s8 + $0x80] sm:$0xff]
  %v5034 = vld [vmem:[%s8 + $0x88] sm:$0xff]
  %v5035 = vld [vmem:[%s8 + $0x90] sm:$0xff]
  %v5036 = vld [vmem:[%s8 + $0x98] sm:$0xff]
  %v5037 = vld [vmem:[%s8 + $0xa0] sm:$0xff]
  %v5038 = vld [vmem:[%s8 + $0xa8] sm:$0xff]
  %v5039 = vld [vmem:[%s8 + $0xb0] sm:$0xff]
  %v5040 = vld [vmem:[%s8 + $0xb8] sm:$0xff]
  %v5041 = vld [vmem:[%s8 + $0xc0] sm:$0xff]
  %v5042 = vld [vmem:[%s8 + $0xc8] sm:$0xff]
  %v5043 = vld [vmem:[%s8 + $0xd0] sm:$0xff]
  %v5044 = vld [vmem:[%s8 + $0xd8] sm:$0xff]
  %v5045 = vld [vmem:[%s8 + $0xe0] sm:$0xff]
  %v5046 = vld [vmem:[%s8 + $0xe8] sm:$0xff]
  %v5047 = vld [vmem:[%s8 + $0xf0] sm:$0xff]
  %v5048 = vld [vmem:[%s8 + $0xf8] sm:$0xff]
  %5050 = vset.pattern.permute.xlu0 0
  %5051 = vperm.xlu0 %5050, %v5017
  %v5052 = vpop.permute.xlu0 %5051
  %5055 = vset.pattern.permute.xlu0 0
  %5056 = vperm.xlu0 %5055, %v5018
  %v5057 = vpop.permute.xlu0 %5056
  %5060 = vset.pattern.permute.xlu0 0
  %5061 = vperm.xlu0 %5060, %v5019
  %v5062 = vpop.permute.xlu0 %5061
  %5065 = vset.pattern.permute.xlu0 0
  %5066 = vperm.xlu0 %5065, %v5020
  %v5067 = vpop.permute.xlu0 %5066
  %5070 = vset.pattern.permute.xlu0 0
  %5071 = vperm.xlu0 %5070, %v5021
  %v5072 = vpop.permute.xlu0 %5071
  %5075 = vset.pattern.permute.xlu0 0
  %5076 = vperm.xlu0 %5075, %v5022
  %v5077 = vpop.permute.xlu0 %5076
  %5080 = vset.pattern.permute.xlu0 0
  %5081 = vperm.xlu0 %5080, %v5023
  %v5082 = vpop.permute.xlu0 %5081
  %5085 = vset.pattern.permute.xlu0 0
  %5086 = vperm.xlu0 %5085, %v5024
  %v5087 = vpop.permute.xlu0 %5086
  %5090 = vset.pattern.permute.xlu0 0
  %5091 = vperm.xlu0 %5090, %v5025
  %v5092 = vpop.permute.xlu0 %5091
  %5095 = vset.pattern.permute.xlu0 0
  %5096 = vperm.xlu0 %5095, %v5026
  %v5097 = vpop.permute.xlu0 %5096
  %5100 = vset.pattern.permute.xlu0 0
  %5101 = vperm.xlu0 %5100, %v5027
  %v5102 = vpop.permute.xlu0 %5101
  %5105 = vset.pattern.permute.xlu0 0
  %5106 = vperm.xlu0 %5105, %v5028
  %v5107 = vpop.permute.xlu0 %5106
  %5110 = vset.pattern.permute.xlu0 0
  %5111 = vperm.xlu0 %5110, %v5029
  %v5112 = vpop.permute.xlu0 %5111
  %5115 = vset.pattern.permute.xlu0 0
  %5116 = vperm.xlu0 %5115, %v5030
  %v5117 = vpop.permute.xlu0 %5116
  %5120 = vset.pattern.permute.xlu0 0
  %5121 = vperm.xlu0 %5120, %v5031
  %v5122 = vpop.permute.xlu0 %5121
  %5125 = vset.pattern.permute.xlu0 0
  %5126 = vperm.xlu0 %5125, %v5032
  %v5127 = vpop.permute.xlu0 %5126
  %5130 = vset.pattern.permute.xlu0 0
  %5131 = vperm.xlu0 %5130, %v5033
  %v5132 = vpop.permute.xlu0 %5131
  %5135 = vset.pattern.permute.xlu0 0
  %5136 = vperm.xlu0 %5135, %v5034
  %v5137 = vpop.permute.xlu0 %5136
  %5140 = vset.pattern.permute.xlu0 0
  %5141 = vperm.xlu0 %5140, %v5035
  %v5142 = vpop.permute.xlu0 %5141
  %5145 = vset.pattern.permute.xlu0 0
  %5146 = vperm.xlu0 %5145, %v5036
  %v5147 = vpop.permute.xlu0 %5146
  %5150 = vset.pattern.permute.xlu0 0
  %5151 = vperm.xlu0 %5150, %v5037
  %v5152 = vpop.permute.xlu0 %5151
  %5155 = vset.pattern.permute.xlu0 0
  %5156 = vperm.xlu0 %5155, %v5038
  %v5157 = vpop.permute.xlu0 %5156
  %5160 = vset.pattern.permute.xlu0 0
  %5161 = vperm.xlu0 %5160, %v5039
  %v5162 = vpop.permute.xlu0 %5161
  %5165 = vset.pattern.permute.xlu0 0
  %5166 = vperm.xlu0 %5165, %v5040
  %v5167 = vpop.permute.xlu0 %5166
  %5170 = vset.pattern.permute.xlu0 0
  %5171 = vperm.xlu0 %5170, %v5041
  %v5172 = vpop.permute.xlu0 %5171
  %5175 = vset.pattern.permute.xlu0 0
  %5176 = vperm.xlu0 %5175, %v5042
  %v5177 = vpop.permute.xlu0 %5176
  %5180 = vset.pattern.permute.xlu0 0
  %5181 = vperm.xlu0 %5180, %v5043
  %v5182 = vpop.permute.xlu0 %5181
  %5185 = vset.pattern.permute.xlu0 0
  %5186 = vperm.xlu0 %5185, %v5044
  %v5187 = vpop.permute.xlu0 %5186
  %5190 = vset.pattern.permute.xlu0 0
  %5191 = vperm.xlu0 %5190, %v5045
  %v5192 = vpop.permute.xlu0 %5191
  %5195 = vset.pattern.permute.xlu0 0
  %5196 = vperm.xlu0 %5195, %v5046
  %v5197 = vpop.permute.xlu0 %5196
  %5200 = vset.pattern.permute.xlu0 0
  %5201 = vperm.xlu0 %5200, %v5047
  %v5202 = vpop.permute.xlu0 %5201
  %5205 = vset.pattern.permute.xlu0 0
  %5206 = vperm.xlu0 %5205, %v5048
  %v5207 = vpop.permute.xlu0 %5206
  %v5210 = vsel %vm192, %v4953, 0
  %v5213 = vsel %vm192, %v4954, 0
  %v5216 = vsel %vm192, %v4955, 0
  %v5219 = vsel %vm192, %v4956, 0
  %v5222 = vsel %vm192, %v4957, 0
  %v5225 = vsel %vm192, %v4958, 0
  %v5228 = vsel %vm192, %v4959, 0
  %v5231 = vsel %vm192, %v4960, 0
  %v5234 = vsel %vm192, %v4961, 0
  %v5237 = vsel %vm192, %v4962, 0
  %v5240 = vsel %vm192, %v4963, 0
  %v5243 = vsel %vm192, %v4964, 0
  %v5246 = vsel %vm192, %v4965, 0
  %v5249 = vsel %vm192, %v4966, 0
  %v5252 = vsel %vm192, %v4967, 0
  %v5255 = vsel %vm192, %v4968, 0
  %v5258 = vsel %vm192, %v4969, 0
  %v5261 = vsel %vm192, %v4970, 0
  %v5264 = vsel %vm192, %v4971, 0
  %v5267 = vsel %vm192, %v4972, 0
  %v5270 = vsel %vm192, %v4973, 0
  %v5273 = vsel %vm192, %v4974, 0
  %v5276 = vsel %vm192, %v4975, 0
  %v5279 = vsel %vm192, %v4976, 0
  %v5282 = vsel %vm192, %v4977, 0
  %v5285 = vsel %vm192, %v4978, 0
  %v5288 = vsel %vm192, %v4979, 0
  %v5291 = vsel %vm192, %v4980, 0
  %v5294 = vsel %vm192, %v4981, 0
  %v5297 = vsel %vm192, %v4982, 0
  %v5300 = vsel %vm192, %v4983, 0
  %v5303 = vsel %vm192, %v4984, 0
  %5305 = vmatprep.subr.mxu0 %v4986
  %5306 = vmatpush1.msra.mxu0 %v4985
  %5307 = vmatprep.subr.mxu0 %v4990
  %5308 = vmatpush1.msra.mxu0 %v4989
  %5309 = vmatprep.subr.mxu0 %v4994
  %5310 = vmatpush1.msra.mxu0 %v4993
  %5311 = vmatprep.subr.mxu0 %v4998
  %5312 = vmatpush1.msra.mxu0 %v4997
  %5313 = vmatprep.subr.mxu0 %v5002
  %5314 = vmatpush1.msra.mxu0 %v5001
  %5315 = vmatprep.subr.mxu0 %v5006
  %5316 = vmatpush1.msra.mxu0 %v5005
  %5317 = vmatprep.subr.mxu0 %v5010
  %5318 = vmatpush1.msra.mxu0 %v5009
  %5319 = vmatprep.subr.mxu0 %v5014
  %5320 = vmatpush1.msra.mxu0 %v5013
  %5321 = vmatprep.subr.mxu0 0.0
  %5322 = vmatpush1.msra.mxu0 0.0
  %5323 = vmatprep.subr.mxu0 0.0
  %5324 = vmatpush1.msra.mxu0 0.0
  %5325 = vmatprep.subr.mxu0 0.0
  %5326 = vmatpush1.msra.mxu0 0.0
  %5327 = vmatprep.subr.mxu0 0.0
  %5328 = vmatpush1.msra.mxu0 0.0
  %5329 = vmatprep.subr.mxu0 0.0
  %5330 = vmatpush1.msra.mxu0 0.0
  %5331 = vmatprep.subr.mxu0 0.0
  %5332 = vmatpush1.msra.mxu0 0.0
  %5333 = vmatprep.subr.mxu0 0.0
  %5334 = vmatpush1.msra.mxu0 0.0
  %5335 = vmatprep.subr.mxu0 0.0
  %5336 = vmatpush1.msra.mxu0 0.0
  %5337 = vmatprep.subr.mxu0 0.0
  %5338 = vmatpush1.msra.mxu0 0.0
  %5339 = vmatprep.subr.mxu0 0.0
  %5340 = vmatpush1.msra.mxu0 0.0
  %5341 = vmatprep.subr.mxu0 0.0
  %5342 = vmatpush1.msra.mxu0 0.0
  %5343 = vmatprep.subr.mxu0 0.0
  %5344 = vmatpush1.msra.mxu0 0.0
  %5345 = vmatprep.subr.mxu0 0.0
  %5346 = vmatpush1.msra.mxu0 0.0
  %5347 = vmatprep.subr.mxu0 0.0
  %5348 = vmatpush1.msra.mxu0 0.0
  %5349 = vmatprep.subr.mxu0 0.0
  %5350 = vmatpush1.msra.mxu0 0.0
  %5351 = vmatprep.subr.mxu0 0.0
  %5352 = vmatpush1.msra.mxu0 0.0
  %5353 = vmatprep.subr.mxu0 0.0
  %5354 = vmatpush1.msra.mxu0 0.0
  %5355 = vmatprep.subr.mxu0 0.0
  %5356 = vmatpush1.msra.mxu0 0.0
  %5357 = vmatprep.subr.mxu0 0.0
  %5358 = vmatpush1.msra.mxu0 0.0
  %5359 = vmatprep.subr.mxu0 0.0
  %5360 = vmatpush1.msra.mxu0 0.0
  %5361 = vmatprep.subr.mxu0 0.0
  %5362 = vmatpush1.msra.mxu0 0.0
  %5363 = vmatprep.subr.mxu0 0.0
  %5364 = vmatpush1.msra.mxu0 0.0
  %5365 = vmatprep.subr.mxu0 0.0
  %5366 = vmatpush1.msra.mxu0 0.0
  %5367 = vmatprep.subr.mxu0 0.0
  %5368 = vmatpush1.msra.mxu0 0.0
  %5369 = vmatprep.mubr.f32.mxu0 0.0
  %5370 = vmatmul.mubr.f32.gmra.mrb[0].mxu0 %v5210
  %v5371 = vpop.f32.mrb[0].mxu0
  %v5372 = vadd.f32 %v5052, %v5371
  %v5373 = vpop.f32.mrb[0].mxu0
  %v5374 = vadd.f32 %v5052, %v5373
  %5375 = vmatprep.mubr.f32.mxu0 0.0
  %5376 = vmatmul.mubr.f32.gmra.mrb[0].mxu0 %v5213
  %v5377 = vpop.f32.mrb[0].mxu0
  %v5378 = vadd.f32 %v5057, %v5377
  %v5379 = vpop.f32.mrb[0].mxu0
  %v5380 = vadd.f32 %v5057, %v5379
  %5381 = vmatprep.mubr.f32.mxu0 0.0
  %5382 = vmatmul.mubr.f32.gmra.mrb[0].mxu0 %v5216
  %v5383 = vpop.f32.mrb[0].mxu0
  %v5384 = vadd.f32 %v5062, %v5383
  %v5385 = vpop.f32.mrb[0].mxu0
  %v5386 = vadd.f32 %v5062, %v5385
  %5387 = vmatprep.mubr.f32.mxu0 0.0
  %5388 = vmatmul.mubr.f32.gmra.mrb[0].mxu0 %v5219
  %v5389 = vpop.f32.mrb[0].mxu0
  %v5390 = vadd.f32 %v5067, %v5389
  %v5391 = vpop.f32.mrb[0].mxu0
  %v5392 = vadd.f32 %v5067, %v5391
  %5393 = vmatprep.mubr.f32.mxu0 0.0
  %5394 = vmatmul.mubr.f32.gmra.mrb[0].mxu0 %v5222
  %v5395 = vpop.f32.mrb[0].mxu0
  %v5396 = vadd.f32 %v5072, %v5395
  %v5397 = vpop.f32.mrb[0].mxu0
  %v5398 = vadd.f32 %v5072, %v5397
  %5399 = vmatprep.mubr.f32.mxu0 0.0
  %5400 = vmatmul.mubr.f32.gmra.mrb[0].mxu0 %v5225
  %v5401 = vpop.f32.mrb[0].mxu0
  %v5402 = vadd.f32 %v5077, %v5401
  %v5403 = vpop.f32.mrb[0].mxu0
  %v5404 = vadd.f32 %v5077, %v5403
  %5405 = vmatprep.mubr.f32.mxu0 0.0
  %5406 = vmatmul.mubr.f32.gmra.mrb[0].mxu0 %v5228
  %v5407 = vpop.f32.mrb[0].mxu0
  %v5408 = vadd.f32 %v5082, %v5407
  %v5409 = vpop.f32.mrb[0].mxu0
  %v5410 = vadd.f32 %v5082, %v5409
  %5411 = vmatprep.mubr.f32.mxu0 0.0
  %5412 = vmatmul.mubr.f32.gmra.mrb[0].mxu0 %v5231
  %v5413 = vpop.f32.mrb[0].mxu0
  %v5414 = vadd.f32 %v5087, %v5413
  %v5415 = vpop.f32.mrb[0].mxu0
  %v5416 = vadd.f32 %v5087, %v5415
  %5417 = vmatprep.mubr.f32.mxu0 0.0
  %5418 = vmatmul.mubr.f32.gmra.mrb[0].mxu0 %v5234
  %v5419 = vpop.f32.mrb[0].mxu0
  %v5420 = vadd.f32 %v5092, %v5419
  %v5421 = vpop.f32.mrb[0].mxu0
  %v5422 = vadd.f32 %v5092, %v5421
  %5423 = vmatprep.mubr.f32.mxu0 0.0
  %5424 = vmatmul.mubr.f32.gmra.mrb[0].mxu0 %v5237
  %v5425 = vpop.f32.mrb[0].mxu0
  %v5426 = vadd.f32 %v5097, %v5425
  %v5427 = vpop.f32.mrb[0].mxu0
  %v5428 = vadd.f32 %v5097, %v5427
  %5429 = vmatprep.mubr.f32.mxu0 0.0
  %5430 = vmatmul.mubr.f32.gmra.mrb[0].mxu0 %v5240
  %v5431 = vpop.f32.mrb[0].mxu0
  %v5432 = vadd.f32 %v5102, %v5431
  %v5433 = vpop.f32.mrb[0].mxu0
  %v5434 = vadd.f32 %v5102, %v5433
  %5435 = vmatprep.mubr.f32.mxu0 0.0
  %5436 = vmatmul.mubr.f32.gmra.mrb[0].mxu0 %v5243
  %v5437 = vpop.f32.mrb[0].mxu0
  %v5438 = vadd.f32 %v5107, %v5437
  %v5439 = vpop.f32.mrb[0].mxu0
  %v5440 = vadd.f32 %v5107, %v5439
  %5441 = vmatprep.mubr.f32.mxu0 0.0
  %5442 = vmatmul.mubr.f32.gmra.mrb[0].mxu0 %v5246
  %v5443 = vpop.f32.mrb[0].mxu0
  %v5444 = vadd.f32 %v5112, %v5443
  %v5445 = vpop.f32.mrb[0].mxu0
  %v5446 = vadd.f32 %v5112, %v5445
  %5447 = vmatprep.mubr.f32.mxu0 0.0
  %5448 = vmatmul.mubr.f32.gmra.mrb[0].mxu0 %v5249
  %v5449 = vpop.f32.mrb[0].mxu0
  %v5450 = vadd.f32 %v5117, %v5449
  %v5451 = vpop.f32.mrb[0].mxu0
  %v5452 = vadd.f32 %v5117, %v5451
  %5453 = vmatprep.mubr.f32.mxu0 0.0
  %5454 = vmatmul.mubr.f32.gmra.mrb[0].mxu0 %v5252
  %v5455 = vpop.f32.mrb[0].mxu0
  %v5456 = vadd.f32 %v5122, %v5455
  %v5457 = vpop.f32.mrb[0].mxu0
  %v5458 = vadd.f32 %v5122, %v5457
  %5459 = vmatprep.mubr.f32.mxu0 0.0
  %5460 = vmatmul.mubr.f32.gmra.mrb[0].mxu0 %v5255
  %v5461 = vpop.f32.mrb[0].mxu0
  %v5462 = vadd.f32 %v5127, %v5461
  %v5463 = vpop.f32.mrb[0].mxu0
  %v5464 = vadd.f32 %v5127, %v5463
  %5465 = vmatprep.mubr.f32.mxu0 0.0
  %5466 = vmatmul.mubr.f32.gmra.mrb[0].mxu0 %v5258
  %v5467 = vpop.f32.mrb[0].mxu0
  %v5468 = vadd.f32 %v5132, %v5467
  %v5469 = vpop.f32.mrb[0].mxu0
  %v5470 = vadd.f32 %v5132, %v5469
  %5471 = vmatprep.mubr.f32.mxu0 0.0
  %5472 = vmatmul.mubr.f32.gmra.mrb[0].mxu0 %v5261
  %v5473 = vpop.f32.mrb[0].mxu0
  %v5474 = vadd.f32 %v5137, %v5473
  %v5475 = vpop.f32.mrb[0].mxu0
  %v5476 = vadd.f32 %v5137, %v5475
  %5477 = vmatprep.mubr.f32.mxu0 0.0
  %5478 = vmatmul.mubr.f32.gmra.mrb[0].mxu0 %v5264
  %v5479 = vpop.f32.mrb[0].mxu0
  %v5480 = vadd.f32 %v5142, %v5479
  %v5481 = vpop.f32.mrb[0].mxu0
  %v5482 = vadd.f32 %v5142, %v5481
  %5483 = vmatprep.mubr.f32.mxu0 0.0
  %5484 = vmatmul.mubr.f32.gmra.mrb[0].mxu0 %v5267
  %v5485 = vpop.f32.mrb[0].mxu0
  %v5486 = vadd.f32 %v5147, %v5485
  %v5487 = vpop.f32.mrb[0].mxu0
  %v5488 = vadd.f32 %v5147, %v5487
  %5489 = vmatprep.mubr.f32.mxu0 0.0
  %5490 = vmatmul.mubr.f32.gmra.mrb[0].mxu0 %v5270
  %v5491 = vpop.f32.mrb[0].mxu0
  %v5492 = vadd.f32 %v5152, %v5491
  %v5493 = vpop.f32.mrb[0].mxu0
  %v5494 = vadd.f32 %v5152, %v5493
  %5495 = vmatprep.mubr.f32.mxu0 0.0
  %5496 = vmatmul.mubr.f32.gmra.mrb[0].mxu0 %v5273
  %v5497 = vpop.f32.mrb[0].mxu0
  %v5498 = vadd.f32 %v5157, %v5497
  %v5499 = vpop.f32.mrb[0].mxu0
  %v5500 = vadd.f32 %v5157, %v5499
  %5501 = vmatprep.mubr.f32.mxu0 0.0
  %5502 = vmatmul.mubr.f32.gmra.mrb[0].mxu0 %v5276
  %v5503 = vpop.f32.mrb[0].mxu0
  %v5504 = vadd.f32 %v5162, %v5503
  %v5505 = vpop.f32.mrb[0].mxu0
  %v5506 = vadd.f32 %v5162, %v5505
  %5507 = vmatprep.mubr.f32.mxu0 0.0
  %5508 = vmatmul.mubr.f32.gmra.mrb[0].mxu0 %v5279
  %v5509 = vpop.f32.mrb[0].mxu0
  %v5510 = vadd.f32 %v5167, %v5509
  %v5511 = vpop.f32.mrb[0].mxu0
  %v5512 = vadd.f32 %v5167, %v5511
  %5513 = vmatprep.mubr.f32.mxu0 0.0
  %5514 = vmatmul.mubr.f32.gmra.mrb[0].mxu0 %v5282
  %v5515 = vpop.f32.mrb[0].mxu0
  %v5516 = vadd.f32 %v5172, %v5515
  %v5517 = vpop.f32.mrb[0].mxu0
  %v5518 = vadd.f32 %v5172, %v5517
  %5519 = vmatprep.mubr.f32.mxu0 0.0
  %5520 = vmatmul.mubr.f32.gmra.mrb[0].mxu0 %v5285
  %v5521 = vpop.f32.mrb[0].mxu0
  %v5522 = vadd.f32 %v5177, %v5521
  %v5523 = vpop.f32.mrb[0].mxu0
  %v5524 = vadd.f32 %v5177, %v5523
  %5525 = vmatprep.mubr.f32.mxu0 0.0
  %5526 = vmatmul.mubr.f32.gmra.mrb[0].mxu0 %v5288
  %v5527 = vpop.f32.mrb[0].mxu0
  %v5528 = vadd.f32 %v5182, %v5527
  %v5529 = vpop.f32.mrb[0].mxu0
  %v5530 = vadd.f32 %v5182, %v5529
  %5531 = vmatprep.mubr.f32.mxu0 0.0
  %5532 = vmatmul.mubr.f32.gmra.mrb[0].mxu0 %v5291
  %v5533 = vpop.f32.mrb[0].mxu0
  %v5534 = vadd.f32 %v5187, %v5533
  %v5535 = vpop.f32.mrb[0].mxu0
  %v5536 = vadd.f32 %v5187, %v5535
  %5537 = vmatprep.mubr.f32.mxu0 0.0
  %5538 = vmatmul.mubr.f32.gmra.mrb[0].mxu0 %v5294
  %v5539 = vpop.f32.mrb[0].mxu0
  %v5540 = vadd.f32 %v5192, %v5539
  %v5541 = vpop.f32.mrb[0].mxu0
  %v5542 = vadd.f32 %v5192, %v5541
  %5543 = vmatprep.mubr.f32.mxu0 0.0
  %5544 = vmatmul.mubr.f32.gmra.mrb[0].mxu0 %v5297
  %v5545 = vpop.f32.mrb[0].mxu0
  %v5546 = vadd.f32 %v5197, %v5545
  %v5547 = vpop.f32.mrb[0].mxu0
  %v5548 = vadd.f32 %v5197, %v5547
  %5549 = vmatprep.mubr.f32.mxu0 0.0
  %5550 = vmatmul.mubr.f32.gmra.mrb[0].mxu0 %v5300
  %v5551 = vpop.f32.mrb[0].mxu0
  %v5552 = vadd.f32 %v5202, %v5551
  %v5553 = vpop.f32.mrb[0].mxu0
  %v5554 = vadd.f32 %v5202, %v5553
  %5555 = vmatprep.mubr.f32.mxu0 0.0
  %5556 = vmatmul.mubr.f32.gmra.mrb[0].mxu0 %v5303
  %v5557 = vpop.f32.mrb[0].mxu0
  %v5558 = vadd.f32 %v5207, %v5557
  %v5559 = vpop.f32.mrb[0].mxu0
  %v5560 = vadd.f32 %v5207, %v5559
  %5561 = vdwg.mxu0
  %5562 = vmatprep.subr.mxu0 %v4988
  %5563 = vmatpush1.msra.mxu0 %v4987
  %5564 = vmatprep.subr.mxu0 %v4992
  %5565 = vmatpush1.msra.mxu0 %v4991
  %5566 = vmatprep.subr.mxu0 %v4996
  %5567 = vmatpush1.msra.mxu0 %v4995
  %5568 = vmatprep.subr.mxu0 %v5000
  %5569 = vmatpush1.msra.mxu0 %v4999
  %5570 = vmatprep.subr.mxu0 %v5004
  %5571 = vmatpush1.msra.mxu0 %v5003
  %5572 = vmatprep.subr.mxu0 %v5008
  %5573 = vmatpush1.msra.mxu0 %v5007
  %5574 = vmatprep.subr.mxu0 %v5012
  %5575 = vmatpush1.msra.mxu0 %v5011
  %5576 = vmatprep.subr.mxu0 %v5016
  %5577 = vmatpush1.msra.mxu0 %v5015
  %5578 = vmatprep.subr.mxu0 0.0
  %5579 = vmatpush1.msra.mxu0 0.0
  %5580 = vmatprep.subr.mxu0 0.0
  %5581 = vmatpush1.msra.mxu0 0.0
  %5582 = vmatprep.subr.mxu0 0.0
  %5583 = vmatpush1.msra.mxu0 0.0
  %5584 = vmatprep.subr.mxu0 0.0
  %5585 = vmatpush1.msra.mxu0 0.0
  %5586 = vmatprep.subr.mxu0 0.0
  %5587 = vmatpush1.msra.mxu0 0.0
  %5588 = vmatprep.subr.mxu0 0.0
  %5589 = vmatpush1.msra.mxu0 0.0
  %5590 = vmatprep.subr.mxu0 0.0
  %5591 = vmatpush1.msra.mxu0 0.0
  %5592 = vmatprep.subr.mxu0 0.0
  %5593 = vmatpush1.msra.mxu0 0.0
  %5594 = vmatprep.subr.mxu0 0.0
  %5595 = vmatpush1.msra.mxu0 0.0
  %5596 = vmatprep.subr.mxu0 0.0
  %5597 = vmatpush1.msra.mxu0 0.0
  %5598 = vmatprep.subr.mxu0 0.0
  %5599 = vmatpush1.msra.mxu0 0.0
  %5600 = vmatprep.subr.mxu0 0.0
  %5601 = vmatpush1.msra.mxu0 0.0
  %5602 = vmatprep.subr.mxu0 0.0
  %5603 = vmatpush1.msra.mxu0 0.0
  %5604 = vmatprep.subr.mxu0 0.0
  %5605 = vmatpush1.msra.mxu0 0.0
  %5606 = vmatprep.subr.mxu0 0.0
  %5607 = vmatpush1.msra.mxu0 0.0
  %5608 = vmatprep.subr.mxu0 0.0
  %5609 = vmatpush1.msra.mxu0 0.0
  %5610 = vmatprep.subr.mxu0 0.0
  %5611 = vmatpush1.msra.mxu0 0.0
  %5612 = vmatprep.subr.mxu0 0.0
  %5613 = vmatpush1.msra.mxu0 0.0
  %5614 = vmatprep.subr.mxu0 0.0
  %5615 = vmatpush1.msra.mxu0 0.0
  %5616 = vmatprep.subr.mxu0 0.0
  %5617 = vmatpush1.msra.mxu0 0.0
  %5618 = vmatprep.subr.mxu0 0.0
  %5619 = vmatpush1.msra.mxu0 0.0
  %5620 = vmatprep.subr.mxu0 0.0
  %5621 = vmatpush1.msra.mxu0 0.0
  %5622 = vmatprep.subr.mxu0 0.0
  %5623 = vmatpush1.msra.mxu0 0.0
  %5624 = vmatprep.subr.mxu0 0.0
  %5625 = vmatpush1.msra.mxu0 0.0
  %5626 = vmatprep.mubr.f32.mxu0 0.0
  %5627 = vmatmul.mubr.f32.gmra.mrb[0].mxu0 %v5210
  %v5628 = vpop.f32.mrb[0].mxu0
  %v5629 = vadd.f32 %v5052, %v5628
  %v5630 = vpop.f32.mrb[0].mxu0
  %v5631 = vadd.f32 %v5052, %v5630
  %5632 = vmatprep.mubr.f32.mxu0 0.0
  %5633 = vmatmul.mubr.f32.gmra.mrb[0].mxu0 %v5213
  %v5634 = vpop.f32.mrb[0].mxu0
  %v5635 = vadd.f32 %v5057, %v5634
  %v5636 = vpop.f32.mrb[0].mxu0
  %v5637 = vadd.f32 %v5057, %v5636
  %5638 = vmatprep.mubr.f32.mxu0 0.0
  %5639 = vmatmul.mubr.f32.gmra.mrb[0].mxu0 %v5216
  %v5640 = vpop.f32.mrb[0].mxu0
  %v5641 = vadd.f32 %v5062, %v5640
  %v5642 = vpop.f32.mrb[0].mxu0
  %v5643 = vadd.f32 %v5062, %v5642
  %5644 = vmatprep.mubr.f32.mxu0 0.0
  %5645 = vmatmul.mubr.f32.gmra.mrb[0].mxu0 %v5219
  %v5646 = vpop.f32.mrb[0].mxu0
  %v5647 = vadd.f32 %v5067, %v5646
  %v5648 = vpop.f32.mrb[0].mxu0
  %v5649 = vadd.f32 %v5067, %v5648
  %5650 = vmatprep.mubr.f32.mxu0 0.0
  %5651 = vmatmul.mubr.f32.gmra.mrb[0].mxu0 %v5222
  %v5652 = vpop.f32.mrb[0].mxu0
  %v5653 = vadd.f32 %v5072, %v5652
  %v5654 = vpop.f32.mrb[0].mxu0
  %v5655 = vadd.f32 %v5072, %v5654
  %5656 = vmatprep.mubr.f32.mxu0 0.0
  %5657 = vmatmul.mubr.f32.gmra.mrb[0].mxu0 %v5225
  %v5658 = vpop.f32.mrb[0].mxu0
  %v5659 = vadd.f32 %v5077, %v5658
  %v5660 = vpop.f32.mrb[0].mxu0
  %v5661 = vadd.f32 %v5077, %v5660
  %5662 = vmatprep.mubr.f32.mxu0 0.0
  %5663 = vmatmul.mubr.f32.gmra.mrb[0].mxu0 %v5228
  %v5664 = vpop.f32.mrb[0].mxu0
  %v5665 = vadd.f32 %v5082, %v5664
  %v5666 = vpop.f32.mrb[0].mxu0
  %v5667 = vadd.f32 %v5082, %v5666
  %5668 = vmatprep.mubr.f32.mxu0 0.0
  %5669 = vmatmul.mubr.f32.gmra.mrb[0].mxu0 %v5231
  %v5670 = vpop.f32.mrb[0].mxu0
  %v5671 = vadd.f32 %v5087, %v5670
  %v5672 = vpop.f32.mrb[0].mxu0
  %v5673 = vadd.f32 %v5087, %v5672
  %5674 = vmatprep.mubr.f32.mxu0 0.0
  %5675 = vmatmul.mubr.f32.gmra.mrb[0].mxu0 %v5234
  %v5676 = vpop.f32.mrb[0].mxu0
  %v5677 = vadd.f32 %v5092, %v5676
  %v5678 = vpop.f32.mrb[0].mxu0
  %v5679 = vadd.f32 %v5092, %v5678
  %5680 = vmatprep.mubr.f32.mxu0 0.0
  %5681 = vmatmul.mubr.f32.gmra.mrb[0].mxu0 %v5237
  %v5682 = vpop.f32.mrb[0].mxu0
  %v5683 = vadd.f32 %v5097, %v5682
  %v5684 = vpop.f32.mrb[0].mxu0
  %v5685 = vadd.f32 %v5097, %v5684
  %5686 = vmatprep.mubr.f32.mxu0 0.0
  %5687 = vmatmul.mubr.f32.gmra.mrb[0].mxu0 %v5240
  %v5688 = vpop.f32.mrb[0].mxu0
  %v5689 = vadd.f32 %v5102, %v5688
  %v5690 = vpop.f32.mrb[0].mxu0
  %v5691 = vadd.f32 %v5102, %v5690
  %5692 = vmatprep.mubr.f32.mxu0 0.0
  %5693 = vmatmul.mubr.f32.gmra.mrb[0].mxu0 %v5243
  %v5694 = vpop.f32.mrb[0].mxu0
  %v5695 = vadd.f32 %v5107, %v5694
  %v5696 = vpop.f32.mrb[0].mxu0
  %v5697 = vadd.f32 %v5107, %v5696
  %5698 = vmatprep.mubr.f32.mxu0 0.0
  %5699 = vmatmul.mubr.f32.gmra.mrb[0].mxu0 %v5246
  %v5700 = vpop.f32.mrb[0].mxu0
  %v5701 = vadd.f32 %v5112, %v5700
  %v5702 = vpop.f32.mrb[0].mxu0
  %v5703 = vadd.f32 %v5112, %v5702
  %5704 = vmatprep.mubr.f32.mxu0 0.0
  %5705 = vmatmul.mubr.f32.gmra.mrb[0].mxu0 %v5249
  %v5706 = vpop.f32.mrb[0].mxu0
  %v5707 = vadd.f32 %v5117, %v5706
  %v5708 = vpop.f32.mrb[0].mxu0
  %v5709 = vadd.f32 %v5117, %v5708
  %5710 = vmatprep.mubr.f32.mxu0 0.0
  %5711 = vmatmul.mubr.f32.gmra.mrb[0].mxu0 %v5252
  %v5712 = vpop.f32.mrb[0].mxu0
  %v5713 = vadd.f32 %v5122, %v5712
  %v5714 = vpop.f32.mrb[0].mxu0
  %v5715 = vadd.f32 %v5122, %v5714
  %5716 = vmatprep.mubr.f32.mxu0 0.0
  %5717 = vmatmul.mubr.f32.gmra.mrb[0].mxu0 %v5255
  %v5718 = vpop.f32.mrb[0].mxu0
  %v5719 = vadd.f32 %v5127, %v5718
  %v5720 = vpop.f32.mrb[0].mxu0
  %v5721 = vadd.f32 %v5127, %v5720
  %5722 = vmatprep.mubr.f32.mxu0 0.0
  %5723 = vmatmul.mubr.f32.gmra.mrb[0].mxu0 %v5258
  %v5724 = vpop.f32.mrb[0].mxu0
  %v5725 = vadd.f32 %v5132, %v5724
  %v5726 = vpop.f32.mrb[0].mxu0
  %v5727 = vadd.f32 %v5132, %v5726
  %5728 = vmatprep.mubr.f32.mxu0 0.0
  %5729 = vmatmul.mubr.f32.gmra.mrb[0].mxu0 %v5261
  %v5730 = vpop.f32.mrb[0].mxu0
  %v5731 = vadd.f32 %v5137, %v5730
  %v5732 = vpop.f32.mrb[0].mxu0
  %v5733 = vadd.f32 %v5137, %v5732
  %5734 = vmatprep.mubr.f32.mxu0 0.0
  %5735 = vmatmul.mubr.f32.gmra.mrb[0].mxu0 %v5264
  %v5736 = vpop.f32.mrb[0].mxu0
  %v5737 = vadd.f32 %v5142, %v5736
  %v5738 = vpop.f32.mrb[0].mxu0
  %v5739 = vadd.f32 %v5142, %v5738
  %5740 = vmatprep.mubr.f32.mxu0 0.0
  %5741 = vmatmul.mubr.f32.gmra.mrb[0].mxu0 %v5267
  %v5742 = vpop.f32.mrb[0].mxu0
  %v5743 = vadd.f32 %v5147, %v5742
  %v5744 = vpop.f32.mrb[0].mxu0
  %v5745 = vadd.f32 %v5147, %v5744
  %5746 = vmatprep.mubr.f32.mxu0 0.0
  %5747 = vmatmul.mubr.f32.gmra.mrb[0].mxu0 %v5270
  %v5748 = vpop.f32.mrb[0].mxu0
  %v5749 = vadd.f32 %v5152, %v5748
  %v5750 = vpop.f32.mrb[0].mxu0
  %v5751 = vadd.f32 %v5152, %v5750
  %5752 = vmatprep.mubr.f32.mxu0 0.0
  %5753 = vmatmul.mubr.f32.gmra.mrb[0].mxu0 %v5273
  %v5754 = vpop.f32.mrb[0].mxu0
  %v5755 = vadd.f32 %v5157, %v5754
  %v5756 = vpop.f32.mrb[0].mxu0
  %v5757 = vadd.f32 %v5157, %v5756
  %5758 = vmatprep.mubr.f32.mxu0 0.0
  %5759 = vmatmul.mubr.f32.gmra.mrb[0].mxu0 %v5276
  %v5760 = vpop.f32.mrb[0].mxu0
  %v5761 = vadd.f32 %v5162, %v5760
  %v5762 = vpop.f32.mrb[0].mxu0
  %v5763 = vadd.f32 %v5162, %v5762
  %5764 = vmatprep.mubr.f32.mxu0 0.0
  %5765 = vmatmul.mubr.f32.gmra.mrb[0].mxu0 %v5279
  %v5766 = vpop.f32.mrb[0].mxu0
  %v5767 = vadd.f32 %v5167, %v5766
  %v5768 = vpop.f32.mrb[0].mxu0
  %v5769 = vadd.f32 %v5167, %v5768
  %5770 = vmatprep.mubr.f32.mxu0 0.0
  %5771 = vmatmul.mubr.f32.gmra.mrb[0].mxu0 %v5282
  %v5772 = vpop.f32.mrb[0].mxu0
  %v5773 = vadd.f32 %v5172, %v5772
  %v5774 = vpop.f32.mrb[0].mxu0
  %v5775 = vadd.f32 %v5172, %v5774
  %5776 = vmatprep.mubr.f32.mxu0 0.0
  %5777 = vmatmul.mubr.f32.gmra.mrb[0].mxu0 %v5285
  %v5778 = vpop.f32.mrb[0].mxu0
  %v5779 = vadd.f32 %v5177, %v5778
  %v5780 = vpop.f32.mrb[0].mxu0
  %v5781 = vadd.f32 %v5177, %v5780
  %5782 = vmatprep.mubr.f32.mxu0 0.0
  %5783 = vmatmul.mubr.f32.gmra.mrb[0].mxu0 %v5288
  %v5784 = vpop.f32.mrb[0].mxu0
  %v5785 = vadd.f32 %v5182, %v5784
  %v5786 = vpop.f32.mrb[0].mxu0
  %v5787 = vadd.f32 %v5182, %v5786
  %5788 = vmatprep.mubr.f32.mxu0 0.0
  %5789 = vmatmul.mubr.f32.gmra.mrb[0].mxu0 %v5291
  %v5790 = vpop.f32.mrb[0].mxu0
  %v5791 = vadd.f32 %v5187, %v5790
  %v5792 = vpop.f32.mrb[0].mxu0
  %v5793 = vadd.f32 %v5187, %v5792
  %5794 = vmatprep.mubr.f32.mxu0 0.0
  %5795 = vmatmul.mubr.f32.gmra.mrb[0].mxu0 %v5294
  %v5796 = vpop.f32.mrb[0].mxu0
  %v5797 = vadd.f32 %v5192, %v5796
  %v5798 = vpop.f32.mrb[0].mxu0
  %v5799 = vadd.f32 %v5192, %v5798
  %5800 = vmatprep.mubr.f32.mxu0 0.0
  %5801 = vmatmul.mubr.f32.gmra.mrb[0].mxu0 %v5297
  %v5802 = vpop.f32.mrb[0].mxu0
  %v5803 = vadd.f32 %v5197, %v5802
  %v5804 = vpop.f32.mrb[0].mxu0
  %v5805 = vadd.f32 %v5197, %v5804
  %5806 = vmatprep.mubr.f32.mxu0 0.0
  %5807 = vmatmul.mubr.f32.gmra.mrb[0].mxu0 %v5300
  %v5808 = vpop.f32.mrb[0].mxu0
  %v5809 = vadd.f32 %v5202, %v5808
  %v5810 = vpop.f32.mrb[0].mxu0
  %v5811 = vadd.f32 %v5202, %v5810
  %5812 = vmatprep.mubr.f32.mxu0 0.0
  %5813 = vmatmul.mubr.f32.gmra.mrb[0].mxu0 %v5303
  %v5814 = vpop.f32.mrb[0].mxu0
  %v5815 = vadd.f32 %v5207, %v5814
  %v5816 = vpop.f32.mrb[0].mxu0
  %v5817 = vadd.f32 %v5207, %v5816
  %5818 = vdwg.mxu0
  %5819 = vst [vmem:[#allocation3] sm:$0xff] %v5372
  %5820 = vst [vmem:[#allocation3 + $0x8] sm:$0xff] %v5374
  %5821 = vst [vmem:[#allocation3 + $0x10] sm:$0xff] %v5629
  %5822 = vst [vmem:[#allocation3 + $0x18] sm:$0xff] %v5631
  %5823 = vst [vmem:[#allocation3 + $0x20] sm:$0xff] %v5378
  %5824 = vst [vmem:[#allocation3 + $0x28] sm:$0xff] %v5380
  %5825 = vst [vmem:[#allocation3 + $0x30] sm:$0xff] %v5635
  %5826 = vst [vmem:[#allocation3 + $0x38] sm:$0xff] %v5637
  %5827 = vst [vmem:[#allocation3 + $0x40] sm:$0xff] %v5384
  %5828 = vst [vmem:[#allocation3 + $0x48] sm:$0xff] %v5386
  %5829 = vst [vmem:[#allocation3 + $0x50] sm:$0xff] %v5641
  %5830 = vst [vmem:[#allocation3 + $0x58] sm:$0xff] %v5643
  %5831 = vst [vmem:[#allocation3 + $0x60] sm:$0xff] %v5390
  %5832 = vst [vmem:[#allocation3 + $0x68] sm:$0xff] %v5392
  %5833 = vst [vmem:[#allocation3 + $0x70] sm:$0xff] %v5647
  %5834 = vst [vmem:[#allocation3 + $0x78] sm:$0xff] %v5649
  %5835 = vst [vmem:[#allocation3 + $0x80] sm:$0xff] %v5396
  %5836 = vst [vmem:[#allocation3 + $0x88] sm:$0xff] %v5398
  %5837 = vst [vmem:[#allocation3 + $0x90] sm:$0xff] %v5653
  %5838 = vst [vmem:[#allocation3 + $0x98] sm:$0xff] %v5655
  %5839 = vst [vmem:[#allocation3 + $0xa0] sm:$0xff] %v5402
  %5840 = vst [vmem:[#allocation3 + $0xa8] sm:$0xff] %v5404
  %5841 = vst [vmem:[#allocation3 + $0xb0] sm:$0xff] %v5659
  %5842 = vst [vmem:[#allocation3 + $0xb8] sm:$0xff] %v5661
  %5843 = vst [vmem:[#allocation3 + $0xc0] sm:$0xff] %v5408
  %5844 = vst [vmem:[#allocation3 + $0xc8] sm:$0xff] %v5410
  %5845 = vst [vmem:[#allocation3 + $0xd0] sm:$0xff] %v5665
  %5846 = vst [vmem:[#allocation3 + $0xd8] sm:$0xff] %v5667
  %5847 = vst [vmem:[#allocation3 + $0xe0] sm:$0xff] %v5414
  %5848 = vst [vmem:[#allocation3 + $0xe8] sm:$0xff] %v5416
  %5849 = vst [vmem:[#allocation3 + $0xf0] sm:$0xff] %v5671
  %5850 = vst [vmem:[#allocation3 + $0xf8] sm:$0xff] %v5673
  %5851 = vst [vmem:[#allocation3 + $0x100] sm:$0xff] %v5420
  %5852 = vst [vmem:[#allocation3 + $0x108] sm:$0xff] %v5422
  %5853 = vst [vmem:[#allocation3 + $0x110] sm:$0xff] %v5677
  %5854 = vst [vmem:[#allocation3 + $0x118] sm:$0xff] %v5679
  %5855 = vst [vmem:[#allocation3 + $0x120] sm:$0xff] %v5426
  %5856 = vst [vmem:[#allocation3 + $0x128] sm:$0xff] %v5428
  %5857 = vst [vmem:[#allocation3 + $0x130] sm:$0xff] %v5683
  %5858 = vst [vmem:[#allocation3 + $0x138] sm:$0xff] %v5685
  %5859 = vst [vmem:[#allocation3 + $0x140] sm:$0xff] %v5432
  %5860 = vst [vmem:[#allocation3 + $0x148] sm:$0xff] %v5434
  %5861 = vst [vmem:[#allocation3 + $0x150] sm:$0xff] %v5689
  %5862 = vst [vmem:[#allocation3 + $0x158] sm:$0xff] %v5691
  %5863 = vst [vmem:[#allocation3 + $0x160] sm:$0xff] %v5438
  %5864 = vst [vmem:[#allocation3 + $0x168] sm:$0xff] %v5440
  %5865 = vst [vmem:[#allocation3 + $0x170] sm:$0xff] %v5695
  %5866 = vst [vmem:[#allocation3 + $0x178] sm:$0xff] %v5697
  %5867 = vst [vmem:[#allocation3 + $0x180] sm:$0xff] %v5444
  %5868 = vst [vmem:[#allocation3 + $0x188] sm:$0xff] %v5446
  %5869 = vst [vmem:[#allocation3 + $0x190] sm:$0xff] %v5701
  %5870 = vst [vmem:[#allocation3 + $0x198] sm:$0xff] %v5703
  %5871 = vst [vmem:[#allocation3 + $0x1a0] sm:$0xff] %v5450
  %5872 = vst [vmem:[#allocation3 + $0x1a8] sm:$0xff] %v5452
  %5873 = vst [vmem:[#allocation3 + $0x1b0] sm:$0xff] %v5707
  %5874 = vst [vmem:[#allocation3 + $0x1b8] sm:$0xff] %v5709
  %5875 = vst [vmem:[#allocation3 + $0x1c0] sm:$0xff] %v5456
  %5876 = vst [vmem:[#allocation3 + $0x1c8] sm:$0xff] %v5458
  %5877 = vst [vmem:[#allocation3 + $0x1d0] sm:$0xff] %v5713
  %5878 = vst [vmem:[#allocation3 + $0x1d8] sm:$0xff] %v5715
  %5879 = vst [vmem:[#allocation3 + $0x1e0] sm:$0xff] %v5462
  %5880 = vst [vmem:[#allocation3 + $0x1e8] sm:$0xff] %v5464
  %5881 = vst [vmem:[#allocation3 + $0x1f0] sm:$0xff] %v5719
  %5882 = vst [vmem:[#allocation3 + $0x1f8] sm:$0xff] %v5721
  %5883 = vst [vmem:[#allocation3 + $0x200] sm:$0xff] %v5468
  %5884 = vst [vmem:[#allocation3 + $0x208] sm:$0xff] %v5470
  %5885 = vst [vmem:[#allocation3 + $0x210] sm:$0xff] %v5725
  %5886 = vst [vmem:[#allocation3 + $0x218] sm:$0xff] %v5727
  %5887 = vst [vmem:[#allocation3 + $0x220] sm:$0xff] %v5474
  %5888 = vst [vmem:[#allocation3 + $0x228] sm:$0xff] %v5476
  %5889 = vst [vmem:[#allocation3 + $0x230] sm:$0xff] %v5731
  %5890 = vst [vmem:[#allocation3 + $0x238] sm:$0xff] %v5733
  %5891 = vst [vmem:[#allocation3 + $0x240] sm:$0xff] %v5480
  %5892 = vst [vmem:[#allocation3 + $0x248] sm:$0xff] %v5482
  %5893 = vst [vmem:[#allocation3 + $0x250] sm:$0xff] %v5737
  %5894 = vst [vmem:[#allocation3 + $0x258] sm:$0xff] %v5739
  %5895 = vst [vmem:[#allocation3 + $0x260] sm:$0xff] %v5486
  %5896 = vst [vmem:[#allocation3 + $0x268] sm:$0xff] %v5488
  %5897 = vst [vmem:[#allocation3 + $0x270] sm:$0xff] %v5743
  %5898 = vst [vmem:[#allocation3 + $0x278] sm:$0xff] %v5745
  %5899 = vst [vmem:[#allocation3 + $0x280] sm:$0xff] %v5492
  %5900 = vst [vmem:[#allocation3 + $0x288] sm:$0xff] %v5494
  %5901 = vst [vmem:[#allocation3 + $0x290] sm:$0xff] %v5749
  %5902 = vst [vmem:[#allocation3 + $0x298] sm:$0xff] %v5751
  %5903 = vst [vmem:[#allocation3 + $0x2a0] sm:$0xff] %v5498
  %5904 = vst [vmem:[#allocation3 + $0x2a8] sm:$0xff] %v5500
  %5905 = vst [vmem:[#allocation3 + $0x2b0] sm:$0xff] %v5755
  %5906 = vst [vmem:[#allocation3 + $0x2b8] sm:$0xff] %v5757
  %5907 = vst [vmem:[#allocation3 + $0x2c0] sm:$0xff] %v5504
  %5908 = vst [vmem:[#allocation3 + $0x2c8] sm:$0xff] %v5506
  %5909 = vst [vmem:[#allocation3 + $0x2d0] sm:$0xff] %v5761
  %5910 = vst [vmem:[#allocation3 + $0x2d8] sm:$0xff] %v5763
  %5911 = vst [vmem:[#allocation3 + $0x2e0] sm:$0xff] %v5510
  %5912 = vst [vmem:[#allocation3 + $0x2e8] sm:$0xff] %v5512
  %5913 = vst [vmem:[#allocation3 + $0x2f0] sm:$0xff] %v5767
  %5914 = vst [vmem:[#allocation3 + $0x2f8] sm:$0xff] %v5769
  %5915 = vst [vmem:[#allocation3 + $0x300] sm:$0xff] %v5516
  %5916 = vst [vmem:[#allocation3 + $0x308] sm:$0xff] %v5518
  %5917 = vst [vmem:[#allocation3 + $0x310] sm:$0xff] %v5773
  %5918 = vst [vmem:[#allocation3 + $0x318] sm:$0xff] %v5775
  %5919 = vst [vmem:[#allocation3 + $0x320] sm:$0xff] %v5522
  %5920 = vst [vmem:[#allocation3 + $0x328] sm:$0xff] %v5524
  %5921 = vst [vmem:[#allocation3 + $0x330] sm:$0xff] %v5779
  %5922 = vst [vmem:[#allocation3 + $0x338] sm:$0xff] %v5781
  %5923 = vst [vmem:[#allocation3 + $0x340] sm:$0xff] %v5528
  %5924 = vst [vmem:[#allocation3 + $0x348] sm:$0xff] %v5530
  %5925 = vst [vmem:[#allocation3 + $0x350] sm:$0xff] %v5785
  %5926 = vst [vmem:[#allocation3 + $0x358] sm:$0xff] %v5787
  %5927 = vst [vmem:[#allocation3 + $0x360] sm:$0xff] %v5534
  %5928 = vst [vmem:[#allocation3 + $0x368] sm:$0xff] %v5536
  %5929 = vst [vmem:[#allocation3 + $0x370] sm:$0xff] %v5791
  %5930 = vst [vmem:[#allocation3 + $0x378] sm:$0xff] %v5793
  %5931 = vst [vmem:[#allocation3 + $0x380] sm:$0xff] %v5540
  %5932 = vst [vmem:[#allocation3 + $0x388] sm:$0xff] %v5542
  %5933 = vst [vmem:[#allocation3 + $0x390] sm:$0xff] %v5797
  %5934 = vst [vmem:[#allocation3 + $0x398] sm:$0xff] %v5799
  %5935 = vst [vmem:[#allocation3 + $0x3a0] sm:$0xff] %v5546
  %5936 = vst [vmem:[#allocation3 + $0x3a8] sm:$0xff] %v5548
  %5937 = vst [vmem:[#allocation3 + $0x3b0] sm:$0xff] %v5803
  %5938 = vst [vmem:[#allocation3 + $0x3b8] sm:$0xff] %v5805
  %5939 = vst [vmem:[#allocation3 + $0x3c0] sm:$0xff] %v5552
  %5940 = vst [vmem:[#allocation3 + $0x3c8] sm:$0xff] %v5554
  %5941 = vst [vmem:[#allocation3 + $0x3d0] sm:$0xff] %v5809
  %5942 = vst [vmem:[#allocation3 + $0x3d8] sm:$0xff] %v5811
  %5943 = vst [vmem:[#allocation3 + $0x3e0] sm:$0xff] %v5558
  %5944 = vst [vmem:[#allocation3 + $0x3e8] sm:$0xff] %v5560
  %5945 = vst [vmem:[#allocation3 + $0x3f0] sm:$0xff] %v5815
  %5946 = vst [vmem:[#allocation3 + $0x3f8] sm:$0xff] %v5817
  %v5947 = vld [vmem:[%s7] sm:$0xff]
  %v5948 = vld [vmem:[%s7 + $0x8] sm:$0xff]
  %v5949 = vld [vmem:[%s7 + $0x10] sm:$0xff]
  %v5950 = vld [vmem:[%s7 + $0x18] sm:$0xff]
  %v5951 = vld [vmem:[%s7 + $0x20] sm:$0xff]
  %v5952 = vld [vmem:[%s7 + $0x28] sm:$0xff]
  %v5953 = vld [vmem:[%s7 + $0x30] sm:$0xff]
  %v5954 = vld [vmem:[%s7 + $0x38] sm:$0xff]
  %v5955 = vld [vmem:[%s7 + $0x40] sm:$0xff]
  %v5956 = vld [vmem:[%s7 + $0x48] sm:$0xff]
  %v5957 = vld [vmem:[%s7 + $0x50] sm:$0xff]
  %v5958 = vld [vmem:[%s7 + $0x58] sm:$0xff]
  %v5959 = vld [vmem:[%s7 + $0x60] sm:$0xff]
  %v5960 = vld [vmem:[%s7 + $0x68] sm:$0xff]
  %v5961 = vld [vmem:[%s7 + $0x70] sm:$0xff]
  %v5962 = vld [vmem:[%s7 + $0x78] sm:$0xff]
  %v5963 = vld [vmem:[#allocation3] sm:$0xff]
  %v5964 = vld [vmem:[#allocation3 + $0x20] sm:$0xff]
  %v5965 = vld [vmem:[#allocation3 + $0x40] sm:$0xff]
  %v5966 = vld [vmem:[#allocation3 + $0x60] sm:$0xff]
  %v5967 = vld [vmem:[#allocation3 + $0x100] sm:$0xff]
  %v5968 = vld [vmem:[#allocation3 + $0x120] sm:$0xff]
  %v5969 = vld [vmem:[#allocation3 + $0x140] sm:$0xff]
  %v5970 = vld [vmem:[#allocation3 + $0x160] sm:$0xff]
  %v5971 = vld [vmem:[#allocation3 + $0x180] sm:$0xff]
  %v5972 = vld [vmem:[#allocation3 + $0x1a0] sm:$0xff]
  %v5973 = vld [vmem:[#allocation3 + $0x1c0] sm:$0xff]
  %v5974 = vld [vmem:[#allocation3 + $0x1e0] sm:$0xff]
  %v5975 = vld [vmem:[#allocation3 + $0x218] sm:$0xff]
  %v5976 = vld [vmem:[#allocation3 + $0x238] sm:$0xff]
  %v5977 = vld [vmem:[#allocation3 + $0x258] sm:$0xff]
  %v5978 = vld [vmem:[#allocation3 + $0x278] sm:$0xff]
  %v5979 = vld [vmem:[#allocation3 + $0x318] sm:$0xff]
  %v5980 = vld [vmem:[#allocation3 + $0x338] sm:$0xff]
  %v5981 = vld [vmem:[#allocation3 + $0x358] sm:$0xff]
  %v5982 = vld [vmem:[#allocation3 + $0x378] sm:$0xff]
  %v5983 = vld [vmem:[#allocation3 + $0x398] sm:$0xff]
  %v5984 = vld [vmem:[#allocation3 + $0x3b8] sm:$0xff]
  %v5985 = vld [vmem:[#allocation3 + $0x3d8] sm:$0xff]
  %v5986 = vld [vmem:[#allocation3 + $0x3f8] sm:$0xff]
  %v5987 = vsel %vm1347, %v5963, %v5975
  %v5988 = vsel %vm1347, %v5964, %v5976
  %v5989 = vsel %vm1347, %v5965, %v5977
  %v5990 = vsel %vm1347, %v5966, %v5978
  %v5991 = vsel %vm1347, %v5967, %v5979
  %v5992 = vsel %vm1347, %v5968, %v5980
  %v5993 = vsel %vm1347, %v5969, %v5981
  %v5994 = vsel %vm1347, %v5970, %v5982
  %v5995 = vsel %vm1347, %v5971, %v5983
  %v5996 = vsel %vm1347, %v5972, %v5984
  %v5997 = vsel %vm1347, %v5973, %v5985
  %v5998 = vsel %vm1347, %v5974, %v5986
  %v5999 = vxor.u32 %v5987, 2147483648
  %v6000 = vxor.u32 %v5988, 2147483648
  %v6001 = vxor.u32 %v5989, 2147483648
  %v6002 = vxor.u32 %v5990, 2147483648
  %v6003 = vmul.f32 %v5999, 1.442695
  %v6004 = vpow.pop %v6003
  %v6005 = vmul.f32 %v6000, 1.442695
  %v6006 = vpow.pop %v6005
  %v6007 = vmul.f32 %v6001, 1.442695
  %v6008 = vpow.pop %v6007
  %v6009 = vmul.f32 %v6002, 1.442695
  %v6010 = vpow.pop %v6009
  %v6011 = vadd.f32 %v6004, 1.0
  %v6012 = vadd.f32 %v6006, 1.0
  %v6013 = vadd.f32 %v6008, 1.0
  %v6014 = vadd.f32 %v6010, 1.0
  %v6015 = vrcp.pop %v6011
  %v6016 = vmul.f32 1.0, %v6015
  %v6017 = vrcp.pop %v6012
  %v6018 = vmul.f32 1.0, %v6017
  %v6019 = vrcp.pop %v6013
  %v6020 = vmul.f32 1.0, %v6019
  %v6021 = vrcp.pop %v6014
  %v6022 = vmul.f32 1.0, %v6021
  %v6023 = vtanh.pop %v5991
  %v6024 = vtanh.pop %v5992
  %v6025 = vtanh.pop %v5993
  %v6026 = vtanh.pop %v5994
  %v6027 = vxor.u32 %v5995, 2147483648
  %v6028 = vxor.u32 %v5996, 2147483648
  %v6029 = vxor.u32 %v5997, 2147483648
  %v6030 = vxor.u32 %v5998, 2147483648
  %v6031 = vmul.f32 %v6027, 1.442695
  %v6032 = vpow.pop %v6031
  %v6033 = vmul.f32 %v6028, 1.442695
  %v6034 = vpow.pop %v6033
  %v6035 = vmul.f32 %v6029, 1.442695
  %v6036 = vpow.pop %v6035
  %v6037 = vmul.f32 %v6030, 1.442695
  %v6038 = vpow.pop %v6037
  %v6039 = vadd.f32 %v6032, 1.0
  %v6040 = vadd.f32 %v6034, 1.0
  %v6041 = vadd.f32 %v6036, 1.0
  %v6042 = vadd.f32 %v6038, 1.0
  %v6043 = vrcp.pop %v6039
  %v6044 = vmul.f32 1.0, %v6043
  %v6045 = vrcp.pop %v6040
  %v6046 = vmul.f32 1.0, %v6045
  %v6047 = vrcp.pop %v6041
  %v6048 = vmul.f32 1.0, %v6047
  %v6049 = vrcp.pop %v6042
  %v6050 = vmul.f32 1.0, %v6049
  %v6051 = vmul.f32 %v6016, %v6023
  %v6052 = vmul.f32 %v6018, %v6024
  %v6053 = vmul.f32 %v6020, %v6025
  %v6054 = vmul.f32 %v6022, %v6026
  %v6055 = vtanh.pop %v6051
  %v6056 = vtanh.pop %v6052
  %v6057 = vtanh.pop %v6053
  %v6058 = vtanh.pop %v6054
  %v6059 = vmul.f32 %v6044, %v6055
  %v6060 = vmul.f32 %v6046, %v6056
  %v6061 = vmul.f32 %v6048, %v6057
  %v6062 = vmul.f32 %v6050, %v6058
  %6063 = vst.msk [vmem:[#allocation5] sm:$0xff] %vm192, %v6059
  %6064 = vst.msk [vmem:[#allocation5 + $0x20] sm:$0xff] %vm192, %v6060
  %6065 = vst.msk [vmem:[#allocation5 + $0x40] sm:$0xff] %vm192, %v6061
  %6066 = vst.msk [vmem:[#allocation5 + $0x60] sm:$0xff] %vm192, %v6062
  %6067 = vst.msk [vmem:[#allocation5 + $0x98] sm:$0xff] %vm370, %v6059
  %6068 = vst.msk [vmem:[#allocation5 + $0xb8] sm:$0xff] %vm370, %v6060
  %6069 = vst.msk [vmem:[#allocation5 + $0xd8] sm:$0xff] %vm370, %v6061
  %6070 = vst.msk [vmem:[#allocation5 + $0xf8] sm:$0xff] %vm370, %v6062
  %v6071 = vld [vmem:[#allocation3] sm:$0xff]
  %v6072 = vld [vmem:[#allocation3 + $0x20] sm:$0xff]
  %v6073 = vld [vmem:[#allocation3 + $0x40] sm:$0xff]
  %v6074 = vld [vmem:[#allocation3 + $0x60] sm:$0xff]
  %v6075 = vld [vmem:[#allocation3 + $0x80] sm:$0xff]
  %v6076 = vld [vmem:[#allocation3 + $0xa0] sm:$0xff]
  %v6077 = vld [vmem:[#allocation3 + $0xc0] sm:$0xff]
  %v6078 = vld [vmem:[#allocation3 + $0xe0] sm:$0xff]
  %v6079 = vld [vmem:[#allocation3 + $0x100] sm:$0xff]
  %v6080 = vld [vmem:[#allocation3 + $0x120] sm:$0xff]
  %v6081 = vld [vmem:[#allocation3 + $0x140] sm:$0xff]
  %v6082 = vld [vmem:[#allocation3 + $0x160] sm:$0xff]
  %v6083 = vld [vmem:[#allocation3 + $0x180] sm:$0xff]
  %v6084 = vld [vmem:[#allocation3 + $0x1a0] sm:$0xff]
  %v6085 = vld [vmem:[#allocation3 + $0x1c0] sm:$0xff]
  %v6086 = vld [vmem:[#allocation3 + $0x1e0] sm:$0xff]
  %v6087 = vld [vmem:[#allocation3 + $0x218] sm:$0xff]
  %v6088 = vld [vmem:[#allocation3 + $0x238] sm:$0xff]
  %v6089 = vld [vmem:[#allocation3 + $0x258] sm:$0xff]
  %v6090 = vld [vmem:[#allocation3 + $0x278] sm:$0xff]
  %v6091 = vld [vmem:[#allocation3 + $0x298] sm:$0xff]
  %v6092 = vld [vmem:[#allocation3 + $0x2b8] sm:$0xff]
  %v6093 = vld [vmem:[#allocation3 + $0x2d8] sm:$0xff]
  %v6094 = vld [vmem:[#allocation3 + $0x2f8] sm:$0xff]
  %v6095 = vld [vmem:[#allocation3 + $0x318] sm:$0xff]
  %v6096 = vld [vmem:[#allocation3 + $0x338] sm:$0xff]
  %v6097 = vld [vmem:[#allocation3 + $0x358] sm:$0xff]
  %v6098 = vld [vmem:[#allocation3 + $0x378] sm:$0xff]
  %v6099 = vld [vmem:[#allocation3 + $0x398] sm:$0xff]
  %v6100 = vld [vmem:[#allocation3 + $0x3b8] sm:$0xff]
  %v6101 = vld [vmem:[#allocation3 + $0x3d8] sm:$0xff]
  %v6102 = vld [vmem:[#allocation3 + $0x3f8] sm:$0xff]
  %v6103 = vsel %vm1347, %v6087, %v6071
  %v6104 = vsel %vm1347, %v6088, %v6072
  %v6105 = vsel %vm1347, %v6089, %v6073
  %v6106 = vsel %vm1347, %v6090, %v6074
  %v6107 = vsel %vm1347, %v6091, %v6075
  %v6108 = vsel %vm1347, %v6092, %v6076
  %v6109 = vsel %vm1347, %v6093, %v6077
  %v6110 = vsel %vm1347, %v6094, %v6078
  %v6111 = vsel %vm1347, %v6095, %v6079
  %v6112 = vsel %vm1347, %v6096, %v6080
  %v6113 = vsel %vm1347, %v6097, %v6081
  %v6114 = vsel %vm1347, %v6098, %v6082
  %v6115 = vsel %vm1347, %v6099, %v6083
  %v6116 = vsel %vm1347, %v6100, %v6084
  %v6117 = vsel %vm1347, %v6101, %v6085
  %v6118 = vsel %vm1347, %v6102, %v6086
  %6119 = vrot.lane.b32.xlu0 %v6103, 64
  %v6120 = vpop.permute.xlu0 %6119
  %6121 = vrot.lane.b32.xlu0 %v6104, 64
  %v6122 = vpop.permute.xlu0 %6121
  %6123 = vrot.lane.b32.xlu0 %v6105, 64
  %v6124 = vpop.permute.xlu0 %6123
  %6125 = vrot.lane.b32.xlu0 %v6106, 64
  %v6126 = vpop.permute.xlu0 %6125
  %6127 = vrot.lane.b32.xlu0 %v6107, 64
  %v6128 = vpop.permute.xlu0 %6127
  %6129 = vrot.lane.b32.xlu0 %v6108, 64
  %v6130 = vpop.permute.xlu0 %6129
  %6131 = vrot.lane.b32.xlu0 %v6109, 64
  %v6132 = vpop.permute.xlu0 %6131
  %6133 = vrot.lane.b32.xlu0 %v6110, 64
  %v6134 = vpop.permute.xlu0 %6133
  %6135 = vrot.lane.b32.xlu0 %v6111, 64
  %v6136 = vpop.permute.xlu0 %6135
  %6137 = vrot.lane.b32.xlu0 %v6112, 64
  %v6138 = vpop.permute.xlu0 %6137
  %6139 = vrot.lane.b32.xlu0 %v6113, 64
  %v6140 = vpop.permute.xlu0 %6139
  %6141 = vrot.lane.b32.xlu0 %v6114, 64
  %v6142 = vpop.permute.xlu0 %6141
  %6143 = vrot.lane.b32.xlu0 %v6115, 64
  %v6144 = vpop.permute.xlu0 %6143
  %6145 = vrot.lane.b32.xlu0 %v6116, 64
  %v6146 = vpop.permute.xlu0 %6145
  %6147 = vrot.lane.b32.xlu0 %v6117, 64
  %v6148 = vpop.permute.xlu0 %6147
  %6149 = vrot.lane.b32.xlu0 %v6118, 64
  %v6150 = vpop.permute.xlu0 %6149
  %v6151 = vsel %vm1347, %v6059, 0.0
  %v6152 = vsel %vm1347, %v6060, 0.0
  %v6153 = vsel %vm1347, %v6061, 0.0
  %v6154 = vsel %vm1347, %v6062, 0.0
  %v6155 = vsel %vm1347, 0.0, %v6059
  %v6156 = vsel %vm1347, 0.0, %v6060
  %v6157 = vsel %vm1347, 0.0, %v6061
  %v6158 = vsel %vm1347, 0.0, %v6062
  %v6160 = vsel %vm192, %v5947, 0
  %v6163 = vsel %vm192, %v5948, 0
  %v6166 = vsel %vm192, %v5949, 0
  %v6169 = vsel %vm192, %v5950, 0
  %v6172 = vsel %vm192, %v5951, 0
  %v6175 = vsel %vm192, %v5952, 0
  %v6178 = vsel %vm192, %v5953, 0
  %v6181 = vsel %vm192, %v5954, 0
  %v6184 = vsel %vm192, %v5955, 0
  %v6187 = vsel %vm192, %v5956, 0
  %v6190 = vsel %vm192, %v5957, 0
  %v6193 = vsel %vm192, %v5958, 0
  %v6196 = vsel %vm192, %v5959, 0
  %v6199 = vsel %vm192, %v5960, 0
  %v6202 = vsel %vm192, %v5961, 0
  %v6205 = vsel %vm192, %v5962, 0
  %6207 = vmatprep.subr.mxu0 0.0
  %6208 = vmatpush1.msra.mxu0 %v6151
  %6209 = vmatprep.subr.mxu0 0.0
  %6210 = vmatpush1.msra.mxu0 %v6152
  %6211 = vmatprep.subr.mxu0 0.0
  %6212 = vmatpush1.msra.mxu0 %v6153
  %6213 = vmatprep.subr.mxu0 0.0
  %6214 = vmatpush1.msra.mxu0 %v6154
  %6215 = vmatprep.subr.mxu0 0.0
  %6216 = vmatpush1.msra.mxu0 %v6155
  %6217 = vmatprep.subr.mxu0 0.0
  %6218 = vmatpush1.msra.mxu0 %v6156
  %6219 = vmatprep.subr.mxu0 0.0
  %6220 = vmatpush1.msra.mxu0 %v6157
  %6221 = vmatprep.subr.mxu0 0.0
  %6222 = vmatpush1.msra.mxu0 %v6158
  %6223 = vmatprep.subr.mxu0 0.0
  %6224 = vmatpush1.msra.mxu0 0.0
  %6225 = vmatprep.subr.mxu0 0.0
  %6226 = vmatpush1.msra.mxu0 0.0
  %6227 = vmatprep.subr.mxu0 0.0
  %6228 = vmatpush1.msra.mxu0 0.0
  %6229 = vmatprep.subr.mxu0 0.0
  %6230 = vmatpush1.msra.mxu0 0.0
  %6231 = vmatprep.subr.mxu0 0.0
  %6232 = vmatpush1.msra.mxu0 0.0
  %6233 = vmatprep.subr.mxu0 0.0
  %6234 = vmatpush1.msra.mxu0 0.0
  %6235 = vmatprep.subr.mxu0 0.0
  %6236 = vmatpush1.msra.mxu0 0.0
  %6237 = vmatprep.subr.mxu0 0.0
  %6238 = vmatpush1.msra.mxu0 0.0
  %6239 = vmatprep.subr.mxu0 0.0
  %6240 = vmatpush1.msra.mxu0 0.0
  %6241 = vmatprep.subr.mxu0 0.0
  %6242 = vmatpush1.msra.mxu0 0.0
  %6243 = vmatprep.subr.mxu0 0.0
  %6244 = vmatpush1.msra.mxu0 0.0
  %6245 = vmatprep.subr.mxu0 0.0
  %6246 = vmatpush1.msra.mxu0 0.0
  %6247 = vmatprep.subr.mxu0 0.0
  %6248 = vmatpush1.msra.mxu0 0.0
  %6249 = vmatprep.subr.mxu0 0.0
  %6250 = vmatpush1.msra.mxu0 0.0
  %6251 = vmatprep.subr.mxu0 0.0
  %6252 = vmatpush1.msra.mxu0 0.0
  %6253 = vmatprep.subr.mxu0 0.0
  %6254 = vmatpush1.msra.mxu0 0.0
  %6255 = vmatprep.subr.mxu0 0.0
  %6256 = vmatpush1.msra.mxu0 0.0
  %6257 = vmatprep.subr.mxu0 0.0
  %6258 = vmatpush1.msra.mxu0 0.0
  %6259 = vmatprep.subr.mxu0 0.0
  %6260 = vmatpush1.msra.mxu0 0.0
  %6261 = vmatprep.subr.mxu0 0.0
  %6262 = vmatpush1.msra.mxu0 0.0
  %6263 = vmatprep.subr.mxu0 0.0
  %6264 = vmatpush1.msra.mxu0 0.0
  %6265 = vmatprep.subr.mxu0 0.0
  %6266 = vmatpush1.msra.mxu0 0.0
  %6267 = vmatprep.subr.mxu0 0.0
  %6268 = vmatpush1.msra.mxu0 0.0
  %6269 = vmatprep.subr.mxu0 0.0
  %6270 = vmatpush1.msra.mxu0 0.0
  %6271 = vmatprep.mubr.f32.mxu0 0.0
  %6272 = vmatmul.mubr.f32.gmra.mrb[0].mxu0 %v6160
  %v6273 = vpop.f32.mrb[0].mxu0
  %v6274 = vadd.f32 0.0, %v6273
  %v6275 = vpop.f32.mrb[0].mxu0
  %6276 = vmatprep.mubr.f32.mxu0 0.0
  %6277 = vmatmul.mubr.f32.gmra.mrb[0].mxu0 %v6163
  %v6278 = vpop.f32.mrb[0].mxu0
  %v6279 = vadd.f32 0.0, %v6278
  %v6280 = vpop.f32.mrb[0].mxu0
  %6281 = vmatprep.mubr.f32.mxu0 0.0
  %6282 = vmatmul.mubr.f32.gmra.mrb[0].mxu0 %v6166
  %v6283 = vpop.f32.mrb[0].mxu0
  %v6284 = vadd.f32 0.0, %v6283
  %v6285 = vpop.f32.mrb[0].mxu0
  %6286 = vmatprep.mubr.f32.mxu0 0.0
  %6287 = vmatmul.mubr.f32.gmra.mrb[0].mxu0 %v6169
  %v6288 = vpop.f32.mrb[0].mxu0
  %v6289 = vadd.f32 0.0, %v6288
  %v6290 = vpop.f32.mrb[0].mxu0
  %6291 = vmatprep.mubr.f32.mxu0 0.0
  %6292 = vmatmul.mubr.f32.gmra.mrb[0].mxu0 %v6172
  %v6293 = vpop.f32.mrb[0].mxu0
  %v6294 = vadd.f32 0.0, %v6293
  %v6295 = vpop.f32.mrb[0].mxu0
  %6296 = vmatprep.mubr.f32.mxu0 0.0
  %6297 = vmatmul.mubr.f32.gmra.mrb[0].mxu0 %v6175
  %v6298 = vpop.f32.mrb[0].mxu0
  %v6299 = vadd.f32 0.0, %v6298
  %v6300 = vpop.f32.mrb[0].mxu0
  %6301 = vmatprep.mubr.f32.mxu0 0.0
  %6302 = vmatmul.mubr.f32.gmra.mrb[0].mxu0 %v6178
  %v6303 = vpop.f32.mrb[0].mxu0
  %v6304 = vadd.f32 0.0, %v6303
  %v6305 = vpop.f32.mrb[0].mxu0
  %6306 = vmatprep.mubr.f32.mxu0 0.0
  %6307 = vmatmul.mubr.f32.gmra.mrb[0].mxu0 %v6181
  %v6308 = vpop.f32.mrb[0].mxu0
  %v6309 = vadd.f32 0.0, %v6308
  %v6310 = vpop.f32.mrb[0].mxu0
  %6311 = vmatprep.mubr.f32.mxu0 0.0
  %6312 = vmatmul.mubr.f32.gmra.mrb[0].mxu0 %v6184
  %v6313 = vpop.f32.mrb[0].mxu0
  %v6314 = vadd.f32 0.0, %v6313
  %v6315 = vpop.f32.mrb[0].mxu0
  %6316 = vmatprep.mubr.f32.mxu0 0.0
  %6317 = vmatmul.mubr.f32.gmra.mrb[0].mxu0 %v6187
  %v6318 = vpop.f32.mrb[0].mxu0
  %v6319 = vadd.f32 0.0, %v6318
  %v6320 = vpop.f32.mrb[0].mxu0
  %6321 = vmatprep.mubr.f32.mxu0 0.0
  %6322 = vmatmul.mubr.f32.gmra.mrb[0].mxu0 %v6190
  %v6323 = vpop.f32.mrb[0].mxu0
  %v6324 = vadd.f32 0.0, %v6323
  %v6325 = vpop.f32.mrb[0].mxu0
  %6326 = vmatprep.mubr.f32.mxu0 0.0
  %6327 = vmatmul.mubr.f32.gmra.mrb[0].mxu0 %v6193
  %v6328 = vpop.f32.mrb[0].mxu0
  %v6329 = vadd.f32 0.0, %v6328
  %v6330 = vpop.f32.mrb[0].mxu0
  %6331 = vmatprep.mubr.f32.mxu0 0.0
  %6332 = vmatmul.mubr.f32.gmra.mrb[0].mxu0 %v6196
  %v6333 = vpop.f32.mrb[0].mxu0
  %v6334 = vadd.f32 0.0, %v6333
  %v6335 = vpop.f32.mrb[0].mxu0
  %6336 = vmatprep.mubr.f32.mxu0 0.0
  %6337 = vmatmul.mubr.f32.gmra.mrb[0].mxu0 %v6199
  %v6338 = vpop.f32.mrb[0].mxu0
  %v6339 = vadd.f32 0.0, %v6338
  %v6340 = vpop.f32.mrb[0].mxu0
  %6341 = vmatprep.mubr.f32.mxu0 0.0
  %6342 = vmatmul.mubr.f32.gmra.mrb[0].mxu0 %v6202
  %v6343 = vpop.f32.mrb[0].mxu0
  %v6344 = vadd.f32 0.0, %v6343
  %v6345 = vpop.f32.mrb[0].mxu0
  %6346 = vmatprep.mubr.f32.mxu0 0.0
  %6347 = vmatmul.mubr.f32.gmra.mrb[0].mxu0 %v6205
  %v6348 = vpop.f32.mrb[0].mxu0
  %v6349 = vadd.f32 0.0, %v6348
  %v6350 = vpop.f32.mrb[0].mxu0
  %6351 = vdwg.mxu0
  %v6352 = vadd.f32 %v6120, %v6274
  %v6353 = vadd.f32 %v6122, %v6279
  %v6354 = vadd.f32 %v6124, %v6284
  %v6355 = vadd.f32 %v6126, %v6289
  %v6356 = vadd.f32 %v6128, %v6294
  %v6357 = vadd.f32 %v6130, %v6299
  %v6358 = vadd.f32 %v6132, %v6304
  %v6359 = vadd.f32 %v6134, %v6309
  %v6360 = vadd.f32 %v6136, %v6314
  %v6361 = vadd.f32 %v6138, %v6319
  %v6362 = vadd.f32 %v6140, %v6324
  %v6363 = vadd.f32 %v6142, %v6329
  %v6364 = vadd.f32 %v6144, %v6334
  %v6365 = vadd.f32 %v6146, %v6339
  %v6366 = vadd.f32 %v6148, %v6344
  %v6367 = vadd.f32 %v6150, %v6349
  %v6368 = vxor.u32 %v6352, 2147483648
  %v6369 = vxor.u32 %v6353, 2147483648
  %v6370 = vxor.u32 %v6354, 2147483648
  %v6371 = vxor.u32 %v6355, 2147483648
  %v6372 = vmul.f32 %v6368, 1.442695
  %v6373 = vpow.pop %v6372
  %v6374 = vmul.f32 %v6369, 1.442695
  %v6375 = vpow.pop %v6374
  %v6376 = vmul.f32 %v6370, 1.442695
  %v6377 = vpow.pop %v6376
  %v6378 = vmul.f32 %v6371, 1.442695
  %v6379 = vpow.pop %v6378
  %v6380 = vadd.f32 %v6373, 1.0
  %v6381 = vadd.f32 %v6375, 1.0
  %v6382 = vadd.f32 %v6377, 1.0
  %v6383 = vadd.f32 %v6379, 1.0
  %v6384 = vrcp.pop %v6380
  %v6385 = vmul.f32 1.0, %v6384
  %v6386 = vrcp.pop %v6381
  %v6387 = vmul.f32 1.0, %v6386
  %v6388 = vrcp.pop %v6382
  %v6389 = vmul.f32 1.0, %v6388
  %v6390 = vrcp.pop %v6383
  %v6391 = vmul.f32 1.0, %v6390
  %v6392 = vtanh.pop %v6360
  %v6393 = vtanh.pop %v6361
  %v6394 = vtanh.pop %v6362
  %v6395 = vtanh.pop %v6363
  %v6396 = vxor.u32 %v6364, 2147483648
  %v6397 = vxor.u32 %v6365, 2147483648
  %v6398 = vxor.u32 %v6366, 2147483648
  %v6399 = vxor.u32 %v6367, 2147483648
  %v6400 = vmul.f32 %v6396, 1.442695
  %v6401 = vpow.pop %v6400
  %v6402 = vmul.f32 %v6397, 1.442695
  %v6403 = vpow.pop %v6402
  %v6404 = vmul.f32 %v6398, 1.442695
  %v6405 = vpow.pop %v6404
  %v6406 = vmul.f32 %v6399, 1.442695
  %v6407 = vpow.pop %v6406
  %v6408 = vadd.f32 %v6401, 1.0
  %v6409 = vadd.f32 %v6403, 1.0
  %v6410 = vadd.f32 %v6405, 1.0
  %v6411 = vadd.f32 %v6407, 1.0
  %v6412 = vrcp.pop %v6408
  %v6413 = vmul.f32 1.0, %v6412
  %v6414 = vrcp.pop %v6409
  %v6415 = vmul.f32 1.0, %v6414
  %v6416 = vrcp.pop %v6410
  %v6417 = vmul.f32 1.0, %v6416
  %v6418 = vrcp.pop %v6411
  %v6419 = vmul.f32 1.0, %v6418
  %v6420 = vxor.u32 %v6356, 2147483648
  %v6421 = vxor.u32 %v6357, 2147483648
  %v6422 = vxor.u32 %v6358, 2147483648
  %v6423 = vxor.u32 %v6359, 2147483648
  %v6424 = vmul.f32 %v6420, 1.442695
  %v6425 = vpow.pop %v6424
  %v6426 = vmul.f32 %v6421, 1.442695
  %v6427 = vpow.pop %v6426
  %v6428 = vmul.f32 %v6422, 1.442695
  %v6429 = vpow.pop %v6428
  %v6430 = vmul.f32 %v6423, 1.442695
  %v6431 = vpow.pop %v6430
  %v6432 = vadd.f32 %v6425, 1.0
  %v6433 = vadd.f32 %v6427, 1.0
  %v6434 = vadd.f32 %v6429, 1.0
  %v6435 = vadd.f32 %v6431, 1.0
  %v6436 = vrcp.pop %v6432
  %v6437 = vmul.f32 1.0, %v6436
  %v6438 = vrcp.pop %v6433
  %v6439 = vmul.f32 1.0, %v6438
  %v6440 = vrcp.pop %v6434
  %v6441 = vmul.f32 1.0, %v6440
  %v6442 = vrcp.pop %v6435
  %v6443 = vmul.f32 1.0, %v6442
  %v6444 = vmul.f32 %v6437, %v6051
  %v6445 = vmul.f32 %v6439, %v6052
  %v6446 = vmul.f32 %v6441, %v6053
  %v6447 = vmul.f32 %v6443, %v6054
  %v6448 = vmul.f32 %v6385, %v6392
  %v6449 = vmul.f32 %v6387, %v6393
  %v6450 = vmul.f32 %v6389, %v6394
  %v6451 = vmul.f32 %v6391, %v6395
  %v6452 = vadd.f32 %v6444, %v6448
  %v6453 = vadd.f32 %v6445, %v6449
  %v6454 = vadd.f32 %v6446, %v6450
  %v6455 = vadd.f32 %v6447, %v6451
  %v6456 = vtanh.pop %v6452
  %v6457 = vtanh.pop %v6453
  %v6458 = vtanh.pop %v6454
  %v6459 = vtanh.pop %v6455
  %v6460 = vmul.f32 %v6413, %v6456
  %v6461 = vmul.f32 %v6415, %v6457
  %v6462 = vmul.f32 %v6417, %v6458
  %v6463 = vmul.f32 %v6419, %v6459
  %6468 = vrot.lane.b32.xlu0 %v6460, 64
  %v6469 = vpop.permute.xlu0 %6468
  %6470 = vrot.lane.b32.xlu0 %v6461, 64
  %v6471 = vpop.permute.xlu0 %6470
  %6472 = vrot.lane.b32.xlu0 %v6462, 64
  %v6473 = vpop.permute.xlu0 %6472
  %6474 = vrot.lane.b32.xlu0 %v6463, 64
  %v6475 = vpop.permute.xlu0 %6474
  %6480 = vst.msk [vmem:[#allocation5] sm:$0xff] %vm370, %v6469
  %6481 = vst.msk [vmem:[#allocation5 + $0x20] sm:$0xff] %vm370, %v6471
  %6482 = vst.msk [vmem:[#allocation5 + $0x40] sm:$0xff] %vm370, %v6473
  %6483 = vst.msk [vmem:[#allocation5 + $0x60] sm:$0xff] %vm370, %v6475
  %6484 = vst.msk [vmem:[#allocation5 + $0x98] sm:$0xff] %vm192, %v6469
  %6485 = vst.msk [vmem:[#allocation5 + $0xb8] sm:$0xff] %vm192, %v6471
  %6486 = vst.msk [vmem:[#allocation5 + $0xd8] sm:$0xff] %vm192, %v6473
  %6487 = vst.msk [vmem:[#allocation5 + $0xf8] sm:$0xff] %vm192, %v6475
  %v6488 = vld [vmem:[#allocation3 + $0x8] sm:$0xff]
  %v6489 = vld [vmem:[#allocation3 + $0x28] sm:$0xff]
  %v6490 = vld [vmem:[#allocation3 + $0x48] sm:$0xff]
  %v6491 = vld [vmem:[#allocation3 + $0x68] sm:$0xff]
  %v6492 = vld [vmem:[#allocation3 + $0x88] sm:$0xff]
  %v6493 = vld [vmem:[#allocation3 + $0xa8] sm:$0xff]
  %v6494 = vld [vmem:[#allocation3 + $0xc8] sm:$0xff]
  %v6495 = vld [vmem:[#allocation3 + $0xe8] sm:$0xff]
  %v6496 = vld [vmem:[#allocation3 + $0x108] sm:$0xff]
  %v6497 = vld [vmem:[#allocation3 + $0x128] sm:$0xff]
  %v6498 = vld [vmem:[#allocation3 + $0x148] sm:$0xff]
  %v6499 = vld [vmem:[#allocation3 + $0x168] sm:$0xff]
  %v6500 = vld [vmem:[#allocation3 + $0x188] sm:$0xff]
  %v6501 = vld [vmem:[#allocation3 + $0x1a8] sm:$0xff]
  %v6502 = vld [vmem:[#allocation3 + $0x1c8] sm:$0xff]
  %v6503 = vld [vmem:[#allocation3 + $0x1e8] sm:$0xff]
  %v6504 = vld [vmem:[#allocation3 + $0x210] sm:$0xff]
  %v6505 = vld [vmem:[#allocation3 + $0x230] sm:$0xff]
  %v6506 = vld [vmem:[#allocation3 + $0x250] sm:$0xff]
  %v6507 = vld [vmem:[#allocation3 + $0x270] sm:$0xff]
  %v6508 = vld [vmem:[#allocation3 + $0x290] sm:$0xff]
  %v6509 = vld [vmem:[#allocation3 + $0x2b0] sm:$0xff]
  %v6510 = vld [vmem:[#allocation3 + $0x2d0] sm:$0xff]
  %v6511 = vld [vmem:[#allocation3 + $0x2f0] sm:$0xff]
  %v6512 = vld [vmem:[#allocation3 + $0x310] sm:$0xff]
  %v6513 = vld [vmem:[#allocation3 + $0x330] sm:$0xff]
  %v6514 = vld [vmem:[#allocation3 + $0x350] sm:$0xff]
  %v6515 = vld [vmem:[#allocation3 + $0x370] sm:$0xff]
  %v6516 = vld [vmem:[#allocation3 + $0x390] sm:$0xff]
  %v6517 = vld [vmem:[#allocation3 + $0x3b0] sm:$0xff]
  %v6518 = vld [vmem:[#allocation3 + $0x3d0] sm:$0xff]
  %v6519 = vld [vmem:[#allocation3 + $0x3f0] sm:$0xff]
  %v6520 = vsel %vm1347, %v6488, %v6504
  %v6521 = vsel %vm1347, %v6489, %v6505
  %v6522 = vsel %vm1347, %v6490, %v6506
  %v6523 = vsel %vm1347, %v6491, %v6507
  %v6524 = vsel %vm1347, %v6492, %v6508
  %v6525 = vsel %vm1347, %v6493, %v6509
  %v6526 = vsel %vm1347, %v6494, %v6510
  %v6527 = vsel %vm1347, %v6495, %v6511
  %v6528 = vsel %vm1347, %v6496, %v6512
  %v6529 = vsel %vm1347, %v6497, %v6513
  %v6530 = vsel %vm1347, %v6498, %v6514
  %v6531 = vsel %vm1347, %v6499, %v6515
  %v6532 = vsel %vm1347, %v6500, %v6516
  %v6533 = vsel %vm1347, %v6501, %v6517
  %v6534 = vsel %vm1347, %v6502, %v6518
  %v6535 = vsel %vm1347, %v6503, %v6519
  %v6536 = vsel %vm1347, %v6460, 0.0
  %v6537 = vsel %vm1347, %v6461, 0.0
  %v6538 = vsel %vm1347, %v6462, 0.0
  %v6539 = vsel %vm1347, %v6463, 0.0
  %v6540 = vsel %vm1347, 0.0, %v6460
  %v6541 = vsel %vm1347, 0.0, %v6461
  %v6542 = vsel %vm1347, 0.0, %v6462
  %v6543 = vsel %vm1347, 0.0, %v6463
  %6544 = vmatprep.subr.mxu0 0.0
  %6545 = vmatpush1.msra.mxu0 %v6536
  %6546 = vmatprep.subr.mxu0 0.0
  %6547 = vmatpush1.msra.mxu0 %v6537
  %6548 = vmatprep.subr.mxu0 0.0
  %6549 = vmatpush1.msra.mxu0 %v6538
  %6550 = vmatprep.subr.mxu0 0.0
  %6551 = vmatpush1.msra.mxu0 %v6539
  %6552 = vmatprep.subr.mxu0 0.0
  %6553 = vmatpush1.msra.mxu0 %v6540
  %6554 = vmatprep.subr.mxu0 0.0
  %6555 = vmatpush1.msra.mxu0 %v6541
  %6556 = vmatprep.subr.mxu0 0.0
  %6557 = vmatpush1.msra.mxu0 %v6542
  %6558 = vmatprep.subr.mxu0 0.0
  %6559 = vmatpush1.msra.mxu0 %v6543
  %6560 = vmatprep.subr.mxu0 0.0
  %6561 = vmatpush1.msra.mxu0 0.0
  %6562 = vmatprep.subr.mxu0 0.0
  %6563 = vmatpush1.msra.mxu0 0.0
  %6564 = vmatprep.subr.mxu0 0.0
  %6565 = vmatpush1.msra.mxu0 0.0
  %6566 = vmatprep.subr.mxu0 0.0
  %6567 = vmatpush1.msra.mxu0 0.0
  %6568 = vmatprep.subr.mxu0 0.0
  %6569 = vmatpush1.msra.mxu0 0.0
  %6570 = vmatprep.subr.mxu0 0.0
  %6571 = vmatpush1.msra.mxu0 0.0
  %6572 = vmatprep.subr.mxu0 0.0
  %6573 = vmatpush1.msra.mxu0 0.0
  %6574 = vmatprep.subr.mxu0 0.0
  %6575 = vmatpush1.msra.mxu0 0.0
  %6576 = vmatprep.subr.mxu0 0.0
  %6577 = vmatpush1.msra.mxu0 0.0
  %6578 = vmatprep.subr.mxu0 0.0
  %6579 = vmatpush1.msra.mxu0 0.0
  %6580 = vmatprep.subr.mxu0 0.0
  %6581 = vmatpush1.msra.mxu0 0.0
  %6582 = vmatprep.subr.mxu0 0.0
  %6583 = vmatpush1.msra.mxu0 0.0
  %6584 = vmatprep.subr.mxu0 0.0
  %6585 = vmatpush1.msra.mxu0 0.0
  %6586 = vmatprep.subr.mxu0 0.0
  %6587 = vmatpush1.msra.mxu0 0.0
  %6588 = vmatprep.subr.mxu0 0.0
  %6589 = vmatpush1.msra.mxu0 0.0
  %6590 = vmatprep.subr.mxu0 0.0
  %6591 = vmatpush1.msra.mxu0 0.0
  %6592 = vmatprep.subr.mxu0 0.0
  %6593 = vmatpush1.msra.mxu0 0.0
  %6594 = vmatprep.subr.mxu0 0.0
  %6595 = vmatpush1.msra.mxu0 0.0
  %6596 = vmatprep.subr.mxu0 0.0
  %6597 = vmatpush1.msra.mxu0 0.0
  %6598 = vmatprep.subr.mxu0 0.0
  %6599 = vmatpush1.msra.mxu0 0.0
  %6600 = vmatprep.subr.mxu0 0.0
  %6601 = vmatpush1.msra.mxu0 0.0
  %6602 = vmatprep.subr.mxu0 0.0
  %6603 = vmatpush1.msra.mxu0 0.0
  %6604 = vmatprep.subr.mxu0 0.0
  %6605 = vmatpush1.msra.mxu0 0.0
  %6606 = vmatprep.subr.mxu0 0.0
  %6607 = vmatpush1.msra.mxu0 0.0
  %6608 = vmatprep.mubr.f32.mxu0 0.0
  %6609 = vmatmul.mubr.f32.gmra.mrb[0].mxu0 %v6160
  %v6610 = vpop.f32.mrb[0].mxu0
  %v6611 = vadd.f32 0.0, %v6610
  %v6612 = vpop.f32.mrb[0].mxu0
  %6613 = vmatprep.mubr.f32.mxu0 0.0
  %6614 = vmatmul.mubr.f32.gmra.mrb[0].mxu0 %v6163
  %v6615 = vpop.f32.mrb[0].mxu0
  %v6616 = vadd.f32 0.0, %v6615
  %v6617 = vpop.f32.mrb[0].mxu0
  %6618 = vmatprep.mubr.f32.mxu0 0.0
  %6619 = vmatmul.mubr.f32.gmra.mrb[0].mxu0 %v6166
  %v6620 = vpop.f32.mrb[0].mxu0
  %v6621 = vadd.f32 0.0, %v6620
  %v6622 = vpop.f32.mrb[0].mxu0
  %6623 = vmatprep.mubr.f32.mxu0 0.0
  %6624 = vmatmul.mubr.f32.gmra.mrb[0].mxu0 %v6169
  %v6625 = vpop.f32.mrb[0].mxu0
  %v6626 = vadd.f32 0.0, %v6625
  %v6627 = vpop.f32.mrb[0].mxu0
  %6628 = vmatprep.mubr.f32.mxu0 0.0
  %6629 = vmatmul.mubr.f32.gmra.mrb[0].mxu0 %v6172
  %v6630 = vpop.f32.mrb[0].mxu0
  %v6631 = vadd.f32 0.0, %v6630
  %v6632 = vpop.f32.mrb[0].mxu0
  %6633 = vmatprep.mubr.f32.mxu0 0.0
  %6634 = vmatmul.mubr.f32.gmra.mrb[0].mxu0 %v6175
  %v6635 = vpop.f32.mrb[0].mxu0
  %v6636 = vadd.f32 0.0, %v6635
  %v6637 = vpop.f32.mrb[0].mxu0
  %6638 = vmatprep.mubr.f32.mxu0 0.0
  %6639 = vmatmul.mubr.f32.gmra.mrb[0].mxu0 %v6178
  %v6640 = vpop.f32.mrb[0].mxu0
  %v6641 = vadd.f32 0.0, %v6640
  %v6642 = vpop.f32.mrb[0].mxu0
  %6643 = vmatprep.mubr.f32.mxu0 0.0
  %6644 = vmatmul.mubr.f32.gmra.mrb[0].mxu0 %v6181
  %v6645 = vpop.f32.mrb[0].mxu0
  %v6646 = vadd.f32 0.0, %v6645
  %v6647 = vpop.f32.mrb[0].mxu0
  %6648 = vmatprep.mubr.f32.mxu0 0.0
  %6649 = vmatmul.mubr.f32.gmra.mrb[0].mxu0 %v6184
  %v6650 = vpop.f32.mrb[0].mxu0
  %v6651 = vadd.f32 0.0, %v6650
  %v6652 = vpop.f32.mrb[0].mxu0
  %6653 = vmatprep.mubr.f32.mxu0 0.0
  %6654 = vmatmul.mubr.f32.gmra.mrb[0].mxu0 %v6187
  %v6655 = vpop.f32.mrb[0].mxu0
  %v6656 = vadd.f32 0.0, %v6655
  %v6657 = vpop.f32.mrb[0].mxu0
  %6658 = vmatprep.mubr.f32.mxu0 0.0
  %6659 = vmatmul.mubr.f32.gmra.mrb[0].mxu0 %v6190
  %v6660 = vpop.f32.mrb[0].mxu0
  %v6661 = vadd.f32 0.0, %v6660
  %v6662 = vpop.f32.mrb[0].mxu0
  %6663 = vmatprep.mubr.f32.mxu0 0.0
  %6664 = vmatmul.mubr.f32.gmra.mrb[0].mxu0 %v6193
  %v6665 = vpop.f32.mrb[0].mxu0
  %v6666 = vadd.f32 0.0, %v6665
  %v6667 = vpop.f32.mrb[0].mxu0
  %6668 = vmatprep.mubr.f32.mxu0 0.0
  %6669 = vmatmul.mubr.f32.gmra.mrb[0].mxu0 %v6196
  %v6670 = vpop.f32.mrb[0].mxu0
  %v6671 = vadd.f32 0.0, %v6670
  %v6672 = vpop.f32.mrb[0].mxu0
  %6673 = vmatprep.mubr.f32.mxu0 0.0
  %6674 = vmatmul.mubr.f32.gmra.mrb[0].mxu0 %v6199
  %v6675 = vpop.f32.mrb[0].mxu0
  %v6676 = vadd.f32 0.0, %v6675
  %v6677 = vpop.f32.mrb[0].mxu0
  %6678 = vmatprep.mubr.f32.mxu0 0.0
  %6679 = vmatmul.mubr.f32.gmra.mrb[0].mxu0 %v6202
  %v6680 = vpop.f32.mrb[0].mxu0
  %v6681 = vadd.f32 0.0, %v6680
  %v6682 = vpop.f32.mrb[0].mxu0
  %6683 = vmatprep.mubr.f32.mxu0 0.0
  %6684 = vmatmul.mubr.f32.gmra.mrb[0].mxu0 %v6205
  %v6685 = vpop.f32.mrb[0].mxu0
  %v6686 = vadd.f32 0.0, %v6685
  %v6687 = vpop.f32.mrb[0].mxu0
  %6688 = vdwg.mxu0
  %v6689 = vadd.f32 %v6520, %v6611
  %v6690 = vadd.f32 %v6521, %v6616
  %v6691 = vadd.f32 %v6522, %v6621
  %v6692 = vadd.f32 %v6523, %v6626
  %v6693 = vadd.f32 %v6524, %v6631
  %v6694 = vadd.f32 %v6525, %v6636
  %v6695 = vadd.f32 %v6526, %v6641
  %v6696 = vadd.f32 %v6527, %v6646
  %v6697 = vadd.f32 %v6528, %v6651
  %v6698 = vadd.f32 %v6529, %v6656
  %v6699 = vadd.f32 %v6530, %v6661
  %v6700 = vadd.f32 %v6531, %v6666
  %v6701 = vadd.f32 %v6532, %v6671
  %v6702 = vadd.f32 %v6533, %v6676
  %v6703 = vadd.f32 %v6534, %v6681
  %v6704 = vadd.f32 %v6535, %v6686
  %v6705 = vxor.u32 %v6689, 2147483648
  %v6706 = vxor.u32 %v6690, 2147483648
  %v6707 = vxor.u32 %v6691, 2147483648
  %v6708 = vxor.u32 %v6692, 2147483648
  %v6709 = vmul.f32 %v6705, 1.442695
  %v6710 = vpow.pop %v6709
  %v6711 = vmul.f32 %v6706, 1.442695
  %v6712 = vpow.pop %v6711
  %v6713 = vmul.f32 %v6707, 1.442695
  %v6714 = vpow.pop %v6713
  %v6715 = vmul.f32 %v6708, 1.442695
  %v6716 = vpow.pop %v6715
  %v6717 = vadd.f32 %v6710, 1.0
  %v6718 = vadd.f32 %v6712, 1.0
  %v6719 = vadd.f32 %v6714, 1.0
  %v6720 = vadd.f32 %v6716, 1.0
  %v6721 = vrcp.pop %v6717
  %v6722 = vmul.f32 1.0, %v6721
  %v6723 = vrcp.pop %v6718
  %v6724 = vmul.f32 1.0, %v6723
  %v6725 = vrcp.pop %v6719
  %v6726 = vmul.f32 1.0, %v6725
  %v6727 = vrcp.pop %v6720
  %v6728 = vmul.f32 1.0, %v6727
  %v6729 = vtanh.pop %v6697
  %v6730 = vtanh.pop %v6698
  %v6731 = vtanh.pop %v6699
  %v6732 = vtanh.pop %v6700
  %v6733 = vxor.u32 %v6701, 2147483648
  %v6734 = vxor.u32 %v6702, 2147483648
  %v6735 = vxor.u32 %v6703, 2147483648
  %v6736 = vxor.u32 %v6704, 2147483648
  %v6737 = vmul.f32 %v6733, 1.442695
  %v6738 = vpow.pop %v6737
  %v6739 = vmul.f32 %v6734, 1.442695
  %v6740 = vpow.pop %v6739
  %v6741 = vmul.f32 %v6735, 1.442695
  %v6742 = vpow.pop %v6741
  %v6743 = vmul.f32 %v6736, 1.442695
  %v6744 = vpow.pop %v6743
  %v6745 = vadd.f32 %v6738, 1.0
  %v6746 = vadd.f32 %v6740, 1.0
  %v6747 = vadd.f32 %v6742, 1.0
  %v6748 = vadd.f32 %v6744, 1.0
  %v6749 = vrcp.pop %v6745
  %v6750 = vmul.f32 1.0, %v6749
  %v6751 = vrcp.pop %v6746
  %v6752 = vmul.f32 1.0, %v6751
  %v6753 = vrcp.pop %v6747
  %v6754 = vmul.f32 1.0, %v6753
  %v6755 = vrcp.pop %v6748
  %v6756 = vmul.f32 1.0, %v6755
  %v6757 = vxor.u32 %v6693, 2147483648
  %v6758 = vxor.u32 %v6694, 2147483648
  %v6759 = vxor.u32 %v6695, 2147483648
  %v6760 = vxor.u32 %v6696, 2147483648
  %v6761 = vmul.f32 %v6757, 1.442695
  %v6762 = vpow.pop %v6761
  %v6763 = vmul.f32 %v6758, 1.442695
  %v6764 = vpow.pop %v6763
  %v6765 = vmul.f32 %v6759, 1.442695
  %v6766 = vpow.pop %v6765
  %v6767 = vmul.f32 %v6760, 1.442695
  %v6768 = vpow.pop %v6767
  %v6769 = vadd.f32 %v6762, 1.0
  %v6770 = vadd.f32 %v6764, 1.0
  %v6771 = vadd.f32 %v6766, 1.0
  %v6772 = vadd.f32 %v6768, 1.0
  %v6773 = vrcp.pop %v6769
  %v6774 = vmul.f32 1.0, %v6773
  %v6775 = vrcp.pop %v6770
  %v6776 = vmul.f32 1.0, %v6775
  %v6777 = vrcp.pop %v6771
  %v6778 = vmul.f32 1.0, %v6777
  %v6779 = vrcp.pop %v6772
  %v6780 = vmul.f32 1.0, %v6779
  %v6781 = vmul.f32 %v6774, %v6452
  %v6782 = vmul.f32 %v6776, %v6453
  %v6783 = vmul.f32 %v6778, %v6454
  %v6784 = vmul.f32 %v6780, %v6455
  %v6785 = vmul.f32 %v6722, %v6729
  %v6786 = vmul.f32 %v6724, %v6730
  %v6787 = vmul.f32 %v6726, %v6731
  %v6788 = vmul.f32 %v6728, %v6732
  %v6789 = vadd.f32 %v6781, %v6785
  %v6790 = vadd.f32 %v6782, %v6786
  %v6791 = vadd.f32 %v6783, %v6787
  %v6792 = vadd.f32 %v6784, %v6788
  %v6793 = vtanh.pop %v6789
  %v6794 = vtanh.pop %v6790
  %v6795 = vtanh.pop %v6791
  %v6796 = vtanh.pop %v6792
  %v6797 = vmul.f32 %v6750, %v6793
  %v6798 = vmul.f32 %v6752, %v6794
  %v6799 = vmul.f32 %v6754, %v6795
  %v6800 = vmul.f32 %v6756, %v6796
  %6801 = vst.msk [vmem:[#allocation5 + $0x8] sm:$0xff] %vm192, %v6797
  %6802 = vst.msk [vmem:[#allocation5 + $0x28] sm:$0xff] %vm192, %v6798
  %6803 = vst.msk [vmem:[#allocation5 + $0x48] sm:$0xff] %vm192, %v6799
  %6804 = vst.msk [vmem:[#allocation5 + $0x68] sm:$0xff] %vm192, %v6800
  %6805 = vst.msk [vmem:[#allocation5 + $0x90] sm:$0xff] %vm370, %v6797
  %6806 = vst.msk [vmem:[#allocation5 + $0xb0] sm:$0xff] %vm370, %v6798
  %6807 = vst.msk [vmem:[#allocation5 + $0xd0] sm:$0xff] %vm370, %v6799
  %6808 = vst.msk [vmem:[#allocation5 + $0xf0] sm:$0xff] %vm370, %v6800
  %v6809 = vld [vmem:[#allocation3 + $0x8] sm:$0xff]
  %v6810 = vld [vmem:[#allocation3 + $0x28] sm:$0xff]
  %v6811 = vld [vmem:[#allocation3 + $0x48] sm:$0xff]
  %v6812 = vld [vmem:[#allocation3 + $0x68] sm:$0xff]
  %v6813 = vld [vmem:[#allocation3 + $0x88] sm:$0xff]
  %v6814 = vld [vmem:[#allocation3 + $0xa8] sm:$0xff]
  %v6815 = vld [vmem:[#allocation3 + $0xc8] sm:$0xff]
  %v6816 = vld [vmem:[#allocation3 + $0xe8] sm:$0xff]
  %v6817 = vld [vmem:[#allocation3 + $0x108] sm:$0xff]
  %v6818 = vld [vmem:[#allocation3 + $0x128] sm:$0xff]
  %v6819 = vld [vmem:[#allocation3 + $0x148] sm:$0xff]
  %v6820 = vld [vmem:[#allocation3 + $0x168] sm:$0xff]
  %v6821 = vld [vmem:[#allocation3 + $0x188] sm:$0xff]
  %v6822 = vld [vmem:[#allocation3 + $0x1a8] sm:$0xff]
  %v6823 = vld [vmem:[#allocation3 + $0x1c8] sm:$0xff]
  %v6824 = vld [vmem:[#allocation3 + $0x1e8] sm:$0xff]
  %v6825 = vld [vmem:[#allocation3 + $0x210] sm:$0xff]
  %v6826 = vld [vmem:[#allocation3 + $0x230] sm:$0xff]
  %v6827 = vld [vmem:[#allocation3 + $0x250] sm:$0xff]
  %v6828 = vld [vmem:[#allocation3 + $0x270] sm:$0xff]
  %v6829 = vld [vmem:[#allocation3 + $0x290] sm:$0xff]
  %v6830 = vld [vmem:[#allocation3 + $0x2b0] sm:$0xff]
  %v6831 = vld [vmem:[#allocation3 + $0x2d0] sm:$0xff]
  %v6832 = vld [vmem:[#allocation3 + $0x2f0] sm:$0xff]
  %v6833 = vld [vmem:[#allocation3 + $0x310] sm:$0xff]
  %v6834 = vld [vmem:[#allocation3 + $0x330] sm:$0xff]
  %v6835 = vld [vmem:[#allocation3 + $0x350] sm:$0xff]
  %v6836 = vld [vmem:[#allocation3 + $0x370] sm:$0xff]
  %v6837 = vld [vmem:[#allocation3 + $0x390] sm:$0xff]
  %v6838 = vld [vmem:[#allocation3 + $0x3b0] sm:$0xff]
  %v6839 = vld [vmem:[#allocation3 + $0x3d0] sm:$0xff]
  %v6840 = vld [vmem:[#allocation3 + $0x3f0] sm:$0xff]
  %v6841 = vsel %vm1347, %v6825, %v6809
  %v6842 = vsel %vm1347, %v6826, %v6810
  %v6843 = vsel %vm1347, %v6827, %v6811
  %v6844 = vsel %vm1347, %v6828, %v6812
  %v6845 = vsel %vm1347, %v6829, %v6813
  %v6846 = vsel %vm1347, %v6830, %v6814
  %v6847 = vsel %vm1347, %v6831, %v6815
  %v6848 = vsel %vm1347, %v6832, %v6816
  %v6849 = vsel %vm1347, %v6833, %v6817
  %v6850 = vsel %vm1347, %v6834, %v6818
  %v6851 = vsel %vm1347, %v6835, %v6819
  %v6852 = vsel %vm1347, %v6836, %v6820
  %v6853 = vsel %vm1347, %v6837, %v6821
  %v6854 = vsel %vm1347, %v6838, %v6822
  %v6855 = vsel %vm1347, %v6839, %v6823
  %v6856 = vsel %vm1347, %v6840, %v6824
  %6857 = vrot.lane.b32.xlu0 %v6841, 64
  %v6858 = vpop.permute.xlu0 %6857
  %6859 = vrot.lane.b32.xlu0 %v6842, 64
  %v6860 = vpop.permute.xlu0 %6859
  %6861 = vrot.lane.b32.xlu0 %v6843, 64
  %v6862 = vpop.permute.xlu0 %6861
  %6863 = vrot.lane.b32.xlu0 %v6844, 64
  %v6864 = vpop.permute.xlu0 %6863
  %6865 = vrot.lane.b32.xlu0 %v6845, 64
  %v6866 = vpop.permute.xlu0 %6865
  %6867 = vrot.lane.b32.xlu0 %v6846, 64
  %v6868 = vpop.permute.xlu0 %6867
  %6869 = vrot.lane.b32.xlu0 %v6847, 64
  %v6870 = vpop.permute.xlu0 %6869
  %6871 = vrot.lane.b32.xlu0 %v6848, 64
  %v6872 = vpop.permute.xlu0 %6871
  %6873 = vrot.lane.b32.xlu0 %v6849, 64
  %v6874 = vpop.permute.xlu0 %6873
  %6875 = vrot.lane.b32.xlu0 %v6850, 64
  %v6876 = vpop.permute.xlu0 %6875
  %6877 = vrot.lane.b32.xlu0 %v6851, 64
  %v6878 = vpop.permute.xlu0 %6877
  %6879 = vrot.lane.b32.xlu0 %v6852, 64
  %v6880 = vpop.permute.xlu0 %6879
  %6881 = vrot.lane.b32.xlu0 %v6853, 64
  %v6882 = vpop.permute.xlu0 %6881
  %6883 = vrot.lane.b32.xlu0 %v6854, 64
  %v6884 = vpop.permute.xlu0 %6883
  %6885 = vrot.lane.b32.xlu0 %v6855, 64
  %v6886 = vpop.permute.xlu0 %6885
  %6887 = vrot.lane.b32.xlu0 %v6856, 64
  %v6888 = vpop.permute.xlu0 %6887
  %v6889 = vsel %vm1347, %v6797, 0.0
  %v6890 = vsel %vm1347, %v6798, 0.0
  %v6891 = vsel %vm1347, %v6799, 0.0
  %v6892 = vsel %vm1347, %v6800, 0.0
  %v6893 = vsel %vm1347, 0.0, %v6797
  %v6894 = vsel %vm1347, 0.0, %v6798
  %v6895 = vsel %vm1347, 0.0, %v6799
  %v6896 = vsel %vm1347, 0.0, %v6800
  %6897 = vmatprep.subr.mxu0 0.0
  %6898 = vmatpush1.msra.mxu0 %v6889
  %6899 = vmatprep.subr.mxu0 0.0
  %6900 = vmatpush1.msra.mxu0 %v6890
  %6901 = vmatprep.subr.mxu0 0.0
  %6902 = vmatpush1.msra.mxu0 %v6891
  %6903 = vmatprep.subr.mxu0 0.0
  %6904 = vmatpush1.msra.mxu0 %v6892
  %6905 = vmatprep.subr.mxu0 0.0
  %6906 = vmatpush1.msra.mxu0 %v6893
  %6907 = vmatprep.subr.mxu0 0.0
  %6908 = vmatpush1.msra.mxu0 %v6894
  %6909 = vmatprep.subr.mxu0 0.0
  %6910 = vmatpush1.msra.mxu0 %v6895
  %6911 = vmatprep.subr.mxu0 0.0
  %6912 = vmatpush1.msra.mxu0 %v6896
  %6913 = vmatprep.subr.mxu0 0.0
  %6914 = vmatpush1.msra.mxu0 0.0
  %6915 = vmatprep.subr.mxu0 0.0
  %6916 = vmatpush1.msra.mxu0 0.0
  %6917 = vmatprep.subr.mxu0 0.0
  %6918 = vmatpush1.msra.mxu0 0.0
  %6919 = vmatprep.subr.mxu0 0.0
  %6920 = vmatpush1.msra.mxu0 0.0
  %6921 = vmatprep.subr.mxu0 0.0
  %6922 = vmatpush1.msra.mxu0 0.0
  %6923 = vmatprep.subr.mxu0 0.0
  %6924 = vmatpush1.msra.mxu0 0.0
  %6925 = vmatprep.subr.mxu0 0.0
  %6926 = vmatpush1.msra.mxu0 0.0
  %6927 = vmatprep.subr.mxu0 0.0
  %6928 = vmatpush1.msra.mxu0 0.0
  %6929 = vmatprep.subr.mxu0 0.0
  %6930 = vmatpush1.msra.mxu0 0.0
  %6931 = vmatprep.subr.mxu0 0.0
  %6932 = vmatpush1.msra.mxu0 0.0
  %6933 = vmatprep.subr.mxu0 0.0
  %6934 = vmatpush1.msra.mxu0 0.0
  %6935 = vmatprep.subr.mxu0 0.0
  %6936 = vmatpush1.msra.mxu0 0.0
  %6937 = vmatprep.subr.mxu0 0.0
  %6938 = vmatpush1.msra.mxu0 0.0
  %6939 = vmatprep.subr.mxu0 0.0
  %6940 = vmatpush1.msra.mxu0 0.0
  %6941 = vmatprep.subr.mxu0 0.0
  %6942 = vmatpush1.msra.mxu0 0.0
  %6943 = vmatprep.subr.mxu0 0.0
  %6944 = vmatpush1.msra.mxu0 0.0
  %6945 = vmatprep.subr.mxu0 0.0
  %6946 = vmatpush1.msra.mxu0 0.0
  %6947 = vmatprep.subr.mxu0 0.0
  %6948 = vmatpush1.msra.mxu0 0.0
  %6949 = vmatprep.subr.mxu0 0.0
  %6950 = vmatpush1.msra.mxu0 0.0
  %6951 = vmatprep.subr.mxu0 0.0
  %6952 = vmatpush1.msra.mxu0 0.0
  %6953 = vmatprep.subr.mxu0 0.0
  %6954 = vmatpush1.msra.mxu0 0.0
  %6955 = vmatprep.subr.mxu0 0.0
  %6956 = vmatpush1.msra.mxu0 0.0
  %6957 = vmatprep.subr.mxu0 0.0
  %6958 = vmatpush1.msra.mxu0 0.0
  %6959 = vmatprep.subr.mxu0 0.0
  %6960 = vmatpush1.msra.mxu0 0.0
  %6961 = vmatprep.mubr.f32.mxu0 0.0
  %6962 = vmatmul.mubr.f32.gmra.mrb[0].mxu0 %v6160
  %v6963 = vpop.f32.mrb[0].mxu0
  %v6964 = vadd.f32 0.0, %v6963
  %v6965 = vpop.f32.mrb[0].mxu0
  %6966 = vmatprep.mubr.f32.mxu0 0.0
  %6967 = vmatmul.mubr.f32.gmra.mrb[0].mxu0 %v6163
  %v6968 = vpop.f32.mrb[0].mxu0
  %v6969 = vadd.f32 0.0, %v6968
  %v6970 = vpop.f32.mrb[0].mxu0
  %6971 = vmatprep.mubr.f32.mxu0 0.0
  %6972 = vmatmul.mubr.f32.gmra.mrb[0].mxu0 %v6166
  %v6973 = vpop.f32.mrb[0].mxu0
  %v6974 = vadd.f32 0.0, %v6973
  %v6975 = vpop.f32.mrb[0].mxu0
  %6976 = vmatprep.mubr.f32.mxu0 0.0
  %6977 = vmatmul.mubr.f32.gmra.mrb[0].mxu0 %v6169
  %v6978 = vpop.f32.mrb[0].mxu0
  %v6979 = vadd.f32 0.0, %v6978
  %v6980 = vpop.f32.mrb[0].mxu0
  %6981 = vmatprep.mubr.f32.mxu0 0.0
  %6982 = vmatmul.mubr.f32.gmra.mrb[0].mxu0 %v6172
  %v6983 = vpop.f32.mrb[0].mxu0
  %v6984 = vadd.f32 0.0, %v6983
  %v6985 = vpop.f32.mrb[0].mxu0
  %6986 = vmatprep.mubr.f32.mxu0 0.0
  %6987 = vmatmul.mubr.f32.gmra.mrb[0].mxu0 %v6175
  %v6988 = vpop.f32.mrb[0].mxu0
  %v6989 = vadd.f32 0.0, %v6988
  %v6990 = vpop.f32.mrb[0].mxu0
  %6991 = vmatprep.mubr.f32.mxu0 0.0
  %6992 = vmatmul.mubr.f32.gmra.mrb[0].mxu0 %v6178
  %v6993 = vpop.f32.mrb[0].mxu0
  %v6994 = vadd.f32 0.0, %v6993
  %v6995 = vpop.f32.mrb[0].mxu0
  %6996 = vmatprep.mubr.f32.mxu0 0.0
  %6997 = vmatmul.mubr.f32.gmra.mrb[0].mxu0 %v6181
  %v6998 = vpop.f32.mrb[0].mxu0
  %v6999 = vadd.f32 0.0, %v6998
  %v7000 = vpop.f32.mrb[0].mxu0
  %7001 = vmatprep.mubr.f32.mxu0 0.0
  %7002 = vmatmul.mubr.f32.gmra.mrb[0].mxu0 %v6184
  %v7003 = vpop.f32.mrb[0].mxu0
  %v7004 = vadd.f32 0.0, %v7003
  %v7005 = vpop.f32.mrb[0].mxu0
  %7006 = vmatprep.mubr.f32.mxu0 0.0
  %7007 = vmatmul.mubr.f32.gmra.mrb[0].mxu0 %v6187
  %v7008 = vpop.f32.mrb[0].mxu0
  %v7009 = vadd.f32 0.0, %v7008
  %v7010 = vpop.f32.mrb[0].mxu0
  %7011 = vmatprep.mubr.f32.mxu0 0.0
  %7012 = vmatmul.mubr.f32.gmra.mrb[0].mxu0 %v6190
  %v7013 = vpop.f32.mrb[0].mxu0
  %v7014 = vadd.f32 0.0, %v7013
  %v7015 = vpop.f32.mrb[0].mxu0
  %7016 = vmatprep.mubr.f32.mxu0 0.0
  %7017 = vmatmul.mubr.f32.gmra.mrb[0].mxu0 %v6193
  %v7018 = vpop.f32.mrb[0].mxu0
  %v7019 = vadd.f32 0.0, %v7018
  %v7020 = vpop.f32.mrb[0].mxu0
  %7021 = vmatprep.mubr.f32.mxu0 0.0
  %7022 = vmatmul.mubr.f32.gmra.mrb[0].mxu0 %v6196
  %v7023 = vpop.f32.mrb[0].mxu0
  %v7024 = vadd.f32 0.0, %v7023
  %v7025 = vpop.f32.mrb[0].mxu0
  %7026 = vmatprep.mubr.f32.mxu0 0.0
  %7027 = vmatmul.mubr.f32.gmra.mrb[0].mxu0 %v6199
  %v7028 = vpop.f32.mrb[0].mxu0
  %v7029 = vadd.f32 0.0, %v7028
  %v7030 = vpop.f32.mrb[0].mxu0
  %7031 = vmatprep.mubr.f32.mxu0 0.0
  %7032 = vmatmul.mubr.f32.gmra.mrb[0].mxu0 %v6202
  %v7033 = vpop.f32.mrb[0].mxu0
  %v7034 = vadd.f32 0.0, %v7033
  %v7035 = vpop.f32.mrb[0].mxu0
  %7036 = vmatprep.mubr.f32.mxu0 0.0
  %7037 = vmatmul.mubr.f32.gmra.mrb[0].mxu0 %v6205
  %v7038 = vpop.f32.mrb[0].mxu0
  %v7039 = vadd.f32 0.0, %v7038
  %v7040 = vpop.f32.mrb[0].mxu0
  %7041 = vdwg.mxu0
  %v7042 = vadd.f32 %v6858, %v6964
  %v7043 = vadd.f32 %v6860, %v6969
  %v7044 = vadd.f32 %v6862, %v6974
  %v7045 = vadd.f32 %v6864, %v6979
  %v7046 = vadd.f32 %v6866, %v6984
  %v7047 = vadd.f32 %v6868, %v6989
  %v7048 = vadd.f32 %v6870, %v6994
  %v7049 = vadd.f32 %v6872, %v6999
  %v7050 = vadd.f32 %v6874, %v7004
  %v7051 = vadd.f32 %v6876, %v7009
  %v7052 = vadd.f32 %v6878, %v7014
  %v7053 = vadd.f32 %v6880, %v7019
  %v7054 = vadd.f32 %v6882, %v7024
  %v7055 = vadd.f32 %v6884, %v7029
  %v7056 = vadd.f32 %v6886, %v7034
  %v7057 = vadd.f32 %v6888, %v7039
  %v7058 = vxor.u32 %v7042, 2147483648
  %v7059 = vxor.u32 %v7043, 2147483648
  %v7060 = vxor.u32 %v7044, 2147483648
  %v7061 = vxor.u32 %v7045, 2147483648
  %v7062 = vmul.f32 %v7058, 1.442695
  %v7063 = vpow.pop %v7062
  %v7064 = vmul.f32 %v7059, 1.442695
  %v7065 = vpow.pop %v7064
  %v7066 = vmul.f32 %v7060, 1.442695
  %v7067 = vpow.pop %v7066
  %v7068 = vmul.f32 %v7061, 1.442695
  %v7069 = vpow.pop %v7068
  %v7070 = vadd.f32 %v7063, 1.0
  %v7071 = vadd.f32 %v7065, 1.0
  %v7072 = vadd.f32 %v7067, 1.0
  %v7073 = vadd.f32 %v7069, 1.0
  %v7074 = vrcp.pop %v7070
  %v7075 = vmul.f32 1.0, %v7074
  %v7076 = vrcp.pop %v7071
  %v7077 = vmul.f32 1.0, %v7076
  %v7078 = vrcp.pop %v7072
  %v7079 = vmul.f32 1.0, %v7078
  %v7080 = vrcp.pop %v7073
  %v7081 = vmul.f32 1.0, %v7080
  %v7082 = vtanh.pop %v7050
  %v7083 = vtanh.pop %v7051
  %v7084 = vtanh.pop %v7052
  %v7085 = vtanh.pop %v7053
  %v7086 = vxor.u32 %v7054, 2147483648
  %v7087 = vxor.u32 %v7055, 2147483648
  %v7088 = vxor.u32 %v7056, 2147483648
  %v7089 = vxor.u32 %v7057, 2147483648
  %v7090 = vmul.f32 %v7086, 1.442695
  %v7091 = vpow.pop %v7090
  %v7092 = vmul.f32 %v7087, 1.442695
  %v7093 = vpow.pop %v7092
  %v7094 = vmul.f32 %v7088, 1.442695
  %v7095 = vpow.pop %v7094
  %v7096 = vmul.f32 %v7089, 1.442695
  %v7097 = vpow.pop %v7096
  %v7098 = vadd.f32 %v7091, 1.0
  %v7099 = vadd.f32 %v7093, 1.0
  %v7100 = vadd.f32 %v7095, 1.0
  %v7101 = vadd.f32 %v7097, 1.0
  %v7102 = vrcp.pop %v7098
  %v7103 = vmul.f32 1.0, %v7102
  %v7104 = vrcp.pop %v7099
  %v7105 = vmul.f32 1.0, %v7104
  %v7106 = vrcp.pop %v7100
  %v7107 = vmul.f32 1.0, %v7106
  %v7108 = vrcp.pop %v7101
  %v7109 = vmul.f32 1.0, %v7108
  %v7110 = vxor.u32 %v7046, 2147483648
  %v7111 = vxor.u32 %v7047, 2147483648
  %v7112 = vxor.u32 %v7048, 2147483648
  %v7113 = vxor.u32 %v7049, 2147483648
  %v7114 = vmul.f32 %v7110, 1.442695
  %v7115 = vpow.pop %v7114
  %v7116 = vmul.f32 %v7111, 1.442695
  %v7117 = vpow.pop %v7116
  %v7118 = vmul.f32 %v7112, 1.442695
  %v7119 = vpow.pop %v7118
  %v7120 = vmul.f32 %v7113, 1.442695
  %v7121 = vpow.pop %v7120
  %v7122 = vadd.f32 %v7115, 1.0
  %v7123 = vadd.f32 %v7117, 1.0
  %v7124 = vadd.f32 %v7119, 1.0
  %v7125 = vadd.f32 %v7121, 1.0
  %v7126 = vrcp.pop %v7122
  %v7127 = vmul.f32 1.0, %v7126
  %v7128 = vrcp.pop %v7123
  %v7129 = vmul.f32 1.0, %v7128
  %v7130 = vrcp.pop %v7124
  %v7131 = vmul.f32 1.0, %v7130
  %v7132 = vrcp.pop %v7125
  %v7133 = vmul.f32 1.0, %v7132
  %v7134 = vmul.f32 %v7127, %v6789
  %v7135 = vmul.f32 %v7129, %v6790
  %v7136 = vmul.f32 %v7131, %v6791
  %v7137 = vmul.f32 %v7133, %v6792
  %v7138 = vmul.f32 %v7075, %v7082
  %v7139 = vmul.f32 %v7077, %v7083
  %v7140 = vmul.f32 %v7079, %v7084
  %v7141 = vmul.f32 %v7081, %v7085
  %v7142 = vadd.f32 %v7134, %v7138
  %v7143 = vadd.f32 %v7135, %v7139
  %v7144 = vadd.f32 %v7136, %v7140
  %v7145 = vadd.f32 %v7137, %v7141
  %v7146 = vtanh.pop %v7142
  %v7147 = vtanh.pop %v7143
  %v7148 = vtanh.pop %v7144
  %v7149 = vtanh.pop %v7145
  %v7150 = vmul.f32 %v7103, %v7146
  %v7151 = vmul.f32 %v7105, %v7147
  %v7152 = vmul.f32 %v7107, %v7148
  %v7153 = vmul.f32 %v7109, %v7149
  %7158 = vrot.lane.b32.xlu0 %v7150, 64
  %v7159 = vpop.permute.xlu0 %7158
  %7160 = vrot.lane.b32.xlu0 %v7151, 64
  %v7161 = vpop.permute.xlu0 %7160
  %7162 = vrot.lane.b32.xlu0 %v7152, 64
  %v7163 = vpop.permute.xlu0 %7162
  %7164 = vrot.lane.b32.xlu0 %v7153, 64
  %v7165 = vpop.permute.xlu0 %7164
  %7170 = vst.msk [vmem:[#allocation5 + $0x8] sm:$0xff] %vm370, %v7159
  %7171 = vst.msk [vmem:[#allocation5 + $0x28] sm:$0xff] %vm370, %v7161
  %7172 = vst.msk [vmem:[#allocation5 + $0x48] sm:$0xff] %vm370, %v7163
  %7173 = vst.msk [vmem:[#allocation5 + $0x68] sm:$0xff] %vm370, %v7165
  %7174 = vst.msk [vmem:[#allocation5 + $0x90] sm:$0xff] %vm192, %v7159
  %7175 = vst.msk [vmem:[#allocation5 + $0xb0] sm:$0xff] %vm192, %v7161
  %7176 = vst.msk [vmem:[#allocation5 + $0xd0] sm:$0xff] %vm192, %v7163
  %7177 = vst.msk [vmem:[#allocation5 + $0xf0] sm:$0xff] %vm192, %v7165
  %v7178 = vld [vmem:[#allocation3 + $0x10] sm:$0xff]
  %v7179 = vld [vmem:[#allocation3 + $0x30] sm:$0xff]
  %v7180 = vld [vmem:[#allocation3 + $0x50] sm:$0xff]
  %v7181 = vld [vmem:[#allocation3 + $0x70] sm:$0xff]
  %v7182 = vld [vmem:[#allocation3 + $0x90] sm:$0xff]
  %v7183 = vld [vmem:[#allocation3 + $0xb0] sm:$0xff]
  %v7184 = vld [vmem:[#allocation3 + $0xd0] sm:$0xff]
  %v7185 = vld [vmem:[#allocation3 + $0xf0] sm:$0xff]
  %v7186 = vld [vmem:[#allocation3 + $0x110] sm:$0xff]
  %v7187 = vld [vmem:[#allocation3 + $0x130] sm:$0xff]
  %v7188 = vld [vmem:[#allocation3 + $0x150] sm:$0xff]
  %v7189 = vld [vmem:[#allocation3 + $0x170] sm:$0xff]
  %v7190 = vld [vmem:[#allocation3 + $0x190] sm:$0xff]
  %v7191 = vld [vmem:[#allocation3 + $0x1b0] sm:$0xff]
  %v7192 = vld [vmem:[#allocation3 + $0x1d0] sm:$0xff]
  %v7193 = vld [vmem:[#allocation3 + $0x1f0] sm:$0xff]
  %v7194 = vld [vmem:[#allocation3 + $0x208] sm:$0xff]
  %v7195 = vld [vmem:[#allocation3 + $0x228] sm:$0xff]
  %v7196 = vld [vmem:[#allocation3 + $0x248] sm:$0xff]
  %v7197 = vld [vmem:[#allocation3 + $0x268] sm:$0xff]
  %v7198 = vld [vmem:[#allocation3 + $0x288] sm:$0xff]
  %v7199 = vld [vmem:[#allocation3 + $0x2a8] sm:$0xff]
  %v7200 = vld [vmem:[#allocation3 + $0x2c8] sm:$0xff]
  %v7201 = vld [vmem:[#allocation3 + $0x2e8] sm:$0xff]
  %v7202 = vld [vmem:[#allocation3 + $0x308] sm:$0xff]
  %v7203 = vld [vmem:[#allocation3 + $0x328] sm:$0xff]
  %v7204 = vld [vmem:[#allocation3 + $0x348] sm:$0xff]
  %v7205 = vld [vmem:[#allocation3 + $0x368] sm:$0xff]
  %v7206 = vld [vmem:[#allocation3 + $0x388] sm:$0xff]
  %v7207 = vld [vmem:[#allocation3 + $0x3a8] sm:$0xff]
  %v7208 = vld [vmem:[#allocation3 + $0x3c8] sm:$0xff]
  %v7209 = vld [vmem:[#allocation3 + $0x3e8] sm:$0xff]
  %v7210 = vsel %vm1347, %v7178, %v7194
  %v7211 = vsel %vm1347, %v7179, %v7195
  %v7212 = vsel %vm1347, %v7180, %v7196
  %v7213 = vsel %vm1347, %v7181, %v7197
  %v7214 = vsel %vm1347, %v7182, %v7198
  %v7215 = vsel %vm1347, %v7183, %v7199
  %v7216 = vsel %vm1347, %v7184, %v7200
  %v7217 = vsel %vm1347, %v7185, %v7201
  %v7218 = vsel %vm1347, %v7186, %v7202
  %v7219 = vsel %vm1347, %v7187, %v7203
  %v7220 = vsel %vm1347, %v7188, %v7204
  %v7221 = vsel %vm1347, %v7189, %v7205
  %v7222 = vsel %vm1347, %v7190, %v7206
  %v7223 = vsel %vm1347, %v7191, %v7207
  %v7224 = vsel %vm1347, %v7192, %v7208
  %v7225 = vsel %vm1347, %v7193, %v7209
  %v7226 = vsel %vm1347, %v7150, 0.0
  %v7227 = vsel %vm1347, %v7151, 0.0
  %v7228 = vsel %vm1347, %v7152, 0.0
  %v7229 = vsel %vm1347, %v7153, 0.0
  %v7230 = vsel %vm1347, 0.0, %v7150
  %v7231 = vsel %vm1347, 0.0, %v7151
  %v7232 = vsel %vm1347, 0.0, %v7152
  %v7233 = vsel %vm1347, 0.0, %v7153
  %7234 = vmatprep.subr.mxu0 0.0
  %7235 = vmatpush1.msra.mxu0 %v7226
  %7236 = vmatprep.subr.mxu0 0.0
  %7237 = vmatpush1.msra.mxu0 %v7227
  %7238 = vmatprep.subr.mxu0 0.0
  %7239 = vmatpush1.msra.mxu0 %v7228
  %7240 = vmatprep.subr.mxu0 0.0
  %7241 = vmatpush1.msra.mxu0 %v7229
  %7242 = vmatprep.subr.mxu0 0.0
  %7243 = vmatpush1.msra.mxu0 %v7230
  %7244 = vmatprep.subr.mxu0 0.0
  %7245 = vmatpush1.msra.mxu0 %v7231
  %7246 = vmatprep.subr.mxu0 0.0
  %7247 = vmatpush1.msra.mxu0 %v7232
  %7248 = vmatprep.subr.mxu0 0.0
  %7249 = vmatpush1.msra.mxu0 %v7233
  %7250 = vmatprep.subr.mxu0 0.0
  %7251 = vmatpush1.msra.mxu0 0.0
  %7252 = vmatprep.subr.mxu0 0.0
  %7253 = vmatpush1.msra.mxu0 0.0
  %7254 = vmatprep.subr.mxu0 0.0
  %7255 = vmatpush1.msra.mxu0 0.0
  %7256 = vmatprep.subr.mxu0 0.0
  %7257 = vmatpush1.msra.mxu0 0.0
  %7258 = vmatprep.subr.mxu0 0.0
  %7259 = vmatpush1.msra.mxu0 0.0
  %7260 = vmatprep.subr.mxu0 0.0
  %7261 = vmatpush1.msra.mxu0 0.0
  %7262 = vmatprep.subr.mxu0 0.0
  %7263 = vmatpush1.msra.mxu0 0.0
  %7264 = vmatprep.subr.mxu0 0.0
  %7265 = vmatpush1.msra.mxu0 0.0
  %7266 = vmatprep.subr.mxu0 0.0
  %7267 = vmatpush1.msra.mxu0 0.0
  %7268 = vmatprep.subr.mxu0 0.0
  %7269 = vmatpush1.msra.mxu0 0.0
  %7270 = vmatprep.subr.mxu0 0.0
  %7271 = vmatpush1.msra.mxu0 0.0
  %7272 = vmatprep.subr.mxu0 0.0
  %7273 = vmatpush1.msra.mxu0 0.0
  %7274 = vmatprep.subr.mxu0 0.0
  %7275 = vmatpush1.msra.mxu0 0.0
  %7276 = vmatprep.subr.mxu0 0.0
  %7277 = vmatpush1.msra.mxu0 0.0
  %7278 = vmatprep.subr.mxu0 0.0
  %7279 = vmatpush1.msra.mxu0 0.0
  %7280 = vmatprep.subr.mxu0 0.0
  %7281 = vmatpush1.msra.mxu0 0.0
  %7282 = vmatprep.subr.mxu0 0.0
  %7283 = vmatpush1.msra.mxu0 0.0
  %7284 = vmatprep.subr.mxu0 0.0
  %7285 = vmatpush1.msra.mxu0 0.0
  %7286 = vmatprep.subr.mxu0 0.0
  %7287 = vmatpush1.msra.mxu0 0.0
  %7288 = vmatprep.subr.mxu0 0.0
  %7289 = vmatpush1.msra.mxu0 0.0
  %7290 = vmatprep.subr.mxu0 0.0
  %7291 = vmatpush1.msra.mxu0 0.0
  %7292 = vmatprep.subr.mxu0 0.0
  %7293 = vmatpush1.msra.mxu0 0.0
  %7294 = vmatprep.subr.mxu0 0.0
  %7295 = vmatpush1.msra.mxu0 0.0
  %7296 = vmatprep.subr.mxu0 0.0
  %7297 = vmatpush1.msra.mxu0 0.0
  %7298 = vmatprep.mubr.f32.mxu0 0.0
  %7299 = vmatmul.mubr.f32.gmra.mrb[0].mxu0 %v6160
  %v7300 = vpop.f32.mrb[0].mxu0
  %v7301 = vadd.f32 0.0, %v7300
  %v7302 = vpop.f32.mrb[0].mxu0
  %7303 = vmatprep.mubr.f32.mxu0 0.0
  %7304 = vmatmul.mubr.f32.gmra.mrb[0].mxu0 %v6163
  %v7305 = vpop.f32.mrb[0].mxu0
  %v7306 = vadd.f32 0.0, %v7305
  %v7307 = vpop.f32.mrb[0].mxu0
  %7308 = vmatprep.mubr.f32.mxu0 0.0
  %7309 = vmatmul.mubr.f32.gmra.mrb[0].mxu0 %v6166
  %v7310 = vpop.f32.mrb[0].mxu0
  %v7311 = vadd.f32 0.0, %v7310
  %v7312 = vpop.f32.mrb[0].mxu0
  %7313 = vmatprep.mubr.f32.mxu0 0.0
  %7314 = vmatmul.mubr.f32.gmra.mrb[0].mxu0 %v6169
  %v7315 = vpop.f32.mrb[0].mxu0
  %v7316 = vadd.f32 0.0, %v7315
  %v7317 = vpop.f32.mrb[0].mxu0
  %7318 = vmatprep.mubr.f32.mxu0 0.0
  %7319 = vmatmul.mubr.f32.gmra.mrb[0].mxu0 %v6172
  %v7320 = vpop.f32.mrb[0].mxu0
  %v7321 = vadd.f32 0.0, %v7320
  %v7322 = vpop.f32.mrb[0].mxu0
  %7323 = vmatprep.mubr.f32.mxu0 0.0
  %7324 = vmatmul.mubr.f32.gmra.mrb[0].mxu0 %v6175
  %v7325 = vpop.f32.mrb[0].mxu0
  %v7326 = vadd.f32 0.0, %v7325
  %v7327 = vpop.f32.mrb[0].mxu0
  %7328 = vmatprep.mubr.f32.mxu0 0.0
  %7329 = vmatmul.mubr.f32.gmra.mrb[0].mxu0 %v6178
  %v7330 = vpop.f32.mrb[0].mxu0
  %v7331 = vadd.f32 0.0, %v7330
  %v7332 = vpop.f32.mrb[0].mxu0
  %7333 = vmatprep.mubr.f32.mxu0 0.0
  %7334 = vmatmul.mubr.f32.gmra.mrb[0].mxu0 %v6181
  %v7335 = vpop.f32.mrb[0].mxu0
  %v7336 = vadd.f32 0.0, %v7335
  %v7337 = vpop.f32.mrb[0].mxu0
  %7338 = vmatprep.mubr.f32.mxu0 0.0
  %7339 = vmatmul.mubr.f32.gmra.mrb[0].mxu0 %v6184
  %v7340 = vpop.f32.mrb[0].mxu0
  %v7341 = vadd.f32 0.0, %v7340
  %v7342 = vpop.f32.mrb[0].mxu0
  %7343 = vmatprep.mubr.f32.mxu0 0.0
  %7344 = vmatmul.mubr.f32.gmra.mrb[0].mxu0 %v6187
  %v7345 = vpop.f32.mrb[0].mxu0
  %v7346 = vadd.f32 0.0, %v7345
  %v7347 = vpop.f32.mrb[0].mxu0
  %7348 = vmatprep.mubr.f32.mxu0 0.0
  %7349 = vmatmul.mubr.f32.gmra.mrb[0].mxu0 %v6190
  %v7350 = vpop.f32.mrb[0].mxu0
  %v7351 = vadd.f32 0.0, %v7350
  %v7352 = vpop.f32.mrb[0].mxu0
  %7353 = vmatprep.mubr.f32.mxu0 0.0
  %7354 = vmatmul.mubr.f32.gmra.mrb[0].mxu0 %v6193
  %v7355 = vpop.f32.mrb[0].mxu0
  %v7356 = vadd.f32 0.0, %v7355
  %v7357 = vpop.f32.mrb[0].mxu0
  %7358 = vmatprep.mubr.f32.mxu0 0.0
  %7359 = vmatmul.mubr.f32.gmra.mrb[0].mxu0 %v6196
  %v7360 = vpop.f32.mrb[0].mxu0
  %v7361 = vadd.f32 0.0, %v7360
  %v7362 = vpop.f32.mrb[0].mxu0
  %7363 = vmatprep.mubr.f32.mxu0 0.0
  %7364 = vmatmul.mubr.f32.gmra.mrb[0].mxu0 %v6199
  %v7365 = vpop.f32.mrb[0].mxu0
  %v7366 = vadd.f32 0.0, %v7365
  %v7367 = vpop.f32.mrb[0].mxu0
  %7368 = vmatprep.mubr.f32.mxu0 0.0
  %7369 = vmatmul.mubr.f32.gmra.mrb[0].mxu0 %v6202
  %v7370 = vpop.f32.mrb[0].mxu0
  %v7371 = vadd.f32 0.0, %v7370
  %v7372 = vpop.f32.mrb[0].mxu0
  %7373 = vmatprep.mubr.f32.mxu0 0.0
  %7374 = vmatmul.mubr.f32.gmra.mrb[0].mxu0 %v6205
  %v7375 = vpop.f32.mrb[0].mxu0
  %v7376 = vadd.f32 0.0, %v7375
  %v7377 = vpop.f32.mrb[0].mxu0
  %7378 = vdwg.mxu0
  %v7379 = vadd.f32 %v7210, %v7301
  %v7380 = vadd.f32 %v7211, %v7306
  %v7381 = vadd.f32 %v7212, %v7311
  %v7382 = vadd.f32 %v7213, %v7316
  %v7383 = vadd.f32 %v7214, %v7321
  %v7384 = vadd.f32 %v7215, %v7326
  %v7385 = vadd.f32 %v7216, %v7331
  %v7386 = vadd.f32 %v7217, %v7336
  %v7387 = vadd.f32 %v7218, %v7341
  %v7388 = vadd.f32 %v7219, %v7346
  %v7389 = vadd.f32 %v7220, %v7351
  %v7390 = vadd.f32 %v7221, %v7356
  %v7391 = vadd.f32 %v7222, %v7361
  %v7392 = vadd.f32 %v7223, %v7366
  %v7393 = vadd.f32 %v7224, %v7371
  %v7394 = vadd.f32 %v7225, %v7376
  %v7395 = vxor.u32 %v7379, 2147483648
  %v7396 = vxor.u32 %v7380, 2147483648
  %v7397 = vxor.u32 %v7381, 2147483648
  %v7398 = vxor.u32 %v7382, 2147483648
  %v7399 = vmul.f32 %v7395, 1.442695
  %v7400 = vpow.pop %v7399
  %v7401 = vmul.f32 %v7396, 1.442695
  %v7402 = vpow.pop %v7401
  %v7403 = vmul.f32 %v7397, 1.442695
  %v7404 = vpow.pop %v7403
  %v7405 = vmul.f32 %v7398, 1.442695
  %v7406 = vpow.pop %v7405
  %v7407 = vadd.f32 %v7400, 1.0
  %v7408 = vadd.f32 %v7402, 1.0
  %v7409 = vadd.f32 %v7404, 1.0
  %v7410 = vadd.f32 %v7406, 1.0
  %v7411 = vrcp.pop %v7407
  %v7412 = vmul.f32 1.0, %v7411
  %v7413 = vrcp.pop %v7408
  %v7414 = vmul.f32 1.0, %v7413
  %v7415 = vrcp.pop %v7409
  %v7416 = vmul.f32 1.0, %v7415
  %v7417 = vrcp.pop %v7410
  %v7418 = vmul.f32 1.0, %v7417
  %v7419 = vtanh.pop %v7387
  %v7420 = vtanh.pop %v7388
  %v7421 = vtanh.pop %v7389
  %v7422 = vtanh.pop %v7390
  %v7423 = vxor.u32 %v7391, 2147483648
  %v7424 = vxor.u32 %v7392, 2147483648
  %v7425 = vxor.u32 %v7393, 2147483648
  %v7426 = vxor.u32 %v7394, 2147483648
  %v7427 = vmul.f32 %v7423, 1.442695
  %v7428 = vpow.pop %v7427
  %v7429 = vmul.f32 %v7424, 1.442695
  %v7430 = vpow.pop %v7429
  %v7431 = vmul.f32 %v7425, 1.442695
  %v7432 = vpow.pop %v7431
  %v7433 = vmul.f32 %v7426, 1.442695
  %v7434 = vpow.pop %v7433
  %v7435 = vadd.f32 %v7428, 1.0
  %v7436 = vadd.f32 %v7430, 1.0
  %v7437 = vadd.f32 %v7432, 1.0
  %v7438 = vadd.f32 %v7434, 1.0
  %v7439 = vrcp.pop %v7435
  %v7440 = vmul.f32 1.0, %v7439
  %v7441 = vrcp.pop %v7436
  %v7442 = vmul.f32 1.0, %v7441
  %v7443 = vrcp.pop %v7437
  %v7444 = vmul.f32 1.0, %v7443
  %v7445 = vrcp.pop %v7438
  %v7446 = vmul.f32 1.0, %v7445
  %v7447 = vxor.u32 %v7383, 2147483648
  %v7448 = vxor.u32 %v7384, 2147483648
  %v7449 = vxor.u32 %v7385, 2147483648
  %v7450 = vxor.u32 %v7386, 2147483648
  %v7451 = vmul.f32 %v7447, 1.442695
  %v7452 = vpow.pop %v7451
  %v7453 = vmul.f32 %v7448, 1.442695
  %v7454 = vpow.pop %v7453
  %v7455 = vmul.f32 %v7449, 1.442695
  %v7456 = vpow.pop %v7455
  %v7457 = vmul.f32 %v7450, 1.442695
  %v7458 = vpow.pop %v7457
  %v7459 = vadd.f32 %v7452, 1.0
  %v7460 = vadd.f32 %v7454, 1.0
  %v7461 = vadd.f32 %v7456, 1.0
  %v7462 = vadd.f32 %v7458, 1.0
  %v7463 = vrcp.pop %v7459
  %v7464 = vmul.f32 1.0, %v7463
  %v7465 = vrcp.pop %v7460
  %v7466 = vmul.f32 1.0, %v7465
  %v7467 = vrcp.pop %v7461
  %v7468 = vmul.f32 1.0, %v7467
  %v7469 = vrcp.pop %v7462
  %v7470 = vmul.f32 1.0, %v7469
  %v7471 = vmul.f32 %v7464, %v7142
  %v7472 = vmul.f32 %v7466, %v7143
  %v7473 = vmul.f32 %v7468, %v7144
  %v7474 = vmul.f32 %v7470, %v7145
  %v7475 = vmul.f32 %v7412, %v7419
  %v7476 = vmul.f32 %v7414, %v7420
  %v7477 = vmul.f32 %v7416, %v7421
  %v7478 = vmul.f32 %v7418, %v7422
  %v7479 = vadd.f32 %v7471, %v7475
  %v7480 = vadd.f32 %v7472, %v7476
  %v7481 = vadd.f32 %v7473, %v7477
  %v7482 = vadd.f32 %v7474, %v7478
  %v7483 = vtanh.pop %v7479
  %v7484 = vtanh.pop %v7480
  %v7485 = vtanh.pop %v7481
  %v7486 = vtanh.pop %v7482
  %v7487 = vmul.f32 %v7440, %v7483
  %v7488 = vmul.f32 %v7442, %v7484
  %v7489 = vmul.f32 %v7444, %v7485
  %v7490 = vmul.f32 %v7446, %v7486
  %7491 = vst.msk [vmem:[#allocation5 + $0x10] sm:$0xff] %vm192, %v7487
  %7492 = vst.msk [vmem:[#allocation5 + $0x30] sm:$0xff] %vm192, %v7488
  %7493 = vst.msk [vmem:[#allocation5 + $0x50] sm:$0xff] %vm192, %v7489
  %7494 = vst.msk [vmem:[#allocation5 + $0x70] sm:$0xff] %vm192, %v7490
  %7495 = vst.msk [vmem:[#allocation5 + $0x88] sm:$0xff] %vm370, %v7487
  %7496 = vst.msk [vmem:[#allocation5 + $0xa8] sm:$0xff] %vm370, %v7488
  %7497 = vst.msk [vmem:[#allocation5 + $0xc8] sm:$0xff] %vm370, %v7489
  %7498 = vst.msk [vmem:[#allocation5 + $0xe8] sm:$0xff] %vm370, %v7490
  %v7499 = vld [vmem:[#allocation3 + $0x10] sm:$0xff]
  %v7500 = vld [vmem:[#allocation3 + $0x30] sm:$0xff]
  %v7501 = vld [vmem:[#allocation3 + $0x50] sm:$0xff]
  %v7502 = vld [vmem:[#allocation3 + $0x70] sm:$0xff]
  %v7503 = vld [vmem:[#allocation3 + $0x90] sm:$0xff]
  %v7504 = vld [vmem:[#allocation3 + $0xb0] sm:$0xff]
  %v7505 = vld [vmem:[#allocation3 + $0xd0] sm:$0xff]
  %v7506 = vld [vmem:[#allocation3 + $0xf0] sm:$0xff]
  %v7507 = vld [vmem:[#allocation3 + $0x110] sm:$0xff]
  %v7508 = vld [vmem:[#allocation3 + $0x130] sm:$0xff]
  %v7509 = vld [vmem:[#allocation3 + $0x150] sm:$0xff]
  %v7510 = vld [vmem:[#allocation3 + $0x170] sm:$0xff]
  %v7511 = vld [vmem:[#allocation3 + $0x190] sm:$0xff]
  %v7512 = vld [vmem:[#allocation3 + $0x1b0] sm:$0xff]
  %v7513 = vld [vmem:[#allocation3 + $0x1d0] sm:$0xff]
  %v7514 = vld [vmem:[#allocation3 + $0x1f0] sm:$0xff]
  %v7515 = vld [vmem:[#allocation3 + $0x208] sm:$0xff]
  %v7516 = vld [vmem:[#allocation3 + $0x228] sm:$0xff]
  %v7517 = vld [vmem:[#allocation3 + $0x248] sm:$0xff]
  %v7518 = vld [vmem:[#allocation3 + $0x268] sm:$0xff]
  %v7519 = vld [vmem:[#allocation3 + $0x288] sm:$0xff]
  %v7520 = vld [vmem:[#allocation3 + $0x2a8] sm:$0xff]
  %v7521 = vld [vmem:[#allocation3 + $0x2c8] sm:$0xff]
  %v7522 = vld [vmem:[#allocation3 + $0x2e8] sm:$0xff]
  %v7523 = vld [vmem:[#allocation3 + $0x308] sm:$0xff]
  %v7524 = vld [vmem:[#allocation3 + $0x328] sm:$0xff]
  %v7525 = vld [vmem:[#allocation3 + $0x348] sm:$0xff]
  %v7526 = vld [vmem:[#allocation3 + $0x368] sm:$0xff]
  %v7527 = vld [vmem:[#allocation3 + $0x388] sm:$0xff]
  %v7528 = vld [vmem:[#allocation3 + $0x3a8] sm:$0xff]
  %v7529 = vld [vmem:[#allocation3 + $0x3c8] sm:$0xff]
  %v7530 = vld [vmem:[#allocation3 + $0x3e8] sm:$0xff]
  %v7531 = vsel %vm1347, %v7515, %v7499
  %v7532 = vsel %vm1347, %v7516, %v7500
  %v7533 = vsel %vm1347, %v7517, %v7501
  %v7534 = vsel %vm1347, %v7518, %v7502
  %v7535 = vsel %vm1347, %v7519, %v7503
  %v7536 = vsel %vm1347, %v7520, %v7504
  %v7537 = vsel %vm1347, %v7521, %v7505
  %v7538 = vsel %vm1347, %v7522, %v7506
  %v7539 = vsel %vm1347, %v7523, %v7507
  %v7540 = vsel %vm1347, %v7524, %v7508
  %v7541 = vsel %vm1347, %v7525, %v7509
  %v7542 = vsel %vm1347, %v7526, %v7510
  %v7543 = vsel %vm1347, %v7527, %v7511
  %v7544 = vsel %vm1347, %v7528, %v7512
  %v7545 = vsel %vm1347, %v7529, %v7513
  %v7546 = vsel %vm1347, %v7530, %v7514
  %7547 = vrot.lane.b32.xlu0 %v7531, 64
  %v7548 = vpop.permute.xlu0 %7547
  %7549 = vrot.lane.b32.xlu0 %v7532, 64
  %v7550 = vpop.permute.xlu0 %7549
  %7551 = vrot.lane.b32.xlu0 %v7533, 64
  %v7552 = vpop.permute.xlu0 %7551
  %7553 = vrot.lane.b32.xlu0 %v7534, 64
  %v7554 = vpop.permute.xlu0 %7553
  %7555 = vrot.lane.b32.xlu0 %v7535, 64
  %v7556 = vpop.permute.xlu0 %7555
  %7557 = vrot.lane.b32.xlu0 %v7536, 64
  %v7558 = vpop.permute.xlu0 %7557
  %7559 = vrot.lane.b32.xlu0 %v7537, 64
  %v7560 = vpop.permute.xlu0 %7559
  %7561 = vrot.lane.b32.xlu0 %v7538, 64
  %v7562 = vpop.permute.xlu0 %7561
  %7563 = vrot.lane.b32.xlu0 %v7539, 64
  %v7564 = vpop.permute.xlu0 %7563
  %7565 = vrot.lane.b32.xlu0 %v7540, 64
  %v7566 = vpop.permute.xlu0 %7565
  %7567 = vrot.lane.b32.xlu0 %v7541, 64
  %v7568 = vpop.permute.xlu0 %7567
  %7569 = vrot.lane.b32.xlu0 %v7542, 64
  %v7570 = vpop.permute.xlu0 %7569
  %7571 = vrot.lane.b32.xlu0 %v7543, 64
  %v7572 = vpop.permute.xlu0 %7571
  %7573 = vrot.lane.b32.xlu0 %v7544, 64
  %v7574 = vpop.permute.xlu0 %7573
  %7575 = vrot.lane.b32.xlu0 %v7545, 64
  %v7576 = vpop.permute.xlu0 %7575
  %7577 = vrot.lane.b32.xlu0 %v7546, 64
  %v7578 = vpop.permute.xlu0 %7577
  %v7579 = vsel %vm1347, %v7487, 0.0
  %v7580 = vsel %vm1347, %v7488, 0.0
  %v7581 = vsel %vm1347, %v7489, 0.0
  %v7582 = vsel %vm1347, %v7490, 0.0
  %v7583 = vsel %vm1347, 0.0, %v7487
  %v7584 = vsel %vm1347, 0.0, %v7488
  %v7585 = vsel %vm1347, 0.0, %v7489
  %v7586 = vsel %vm1347, 0.0, %v7490
  %7587 = vmatprep.subr.mxu0 0.0
  %7588 = vmatpush1.msra.mxu0 %v7579
  %7589 = vmatprep.subr.mxu0 0.0
  %7590 = vmatpush1.msra.mxu0 %v7580
  %7591 = vmatprep.subr.mxu0 0.0
  %7592 = vmatpush1.msra.mxu0 %v7581
  %7593 = vmatprep.subr.mxu0 0.0
  %7594 = vmatpush1.msra.mxu0 %v7582
  %7595 = vmatprep.subr.mxu0 0.0
  %7596 = vmatpush1.msra.mxu0 %v7583
  %7597 = vmatprep.subr.mxu0 0.0
  %7598 = vmatpush1.msra.mxu0 %v7584
  %7599 = vmatprep.subr.mxu0 0.0
  %7600 = vmatpush1.msra.mxu0 %v7585
  %7601 = vmatprep.subr.mxu0 0.0
  %7602 = vmatpush1.msra.mxu0 %v7586
  %7603 = vmatprep.subr.mxu0 0.0
  %7604 = vmatpush1.msra.mxu0 0.0
  %7605 = vmatprep.subr.mxu0 0.0
  %7606 = vmatpush1.msra.mxu0 0.0
  %7607 = vmatprep.subr.mxu0 0.0
  %7608 = vmatpush1.msra.mxu0 0.0
  %7609 = vmatprep.subr.mxu0 0.0
  %7610 = vmatpush1.msra.mxu0 0.0
  %7611 = vmatprep.subr.mxu0 0.0
  %7612 = vmatpush1.msra.mxu0 0.0
  %7613 = vmatprep.subr.mxu0 0.0
  %7614 = vmatpush1.msra.mxu0 0.0
  %7615 = vmatprep.subr.mxu0 0.0
  %7616 = vmatpush1.msra.mxu0 0.0
  %7617 = vmatprep.subr.mxu0 0.0
  %7618 = vmatpush1.msra.mxu0 0.0
  %7619 = vmatprep.subr.mxu0 0.0
  %7620 = vmatpush1.msra.mxu0 0.0
  %7621 = vmatprep.subr.mxu0 0.0
  %7622 = vmatpush1.msra.mxu0 0.0
  %7623 = vmatprep.subr.mxu0 0.0
  %7624 = vmatpush1.msra.mxu0 0.0
  %7625 = vmatprep.subr.mxu0 0.0
  %7626 = vmatpush1.msra.mxu0 0.0
  %7627 = vmatprep.subr.mxu0 0.0
  %7628 = vmatpush1.msra.mxu0 0.0
  %7629 = vmatprep.subr.mxu0 0.0
  %7630 = vmatpush1.msra.mxu0 0.0
  %7631 = vmatprep.subr.mxu0 0.0
  %7632 = vmatpush1.msra.mxu0 0.0
  %7633 = vmatprep.subr.mxu0 0.0
  %7634 = vmatpush1.msra.mxu0 0.0
  %7635 = vmatprep.subr.mxu0 0.0
  %7636 = vmatpush1.msra.mxu0 0.0
  %7637 = vmatprep.subr.mxu0 0.0
  %7638 = vmatpush1.msra.mxu0 0.0
  %7639 = vmatprep.subr.mxu0 0.0
  %7640 = vmatpush1.msra.mxu0 0.0
  %7641 = vmatprep.subr.mxu0 0.0
  %7642 = vmatpush1.msra.mxu0 0.0
  %7643 = vmatprep.subr.mxu0 0.0
  %7644 = vmatpush1.msra.mxu0 0.0
  %7645 = vmatprep.subr.mxu0 0.0
  %7646 = vmatpush1.msra.mxu0 0.0
  %7647 = vmatprep.subr.mxu0 0.0
  %7648 = vmatpush1.msra.mxu0 0.0
  %7649 = vmatprep.subr.mxu0 0.0
  %7650 = vmatpush1.msra.mxu0 0.0
  %7651 = vmatprep.mubr.f32.mxu0 0.0
  %7652 = vmatmul.mubr.f32.gmra.mrb[0].mxu0 %v6160
  %v7653 = vpop.f32.mrb[0].mxu0
  %v7654 = vadd.f32 0.0, %v7653
  %v7655 = vpop.f32.mrb[0].mxu0
  %7656 = vmatprep.mubr.f32.mxu0 0.0
  %7657 = vmatmul.mubr.f32.gmra.mrb[0].mxu0 %v6163
  %v7658 = vpop.f32.mrb[0].mxu0
  %v7659 = vadd.f32 0.0, %v7658
  %v7660 = vpop.f32.mrb[0].mxu0
  %7661 = vmatprep.mubr.f32.mxu0 0.0
  %7662 = vmatmul.mubr.f32.gmra.mrb[0].mxu0 %v6166
  %v7663 = vpop.f32.mrb[0].mxu0
  %v7664 = vadd.f32 0.0, %v7663
  %v7665 = vpop.f32.mrb[0].mxu0
  %7666 = vmatprep.mubr.f32.mxu0 0.0
  %7667 = vmatmul.mubr.f32.gmra.mrb[0].mxu0 %v6169
  %v7668 = vpop.f32.mrb[0].mxu0
  %v7669 = vadd.f32 0.0, %v7668
  %v7670 = vpop.f32.mrb[0].mxu0
  %7671 = vmatprep.mubr.f32.mxu0 0.0
  %7672 = vmatmul.mubr.f32.gmra.mrb[0].mxu0 %v6172
  %v7673 = vpop.f32.mrb[0].mxu0
  %v7674 = vadd.f32 0.0, %v7673
  %v7675 = vpop.f32.mrb[0].mxu0
  %7676 = vmatprep.mubr.f32.mxu0 0.0
  %7677 = vmatmul.mubr.f32.gmra.mrb[0].mxu0 %v6175
  %v7678 = vpop.f32.mrb[0].mxu0
  %v7679 = vadd.f32 0.0, %v7678
  %v7680 = vpop.f32.mrb[0].mxu0
  %7681 = vmatprep.mubr.f32.mxu0 0.0
  %7682 = vmatmul.mubr.f32.gmra.mrb[0].mxu0 %v6178
  %v7683 = vpop.f32.mrb[0].mxu0
  %v7684 = vadd.f32 0.0, %v7683
  %v7685 = vpop.f32.mrb[0].mxu0
  %7686 = vmatprep.mubr.f32.mxu0 0.0
  %7687 = vmatmul.mubr.f32.gmra.mrb[0].mxu0 %v6181
  %v7688 = vpop.f32.mrb[0].mxu0
  %v7689 = vadd.f32 0.0, %v7688
  %v7690 = vpop.f32.mrb[0].mxu0
  %7691 = vmatprep.mubr.f32.mxu0 0.0
  %7692 = vmatmul.mubr.f32.gmra.mrb[0].mxu0 %v6184
  %v7693 = vpop.f32.mrb[0].mxu0
  %v7694 = vadd.f32 0.0, %v7693
  %v7695 = vpop.f32.mrb[0].mxu0
  %7696 = vmatprep.mubr.f32.mxu0 0.0
  %7697 = vmatmul.mubr.f32.gmra.mrb[0].mxu0 %v6187
  %v7698 = vpop.f32.mrb[0].mxu0
  %v7699 = vadd.f32 0.0, %v7698
  %v7700 = vpop.f32.mrb[0].mxu0
  %7701 = vmatprep.mubr.f32.mxu0 0.0
  %7702 = vmatmul.mubr.f32.gmra.mrb[0].mxu0 %v6190
  %v7703 = vpop.f32.mrb[0].mxu0
  %v7704 = vadd.f32 0.0, %v7703
  %v7705 = vpop.f32.mrb[0].mxu0
  %7706 = vmatprep.mubr.f32.mxu0 0.0
  %7707 = vmatmul.mubr.f32.gmra.mrb[0].mxu0 %v6193
  %v7708 = vpop.f32.mrb[0].mxu0
  %v7709 = vadd.f32 0.0, %v7708
  %v7710 = vpop.f32.mrb[0].mxu0
  %7711 = vmatprep.mubr.f32.mxu0 0.0
  %7712 = vmatmul.mubr.f32.gmra.mrb[0].mxu0 %v6196
  %v7713 = vpop.f32.mrb[0].mxu0
  %v7714 = vadd.f32 0.0, %v7713
  %v7715 = vpop.f32.mrb[0].mxu0
  %7716 = vmatprep.mubr.f32.mxu0 0.0
  %7717 = vmatmul.mubr.f32.gmra.mrb[0].mxu0 %v6199
  %v7718 = vpop.f32.mrb[0].mxu0
  %v7719 = vadd.f32 0.0, %v7718
  %v7720 = vpop.f32.mrb[0].mxu0
  %7721 = vmatprep.mubr.f32.mxu0 0.0
  %7722 = vmatmul.mubr.f32.gmra.mrb[0].mxu0 %v6202
  %v7723 = vpop.f32.mrb[0].mxu0
  %v7724 = vadd.f32 0.0, %v7723
  %v7725 = vpop.f32.mrb[0].mxu0
  %7726 = vmatprep.mubr.f32.mxu0 0.0
  %7727 = vmatmul.mubr.f32.gmra.mrb[0].mxu0 %v6205
  %v7728 = vpop.f32.mrb[0].mxu0
  %v7729 = vadd.f32 0.0, %v7728
  %v7730 = vpop.f32.mrb[0].mxu0
  %7731 = vdwg.mxu0
  %v7732 = vadd.f32 %v7548, %v7654
  %v7733 = vadd.f32 %v7550, %v7659
  %v7734 = vadd.f32 %v7552, %v7664
  %v7735 = vadd.f32 %v7554, %v7669
  %v7736 = vadd.f32 %v7556, %v7674
  %v7737 = vadd.f32 %v7558, %v7679
  %v7738 = vadd.f32 %v7560, %v7684
  %v7739 = vadd.f32 %v7562, %v7689
  %v7740 = vadd.f32 %v7564, %v7694
  %v7741 = vadd.f32 %v7566, %v7699
  %v7742 = vadd.f32 %v7568, %v7704
  %v7743 = vadd.f32 %v7570, %v7709
  %v7744 = vadd.f32 %v7572, %v7714
  %v7745 = vadd.f32 %v7574, %v7719
  %v7746 = vadd.f32 %v7576, %v7724
  %v7747 = vadd.f32 %v7578, %v7729
  %v7748 = vxor.u32 %v7732, 2147483648
  %v7749 = vxor.u32 %v7733, 2147483648
  %v7750 = vxor.u32 %v7734, 2147483648
  %v7751 = vxor.u32 %v7735, 2147483648
  %v7752 = vmul.f32 %v7748, 1.442695
  %v7753 = vpow.pop %v7752
  %v7754 = vmul.f32 %v7749, 1.442695
  %v7755 = vpow.pop %v7754
  %v7756 = vmul.f32 %v7750, 1.442695
  %v7757 = vpow.pop %v7756
  %v7758 = vmul.f32 %v7751, 1.442695
  %v7759 = vpow.pop %v7758
  %v7760 = vadd.f32 %v7753, 1.0
  %v7761 = vadd.f32 %v7755, 1.0
  %v7762 = vadd.f32 %v7757, 1.0
  %v7763 = vadd.f32 %v7759, 1.0
  %v7764 = vrcp.pop %v7760
  %v7765 = vmul.f32 1.0, %v7764
  %v7766 = vrcp.pop %v7761
  %v7767 = vmul.f32 1.0, %v7766
  %v7768 = vrcp.pop %v7762
  %v7769 = vmul.f32 1.0, %v7768
  %v7770 = vrcp.pop %v7763
  %v7771 = vmul.f32 1.0, %v7770
  %v7772 = vtanh.pop %v7740
  %v7773 = vtanh.pop %v7741
  %v7774 = vtanh.pop %v7742
  %v7775 = vtanh.pop %v7743
  %v7776 = vxor.u32 %v7744, 2147483648
  %v7777 = vxor.u32 %v7745, 2147483648
  %v7778 = vxor.u32 %v7746, 2147483648
  %v7779 = vxor.u32 %v7747, 2147483648
  %v7780 = vmul.f32 %v7776, 1.442695
  %v7781 = vpow.pop %v7780
  %v7782 = vmul.f32 %v7777, 1.442695
  %v7783 = vpow.pop %v7782
  %v7784 = vmul.f32 %v7778, 1.442695
  %v7785 = vpow.pop %v7784
  %v7786 = vmul.f32 %v7779, 1.442695
  %v7787 = vpow.pop %v7786
  %v7788 = vadd.f32 %v7781, 1.0
  %v7789 = vadd.f32 %v7783, 1.0
  %v7790 = vadd.f32 %v7785, 1.0
  %v7791 = vadd.f32 %v7787, 1.0
  %v7792 = vrcp.pop %v7788
  %v7793 = vmul.f32 1.0, %v7792
  %v7794 = vrcp.pop %v7789
  %v7795 = vmul.f32 1.0, %v7794
  %v7796 = vrcp.pop %v7790
  %v7797 = vmul.f32 1.0, %v7796
  %v7798 = vrcp.pop %v7791
  %v7799 = vmul.f32 1.0, %v7798
  %v7800 = vxor.u32 %v7736, 2147483648
  %v7801 = vxor.u32 %v7737, 2147483648
  %v7802 = vxor.u32 %v7738, 2147483648
  %v7803 = vxor.u32 %v7739, 2147483648
  %v7804 = vmul.f32 %v7800, 1.442695
  %v7805 = vpow.pop %v7804
  %v7806 = vmul.f32 %v7801, 1.442695
  %v7807 = vpow.pop %v7806
  %v7808 = vmul.f32 %v7802, 1.442695
  %v7809 = vpow.pop %v7808
  %v7810 = vmul.f32 %v7803, 1.442695
  %v7811 = vpow.pop %v7810
  %v7812 = vadd.f32 %v7805, 1.0
  %v7813 = vadd.f32 %v7807, 1.0
  %v7814 = vadd.f32 %v7809, 1.0
  %v7815 = vadd.f32 %v7811, 1.0
  %v7816 = vrcp.pop %v7812
  %v7817 = vmul.f32 1.0, %v7816
  %v7818 = vrcp.pop %v7813
  %v7819 = vmul.f32 1.0, %v7818
  %v7820 = vrcp.pop %v7814
  %v7821 = vmul.f32 1.0, %v7820
  %v7822 = vrcp.pop %v7815
  %v7823 = vmul.f32 1.0, %v7822
  %v7824 = vmul.f32 %v7817, %v7479
  %v7825 = vmul.f32 %v7819, %v7480
  %v7826 = vmul.f32 %v7821, %v7481
  %v7827 = vmul.f32 %v7823, %v7482
  %v7828 = vmul.f32 %v7765, %v7772
  %v7829 = vmul.f32 %v7767, %v7773
  %v7830 = vmul.f32 %v7769, %v7774
  %v7831 = vmul.f32 %v7771, %v7775
  %v7832 = vadd.f32 %v7824, %v7828
  %v7833 = vadd.f32 %v7825, %v7829
  %v7834 = vadd.f32 %v7826, %v7830
  %v7835 = vadd.f32 %v7827, %v7831
  %v7836 = vtanh.pop %v7832
  %v7837 = vtanh.pop %v7833
  %v7838 = vtanh.pop %v7834
  %v7839 = vtanh.pop %v7835
  %v7840 = vmul.f32 %v7793, %v7836
  %v7841 = vmul.f32 %v7795, %v7837
  %v7842 = vmul.f32 %v7797, %v7838
  %v7843 = vmul.f32 %v7799, %v7839
  %7848 = vrot.lane.b32.xlu0 %v7840, 64
  %v7849 = vpop.permute.xlu0 %7848
  %7850 = vrot.lane.b32.xlu0 %v7841, 64
  %v7851 = vpop.permute.xlu0 %7850
  %7852 = vrot.lane.b32.xlu0 %v7842, 64
  %v7853 = vpop.permute.xlu0 %7852
  %7854 = vrot.lane.b32.xlu0 %v7843, 64
  %v7855 = vpop.permute.xlu0 %7854
  %7860 = vst.msk [vmem:[#allocation5 + $0x10] sm:$0xff] %vm370, %v7849
  %7861 = vst.msk [vmem:[#allocation5 + $0x30] sm:$0xff] %vm370, %v7851
  %7862 = vst.msk [vmem:[#allocation5 + $0x50] sm:$0xff] %vm370, %v7853
  %7863 = vst.msk [vmem:[#allocation5 + $0x70] sm:$0xff] %vm370, %v7855
  %7864 = vst.msk [vmem:[#allocation5 + $0x88] sm:$0xff] %vm192, %v7849
  %7865 = vst.msk [vmem:[#allocation5 + $0xa8] sm:$0xff] %vm192, %v7851
  %7866 = vst.msk [vmem:[#allocation5 + $0xc8] sm:$0xff] %vm192, %v7853
  %7867 = vst.msk [vmem:[#allocation5 + $0xe8] sm:$0xff] %vm192, %v7855
  %v7868 = vld [vmem:[#allocation3 + $0x18] sm:$0xff]
  %v7869 = vld [vmem:[#allocation3 + $0x38] sm:$0xff]
  %v7870 = vld [vmem:[#allocation3 + $0x58] sm:$0xff]
  %v7871 = vld [vmem:[#allocation3 + $0x78] sm:$0xff]
  %v7872 = vld [vmem:[#allocation3 + $0x98] sm:$0xff]
  %v7873 = vld [vmem:[#allocation3 + $0xb8] sm:$0xff]
  %v7874 = vld [vmem:[#allocation3 + $0xd8] sm:$0xff]
  %v7875 = vld [vmem:[#allocation3 + $0xf8] sm:$0xff]
  %v7876 = vld [vmem:[#allocation3 + $0x118] sm:$0xff]
  %v7877 = vld [vmem:[#allocation3 + $0x138] sm:$0xff]
  %v7878 = vld [vmem:[#allocation3 + $0x158] sm:$0xff]
  %v7879 = vld [vmem:[#allocation3 + $0x178] sm:$0xff]
  %v7880 = vld [vmem:[#allocation3 + $0x198] sm:$0xff]
  %v7881 = vld [vmem:[#allocation3 + $0x1b8] sm:$0xff]
  %v7882 = vld [vmem:[#allocation3 + $0x1d8] sm:$0xff]
  %v7883 = vld [vmem:[#allocation3 + $0x1f8] sm:$0xff]
  %v7884 = vld [vmem:[#allocation3 + $0x200] sm:$0xff]
  %v7885 = vld [vmem:[#allocation3 + $0x220] sm:$0xff]
  %v7886 = vld [vmem:[#allocation3 + $0x240] sm:$0xff]
  %v7887 = vld [vmem:[#allocation3 + $0x260] sm:$0xff]
  %v7888 = vld [vmem:[#allocation3 + $0x280] sm:$0xff]
  %v7889 = vld [vmem:[#allocation3 + $0x2a0] sm:$0xff]
  %v7890 = vld [vmem:[#allocation3 + $0x2c0] sm:$0xff]
  %v7891 = vld [vmem:[#allocation3 + $0x2e0] sm:$0xff]
  %v7892 = vld [vmem:[#allocation3 + $0x300] sm:$0xff]
  %v7893 = vld [vmem:[#allocation3 + $0x320] sm:$0xff]
  %v7894 = vld [vmem:[#allocation3 + $0x340] sm:$0xff]
  %v7895 = vld [vmem:[#allocation3 + $0x360] sm:$0xff]
  %v7896 = vld [vmem:[#allocation3 + $0x380] sm:$0xff]
  %v7897 = vld [vmem:[#allocation3 + $0x3a0] sm:$0xff]
  %v7898 = vld [vmem:[#allocation3 + $0x3c0] sm:$0xff]
  %v7899 = vld [vmem:[#allocation3 + $0x3e0] sm:$0xff]
  %v7900 = vsel %vm1347, %v7868, %v7884
  %v7901 = vsel %vm1347, %v7869, %v7885
  %v7902 = vsel %vm1347, %v7870, %v7886
  %v7903 = vsel %vm1347, %v7871, %v7887
  %v7904 = vsel %vm1347, %v7872, %v7888
  %v7905 = vsel %vm1347, %v7873, %v7889
  %v7906 = vsel %vm1347, %v7874, %v7890
  %v7907 = vsel %vm1347, %v7875, %v7891
  %v7908 = vsel %vm1347, %v7876, %v7892
  %v7909 = vsel %vm1347, %v7877, %v7893
  %v7910 = vsel %vm1347, %v7878, %v7894
  %v7911 = vsel %vm1347, %v7879, %v7895
  %v7912 = vsel %vm1347, %v7880, %v7896
  %v7913 = vsel %vm1347, %v7881, %v7897
  %v7914 = vsel %vm1347, %v7882, %v7898
  %v7915 = vsel %vm1347, %v7883, %v7899
  %v7916 = vsel %vm1347, %v7840, 0.0
  %v7917 = vsel %vm1347, %v7841, 0.0
  %v7918 = vsel %vm1347, %v7842, 0.0
  %v7919 = vsel %vm1347, %v7843, 0.0
  %v7920 = vsel %vm1347, 0.0, %v7840
  %v7921 = vsel %vm1347, 0.0, %v7841
  %v7922 = vsel %vm1347, 0.0, %v7842
  %v7923 = vsel %vm1347, 0.0, %v7843
  %7924 = vmatprep.subr.mxu0 0.0
  %7925 = vmatpush1.msra.mxu0 %v7916
  %7926 = vmatprep.subr.mxu0 0.0
  %7927 = vmatpush1.msra.mxu0 %v7917
  %7928 = vmatprep.subr.mxu0 0.0
  %7929 = vmatpush1.msra.mxu0 %v7918
  %7930 = vmatprep.subr.mxu0 0.0
  %7931 = vmatpush1.msra.mxu0 %v7919
  %7932 = vmatprep.subr.mxu0 0.0
  %7933 = vmatpush1.msra.mxu0 %v7920
  %7934 = vmatprep.subr.mxu0 0.0
  %7935 = vmatpush1.msra.mxu0 %v7921
  %7936 = vmatprep.subr.mxu0 0.0
  %7937 = vmatpush1.msra.mxu0 %v7922
  %7938 = vmatprep.subr.mxu0 0.0
  %7939 = vmatpush1.msra.mxu0 %v7923
  %7940 = vmatprep.subr.mxu0 0.0
  %7941 = vmatpush1.msra.mxu0 0.0
  %7942 = vmatprep.subr.mxu0 0.0
  %7943 = vmatpush1.msra.mxu0 0.0
  %7944 = vmatprep.subr.mxu0 0.0
  %7945 = vmatpush1.msra.mxu0 0.0
  %7946 = vmatprep.subr.mxu0 0.0
  %7947 = vmatpush1.msra.mxu0 0.0
  %7948 = vmatprep.subr.mxu0 0.0
  %7949 = vmatpush1.msra.mxu0 0.0
  %7950 = vmatprep.subr.mxu0 0.0
  %7951 = vmatpush1.msra.mxu0 0.0
  %7952 = vmatprep.subr.mxu0 0.0
  %7953 = vmatpush1.msra.mxu0 0.0
  %7954 = vmatprep.subr.mxu0 0.0
  %7955 = vmatpush1.msra.mxu0 0.0
  %7956 = vmatprep.subr.mxu0 0.0
  %7957 = vmatpush1.msra.mxu0 0.0
  %7958 = vmatprep.subr.mxu0 0.0
  %7959 = vmatpush1.msra.mxu0 0.0
  %7960 = vmatprep.subr.mxu0 0.0
  %7961 = vmatpush1.msra.mxu0 0.0
  %7962 = vmatprep.subr.mxu0 0.0
  %7963 = vmatpush1.msra.mxu0 0.0
  %7964 = vmatprep.subr.mxu0 0.0
  %7965 = vmatpush1.msra.mxu0 0.0
  %7966 = vmatprep.subr.mxu0 0.0
  %7967 = vmatpush1.msra.mxu0 0.0
  %7968 = vmatprep.subr.mxu0 0.0
  %7969 = vmatpush1.msra.mxu0 0.0
  %7970 = vmatprep.subr.mxu0 0.0
  %7971 = vmatpush1.msra.mxu0 0.0
  %7972 = vmatprep.subr.mxu0 0.0
  %7973 = vmatpush1.msra.mxu0 0.0
  %7974 = vmatprep.subr.mxu0 0.0
  %7975 = vmatpush1.msra.mxu0 0.0
  %7976 = vmatprep.subr.mxu0 0.0
  %7977 = vmatpush1.msra.mxu0 0.0
  %7978 = vmatprep.subr.mxu0 0.0
  %7979 = vmatpush1.msra.mxu0 0.0
  %7980 = vmatprep.subr.mxu0 0.0
  %7981 = vmatpush1.msra.mxu0 0.0
  %7982 = vmatprep.subr.mxu0 0.0
  %7983 = vmatpush1.msra.mxu0 0.0
  %7984 = vmatprep.subr.mxu0 0.0
  %7985 = vmatpush1.msra.mxu0 0.0
  %7986 = vmatprep.subr.mxu0 0.0
  %7987 = vmatpush1.msra.mxu0 0.0
  %7988 = vmatprep.mubr.f32.mxu0 0.0
  %7989 = vmatmul.mubr.f32.gmra.mrb[0].mxu0 %v6160
  %v7990 = vpop.f32.mrb[0].mxu0
  %v7991 = vadd.f32 0.0, %v7990
  %v7992 = vpop.f32.mrb[0].mxu0
  %7993 = vmatprep.mubr.f32.mxu0 0.0
  %7994 = vmatmul.mubr.f32.gmra.mrb[0].mxu0 %v6163
  %v7995 = vpop.f32.mrb[0].mxu0
  %v7996 = vadd.f32 0.0, %v7995
  %v7997 = vpop.f32.mrb[0].mxu0
  %7998 = vmatprep.mubr.f32.mxu0 0.0
  %7999 = vmatmul.mubr.f32.gmra.mrb[0].mxu0 %v6166
  %v8000 = vpop.f32.mrb[0].mxu0
  %v8001 = vadd.f32 0.0, %v8000
  %v8002 = vpop.f32.mrb[0].mxu0
  %8003 = vmatprep.mubr.f32.mxu0 0.0
  %8004 = vmatmul.mubr.f32.gmra.mrb[0].mxu0 %v6169
  %v8005 = vpop.f32.mrb[0].mxu0
  %v8006 = vadd.f32 0.0, %v8005
  %v8007 = vpop.f32.mrb[0].mxu0
  %8008 = vmatprep.mubr.f32.mxu0 0.0
  %8009 = vmatmul.mubr.f32.gmra.mrb[0].mxu0 %v6172
  %v8010 = vpop.f32.mrb[0].mxu0
  %v8011 = vadd.f32 0.0, %v8010
  %v8012 = vpop.f32.mrb[0].mxu0
  %8013 = vmatprep.mubr.f32.mxu0 0.0
  %8014 = vmatmul.mubr.f32.gmra.mrb[0].mxu0 %v6175
  %v8015 = vpop.f32.mrb[0].mxu0
  %v8016 = vadd.f32 0.0, %v8015
  %v8017 = vpop.f32.mrb[0].mxu0
  %8018 = vmatprep.mubr.f32.mxu0 0.0
  %8019 = vmatmul.mubr.f32.gmra.mrb[0].mxu0 %v6178
  %v8020 = vpop.f32.mrb[0].mxu0
  %v8021 = vadd.f32 0.0, %v8020
  %v8022 = vpop.f32.mrb[0].mxu0
  %8023 = vmatprep.mubr.f32.mxu0 0.0
  %8024 = vmatmul.mubr.f32.gmra.mrb[0].mxu0 %v6181
  %v8025 = vpop.f32.mrb[0].mxu0
  %v8026 = vadd.f32 0.0, %v8025
  %v8027 = vpop.f32.mrb[0].mxu0
  %8028 = vmatprep.mubr.f32.mxu0 0.0
  %8029 = vmatmul.mubr.f32.gmra.mrb[0].mxu0 %v6184
  %v8030 = vpop.f32.mrb[0].mxu0
  %v8031 = vadd.f32 0.0, %v8030
  %v8032 = vpop.f32.mrb[0].mxu0
  %8033 = vmatprep.mubr.f32.mxu0 0.0
  %8034 = vmatmul.mubr.f32.gmra.mrb[0].mxu0 %v6187
  %v8035 = vpop.f32.mrb[0].mxu0
  %v8036 = vadd.f32 0.0, %v8035
  %v8037 = vpop.f32.mrb[0].mxu0
  %8038 = vmatprep.mubr.f32.mxu0 0.0
  %8039 = vmatmul.mubr.f32.gmra.mrb[0].mxu0 %v6190
  %v8040 = vpop.f32.mrb[0].mxu0
  %v8041 = vadd.f32 0.0, %v8040
  %v8042 = vpop.f32.mrb[0].mxu0
  %8043 = vmatprep.mubr.f32.mxu0 0.0
  %8044 = vmatmul.mubr.f32.gmra.mrb[0].mxu0 %v6193
  %v8045 = vpop.f32.mrb[0].mxu0
  %v8046 = vadd.f32 0.0, %v8045
  %v8047 = vpop.f32.mrb[0].mxu0
  %8048 = vmatprep.mubr.f32.mxu0 0.0
  %8049 = vmatmul.mubr.f32.gmra.mrb[0].mxu0 %v6196
  %v8050 = vpop.f32.mrb[0].mxu0
  %v8051 = vadd.f32 0.0, %v8050
  %v8052 = vpop.f32.mrb[0].mxu0
  %8053 = vmatprep.mubr.f32.mxu0 0.0
  %8054 = vmatmul.mubr.f32.gmra.mrb[0].mxu0 %v6199
  %v8055 = vpop.f32.mrb[0].mxu0
  %v8056 = vadd.f32 0.0, %v8055
  %v8057 = vpop.f32.mrb[0].mxu0
  %8058 = vmatprep.mubr.f32.mxu0 0.0
  %8059 = vmatmul.mubr.f32.gmra.mrb[0].mxu0 %v6202
  %v8060 = vpop.f32.mrb[0].mxu0
  %v8061 = vadd.f32 0.0, %v8060
  %v8062 = vpop.f32.mrb[0].mxu0
  %8063 = vmatprep.mubr.f32.mxu0 0.0
  %8064 = vmatmul.mubr.f32.gmra.mrb[0].mxu0 %v6205
  %v8065 = vpop.f32.mrb[0].mxu0
  %v8066 = vadd.f32 0.0, %v8065
  %v8067 = vpop.f32.mrb[0].mxu0
  %8068 = vdwg.mxu0
  %v8069 = vadd.f32 %v7900, %v7991
  %v8070 = vadd.f32 %v7901, %v7996
  %v8071 = vadd.f32 %v7902, %v8001
  %v8072 = vadd.f32 %v7903, %v8006
  %v8073 = vadd.f32 %v7904, %v8011
  %v8074 = vadd.f32 %v7905, %v8016
  %v8075 = vadd.f32 %v7906, %v8021
  %v8076 = vadd.f32 %v7907, %v8026
  %v8077 = vadd.f32 %v7908, %v8031
  %v8078 = vadd.f32 %v7909, %v8036
  %v8079 = vadd.f32 %v7910, %v8041
  %v8080 = vadd.f32 %v7911, %v8046
  %v8081 = vadd.f32 %v7912, %v8051
  %v8082 = vadd.f32 %v7913, %v8056
  %v8083 = vadd.f32 %v7914, %v8061
  %v8084 = vadd.f32 %v7915, %v8066
  %v8085 = vxor.u32 %v8069, 2147483648
  %v8086 = vxor.u32 %v8070, 2147483648
  %v8087 = vxor.u32 %v8071, 2147483648
  %v8088 = vxor.u32 %v8072, 2147483648
  %v8089 = vmul.f32 %v8085, 1.442695
  %v8090 = vpow.pop %v8089
  %v8091 = vmul.f32 %v8086, 1.442695
  %v8092 = vpow.pop %v8091
  %v8093 = vmul.f32 %v8087, 1.442695
  %v8094 = vpow.pop %v8093
  %v8095 = vmul.f32 %v8088, 1.442695
  %v8096 = vpow.pop %v8095
  %v8097 = vadd.f32 %v8090, 1.0
  %v8098 = vadd.f32 %v8092, 1.0
  %v8099 = vadd.f32 %v8094, 1.0
  %v8100 = vadd.f32 %v8096, 1.0
  %v8101 = vrcp.pop %v8097
  %v8102 = vmul.f32 1.0, %v8101
  %v8103 = vrcp.pop %v8098
  %v8104 = vmul.f32 1.0, %v8103
  %v8105 = vrcp.pop %v8099
  %v8106 = vmul.f32 1.0, %v8105
  %v8107 = vrcp.pop %v8100
  %v8108 = vmul.f32 1.0, %v8107
  %v8109 = vtanh.pop %v8077
  %v8110 = vtanh.pop %v8078
  %v8111 = vtanh.pop %v8079
  %v8112 = vtanh.pop %v8080
  %v8113 = vxor.u32 %v8081, 2147483648
  %v8114 = vxor.u32 %v8082, 2147483648
  %v8115 = vxor.u32 %v8083, 2147483648
  %v8116 = vxor.u32 %v8084, 2147483648
  %v8117 = vmul.f32 %v8113, 1.442695
  %v8118 = vpow.pop %v8117
  %v8119 = vmul.f32 %v8114, 1.442695
  %v8120 = vpow.pop %v8119
  %v8121 = vmul.f32 %v8115, 1.442695
  %v8122 = vpow.pop %v8121
  %v8123 = vmul.f32 %v8116, 1.442695
  %v8124 = vpow.pop %v8123
  %v8125 = vadd.f32 %v8118, 1.0
  %v8126 = vadd.f32 %v8120, 1.0
  %v8127 = vadd.f32 %v8122, 1.0
  %v8128 = vadd.f32 %v8124, 1.0
  %v8129 = vrcp.pop %v8125
  %v8130 = vmul.f32 1.0, %v8129
  %v8131 = vrcp.pop %v8126
  %v8132 = vmul.f32 1.0, %v8131
  %v8133 = vrcp.pop %v8127
  %v8134 = vmul.f32 1.0, %v8133
  %v8135 = vrcp.pop %v8128
  %v8136 = vmul.f32 1.0, %v8135
  %v8137 = vxor.u32 %v8073, 2147483648
  %v8138 = vxor.u32 %v8074, 2147483648
  %v8139 = vxor.u32 %v8075, 2147483648
  %v8140 = vxor.u32 %v8076, 2147483648
  %v8141 = vmul.f32 %v8137, 1.442695
  %v8142 = vpow.pop %v8141
  %v8143 = vmul.f32 %v8138, 1.442695
  %v8144 = vpow.pop %v8143
  %v8145 = vmul.f32 %v8139, 1.442695
  %v8146 = vpow.pop %v8145
  %v8147 = vmul.f32 %v8140, 1.442695
  %v8148 = vpow.pop %v8147
  %v8149 = vadd.f32 %v8142, 1.0
  %v8150 = vadd.f32 %v8144, 1.0
  %v8151 = vadd.f32 %v8146, 1.0
  %v8152 = vadd.f32 %v8148, 1.0
  %v8153 = vrcp.pop %v8149
  %v8154 = vmul.f32 1.0, %v8153
  %v8155 = vrcp.pop %v8150
  %v8156 = vmul.f32 1.0, %v8155
  %v8157 = vrcp.pop %v8151
  %v8158 = vmul.f32 1.0, %v8157
  %v8159 = vrcp.pop %v8152
  %v8160 = vmul.f32 1.0, %v8159
  %v8161 = vmul.f32 %v8154, %v7832
  %v8162 = vmul.f32 %v8156, %v7833
  %v8163 = vmul.f32 %v8158, %v7834
  %v8164 = vmul.f32 %v8160, %v7835
  %v8165 = vmul.f32 %v8102, %v8109
  %v8166 = vmul.f32 %v8104, %v8110
  %v8167 = vmul.f32 %v8106, %v8111
  %v8168 = vmul.f32 %v8108, %v8112
  %v8169 = vadd.f32 %v8161, %v8165
  %v8170 = vadd.f32 %v8162, %v8166
  %v8171 = vadd.f32 %v8163, %v8167
  %v8172 = vadd.f32 %v8164, %v8168
  %v8173 = vtanh.pop %v8169
  %v8174 = vtanh.pop %v8170
  %v8175 = vtanh.pop %v8171
  %v8176 = vtanh.pop %v8172
  %v8177 = vmul.f32 %v8130, %v8173
  %v8178 = vmul.f32 %v8132, %v8174
  %v8179 = vmul.f32 %v8134, %v8175
  %v8180 = vmul.f32 %v8136, %v8176
  %8181 = vst.msk [vmem:[#allocation5 + $0x18] sm:$0xff] %vm192, %v8177
  %8182 = vst.msk [vmem:[#allocation5 + $0x38] sm:$0xff] %vm192, %v8178
  %8183 = vst.msk [vmem:[#allocation5 + $0x58] sm:$0xff] %vm192, %v8179
  %8184 = vst.msk [vmem:[#allocation5 + $0x78] sm:$0xff] %vm192, %v8180
  %8185 = vst.msk [vmem:[#allocation5 + $0x80] sm:$0xff] %vm370, %v8177
  %8186 = vst.msk [vmem:[#allocation5 + $0xa0] sm:$0xff] %vm370, %v8178
  %8187 = vst.msk [vmem:[#allocation5 + $0xc0] sm:$0xff] %vm370, %v8179
  %8188 = vst.msk [vmem:[#allocation5 + $0xe0] sm:$0xff] %vm370, %v8180
  %v8189 = vld [vmem:[#allocation3 + $0x18] sm:$0xff]
  %v8190 = vld [vmem:[#allocation3 + $0x38] sm:$0xff]
  %v8191 = vld [vmem:[#allocation3 + $0x58] sm:$0xff]
  %v8192 = vld [vmem:[#allocation3 + $0x78] sm:$0xff]
  %v8193 = vld [vmem:[#allocation3 + $0x98] sm:$0xff]
  %v8194 = vld [vmem:[#allocation3 + $0xb8] sm:$0xff]
  %v8195 = vld [vmem:[#allocation3 + $0xd8] sm:$0xff]
  %v8196 = vld [vmem:[#allocation3 + $0xf8] sm:$0xff]
  %v8197 = vld [vmem:[#allocation3 + $0x118] sm:$0xff]
  %v8198 = vld [vmem:[#allocation3 + $0x138] sm:$0xff]
  %v8199 = vld [vmem:[#allocation3 + $0x158] sm:$0xff]
  %v8200 = vld [vmem:[#allocation3 + $0x178] sm:$0xff]
  %v8201 = vld [vmem:[#allocation3 + $0x198] sm:$0xff]
  %v8202 = vld [vmem:[#allocation3 + $0x1b8] sm:$0xff]
  %v8203 = vld [vmem:[#allocation3 + $0x1d8] sm:$0xff]
  %v8204 = vld [vmem:[#allocation3 + $0x1f8] sm:$0xff]
  %v8205 = vld [vmem:[#allocation3 + $0x200] sm:$0xff]
  %v8206 = vld [vmem:[#allocation3 + $0x220] sm:$0xff]
  %v8207 = vld [vmem:[#allocation3 + $0x240] sm:$0xff]
  %v8208 = vld [vmem:[#allocation3 + $0x260] sm:$0xff]
  %v8209 = vld [vmem:[#allocation3 + $0x280] sm:$0xff]
  %v8210 = vld [vmem:[#allocation3 + $0x2a0] sm:$0xff]
  %v8211 = vld [vmem:[#allocation3 + $0x2c0] sm:$0xff]
  %v8212 = vld [vmem:[#allocation3 + $0x2e0] sm:$0xff]
  %v8213 = vld [vmem:[#allocation3 + $0x300] sm:$0xff]
  %v8214 = vld [vmem:[#allocation3 + $0x320] sm:$0xff]
  %v8215 = vld [vmem:[#allocation3 + $0x340] sm:$0xff]
  %v8216 = vld [vmem:[#allocation3 + $0x360] sm:$0xff]
  %v8217 = vld [vmem:[#allocation3 + $0x380] sm:$0xff]
  %v8218 = vld [vmem:[#allocation3 + $0x3a0] sm:$0xff]
  %v8219 = vld [vmem:[#allocation3 + $0x3c0] sm:$0xff]
  %v8220 = vld [vmem:[#allocation3 + $0x3e0] sm:$0xff]
  %v8221 = vsel %vm1347, %v8205, %v8189
  %v8222 = vsel %vm1347, %v8206, %v8190
  %v8223 = vsel %vm1347, %v8207, %v8191
  %v8224 = vsel %vm1347, %v8208, %v8192
  %v8225 = vsel %vm1347, %v8209, %v8193
  %v8226 = vsel %vm1347, %v8210, %v8194
  %v8227 = vsel %vm1347, %v8211, %v8195
  %v8228 = vsel %vm1347, %v8212, %v8196
  %v8229 = vsel %vm1347, %v8213, %v8197
  %v8230 = vsel %vm1347, %v8214, %v8198
  %v8231 = vsel %vm1347, %v8215, %v8199
  %v8232 = vsel %vm1347, %v8216, %v8200
  %v8233 = vsel %vm1347, %v8217, %v8201
  %v8234 = vsel %vm1347, %v8218, %v8202
  %v8235 = vsel %vm1347, %v8219, %v8203
  %v8236 = vsel %vm1347, %v8220, %v8204
  %8237 = vrot.lane.b32.xlu0 %v8221, 64
  %v8238 = vpop.permute.xlu0 %8237
  %8239 = vrot.lane.b32.xlu0 %v8222, 64
  %v8240 = vpop.permute.xlu0 %8239
  %8241 = vrot.lane.b32.xlu0 %v8223, 64
  %v8242 = vpop.permute.xlu0 %8241
  %8243 = vrot.lane.b32.xlu0 %v8224, 64
  %v8244 = vpop.permute.xlu0 %8243
  %8245 = vrot.lane.b32.xlu0 %v8225, 64
  %v8246 = vpop.permute.xlu0 %8245
  %8247 = vrot.lane.b32.xlu0 %v8226, 64
  %v8248 = vpop.permute.xlu0 %8247
  %8249 = vrot.lane.b32.xlu0 %v8227, 64
  %v8250 = vpop.permute.xlu0 %8249
  %8251 = vrot.lane.b32.xlu0 %v8228, 64
  %v8252 = vpop.permute.xlu0 %8251
  %8253 = vrot.lane.b32.xlu0 %v8229, 64
  %v8254 = vpop.permute.xlu0 %8253
  %8255 = vrot.lane.b32.xlu0 %v8230, 64
  %v8256 = vpop.permute.xlu0 %8255
  %8257 = vrot.lane.b32.xlu0 %v8231, 64
  %v8258 = vpop.permute.xlu0 %8257
  %8259 = vrot.lane.b32.xlu0 %v8232, 64
  %v8260 = vpop.permute.xlu0 %8259
  %8261 = vrot.lane.b32.xlu0 %v8233, 64
  %v8262 = vpop.permute.xlu0 %8261
  %8263 = vrot.lane.b32.xlu0 %v8234, 64
  %v8264 = vpop.permute.xlu0 %8263
  %8265 = vrot.lane.b32.xlu0 %v8235, 64
  %v8266 = vpop.permute.xlu0 %8265
  %8267 = vrot.lane.b32.xlu0 %v8236, 64
  %v8268 = vpop.permute.xlu0 %8267
  %v8269 = vsel %vm1347, %v8177, 0.0
  %v8270 = vsel %vm1347, %v8178, 0.0
  %v8271 = vsel %vm1347, %v8179, 0.0
  %v8272 = vsel %vm1347, %v8180, 0.0
  %v8273 = vsel %vm1347, 0.0, %v8177
  %v8274 = vsel %vm1347, 0.0, %v8178
  %v8275 = vsel %vm1347, 0.0, %v8179
  %v8276 = vsel %vm1347, 0.0, %v8180
  %8277 = vmatprep.subr.mxu0 0.0
  %8278 = vmatpush1.msra.mxu0 %v8269
  %8279 = vmatprep.subr.mxu0 0.0
  %8280 = vmatpush1.msra.mxu0 %v8270
  %8281 = vmatprep.subr.mxu0 0.0
  %8282 = vmatpush1.msra.mxu0 %v8271
  %8283 = vmatprep.subr.mxu0 0.0
  %8284 = vmatpush1.msra.mxu0 %v8272
  %8285 = vmatprep.subr.mxu0 0.0
  %8286 = vmatpush1.msra.mxu0 %v8273
  %8287 = vmatprep.subr.mxu0 0.0
  %8288 = vmatpush1.msra.mxu0 %v8274
  %8289 = vmatprep.subr.mxu0 0.0
  %8290 = vmatpush1.msra.mxu0 %v8275
  %8291 = vmatprep.subr.mxu0 0.0
  %8292 = vmatpush1.msra.mxu0 %v8276
  %8293 = vmatprep.subr.mxu0 0.0
  %8294 = vmatpush1.msra.mxu0 0.0
  %8295 = vmatprep.subr.mxu0 0.0
  %8296 = vmatpush1.msra.mxu0 0.0
  %8297 = vmatprep.subr.mxu0 0.0
  %8298 = vmatpush1.msra.mxu0 0.0
  %8299 = vmatprep.subr.mxu0 0.0
  %8300 = vmatpush1.msra.mxu0 0.0
  %8301 = vmatprep.subr.mxu0 0.0
  %8302 = vmatpush1.msra.mxu0 0.0
  %8303 = vmatprep.subr.mxu0 0.0
  %8304 = vmatpush1.msra.mxu0 0.0
  %8305 = vmatprep.subr.mxu0 0.0
  %8306 = vmatpush1.msra.mxu0 0.0
  %8307 = vmatprep.subr.mxu0 0.0
  %8308 = vmatpush1.msra.mxu0 0.0
  %8309 = vmatprep.subr.mxu0 0.0
  %8310 = vmatpush1.msra.mxu0 0.0
  %8311 = vmatprep.subr.mxu0 0.0
  %8312 = vmatpush1.msra.mxu0 0.0
  %8313 = vmatprep.subr.mxu0 0.0
  %8314 = vmatpush1.msra.mxu0 0.0
  %8315 = vmatprep.subr.mxu0 0.0
  %8316 = vmatpush1.msra.mxu0 0.0
  %8317 = vmatprep.subr.mxu0 0.0
  %8318 = vmatpush1.msra.mxu0 0.0
  %8319 = vmatprep.subr.mxu0 0.0
  %8320 = vmatpush1.msra.mxu0 0.0
  %8321 = vmatprep.subr.mxu0 0.0
  %8322 = vmatpush1.msra.mxu0 0.0
  %8323 = vmatprep.subr.mxu0 0.0
  %8324 = vmatpush1.msra.mxu0 0.0
  %8325 = vmatprep.subr.mxu0 0.0
  %8326 = vmatpush1.msra.mxu0 0.0
  %8327 = vmatprep.subr.mxu0 0.0
  %8328 = vmatpush1.msra.mxu0 0.0
  %8329 = vmatprep.subr.mxu0 0.0
  %8330 = vmatpush1.msra.mxu0 0.0
  %8331 = vmatprep.subr.mxu0 0.0
  %8332 = vmatpush1.msra.mxu0 0.0
  %8333 = vmatprep.subr.mxu0 0.0
  %8334 = vmatpush1.msra.mxu0 0.0
  %8335 = vmatprep.subr.mxu0 0.0
  %8336 = vmatpush1.msra.mxu0 0.0
  %8337 = vmatprep.subr.mxu0 0.0
  %8338 = vmatpush1.msra.mxu0 0.0
  %8339 = vmatprep.subr.mxu0 0.0
  %8340 = vmatpush1.msra.mxu0 0.0
  %8341 = vmatprep.mubr.f32.mxu0 0.0
  %8342 = vmatmul.mubr.f32.gmra.mrb[0].mxu0 %v6160
  %v8343 = vpop.f32.mrb[0].mxu0
  %v8344 = vadd.f32 0.0, %v8343
  %v8345 = vpop.f32.mrb[0].mxu0
  %8346 = vmatprep.mubr.f32.mxu0 0.0
  %8347 = vmatmul.mubr.f32.gmra.mrb[0].mxu0 %v6163
  %v8348 = vpop.f32.mrb[0].mxu0
  %v8349 = vadd.f32 0.0, %v8348
  %v8350 = vpop.f32.mrb[0].mxu0
  %8351 = vmatprep.mubr.f32.mxu0 0.0
  %8352 = vmatmul.mubr.f32.gmra.mrb[0].mxu0 %v6166
  %v8353 = vpop.f32.mrb[0].mxu0
  %v8354 = vadd.f32 0.0, %v8353
  %v8355 = vpop.f32.mrb[0].mxu0
  %8356 = vmatprep.mubr.f32.mxu0 0.0
  %8357 = vmatmul.mubr.f32.gmra.mrb[0].mxu0 %v6169
  %v8358 = vpop.f32.mrb[0].mxu0
  %v8359 = vadd.f32 0.0, %v8358
  %v8360 = vpop.f32.mrb[0].mxu0
  %8361 = vmatprep.mubr.f32.mxu0 0.0
  %8362 = vmatmul.mubr.f32.gmra.mrb[0].mxu0 %v6172
  %v8363 = vpop.f32.mrb[0].mxu0
  %v8364 = vadd.f32 0.0, %v8363
  %v8365 = vpop.f32.mrb[0].mxu0
  %8366 = vmatprep.mubr.f32.mxu0 0.0
  %8367 = vmatmul.mubr.f32.gmra.mrb[0].mxu0 %v6175
  %v8368 = vpop.f32.mrb[0].mxu0
  %v8369 = vadd.f32 0.0, %v8368
  %v8370 = vpop.f32.mrb[0].mxu0
  %8371 = vmatprep.mubr.f32.mxu0 0.0
  %8372 = vmatmul.mubr.f32.gmra.mrb[0].mxu0 %v6178
  %v8373 = vpop.f32.mrb[0].mxu0
  %v8374 = vadd.f32 0.0, %v8373
  %v8375 = vpop.f32.mrb[0].mxu0
  %8376 = vmatprep.mubr.f32.mxu0 0.0
  %8377 = vmatmul.mubr.f32.gmra.mrb[0].mxu0 %v6181
  %v8378 = vpop.f32.mrb[0].mxu0
  %v8379 = vadd.f32 0.0, %v8378
  %v8380 = vpop.f32.mrb[0].mxu0
  %8381 = vmatprep.mubr.f32.mxu0 0.0
  %8382 = vmatmul.mubr.f32.gmra.mrb[0].mxu0 %v6184
  %v8383 = vpop.f32.mrb[0].mxu0
  %v8384 = vadd.f32 0.0, %v8383
  %v8385 = vpop.f32.mrb[0].mxu0
  %8386 = vmatprep.mubr.f32.mxu0 0.0
  %8387 = vmatmul.mubr.f32.gmra.mrb[0].mxu0 %v6187
  %v8388 = vpop.f32.mrb[0].mxu0
  %v8389 = vadd.f32 0.0, %v8388
  %v8390 = vpop.f32.mrb[0].mxu0
  %8391 = vmatprep.mubr.f32.mxu0 0.0
  %8392 = vmatmul.mubr.f32.gmra.mrb[0].mxu0 %v6190
  %v8393 = vpop.f32.mrb[0].mxu0
  %v8394 = vadd.f32 0.0, %v8393
  %v8395 = vpop.f32.mrb[0].mxu0
  %8396 = vmatprep.mubr.f32.mxu0 0.0
  %8397 = vmatmul.mubr.f32.gmra.mrb[0].mxu0 %v6193
  %v8398 = vpop.f32.mrb[0].mxu0
  %v8399 = vadd.f32 0.0, %v8398
  %v8400 = vpop.f32.mrb[0].mxu0
  %8401 = vmatprep.mubr.f32.mxu0 0.0
  %8402 = vmatmul.mubr.f32.gmra.mrb[0].mxu0 %v6196
  %v8403 = vpop.f32.mrb[0].mxu0
  %v8404 = vadd.f32 0.0, %v8403
  %v8405 = vpop.f32.mrb[0].mxu0
  %8406 = vmatprep.mubr.f32.mxu0 0.0
  %8407 = vmatmul.mubr.f32.gmra.mrb[0].mxu0 %v6199
  %v8408 = vpop.f32.mrb[0].mxu0
  %v8409 = vadd.f32 0.0, %v8408
  %v8410 = vpop.f32.mrb[0].mxu0
  %8411 = vmatprep.mubr.f32.mxu0 0.0
  %8412 = vmatmul.mubr.f32.gmra.mrb[0].mxu0 %v6202
  %v8413 = vpop.f32.mrb[0].mxu0
  %v8414 = vadd.f32 0.0, %v8413
  %v8415 = vpop.f32.mrb[0].mxu0
  %8416 = vmatprep.mubr.f32.mxu0 0.0
  %8417 = vmatmul.mubr.f32.gmra.mrb[0].mxu0 %v6205
  %v8418 = vpop.f32.mrb[0].mxu0
  %v8419 = vadd.f32 0.0, %v8418
  %v8420 = vpop.f32.mrb[0].mxu0
  %8421 = vdwg.mxu0
  %v8422 = vadd.f32 %v8238, %v8344
  %v8423 = vadd.f32 %v8240, %v8349
  %v8424 = vadd.f32 %v8242, %v8354
  %v8425 = vadd.f32 %v8244, %v8359
  %v8426 = vadd.f32 %v8246, %v8364
  %v8427 = vadd.f32 %v8248, %v8369
  %v8428 = vadd.f32 %v8250, %v8374
  %v8429 = vadd.f32 %v8252, %v8379
  %v8430 = vadd.f32 %v8254, %v8384
  %v8431 = vadd.f32 %v8256, %v8389
  %v8432 = vadd.f32 %v8258, %v8394
  %v8433 = vadd.f32 %v8260, %v8399
  %v8434 = vadd.f32 %v8262, %v8404
  %v8435 = vadd.f32 %v8264, %v8409
  %v8436 = vadd.f32 %v8266, %v8414
  %v8437 = vadd.f32 %v8268, %v8419
  %v8438 = vxor.u32 %v8422, 2147483648
  %v8439 = vxor.u32 %v8423, 2147483648
  %v8440 = vxor.u32 %v8424, 2147483648
  %v8441 = vxor.u32 %v8425, 2147483648
  %v8442 = vmul.f32 %v8438, 1.442695
  %v8443 = vpow.pop %v8442
  %v8444 = vmul.f32 %v8439, 1.442695
  %v8445 = vpow.pop %v8444
  %v8446 = vmul.f32 %v8440, 1.442695
  %v8447 = vpow.pop %v8446
  %v8448 = vmul.f32 %v8441, 1.442695
  %v8449 = vpow.pop %v8448
  %v8450 = vadd.f32 %v8443, 1.0
  %v8451 = vadd.f32 %v8445, 1.0
  %v8452 = vadd.f32 %v8447, 1.0
  %v8453 = vadd.f32 %v8449, 1.0
  %v8454 = vrcp.pop %v8450
  %v8455 = vmul.f32 1.0, %v8454
  %v8456 = vrcp.pop %v8451
  %v8457 = vmul.f32 1.0, %v8456
  %v8458 = vrcp.pop %v8452
  %v8459 = vmul.f32 1.0, %v8458
  %v8460 = vrcp.pop %v8453
  %v8461 = vmul.f32 1.0, %v8460
  %v8462 = vtanh.pop %v8430
  %v8463 = vtanh.pop %v8431
  %v8464 = vtanh.pop %v8432
  %v8465 = vtanh.pop %v8433
  %v8466 = vxor.u32 %v8434, 2147483648
  %v8467 = vxor.u32 %v8435, 2147483648
  %v8468 = vxor.u32 %v8436, 2147483648
  %v8469 = vxor.u32 %v8437, 2147483648
  %v8470 = vmul.f32 %v8466, 1.442695
  %v8471 = vpow.pop %v8470
  %v8472 = vmul.f32 %v8467, 1.442695
  %v8473 = vpow.pop %v8472
  %v8474 = vmul.f32 %v8468, 1.442695
  %v8475 = vpow.pop %v8474
  %v8476 = vmul.f32 %v8469, 1.442695
  %v8477 = vpow.pop %v8476
  %v8478 = vadd.f32 %v8471, 1.0
  %v8479 = vadd.f32 %v8473, 1.0
  %v8480 = vadd.f32 %v8475, 1.0
  %v8481 = vadd.f32 %v8477, 1.0
  %v8482 = vrcp.pop %v8478
  %v8483 = vmul.f32 1.0, %v8482
  %v8484 = vrcp.pop %v8479
  %v8485 = vmul.f32 1.0, %v8484
  %v8486 = vrcp.pop %v8480
  %v8487 = vmul.f32 1.0, %v8486
  %v8488 = vrcp.pop %v8481
  %v8489 = vmul.f32 1.0, %v8488
  %v8490 = vxor.u32 %v8426, 2147483648
  %v8491 = vxor.u32 %v8427, 2147483648
  %v8492 = vxor.u32 %v8428, 2147483648
  %v8493 = vxor.u32 %v8429, 2147483648
  %v8494 = vmul.f32 %v8490, 1.442695
  %v8495 = vpow.pop %v8494
  %v8496 = vmul.f32 %v8491, 1.442695
  %v8497 = vpow.pop %v8496
  %v8498 = vmul.f32 %v8492, 1.442695
  %v8499 = vpow.pop %v8498
  %v8500 = vmul.f32 %v8493, 1.442695
  %v8501 = vpow.pop %v8500
  %v8502 = vadd.f32 %v8495, 1.0
  %v8503 = vadd.f32 %v8497, 1.0
  %v8504 = vadd.f32 %v8499, 1.0
  %v8505 = vadd.f32 %v8501, 1.0
  %v8506 = vrcp.pop %v8502
  %v8507 = vmul.f32 1.0, %v8506
  %v8508 = vrcp.pop %v8503
  %v8509 = vmul.f32 1.0, %v8508
  %v8510 = vrcp.pop %v8504
  %v8511 = vmul.f32 1.0, %v8510
  %v8512 = vrcp.pop %v8505
  %v8513 = vmul.f32 1.0, %v8512
  %v8514 = vmul.f32 %v8507, %v8169
  %v8515 = vmul.f32 %v8509, %v8170
  %v8516 = vmul.f32 %v8511, %v8171
  %v8517 = vmul.f32 %v8513, %v8172
  %v8518 = vmul.f32 %v8455, %v8462
  %v8519 = vmul.f32 %v8457, %v8463
  %v8520 = vmul.f32 %v8459, %v8464
  %v8521 = vmul.f32 %v8461, %v8465
  %v8522 = vadd.f32 %v8514, %v8518
  %v8523 = vadd.f32 %v8515, %v8519
  %v8524 = vadd.f32 %v8516, %v8520
  %v8525 = vadd.f32 %v8517, %v8521
  %v8526 = vtanh.pop %v8522
  %v8527 = vtanh.pop %v8523
  %v8528 = vtanh.pop %v8524
  %v8529 = vtanh.pop %v8525
  %v8530 = vmul.f32 %v8483, %v8526
  %v8531 = vmul.f32 %v8485, %v8527
  %v8532 = vmul.f32 %v8487, %v8528
  %v8533 = vmul.f32 %v8489, %v8529
  %8538 = vrot.lane.b32.xlu0 %v8530, 64
  %v8539 = vpop.permute.xlu0 %8538
  %8540 = vrot.lane.b32.xlu0 %v8531, 64
  %v8541 = vpop.permute.xlu0 %8540
  %8542 = vrot.lane.b32.xlu0 %v8532, 64
  %v8543 = vpop.permute.xlu0 %8542
  %8544 = vrot.lane.b32.xlu0 %v8533, 64
  %v8545 = vpop.permute.xlu0 %8544
  %8550 = vst.msk [vmem:[#allocation5 + $0x18] sm:$0xff] %vm370, %v8539
  %8551 = vst.msk [vmem:[#allocation5 + $0x38] sm:$0xff] %vm370, %v8541
  %8552 = vst.msk [vmem:[#allocation5 + $0x58] sm:$0xff] %vm370, %v8543
  %8553 = vst.msk [vmem:[#allocation5 + $0x78] sm:$0xff] %vm370, %v8545
  %8554 = vst.msk [vmem:[#allocation5 + $0x80] sm:$0xff] %vm192, %v8539
  %8555 = vst.msk [vmem:[#allocation5 + $0xa0] sm:$0xff] %vm192, %v8541
  %8556 = vst.msk [vmem:[#allocation5 + $0xc0] sm:$0xff] %vm192, %v8543
  %8557 = vst.msk [vmem:[#allocation5 + $0xe0] sm:$0xff] %vm192, %v8545
  %v8558 = vld [vmem:[%s9] sm:$0xff]
  %v8559 = vld [vmem:[%s9 + $0x8] sm:$0xff]
  %v8560 = vld [vmem:[#allocation5] sm:$0xff]
  %v8561 = vld [vmem:[#allocation5 + $0x8] sm:$0xff]
  %v8562 = vld [vmem:[#allocation5 + $0x10] sm:$0xff]
  %v8563 = vld [vmem:[#allocation5 + $0x18] sm:$0xff]
  %v8564 = vld [vmem:[#allocation5 + $0x20] sm:$0xff]
  %v8565 = vld [vmem:[#allocation5 + $0x28] sm:$0xff]
  %v8566 = vld [vmem:[#allocation5 + $0x30] sm:$0xff]
  %v8567 = vld [vmem:[#allocation5 + $0x38] sm:$0xff]
  %v8568 = vld [vmem:[#allocation5 + $0x40] sm:$0xff]
  %v8569 = vld [vmem:[#allocation5 + $0x48] sm:$0xff]
  %v8570 = vld [vmem:[#allocation5 + $0x50] sm:$0xff]
  %v8571 = vld [vmem:[#allocation5 + $0x58] sm:$0xff]
  %v8572 = vld [vmem:[#allocation5 + $0x60] sm:$0xff]
  %v8573 = vld [vmem:[#allocation5 + $0x68] sm:$0xff]
  %v8574 = vld [vmem:[#allocation5 + $0x70] sm:$0xff]
  %v8575 = vld [vmem:[#allocation5 + $0x78] sm:$0xff]
  %v8576 = vld [vmem:[#allocation5 + $0x80] sm:$0xff]
  %v8577 = vld [vmem:[#allocation5 + $0x88] sm:$0xff]
  %v8578 = vld [vmem:[#allocation5 + $0x90] sm:$0xff]
  %v8579 = vld [vmem:[#allocation5 + $0x98] sm:$0xff]
  %v8580 = vld [vmem:[#allocation5 + $0xa0] sm:$0xff]
  %v8581 = vld [vmem:[#allocation5 + $0xa8] sm:$0xff]
  %v8582 = vld [vmem:[#allocation5 + $0xb0] sm:$0xff]
  %v8583 = vld [vmem:[#allocation5 + $0xb8] sm:$0xff]
  %v8584 = vld [vmem:[#allocation5 + $0xc0] sm:$0xff]
  %v8585 = vld [vmem:[#allocation5 + $0xc8] sm:$0xff]
  %v8586 = vld [vmem:[#allocation5 + $0xd0] sm:$0xff]
  %v8587 = vld [vmem:[#allocation5 + $0xd8] sm:$0xff]
  %v8588 = vld [vmem:[#allocation5 + $0xe0] sm:$0xff]
  %v8589 = vld [vmem:[#allocation5 + $0xe8] sm:$0xff]
  %v8590 = vld [vmem:[#allocation5 + $0xf0] sm:$0xff]
  %v8591 = vld [vmem:[#allocation5 + $0xf8] sm:$0xff]
  %v8592 = vld [vmem:[%s10] sm:$0xff]
  %v8593 = vld [vmem:[%s10 + $0x8] sm:$0xff]
  %8595 = vset.pattern.permute.xlu0 0
  %8596 = vperm.xlu0 %8595, %v8592
  %v8597 = vpop.permute.xlu0 %8596
  %8600 = vset.pattern.permute.xlu0 0
  %8601 = vperm.xlu0 %8600, %v8593
  %v8602 = vpop.permute.xlu0 %8601
  %v8605 = vsel %vm192, %v8558, 0
  %v8608 = vsel %vm192, %v8559, 0
  %8610 = vmatprep.subr.mxu0 %v8561
  %8611 = vmatpush1.msra.mxu0 %v8560
  %8612 = vmatprep.subr.mxu0 %v8565
  %8613 = vmatpush1.msra.mxu0 %v8564
  %8614 = vmatprep.subr.mxu0 %v8569
  %8615 = vmatpush1.msra.mxu0 %v8568
  %8616 = vmatprep.subr.mxu0 %v8573
  %8617 = vmatpush1.msra.mxu0 %v8572
  %8618 = vmatprep.subr.mxu0 %v8577
  %8619 = vmatpush1.msra.mxu0 %v8576
  %8620 = vmatprep.subr.mxu0 %v8581
  %8621 = vmatpush1.msra.mxu0 %v8580
  %8622 = vmatprep.subr.mxu0 %v8585
  %8623 = vmatpush1.msra.mxu0 %v8584
  %8624 = vmatprep.subr.mxu0 %v8589
  %8625 = vmatpush1.msra.mxu0 %v8588
  %8626 = vmatprep.subr.mxu0 0.0
  %8627 = vmatpush1.msra.mxu0 0.0
  %8628 = vmatprep.subr.mxu0 0.0
  %8629 = vmatpush1.msra.mxu0 0.0
  %8630 = vmatprep.subr.mxu0 0.0
  %8631 = vmatpush1.msra.mxu0 0.0
  %8632 = vmatprep.subr.mxu0 0.0
  %8633 = vmatpush1.msra.mxu0 0.0
  %8634 = vmatprep.subr.mxu0 0.0
  %8635 = vmatpush1.msra.mxu0 0.0
  %8636 = vmatprep.subr.mxu0 0.0
  %8637 = vmatpush1.msra.mxu0 0.0
  %8638 = vmatprep.subr.mxu0 0.0
  %8639 = vmatpush1.msra.mxu0 0.0
  %8640 = vmatprep.subr.mxu0 0.0
  %8641 = vmatpush1.msra.mxu0 0.0
  %8642 = vmatprep.subr.mxu0 0.0
  %8643 = vmatpush1.msra.mxu0 0.0
  %8644 = vmatprep.subr.mxu0 0.0
  %8645 = vmatpush1.msra.mxu0 0.0
  %8646 = vmatprep.subr.mxu0 0.0
  %8647 = vmatpush1.msra.mxu0 0.0
  %8648 = vmatprep.subr.mxu0 0.0
  %8649 = vmatpush1.msra.mxu0 0.0
  %8650 = vmatprep.subr.mxu0 0.0
  %8651 = vmatpush1.msra.mxu0 0.0
  %8652 = vmatprep.subr.mxu0 0.0
  %8653 = vmatpush1.msra.mxu0 0.0
  %8654 = vmatprep.subr.mxu0 0.0
  %8655 = vmatpush1.msra.mxu0 0.0
  %8656 = vmatprep.subr.mxu0 0.0
  %8657 = vmatpush1.msra.mxu0 0.0
  %8658 = vmatprep.subr.mxu0 0.0
  %8659 = vmatpush1.msra.mxu0 0.0
  %8660 = vmatprep.subr.mxu0 0.0
  %8661 = vmatpush1.msra.mxu0 0.0
  %8662 = vmatprep.subr.mxu0 0.0
  %8663 = vmatpush1.msra.mxu0 0.0
  %8664 = vmatprep.subr.mxu0 0.0
  %8665 = vmatpush1.msra.mxu0 0.0
  %8666 = vmatprep.subr.mxu0 0.0
  %8667 = vmatpush1.msra.mxu0 0.0
  %8668 = vmatprep.subr.mxu0 0.0
  %8669 = vmatpush1.msra.mxu0 0.0
  %8670 = vmatprep.subr.mxu0 0.0
  %8671 = vmatpush1.msra.mxu0 0.0
  %8672 = vmatprep.subr.mxu0 0.0
  %8673 = vmatpush1.msra.mxu0 0.0
  %8674 = vmatprep.mubr.f32.mxu0 0.0
  %8675 = vmatmul.mubr.f32.gmra.mrb[0].mxu0 %v8605
  %v8676 = vpop.f32.mrb[0].mxu0
  %v8677 = vadd.f32 %v8597, %v8676
  %v8678 = vpop.f32.mrb[0].mxu0
  %v8679 = vadd.f32 %v8597, %v8678
  %8680 = vmatprep.mubr.f32.mxu0 0.0
  %8681 = vmatmul.mubr.f32.gmra.mrb[0].mxu0 %v8608
  %v8682 = vpop.f32.mrb[0].mxu0
  %v8683 = vadd.f32 %v8602, %v8682
  %v8684 = vpop.f32.mrb[0].mxu0
  %v8685 = vadd.f32 %v8602, %v8684
  %8686 = vdwg.mxu0
  %8687 = vmatprep.subr.mxu0 %v8563
  %8688 = vmatpush1.msra.mxu0 %v8562
  %8689 = vmatprep.subr.mxu0 %v8567
  %8690 = vmatpush1.msra.mxu0 %v8566
  %8691 = vmatprep.subr.mxu0 %v8571
  %8692 = vmatpush1.msra.mxu0 %v8570
  %8693 = vmatprep.subr.mxu0 %v8575
  %8694 = vmatpush1.msra.mxu0 %v8574
  %8695 = vmatprep.subr.mxu0 %v8579
  %8696 = vmatpush1.msra.mxu0 %v8578
  %8697 = vmatprep.subr.mxu0 %v8583
  %8698 = vmatpush1.msra.mxu0 %v8582
  %8699 = vmatprep.subr.mxu0 %v8587
  %8700 = vmatpush1.msra.mxu0 %v8586
  %8701 = vmatprep.subr.mxu0 %v8591
  %8702 = vmatpush1.msra.mxu0 %v8590
  %8703 = vmatprep.subr.mxu0 0.0
  %8704 = vmatpush1.msra.mxu0 0.0
  %8705 = vmatprep.subr.mxu0 0.0
  %8706 = vmatpush1.msra.mxu0 0.0
  %8707 = vmatprep.subr.mxu0 0.0
  %8708 = vmatpush1.msra.mxu0 0.0
  %8709 = vmatprep.subr.mxu0 0.0
  %8710 = vmatpush1.msra.mxu0 0.0
  %8711 = vmatprep.subr.mxu0 0.0
  %8712 = vmatpush1.msra.mxu0 0.0
  %8713 = vmatprep.subr.mxu0 0.0
  %8714 = vmatpush1.msra.mxu0 0.0
  %8715 = vmatprep.subr.mxu0 0.0
  %8716 = vmatpush1.msra.mxu0 0.0
  %8717 = vmatprep.subr.mxu0 0.0
  %8718 = vmatpush1.msra.mxu0 0.0
  %8719 = vmatprep.subr.mxu0 0.0
  %8720 = vmatpush1.msra.mxu0 0.0
  %8721 = vmatprep.subr.mxu0 0.0
  %8722 = vmatpush1.msra.mxu0 0.0
  %8723 = vmatprep.subr.mxu0 0.0
  %8724 = vmatpush1.msra.mxu0 0.0
  %8725 = vmatprep.subr.mxu0 0.0
  %8726 = vmatpush1.msra.mxu0 0.0
  %8727 = vmatprep.subr.mxu0 0.0
  %8728 = vmatpush1.msra.mxu0 0.0
  %8729 = vmatprep.subr.mxu0 0.0
  %8730 = vmatpush1.msra.mxu0 0.0
  %8731 = vmatprep.subr.mxu0 0.0
  %8732 = vmatpush1.msra.mxu0 0.0
  %8733 = vmatprep.subr.mxu0 0.0
  %8734 = vmatpush1.msra.mxu0 0.0
  %8735 = vmatprep.subr.mxu0 0.0
  %8736 = vmatpush1.msra.mxu0 0.0
  %8737 = vmatprep.subr.mxu0 0.0
  %8738 = vmatpush1.msra.mxu0 0.0
  %8739 = vmatprep.subr.mxu0 0.0
  %8740 = vmatpush1.msra.mxu0 0.0
  %8741 = vmatprep.subr.mxu0 0.0
  %8742 = vmatpush1.msra.mxu0 0.0
  %8743 = vmatprep.subr.mxu0 0.0
  %8744 = vmatpush1.msra.mxu0 0.0
  %8745 = vmatprep.subr.mxu0 0.0
  %8746 = vmatpush1.msra.mxu0 0.0
  %8747 = vmatprep.subr.mxu0 0.0
  %8748 = vmatpush1.msra.mxu0 0.0
  %8749 = vmatprep.subr.mxu0 0.0
  %8750 = vmatpush1.msra.mxu0 0.0
  %8751 = vmatprep.mubr.f32.mxu0 0.0
  %8752 = vmatmul.mubr.f32.gmra.mrb[0].mxu0 %v8605
  %v8753 = vpop.f32.mrb[0].mxu0
  %v8754 = vadd.f32 %v8597, %v8753
  %v8755 = vpop.f32.mrb[0].mxu0
  %v8756 = vadd.f32 %v8597, %v8755
  %8757 = vmatprep.mubr.f32.mxu0 0.0
  %8758 = vmatmul.mubr.f32.gmra.mrb[0].mxu0 %v8608
  %v8759 = vpop.f32.mrb[0].mxu0
  %v8760 = vadd.f32 %v8602, %v8759
  %v8761 = vpop.f32.mrb[0].mxu0
  %v8762 = vadd.f32 %v8602, %v8761
  %8763 = vdwg.mxu0
  %8764 = vst [vmem:[%s11] sm:$0xff] %v8677
  %8765 = vst [vmem:[%s11 + $0x8] sm:$0xff] %v8679
  %8766 = vst [vmem:[%s11 + $0x10] sm:$0xff] %v8754
  %8767 = vst [vmem:[%s11 + $0x18] sm:$0xff] %v8756
  %8768 = vst [vmem:[%s11 + $0x20] sm:$0xff] %v8683
  %8769 = vst [vmem:[%s11 + $0x28] sm:$0xff] %v8685
  %8770 = vst [vmem:[%s11 + $0x30] sm:$0xff] %v8760
  %8771 = vst [vmem:[%s11 + $0x38] sm:$0xff] %v8762
  // Predicated region
  $region46: #{_baseline_forward_impl.1} parent=0 // pred_check
    _
  $region47: #{_baseline_forward_impl.1} parent=0 // pred_check_branch
    %8773 = sbr.rel (0) target = $region49
  $region48: #{_baseline_forward_impl.1} parent=0 // pred_region
    _
  $region49: #{_baseline_forward_impl.1} parent=0 // pred_fallthru
    _
  // Predicated region
  $region50: #{_baseline_forward_impl.1} parent=0 // pred_check
    _
  $region51: #{_baseline_forward_impl.1} parent=0 // pred_check_branch
    %8775 = sbr.rel (0) target = $region53
  $region52: #{_baseline_forward_impl.1} parent=0 // pred_region
    _
  $region53: #{_baseline_forward_impl.1} parent=0 // pred_fallthru
    _

</llo_original>
